<compile_context>
chip_gen: v7x
topology: tpu7x:2x2x1
jax: 0.10.0
libtpu: 0.0.40
codegen_flags: <defaults>
</compile_context>

<pallas_src>
import jax
import jax.numpy as jnp
from jax import lax
from jax.experimental import pallas as pl
from jax.experimental.pallas import tpu as pltpu

BN_EPS = 1e-5

# Packed per-channel vector layout (f32, one (1, 5760) array):
#   [bn1_scale, bn1_bias, bn2_scale, bn2_bias, bn3_scale, bn3_bias, fc1_b, fc2_b(pad->128)]
_VEC_SIZES = (256, 256, 512, 512, 1024, 1024, 2048, 128)
_VEC_OFFS = []
_off = 0
for _s in _VEC_SIZES:
    _VEC_OFFS.append(_off)
    _off += _s
_VEC_OFFS = tuple(_VEC_OFFS)
_VEC_TOTAL = _off                      # 5760 = 45 * 128 (every slice is lane-aligned)


# ------------------------------ Pallas kernel ------------------------------ #

def _make_fused_kernel(lseq):
    """Fused forward kernel for per-batch sequence length `lseq` (must be 8)."""
    l2 = lseq // 2      # per-batch length entering conv2
    l3 = lseq // 4      # per-batch length entering conv3
    # Power-of-two per-batch lengths: the `r & (lc - 1)` boundary masks below rely on it.
    assert l2 > 0 and (l2 & (l2 - 1)) == 0 and l3 > 0 and (l3 & (l3 - 1)) == 0

    f32, bf16 = jnp.float32, jnp.bfloat16

    def _sel(nrows, ncols, cond):
        """Exact 0/1 selection matrix (nrows, ncols) in bf16 built from 2-D iota."""
        r = lax.broadcasted_iota(jnp.int32, (nrows, ncols), 0)
        c = lax.broadcasted_iota(jnp.int32, (nrows, ncols), 1)
        return jnp.where(cond(r, c), 1.0, 0.0).astype(bf16)

    def _pool(z_bf):
        """MaxPool1d(2, 2) over batch-major rows: (n, C) bf16 -> (n//2, C) bf16 (exact)."""
        n = z_bf.shape[0]
        e = _sel(n // 2, n, lambda r, c: c == 2 * r)
        o = _sel(n // 2, n, lambda r, c: c == 2 * r + 1)
        ze = jnp.dot(e, z_bf, preferred_element_type=f32)   # exact row copies
        zo = jnp.dot(o, z_bf, preferred_element_type=f32)
        return jnp.maximum(ze, zo).astype(bf16)             # values already bf16-exact

    def _bn_relu(y, s, b_):
        """Folded conv-bias + BatchNorm(eval) scale/shift, then ReLU; f32 in, bf16 out."""
        return jnp.maximum(y * s + b_, 0.0).astype(bf16)

    def _taps3(a_bf, lc):
        """Build [x_{l-1} | x_l | x_{l+1}] lane-concat with 'same' zero padding.

        a_bf: (n, C) bf16, batch-major rows with per-batch length lc (power of two).
        Returns (n, 3C) bf16 feeding the fused K=3*C conv matmul.
        """
        n = a_bf.shape[0]
        p_prev = _sel(n, n, lambda r, c: (c == r - 1) & ((r & (lc - 1)) != 0))
        p_next = _sel(n, n, lambda r, c: (c == r + 1) & ((r & (lc - 1)) != lc - 1))
        a_prev = jnp.dot(p_prev, a_bf, preferred_element_type=f32).astype(bf16)  # exact
        a_next = jnp.dot(p_next, a_bf, preferred_element_type=f32).astype(bf16)  # exact
        return jnp.concatenate([a_prev, a_bf, a_next], axis=1)

    def kernel(xc_ref, w1_ref, w2_ref, vec_ref,          # blocked (auto-DMA) inputs
               w3_hbm, fc1w_hbm, fc2w_hbm,               # ANY-space (manual DMA) inputs
               o_ref,                                    # output
               w3_v, fc1w_v, fc2w_v, sem):               # VMEM scratch + DMA sems
        # Kick off the large weight streams immediately; the conv1/conv2 chain and all
        # pool/shift plumbing overlap with these DMAs.
        cp_w3 = pltpu.make_async_copy(w3_hbm, w3_v, sem.at[0])
        cp_w3.start()
        cp_f1 = pltpu.make_async_copy(fc1w_hbm, fc1w_v, sem.at[1])
        cp_f1.start()
        cp_f2 = pltpu.make_async_copy(fc2w_hbm, fc2w_v, sem.at[2])
        cp_f2.start()

        def vec(i):
            off = _VEC_OFFS[i]
            return vec_ref[:, off:off + _VEC_SIZES[i]]    # static, 128-lane-aligned slice

        # conv1 (Cin == 1): im2col columns prebuilt in the wrapper -> single matmul.
        xc = xc_ref[...].astype(bf16)                                      # (B*L, 3)
        y1 = jnp.dot(xc, w1_ref[...], preferred_element_type=f32)         # (B*L, 256)
        a1 = _pool(_bn_relu(y1, vec(0), vec(1)))                           # (B*L/2, 256)

        # conv2: fused K = 3*256 matmul.
        y2 = jnp.dot(_taps3(a1, l2), w2_ref[...], preferred_element_type=f32)
        a2 = _pool(_bn_relu(y2, vec(2), vec(3)))                           # (B*L/4, 512)

        # conv3: fused K = 3*512 matmul on the streamed weights.
        cp_w3.wait()
        y3 = jnp.dot(_taps3(a2, l3), w3_v[...], preferred_element_type=f32)
        a3 = _pool(_bn_relu(y3, vec(4), vec(5)))                           # (B, 1024)

        # fc1 -> ReLU -> fc2  (dropout4 is identity at inference).
        cp_f1.wait()
        h = jnp.dot(a3, fc1w_v[...], preferred_element_type=f32) + vec(6)
        h = jnp.maximum(h, 0.0).astype(bf16)                               # (B, 2048)
        cp_f2.wait()
        o_ref[...] = jnp.dot(h, fc2w_v[...], preferred_element_type=f32) + vec(7)

    return kernel


# ------------------------------- glue (JAX) -------------------------------- #

def _nbytes(a):
    n = 1
    for d in a.shape:
        n *= int(d)
    return n * a.dtype.itemsize


def cd_spectrum_cnn_forward(x_ncl, pk):
    """x_ncl: (B, 1, L) float32;  pk: packed parameters from pack_params().

    Note: wall time is weight-stream bound and essentially flat in B; larger batches
    amortize the ~8 MiB weight stream almost linearly (fc M dim < MXU height).
    """
    b, cin, lseq = x_ncl.shape
    assert cin == 1, "CDSpectrumCNN takes a single input channel"
    # fc1 is nn.Linear(1024, 2048): after three MaxPool(2) stages the flat feature size
    # 1024 * L/8 must equal 1024, and L must stay even at every pooling stage -> L == 8.
    assert lseq == 8, "sequence length must be 8 (1024 flat features for fc1)"

    # im2col for conv1 only (Cin == 1 -> K*Cin = 3 columns); rows are batch-major.
    x = x_ncl[:, 0, :].astype(jnp.float32)                       # (B, L)
    xp = jnp.pad(x, ((0, 0), (1, 1)))                            # zero 'same' padding
    xc = jnp.stack([xp[:, 0:lseq], xp[:, 1:lseq + 1], xp[:, 2:lseq + 2]], axis=-1)
    xc = xc.reshape(b * lseq, 3)

    blocked = (xc, pk['w1'], pk['w2'], pk['vec'])
    streamed = (pk['w3'], pk['fc1_w'], pk['fc2_w'])

    def _full_spec(a):
        zeros = (0,) * len(a.shape)
        return pl.BlockSpec(tuple(a.shape), lambda: zeros)

    in_specs = ([_full_spec(a) for a in blocked]
                + [pl.BlockSpec(memory_space=pl.ANY) for _ in streamed])

    scratch_shapes = [
        pltpu.VMEM(tuple(pk['w3'].shape), jnp.bfloat16),      # conv3 weights
        pltpu.VMEM(tuple(pk['fc1_w'].shape), jnp.bfloat16),   # fc1 weights
        pltpu.VMEM(tuple(pk['fc2_w'].shape), jnp.bfloat16),   # fc2 weights (padded N=128)
        pltpu.SemaphoreType.DMA((3,)),
    ]

    n1 = b * lseq
    flops = 2 * (n1 * 3 * 256
                 + (n1 // 2) * (3 * 256) * 512
                 + (n1 // 4) * (3 * 512) * 1024
                 + b * 1024 * 2048
                 + b * 2048 * 128)
    bytes_accessed = sum(_nbytes(a) for a in blocked + streamed) + b * 128 * 4

    out = pl.pallas_call(
        _make_fused_kernel(lseq),
        out_shape=jax.ShapeDtypeStruct((b, 128), jnp.float32),
        in_specs=in_specs,
        out_specs=pl.BlockSpec((b, 128), lambda: (0, 0)),
        scratch_shapes=scratch_shapes,
        compiler_params=pltpu.CompilerParams(vmem_limit_bytes=32 * 1024 * 1024),
        cost_estimate=pl.CostEstimate(flops=flops, transcendentals=0,
                                      bytes_accessed=bytes_accessed),
    )(*blocked, *streamed)
    return out[:, :120]


def pack_params(params):
    """One-time weight packing (run OUTSIDE the jitted forward).

    conv{i}: (Cout, Cin, K) -> (K*Cin, Cout) bf16, tap-major rows (prev|center|next),
    so the kernel's lane-concat [x_{l-1}|x_l|x_{l+1}] feeds a single fused matmul.
    conv bias + BatchNorm(eval) folded into per-channel f32 scale/bias; all the tiny
    vectors (scales, biases, fc biases) concatenated into one (1, 5760) f32 array.
    fc weights pre-transposed to (in, out) bf16; fc2 padded 120 -> 128 columns.
    """
    pk = {}
    vec_parts = []
    for i in (1, 2, 3):
        w = params[f'conv{i}_w']                                    # (Cout, Cin, K)
        cout, cin, k = w.shape
        scale = params[f'bn{i}_gamma'] / jnp.sqrt(params[f'bn{i}_var'] + BN_EPS)
        bias = params[f'conv{i}_b'] * scale + (params[f'bn{i}_beta']
                                               - params[f'bn{i}_mean'] * scale)
        wk = jnp.transpose(w, (2, 1, 0)).reshape(k * cin, cout)     # (K*Cin, Cout)
        pk[f'w{i}'] = wk.astype(jnp.bfloat16)
        vec_parts += [scale.astype(jnp.float32), bias.astype(jnp.float32)]

    pk['fc1_w'] = params['fc1_w'].T.astype(jnp.bfloat16)            # (1024, 2048)
    w2t = params['fc2_w'].T                                         # (2048, 120)
    pad = (-w2t.shape[1]) % 128                                     # lane-dense 128 output
    pk['fc2_w'] = jnp.pad(w2t, ((0, 0), (0, pad))).astype(jnp.bfloat16)
    vec_parts += [params['fc1_b'].astype(jnp.float32),
                  jnp.pad(params['fc2_b'], (0, pad)).astype(jnp.float32)]

    assert tuple(int(p.shape[0]) for p in vec_parts) == _VEC_SIZES
    vec = jnp.concatenate(vec_parts)[None, :]                       # (1, 5760) f32
    assert vec.shape[1] == _VEC_TOTAL
    pk['vec'] = vec
    return pk


# ----------------------------- reference (JAX) ----------------------------- #

def reference_forward(x_ncl, params):
    """Pure-JAX reference emulating the kernel numerics: bf16 weights/activations at
    every matmul input, float32 accumulation and post-ops, eval-mode BatchNorm,
    identity dropout."""
    hi = lax.Precision.HIGHEST
    q = lambda a: a.astype(jnp.bfloat16).astype(jnp.float32)
    x = x_ncl.astype(jnp.float32)
    for i in (1, 2, 3):
        y = lax.conv_general_dilated(
            q(x), q(params[f'conv{i}_w']), window_strides=(1,), padding=[(1, 1)],
            dimension_numbers=('NCH', 'OIH', 'NCH'), precision=hi)
        y = y + params[f'conv{i}_b'][None, :, None]
        scale = params[f'bn{i}_gamma'] / jnp.sqrt(params[f'bn{i}_var'] + BN_EPS)
        shift = params[f'bn{i}_beta'] - params[f'bn{i}_mean'] * scale
        y = jnp.maximum(y * scale[None, :, None] + shift[None, :, None], 0.0)
        bsz, c, l = y.shape
        x = y.reshape(bsz, c, l // 2, 2).max(axis=-1)
    feat = x.reshape(x.shape[0], -1)
    h = jnp.maximum(jnp.dot(q(feat), q(params['fc1_w'].T), precision=hi)
                    + params['fc1_b'], 0.0)
    return jnp.dot(q(h), q(params['fc2_w'].T), precision=hi) + params['fc2_b']


# ------------------------------- parameters -------------------------------- #

def init_params(key):
    p = {}
    ks = jax.random.split(key, 20)
    conv_dims = [(256, 1), (512, 256), (1024, 512)]
    j = 0
    for i, (cout, cin) in enumerate(conv_dims, start=1):
        fan_in = cin * 3
        p[f'conv{i}_w'] = jax.random.normal(ks[j], (cout, cin, 3), jnp.float32) / jnp.sqrt(fan_in); j += 1
        p[f'conv{i}_b'] = 0.01 * jax.random.normal(ks[j], (cout,), jnp.float32); j += 1
        p[f'bn{i}_gamma'] = 1.0 + 0.1 * jax.random.normal(ks[j], (cout,), jnp.float32); j += 1
        p[f'bn{i}_beta'] = 0.1 * jax.random.normal(ks[j], (cout,), jnp.float32); j += 1
        p[f'bn{i}_mean'] = 0.05 * jax.random.normal(ks[j], (cout,), jnp.float32); j += 1
        p[f'bn{i}_var'] = 1.0 + 0.1 * jnp.abs(jax.random.normal(ks[j], (cout,), jnp.float32)); j += 1
    p['fc1_w'] = jax.random.normal(ks[j], (2048, 1024), jnp.float32) / jnp.sqrt(1024.0); j += 1
    p['fc1_b'] = 0.01 * jax.random.normal(ks[j], (2048,), jnp.float32); j += 1
    p['fc2_w'] = jax.random.normal(ks[j], (120, 2048), jnp.float32) / jnp.sqrt(2048.0); j += 1
    p['fc2_b'] = 0.01 * jax.random.normal(ks[j], (120,), jnp.float32); j += 1
    return p


# ---------------------------------- main ------------------------------------ #

if __name__ == "__main__":
    key = jax.random.PRNGKey(0)
    k_param, k_x = jax.random.split(key)
    params = init_params(k_param)
    packed = pack_params(params)      # one-time weight packing, outside the jitted forward

    # Input: (B, C=1, L=8).  L=8 so that after three MaxPool(2) stages L=1 and the
    # flattened feature size is exactly 1024, matching nn.Linear(1024, 2048).
    B, L = 2, 8
    x = jax.random.normal(k_x, (B, 1, L), jnp.float32)

    fwd = jax.jit(cd_spectrum_cnn_forward)
    out = jax.block_until_ready(fwd(x, packed))
    assert out.shape == (B, 120), out.shape

    ref = jax.block_until_ready(reference_forward(x, params))
    max_err = float(jnp.max(jnp.abs(out - ref)))
    assert jnp.allclose(out, ref, rtol=1e-2, atol=1e-2), max_err

    print("KERNEL_OK")
</pallas_src>

<mosaic_0001>
module attributes {stable_mosaic.version = 11 : i64} {
  func.func @kernel(%arg0: memref<16x3xf32, #tpu.memory_space<vmem>>, %arg1: memref<3x256xbf16, #tpu.memory_space<vmem>>, %arg2: memref<768x512xbf16, #tpu.memory_space<vmem>>, %arg3: memref<1x5760xf32, #tpu.memory_space<vmem>>, %arg4: memref<1536x1024xbf16, #tpu.memory_space<any>>, %arg5: memref<1024x2048xbf16, #tpu.memory_space<any>>, %arg6: memref<2048x128xbf16, #tpu.memory_space<any>>, %arg7: memref<2x128xf32, #tpu.memory_space<vmem>>, %arg8: memref<1536x1024xbf16, #tpu.memory_space<vmem>>, %arg9: memref<1024x2048xbf16, #tpu.memory_space<vmem>>, %arg10: memref<2048x128xbf16, #tpu.memory_space<vmem>>, %arg11: memref<3x!tpu.dma_semaphore, #tpu.memory_space<semaphore_mem>>) attributes {dimension_semantics = [], scalar_prefetch = 0 : i64, scratch_operands = 4 : i64, tpu.core_type = #tpu.core_type<tc>} {
    %c0_i32 = arith.constant 0 : i32
    %0 = tpu.memref_slice %arg11[%c0_i32] : memref<3x!tpu.dma_semaphore, #tpu.memory_space<semaphore_mem>> -> memref<1x!tpu.dma_semaphore, #tpu.memory_space<semaphore_mem>>
    %1 = tpu.memref_squeeze %0 : memref<1x!tpu.dma_semaphore, #tpu.memory_space<semaphore_mem>> -> memref<!tpu.dma_semaphore, #tpu.memory_space<semaphore_mem>>
    tpu.enqueue_dma source(%arg4 : memref<1536x1024xbf16, #tpu.memory_space<any>>) target(%arg8 : memref<1536x1024xbf16, #tpu.memory_space<vmem>>) target_semaphore(%1 : memref<!tpu.dma_semaphore, #tpu.memory_space<semaphore_mem>>)
    %c1_i32 = arith.constant 1 : i32
    %2 = tpu.memref_slice %arg11[%c1_i32] : memref<3x!tpu.dma_semaphore, #tpu.memory_space<semaphore_mem>> -> memref<1x!tpu.dma_semaphore, #tpu.memory_space<semaphore_mem>>
    %3 = tpu.memref_squeeze %2 : memref<1x!tpu.dma_semaphore, #tpu.memory_space<semaphore_mem>> -> memref<!tpu.dma_semaphore, #tpu.memory_space<semaphore_mem>>
    tpu.enqueue_dma source(%arg5 : memref<1024x2048xbf16, #tpu.memory_space<any>>) target(%arg9 : memref<1024x2048xbf16, #tpu.memory_space<vmem>>) target_semaphore(%3 : memref<!tpu.dma_semaphore, #tpu.memory_space<semaphore_mem>>)
    %c2_i32 = arith.constant 2 : i32
    %4 = tpu.memref_slice %arg11[%c2_i32] : memref<3x!tpu.dma_semaphore, #tpu.memory_space<semaphore_mem>> -> memref<1x!tpu.dma_semaphore, #tpu.memory_space<semaphore_mem>>
    %5 = tpu.memref_squeeze %4 : memref<1x!tpu.dma_semaphore, #tpu.memory_space<semaphore_mem>> -> memref<!tpu.dma_semaphore, #tpu.memory_space<semaphore_mem>>
    tpu.enqueue_dma source(%arg6 : memref<2048x128xbf16, #tpu.memory_space<any>>) target(%arg10 : memref<2048x128xbf16, #tpu.memory_space<vmem>>) target_semaphore(%5 : memref<!tpu.dma_semaphore, #tpu.memory_space<semaphore_mem>>)
    %c0 = arith.constant 0 : index
    %c0_0 = arith.constant 0 : index
    %6 = vector.load %arg0[%c0, %c0_0] : memref<16x3xf32, #tpu.memory_space<vmem>>, vector<16x3xf32>
    %7 = arith.truncf %6 : vector<16x3xf32> to vector<16x3xbf16>
    %c0_1 = arith.constant 0 : index
    %c0_2 = arith.constant 0 : index
    %8 = vector.load %arg1[%c0_1, %c0_2] : memref<3x256xbf16, #tpu.memory_space<vmem>>, vector<3x256xbf16>
    %cst = arith.constant dense<0.000000e+00> : vector<16x256xf32>
    %9 = tpu.matmul %7, %8, %cst {dimension_numbers = #tpu.dot_dimension_numbers<[1], [0], [0], [1], [0, 0, 1, 1], [], []>} : vector<16x3xbf16>, vector<3x256xbf16>, vector<16x256xf32> -> vector<16x256xf32>
    %c0_3 = arith.constant 0 : index
    %c0_4 = arith.constant 0 : index
    %10 = vector.load %arg3[%c0_3, %c0_4] : memref<1x5760xf32, #tpu.memory_space<vmem>>, vector<1x256xf32>
    %c0_5 = arith.constant 0 : index
    %c256 = arith.constant 256 : index
    %11 = vector.load %arg3[%c0_5, %c256] : memref<1x5760xf32, #tpu.memory_space<vmem>>, vector<1x256xf32>
    %12 = vector.broadcast %10 : vector<1x256xf32> to vector<16x256xf32>
    %13 = arith.mulf %9, %12 : vector<16x256xf32>
    %14 = vector.broadcast %11 : vector<1x256xf32> to vector<16x256xf32>
    %15 = arith.addf %13, %14 : vector<16x256xf32>
    %cst_6 = arith.constant 0.000000e+00 : f32
    %16 = vector.broadcast %cst_6 : f32 to vector<16x256xf32>
    %17 = arith.maximumf %15, %16 : vector<16x256xf32>
    %18 = arith.truncf %17 : vector<16x256xf32> to vector<16x256xbf16>
    %19 = tpu.iota {dimensions = array<i32: 0>} : vector<8x16xi32>
    %20 = tpu.iota {dimensions = array<i32: 1>} : vector<8x16xi32>
    %c2_i32_7 = arith.constant 2 : i32
    %21 = vector.broadcast %c2_i32_7 : i32 to vector<8x16xi32>
    %22 = arith.muli %21, %19 : vector<8x16xi32>
    %23 = arith.cmpi eq, %20, %22 : vector<8x16xi32>
    %cst_8 = arith.constant 1.000000e+00 : f32
    %cst_9 = arith.constant 0.000000e+00 : f32
    %24 = vector.broadcast %cst_8 : f32 to vector<8x16xf32>
    %25 = vector.broadcast %cst_9 : f32 to vector<8x16xf32>
    %26 = arith.select %23, %24, %25 : vector<8x16xi1>, vector<8x16xf32>
    %27 = arith.truncf %26 : vector<8x16xf32> to vector<8x16xbf16>
    %28 = tpu.iota {dimensions = array<i32: 0>} : vector<8x16xi32>
    %29 = tpu.iota {dimensions = array<i32: 1>} : vector<8x16xi32>
    %c2_i32_10 = arith.constant 2 : i32
    %30 = vector.broadcast %c2_i32_10 : i32 to vector<8x16xi32>
    %31 = arith.muli %30, %28 : vector<8x16xi32>
    %c1_i32_11 = arith.constant 1 : i32
    %32 = vector.broadcast %c1_i32_11 : i32 to vector<8x16xi32>
    %33 = arith.addi %31, %32 : vector<8x16xi32>
    %34 = arith.cmpi eq, %29, %33 : vector<8x16xi32>
    %cst_12 = arith.constant 1.000000e+00 : f32
    %cst_13 = arith.constant 0.000000e+00 : f32
    %35 = vector.broadcast %cst_12 : f32 to vector<8x16xf32>
    %36 = vector.broadcast %cst_13 : f32 to vector<8x16xf32>
    %37 = arith.select %34, %35, %36 : vector<8x16xi1>, vector<8x16xf32>
    %38 = arith.truncf %37 : vector<8x16xf32> to vector<8x16xbf16>
    %cst_14 = arith.constant dense<0.000000e+00> : vector<8x256xf32>
    %39 = tpu.matmul %27, %18, %cst_14 {dimension_numbers = #tpu.dot_dimension_numbers<[1], [0], [0], [1], [0, 0, 1, 1], [], []>} : vector<8x16xbf16>, vector<16x256xbf16>, vector<8x256xf32> -> vector<8x256xf32>
    %cst_15 = arith.constant dense<0.000000e+00> : vector<8x256xf32>
    %40 = tpu.matmul %38, %18, %cst_15 {dimension_numbers = #tpu.dot_dimension_numbers<[1], [0], [0], [1], [0, 0, 1, 1], [], []>} : vector<8x16xbf16>, vector<16x256xbf16>, vector<8x256xf32> -> vector<8x256xf32>
    %41 = arith.maximumf %39, %40 : vector<8x256xf32>
    %42 = arith.truncf %41 : vector<8x256xf32> to vector<8x256xbf16>
    %43 = tpu.iota {dimensions = array<i32: 0>} : vector<8x8xi32>
    %44 = tpu.iota {dimensions = array<i32: 1>} : vector<8x8xi32>
    %c1_i32_16 = arith.constant 1 : i32
    %45 = vector.broadcast %c1_i32_16 : i32 to vector<8x8xi32>
    %46 = arith.subi %43, %45 : vector<8x8xi32>
    %47 = arith.cmpi eq, %44, %46 : vector<8x8xi32>
    %c3_i32 = arith.constant 3 : i32
    %48 = vector.broadcast %c3_i32 : i32 to vector<8x8xi32>
    %49 = arith.andi %43, %48 : vector<8x8xi32>
    %c0_i32_17 = arith.constant 0 : i32
    %50 = vector.broadcast %c0_i32_17 : i32 to vector<8x8xi32>
    %51 = arith.cmpi ne, %49, %50 : vector<8x8xi32>
    %52 = arith.andi %47, %51 : vector<8x8xi1>
    %cst_18 = arith.constant 1.000000e+00 : f32
    %cst_19 = arith.constant 0.000000e+00 : f32
    %53 = vector.broadcast %cst_18 : f32 to vector<8x8xf32>
    %54 = vector.broadcast %cst_19 : f32 to vector<8x8xf32>
    %55 = arith.select %52, %53, %54 : vector<8x8xi1>, vector<8x8xf32>
    %56 = arith.truncf %55 : vector<8x8xf32> to vector<8x8xbf16>
    %57 = tpu.iota {dimensions = array<i32: 0>} : vector<8x8xi32>
    %58 = tpu.iota {dimensions = array<i32: 1>} : vector<8x8xi32>
    %c1_i32_20 = arith.constant 1 : i32
    %59 = vector.broadcast %c1_i32_20 : i32 to vector<8x8xi32>
    %60 = arith.addi %57, %59 : vector<8x8xi32>
    %61 = arith.cmpi eq, %58, %60 : vector<8x8xi32>
    %c3_i32_21 = arith.constant 3 : i32
    %62 = vector.broadcast %c3_i32_21 : i32 to vector<8x8xi32>
    %63 = arith.andi %57, %62 : vector<8x8xi32>
    %c3_i32_22 = arith.constant 3 : i32
    %64 = vector.broadcast %c3_i32_22 : i32 to vector<8x8xi32>
    %65 = arith.cmpi ne, %63, %64 : vector<8x8xi32>
    %66 = arith.andi %61, %65 : vector<8x8xi1>
    %cst_23 = arith.constant 1.000000e+00 : f32
    %cst_24 = arith.constant 0.000000e+00 : f32
    %67 = vector.broadcast %cst_23 : f32 to vector<8x8xf32>
    %68 = vector.broadcast %cst_24 : f32 to vector<8x8xf32>
    %69 = arith.select %66, %67, %68 : vector<8x8xi1>, vector<8x8xf32>
    %70 = arith.truncf %69 : vector<8x8xf32> to vector<8x8xbf16>
    %cst_25 = arith.constant dense<0.000000e+00> : vector<8x256xf32>
    %71 = tpu.matmul %56, %42, %cst_25 {dimension_numbers = #tpu.dot_dimension_numbers<[1], [0], [0], [1], [0, 0, 1, 1], [], []>} : vector<8x8xbf16>, vector<8x256xbf16>, vector<8x256xf32> -> vector<8x256xf32>
    %72 = arith.truncf %71 : vector<8x256xf32> to vector<8x256xbf16>
    %cst_26 = arith.constant dense<0.000000e+00> : vector<8x256xf32>
    %73 = tpu.matmul %70, %42, %cst_26 {dimension_numbers = #tpu.dot_dimension_numbers<[1], [0], [0], [1], [0, 0, 1, 1], [], []>} : vector<8x8xbf16>, vector<8x256xbf16>, vector<8x256xf32> -> vector<8x256xf32>
    %74 = arith.truncf %73 : vector<8x256xf32> to vector<8x256xbf16>
    %75 = tpu.concatenate %72, %42, %74 in 1 : vector<8x256xbf16>, vector<8x256xbf16>, vector<8x256xbf16> -> vector<8x768xbf16>
    %c0_27 = arith.constant 0 : index
    %c0_28 = arith.constant 0 : index
    %76 = vector.load %arg2[%c0_27, %c0_28] : memref<768x512xbf16, #tpu.memory_space<vmem>>, vector<768x512xbf16>
    %cst_29 = arith.constant dense<0.000000e+00> : vector<8x512xf32>
    %77 = tpu.matmul %75, %76, %cst_29 {dimension_numbers = #tpu.dot_dimension_numbers<[1], [0], [0], [1], [0, 0, 1, 1], [], []>} : vector<8x768xbf16>, vector<768x512xbf16>, vector<8x512xf32> -> vector<8x512xf32>
    %c0_30 = arith.constant 0 : index
    %c512 = arith.constant 512 : index
    %78 = vector.load %arg3[%c0_30, %c512] : memref<1x5760xf32, #tpu.memory_space<vmem>>, vector<1x512xf32>
    %c0_31 = arith.constant 0 : index
    %c1024 = arith.constant 1024 : index
    %79 = vector.load %arg3[%c0_31, %c1024] : memref<1x5760xf32, #tpu.memory_space<vmem>>, vector<1x512xf32>
    %80 = vector.broadcast %78 : vector<1x512xf32> to vector<8x512xf32>
    %81 = arith.mulf %77, %80 : vector<8x512xf32>
    %82 = vector.broadcast %79 : vector<1x512xf32> to vector<8x512xf32>
    %83 = arith.addf %81, %82 : vector<8x512xf32>
    %cst_32 = arith.constant 0.000000e+00 : f32
    %84 = vector.broadcast %cst_32 : f32 to vector<8x512xf32>
    %85 = arith.maximumf %83, %84 : vector<8x512xf32>
    %86 = arith.truncf %85 : vector<8x512xf32> to vector<8x512xbf16>
    %87 = tpu.iota {dimensions = array<i32: 0>} : vector<4x8xi32>
    %88 = tpu.iota {dimensions = array<i32: 1>} : vector<4x8xi32>
    %c2_i32_33 = arith.constant 2 : i32
    %89 = vector.broadcast %c2_i32_33 : i32 to vector<4x8xi32>
    %90 = arith.muli %89, %87 : vector<4x8xi32>
    %91 = arith.cmpi eq, %88, %90 : vector<4x8xi32>
    %cst_34 = arith.constant 1.000000e+00 : f32
    %cst_35 = arith.constant 0.000000e+00 : f32
    %92 = vector.broadcast %cst_34 : f32 to vector<4x8xf32>
    %93 = vector.broadcast %cst_35 : f32 to vector<4x8xf32>
    %94 = arith.select %91, %92, %93 : vector<4x8xi1>, vector<4x8xf32>
    %95 = arith.truncf %94 : vector<4x8xf32> to vector<4x8xbf16>
    %96 = tpu.iota {dimensions = array<i32: 0>} : vector<4x8xi32>
    %97 = tpu.iota {dimensions = array<i32: 1>} : vector<4x8xi32>
    %c2_i32_36 = arith.constant 2 : i32
    %98 = vector.broadcast %c2_i32_36 : i32 to vector<4x8xi32>
    %99 = arith.muli %98, %96 : vector<4x8xi32>
    %c1_i32_37 = arith.constant 1 : i32
    %100 = vector.broadcast %c1_i32_37 : i32 to vector<4x8xi32>
    %101 = arith.addi %99, %100 : vector<4x8xi32>
    %102 = arith.cmpi eq, %97, %101 : vector<4x8xi32>
    %cst_38 = arith.constant 1.000000e+00 : f32
    %cst_39 = arith.constant 0.000000e+00 : f32
    %103 = vector.broadcast %cst_38 : f32 to vector<4x8xf32>
    %104 = vector.broadcast %cst_39 : f32 to vector<4x8xf32>
    %105 = arith.select %102, %103, %104 : vector<4x8xi1>, vector<4x8xf32>
    %106 = arith.truncf %105 : vector<4x8xf32> to vector<4x8xbf16>
    %cst_40 = arith.constant dense<0.000000e+00> : vector<4x512xf32>
    %107 = tpu.matmul %95, %86, %cst_40 {dimension_numbers = #tpu.dot_dimension_numbers<[1], [0], [0], [1], [0, 0, 1, 1], [], []>} : vector<4x8xbf16>, vector<8x512xbf16>, vector<4x512xf32> -> vector<4x512xf32>
    %cst_41 = arith.constant dense<0.000000e+00> : vector<4x512xf32>
    %108 = tpu.matmul %106, %86, %cst_41 {dimension_numbers = #tpu.dot_dimension_numbers<[1], [0], [0], [1], [0, 0, 1, 1], [], []>} : vector<4x8xbf16>, vector<8x512xbf16>, vector<4x512xf32> -> vector<4x512xf32>
    %109 = arith.maximumf %107, %108 : vector<4x512xf32>
    %110 = arith.truncf %109 : vector<4x512xf32> to vector<4x512xbf16>
    %c0_i32_42 = arith.constant 0 : i32
    %111 = tpu.memref_slice %arg11[%c0_i32_42] : memref<3x!tpu.dma_semaphore, #tpu.memory_space<semaphore_mem>> -> memref<1x!tpu.dma_semaphore, #tpu.memory_space<semaphore_mem>>
    %112 = tpu.memref_squeeze %111 : memref<1x!tpu.dma_semaphore, #tpu.memory_space<semaphore_mem>> -> memref<!tpu.dma_semaphore, #tpu.memory_space<semaphore_mem>>
    tpu.wait_dma2 semaphore(%112 : memref<!tpu.dma_semaphore, #tpu.memory_space<semaphore_mem>>) src(%arg4 : memref<1536x1024xbf16, #tpu.memory_space<any>>) dst(%arg8 : memref<1536x1024xbf16, #tpu.memory_space<vmem>>)
    %113 = tpu.iota {dimensions = array<i32: 0>} : vector<4x4xi32>
    %114 = tpu.iota {dimensions = array<i32: 1>} : vector<4x4xi32>
    %c1_i32_43 = arith.constant 1 : i32
    %115 = vector.broadcast %c1_i32_43 : i32 to vector<4x4xi32>
    %116 = arith.subi %113, %115 : vector<4x4xi32>
    %117 = arith.cmpi eq, %114, %116 : vector<4x4xi32>
    %c1_i32_44 = arith.constant 1 : i32
    %118 = vector.broadcast %c1_i32_44 : i32 to vector<4x4xi32>
    %119 = arith.andi %113, %118 : vector<4x4xi32>
    %c0_i32_45 = arith.constant 0 : i32
    %120 = vector.broadcast %c0_i32_45 : i32 to vector<4x4xi32>
    %121 = arith.cmpi ne, %119, %120 : vector<4x4xi32>
    %122 = arith.andi %117, %121 : vector<4x4xi1>
    %cst_46 = arith.constant 1.000000e+00 : f32
    %cst_47 = arith.constant 0.000000e+00 : f32
    %123 = vector.broadcast %cst_46 : f32 to vector<4x4xf32>
    %124 = vector.broadcast %cst_47 : f32 to vector<4x4xf32>
    %125 = arith.select %122, %123, %124 : vector<4x4xi1>, vector<4x4xf32>
    %126 = arith.truncf %125 : vector<4x4xf32> to vector<4x4xbf16>
    %127 = tpu.iota {dimensions = array<i32: 0>} : vector<4x4xi32>
    %128 = tpu.iota {dimensions = array<i32: 1>} : vector<4x4xi32>
    %c1_i32_48 = arith.constant 1 : i32
    %129 = vector.broadcast %c1_i32_48 : i32 to vector<4x4xi32>
    %130 = arith.addi %127, %129 : vector<4x4xi32>
    %131 = arith.cmpi eq, %128, %130 : vector<4x4xi32>
    %c1_i32_49 = arith.constant 1 : i32
    %132 = vector.broadcast %c1_i32_49 : i32 to vector<4x4xi32>
    %133 = arith.andi %127, %132 : vector<4x4xi32>
    %c1_i32_50 = arith.constant 1 : i32
    %134 = vector.broadcast %c1_i32_50 : i32 to vector<4x4xi32>
    %135 = arith.cmpi ne, %133, %134 : vector<4x4xi32>
    %136 = arith.andi %131, %135 : vector<4x4xi1>
    %cst_51 = arith.constant 1.000000e+00 : f32
    %cst_52 = arith.constant 0.000000e+00 : f32
    %137 = vector.broadcast %cst_51 : f32 to vector<4x4xf32>
    %138 = vector.broadcast %cst_52 : f32 to vector<4x4xf32>
    %139 = arith.select %136, %137, %138 : vector<4x4xi1>, vector<4x4xf32>
    %140 = arith.truncf %139 : vector<4x4xf32> to vector<4x4xbf16>
    %cst_53 = arith.constant dense<0.000000e+00> : vector<4x512xf32>
    %141 = tpu.matmul %126, %110, %cst_53 {dimension_numbers = #tpu.dot_dimension_numbers<[1], [0], [0], [1], [0, 0, 1, 1], [], []>} : vector<4x4xbf16>, vector<4x512xbf16>, vector<4x512xf32> -> vector<4x512xf32>
    %142 = arith.truncf %141 : vector<4x512xf32> to vector<4x512xbf16>
    %cst_54 = arith.constant dense<0.000000e+00> : vector<4x512xf32>
    %143 = tpu.matmul %140, %110, %cst_54 {dimension_numbers = #tpu.dot_dimension_numbers<[1], [0], [0], [1], [0, 0, 1, 1], [], []>} : vector<4x4xbf16>, vector<4x512xbf16>, vector<4x512xf32> -> vector<4x512xf32>
    %144 = arith.truncf %143 : vector<4x512xf32> to vector<4x512xbf16>
    %145 = tpu.concatenate %142, %110, %144 in 1 : vector<4x512xbf16>, vector<4x512xbf16>, vector<4x512xbf16> -> vector<4x1536xbf16>
    %c0_55 = arith.constant 0 : index
    %c0_56 = arith.constant 0 : index
    %146 = vector.load %arg8[%c0_55, %c0_56] : memref<1536x1024xbf16, #tpu.memory_space<vmem>>, vector<1536x1024xbf16>
    %cst_57 = arith.constant dense<0.000000e+00> : vector<4x1024xf32>
    %147 = tpu.matmul %145, %146, %cst_57 {dimension_numbers = #tpu.dot_dimension_numbers<[1], [0], [0], [1], [0, 0, 1, 1], [], []>} : vector<4x1536xbf16>, vector<1536x1024xbf16>, vector<4x1024xf32> -> vector<4x1024xf32>
    %c0_58 = arith.constant 0 : index
    %c1536 = arith.constant 1536 : index
    %148 = vector.load %arg3[%c0_58, %c1536] : memref<1x5760xf32, #tpu.memory_space<vmem>>, vector<1x1024xf32>
    %c0_59 = arith.constant 0 : index
    %c2560 = arith.constant 2560 : index
    %149 = vector.load %arg3[%c0_59, %c2560] : memref<1x5760xf32, #tpu.memory_space<vmem>>, vector<1x1024xf32>
    %150 = vector.broadcast %148 : vector<1x1024xf32> to vector<4x1024xf32>
    %151 = arith.mulf %147, %150 : vector<4x1024xf32>
    %152 = vector.broadcast %149 : vector<1x1024xf32> to vector<4x1024xf32>
    %153 = arith.addf %151, %152 : vector<4x1024xf32>
    %cst_60 = arith.constant 0.000000e+00 : f32
    %154 = vector.broadcast %cst_60 : f32 to vector<4x1024xf32>
    %155 = arith.maximumf %153, %154 : vector<4x1024xf32>
    %156 = arith.truncf %155 : vector<4x1024xf32> to vector<4x1024xbf16>
    %157 = tpu.iota {dimensions = array<i32: 0>} : vector<2x4xi32>
    %158 = tpu.iota {dimensions = array<i32: 1>} : vector<2x4xi32>
    %c2_i32_61 = arith.constant 2 : i32
    %159 = vector.broadcast %c2_i32_61 : i32 to vector<2x4xi32>
    %160 = arith.muli %159, %157 : vector<2x4xi32>
    %161 = arith.cmpi eq, %158, %160 : vector<2x4xi32>
    %cst_62 = arith.constant 1.000000e+00 : f32
    %cst_63 = arith.constant 0.000000e+00 : f32
    %162 = vector.broadcast %cst_62 : f32 to vector<2x4xf32>
    %163 = vector.broadcast %cst_63 : f32 to vector<2x4xf32>
    %164 = arith.select %161, %162, %163 : vector<2x4xi1>, vector<2x4xf32>
    %165 = arith.truncf %164 : vector<2x4xf32> to vector<2x4xbf16>
    %166 = tpu.iota {dimensions = array<i32: 0>} : vector<2x4xi32>
    %167 = tpu.iota {dimensions = array<i32: 1>} : vector<2x4xi32>
    %c2_i32_64 = arith.constant 2 : i32
    %168 = vector.broadcast %c2_i32_64 : i32 to vector<2x4xi32>
    %169 = arith.muli %168, %166 : vector<2x4xi32>
    %c1_i32_65 = arith.constant 1 : i32
    %170 = vector.broadcast %c1_i32_65 : i32 to vector<2x4xi32>
    %171 = arith.addi %169, %170 : vector<2x4xi32>
    %172 = arith.cmpi eq, %167, %171 : vector<2x4xi32>
    %cst_66 = arith.constant 1.000000e+00 : f32
    %cst_67 = arith.constant 0.000000e+00 : f32
    %173 = vector.broadcast %cst_66 : f32 to vector<2x4xf32>
    %174 = vector.broadcast %cst_67 : f32 to vector<2x4xf32>
    %175 = arith.select %172, %173, %174 : vector<2x4xi1>, vector<2x4xf32>
    %176 = arith.truncf %175 : vector<2x4xf32> to vector<2x4xbf16>
    %cst_68 = arith.constant dense<0.000000e+00> : vector<2x1024xf32>
    %177 = tpu.matmul %165, %156, %cst_68 {dimension_numbers = #tpu.dot_dimension_numbers<[1], [0], [0], [1], [0, 0, 1, 1], [], []>} : vector<2x4xbf16>, vector<4x1024xbf16>, vector<2x1024xf32> -> vector<2x1024xf32>
    %cst_69 = arith.constant dense<0.000000e+00> : vector<2x1024xf32>
    %178 = tpu.matmul %176, %156, %cst_69 {dimension_numbers = #tpu.dot_dimension_numbers<[1], [0], [0], [1], [0, 0, 1, 1], [], []>} : vector<2x4xbf16>, vector<4x1024xbf16>, vector<2x1024xf32> -> vector<2x1024xf32>
    %179 = arith.maximumf %177, %178 : vector<2x1024xf32>
    %180 = arith.truncf %179 : vector<2x1024xf32> to vector<2x1024xbf16>
    %c1_i32_70 = arith.constant 1 : i32
    %181 = tpu.memref_slice %arg11[%c1_i32_70] : memref<3x!tpu.dma_semaphore, #tpu.memory_space<semaphore_mem>> -> memref<1x!tpu.dma_semaphore, #tpu.memory_space<semaphore_mem>>
    %182 = tpu.memref_squeeze %181 : memref<1x!tpu.dma_semaphore, #tpu.memory_space<semaphore_mem>> -> memref<!tpu.dma_semaphore, #tpu.memory_space<semaphore_mem>>
    tpu.wait_dma2 semaphore(%182 : memref<!tpu.dma_semaphore, #tpu.memory_space<semaphore_mem>>) src(%arg5 : memref<1024x2048xbf16, #tpu.memory_space<any>>) dst(%arg9 : memref<1024x2048xbf16, #tpu.memory_space<vmem>>)
    %c0_71 = arith.constant 0 : index
    %c0_72 = arith.constant 0 : index
    %183 = vector.load %arg9[%c0_71, %c0_72] : memref<1024x2048xbf16, #tpu.memory_space<vmem>>, vector<1024x2048xbf16>
    %cst_73 = arith.constant dense<0.000000e+00> : vector<2x2048xf32>
    %184 = tpu.matmul %180, %183, %cst_73 {dimension_numbers = #tpu.dot_dimension_numbers<[1], [0], [0], [1], [0, 0, 1, 1], [], []>} : vector<2x1024xbf16>, vector<1024x2048xbf16>, vector<2x2048xf32> -> vector<2x2048xf32>
    %c0_74 = arith.constant 0 : index
    %c3584 = arith.constant 3584 : index
    %185 = vector.load %arg3[%c0_74, %c3584] : memref<1x5760xf32, #tpu.memory_space<vmem>>, vector<1x2048xf32>
    %186 = vector.broadcast %185 : vector<1x2048xf32> to vector<2x2048xf32>
    %187 = arith.addf %184, %186 : vector<2x2048xf32>
    %cst_75 = arith.constant 0.000000e+00 : f32
    %188 = vector.broadcast %cst_75 : f32 to vector<2x2048xf32>
    %189 = arith.maximumf %187, %188 : vector<2x2048xf32>
    %190 = arith.truncf %189 : vector<2x2048xf32> to vector<2x2048xbf16>
    %c2_i32_76 = arith.constant 2 : i32
    %191 = tpu.memref_slice %arg11[%c2_i32_76] : memref<3x!tpu.dma_semaphore, #tpu.memory_space<semaphore_mem>> -> memref<1x!tpu.dma_semaphore, #tpu.memory_space<semaphore_mem>>
    %192 = tpu.memref_squeeze %191 : memref<1x!tpu.dma_semaphore, #tpu.memory_space<semaphore_mem>> -> memref<!tpu.dma_semaphore, #tpu.memory_space<semaphore_mem>>
    tpu.wait_dma2 semaphore(%192 : memref<!tpu.dma_semaphore, #tpu.memory_space<semaphore_mem>>) src(%arg6 : memref<2048x128xbf16, #tpu.memory_space<any>>) dst(%arg10 : memref<2048x128xbf16, #tpu.memory_space<vmem>>)
    %c0_77 = arith.constant 0 : index
    %c0_78 = arith.constant 0 : index
    %193 = vector.load %arg10[%c0_77, %c0_78] : memref<2048x128xbf16, #tpu.memory_space<vmem>>, vector<2048x128xbf16>
    %cst_79 = arith.constant dense<0.000000e+00> : vector<2x128xf32>
    %194 = tpu.matmul %190, %193, %cst_79 {dimension_numbers = #tpu.dot_dimension_numbers<[1], [0], [0], [1], [0, 0, 1, 1], [], []>} : vector<2x2048xbf16>, vector<2048x128xbf16>, vector<2x128xf32> -> vector<2x128xf32>
    %c0_80 = arith.constant 0 : index
    %c5632 = arith.constant 5632 : index
    %195 = vector.load %arg3[%c0_80, %c5632] : memref<1x5760xf32, #tpu.memory_space<vmem>>, vector<1x128xf32>
    %196 = vector.broadcast %195 : vector<1x128xf32> to vector<2x128xf32>
    %197 = arith.addf %194, %196 : vector<2x128xf32>
    %c0_81 = arith.constant 0 : index
    %c0_82 = arith.constant 0 : index
    %198 = vector.load %arg7[%c0_81, %c0_82] : memref<2x128xf32, #tpu.memory_space<vmem>>, vector<2x128xf32>
    tpu.vector_store %arg7[%c0_81, %c0_82], %197 {strides = array<i32>} : memref<2x128xf32, #tpu.memory_space<vmem>>, vector<2x128xf32>,
    return
  }
}

</mosaic_0001>

<llo_original>
// kernel: cd_spectrum_cnn_forward.1
$region0: #{cd_spectrum_cnn_forward.1}
  #allocation0 [shape = 'u32[]', space=smem, size = 0x4, offset = 0x4, fixed_abs, tag = 'smem constant byte address 0x4 - core index']
  #allocation1 [shape = 'u32[144,128]{1,0:T(1,128)}', space=vmem, size = 0x12000, scoped, tag = 'internal scratch']
  #allocation2 [shape = 'bf16[1536,1024]{1,0:T(16,128)(2,1)}', space=vmem, size = 0x300000, scoped, tag = 'scratch operand']
  #allocation3 [shape = 'bf16[1024,2048]{1,0:T(16,128)(2,1)}', space=vmem, size = 0x400000, scoped, tag = 'scratch operand']
  #allocation4 [shape = 'bf16[2048,128]{1,0:T(16,128)(2,1)}', space=vmem, size = 0x80000, scoped, tag = 'scratch operand']
  #allocation5 [shape = 's32[3]{0}', space=sflag, size = 0xc, scoped, tag = 'scratch operand']
  #allocation13 [shape = 's32[]', space=sflag, size = 0x4, offset = 0, fixed_abs, tag = 'sflag constant byte address 0x0 - dummy sync flag']
  #allocation15 [shape = 's32[]', space=sflag, size = 0x4, offset = 0, fixed_abs, tag = 'sflag constant byte address 0x0 - dummy sync flag']
  #allocation17 [shape = 's32[]', space=sflag, size = 0x4, offset = 0, fixed_abs, tag = 'sflag constant byte address 0x0 - dummy sync flag']
  #allocation18 [shape = 's32[]', space=sflag, size = 0x4, offset = 0, fixed_abs, tag = 'sflag constant byte address 0x0 - dummy sync flag']
  #allocation19 [shape = 'u32[]', space=smem, size = 0x4, offset = 0x44, fixed_abs, tag = 'smem constant byte address 0x44 - assertion arg 0']
  #allocation20 [shape = 'u32[]', space=smem, size = 0x4, offset = 0x48, fixed_abs, tag = 'smem constant byte address 0x48 - assertion arg 1']
  %s0 = inlined_call_operand.vmem [shape: f32[16,3], index: 0, kind: input, shape index: {}]
  %s1 = inlined_call_operand.hbm [shape: bf16[3,256], index: 1, kind: input, shape index: {}]
  %s2 = inlined_call_operand.hbm [shape: bf16[768,512], index: 2, kind: input, shape index: {}]
  %s3 = inlined_call_operand.hbm [shape: f32[1,5760], index: 3, kind: input, shape index: {}]
  %s4 = inlined_call_operand.hbm [shape: bf16[1536,1024], index: 4, kind: input, shape index: {}]
  %s5 = inlined_call_operand.hbm [shape: bf16[1024,2048], index: 5, kind: input, shape index: {}]
  %s6 = inlined_call_operand.hbm [shape: bf16[2048,128], index: 6, kind: input, shape index: {}]
  %s7 = inlined_call_operand.hbm [shape: f32[2,128], index: 7, kind: output, shape index: {}]
  %s8 = sld [smem:[#allocation0]]
  $region42: #{cd_spectrum_cnn_forward.1} parent=0
    _
  %s10 = ssub.s32 1, %s8
  %s11 = scalar_select 0, %s10, %s8
  $region1: #{cd_spectrum_cnn_forward.1} parent=0
    #allocation6 [shape = 'u8[2048]{0}', space=vmem, size = 0x800, scoped, tag = 'input window, operand 1, single buffered']
    #allocation7 [shape = 's32[1]{0}', space=sflag, size = 0x4, scoped, tag = 'scoped memory for cd_spectrum_cnn_forward.1']
    #allocation8 [shape = 's32[1]{0}', space=sflag, size = 0x4, scoped, tag = 'scoped memory for cd_spectrum_cnn_forward.1']
    #allocation9 [shape = 'u8[786432]{0}', space=vmem, size = 0xc0000, scoped, tag = 'input window, operand 2, single buffered']
    #allocation10 [shape = 's32[1]{0}', space=sflag, size = 0x4, scoped, tag = 'scoped memory for cd_spectrum_cnn_forward.1']
    #allocation11 [shape = 'u8[23040]{0}', space=vmem, size = 0x5c00, scoped, tag = 'input window, operand 3, single buffered']
    #allocation12 [shape = 'u8[1024]{0}', space=vmem, size = 0x400, scoped, tag = 'output window, operand 0, single buffered']
    #allocation14 [shape = 'u32[9]{0}', space=smem, size = 0x24, scoped, tag = 'DMA stride descriptor']
    #allocation16 [shape = 'u32[9]{0}', space=smem, size = 0x24, scoped, tag = 'DMA stride descriptor']
    %12 = vsyncpa [#allocation7], 0
    %13 = vsyncpa [#allocation10], 0
    %14 = vsyncpa [#allocation8], 0
    // Predicated region
    $region2: #{cd_spectrum_cnn_forward.1} parent=1 // pred_check
      _
    $region3: #{cd_spectrum_cnn_forward.1} parent=1 // pred_check_branch
      %16 = sbr.rel (0) target = $region5
    $region4: #{cd_spectrum_cnn_forward.1} parent=1 // pred_region
      _
    $region5: #{cd_spectrum_cnn_forward.1} parent=1 // pred_fallthru
      _
    // Predicated region
    $region6: #{cd_spectrum_cnn_forward.1} parent=1 // pred_check
      _
    $region7: #{cd_spectrum_cnn_forward.1} parent=1 // pred_check_branch
      %18 = sbr.rel (0) target = $region9
    $region8: #{cd_spectrum_cnn_forward.1} parent=1 // pred_region
      %s20 = ssub.s32 64, 64
      %21 = vsyncadd [#allocation7], %s20
      %s23 = sshll.u32 [#allocation6], 4
      %s24 = int_to_ptr.vmem [resolvable:$true] %s23
      %26 = dma.hbm_to_vmem [thread:$0]  %s1, 64, %s24, [#allocation7]
    $region9: #{cd_spectrum_cnn_forward.1} parent=1 // pred_fallthru
      _
    // Predicated region
    $region10: #{cd_spectrum_cnn_forward.1} parent=1 // pred_check
      _
    $region11: #{cd_spectrum_cnn_forward.1} parent=1 // pred_check_branch
      %28 = sbr.rel (0) target = $region13
    $region12: #{cd_spectrum_cnn_forward.1} parent=1 // pred_region
      %s30 = ssub.s32 24576, 24576
      %31 = vsyncadd [#allocation10], %s30
      %s32 = sshll.u32 [#allocation9], 4
      %s33 = int_to_ptr.vmem [resolvable:$true] %s32
      %38 = dma.hbm_to_vmem [thread:$0]  %s2, 24576, %s33, [#allocation10], 256, 256, 16
    $region13: #{cd_spectrum_cnn_forward.1} parent=1 // pred_fallthru
      _
    // Predicated region
    $region14: #{cd_spectrum_cnn_forward.1} parent=1 // pred_check
      _
    $region15: #{cd_spectrum_cnn_forward.1} parent=1 // pred_check_branch
      %40 = sbr.rel (0) target = $region17
    $region16: #{cd_spectrum_cnn_forward.1} parent=1 // pred_region
      %s42 = ssub.s32 720, 720
      %43 = vsyncadd [#allocation10], %s42
      %s45 = sshll.u32 [#allocation11], 4
      %s46 = int_to_ptr.vmem [resolvable:$true] %s45
      %48 = dma.hbm_to_vmem [thread:$0]  %s3, 720, %s46, [#allocation10]
    $region17: #{cd_spectrum_cnn_forward.1} parent=1 // pred_fallthru
      _
    // Predicated region
    $region18: #{cd_spectrum_cnn_forward.1} parent=1 // pred_check
      _
    $region19: #{cd_spectrum_cnn_forward.1} parent=1 // pred_check_branch
      %50 = sbr.rel (0) target = $region21
    $region20: #{cd_spectrum_cnn_forward.1} parent=1 // pred_region
      %51 = dma.done [#allocation7], 64
    $region21: #{cd_spectrum_cnn_forward.1} parent=1 // pred_fallthru
      _
    // Predicated region
    $region22: #{cd_spectrum_cnn_forward.1} parent=1 // pred_check
      _
    $region23: #{cd_spectrum_cnn_forward.1} parent=1 // pred_check_branch
      %53 = sbr.rel (0) target = $region25
    $region24: #{cd_spectrum_cnn_forward.1} parent=1 // pred_region
      %54 = dma.done [#allocation10], 24576
    $region25: #{cd_spectrum_cnn_forward.1} parent=1 // pred_fallthru
      _
    // Predicated region
    $region26: #{cd_spectrum_cnn_forward.1} parent=1 // pred_check
      _
    $region27: #{cd_spectrum_cnn_forward.1} parent=1 // pred_check_branch
      %56 = sbr.rel (0) target = $region29
    $region28: #{cd_spectrum_cnn_forward.1} parent=1 // pred_region
      %57 = dma.done [#allocation10], 720
    $region29: #{cd_spectrum_cnn_forward.1} parent=1 // pred_fallthru
      _
    %s60 = sshll.u32 1, 14
    %s61 = sxor.u32 4294967295, %s60
    %s63 = sld [smem:[#allocation0]]
    %s64 = sadd.s32 2, %s63
    %s66 = sshll.u32 7, 26
    %s67 = sxor.u32 4294967295, %s66
    %s68 = sand.u32 0, %s67
    %s69 = sshll.u32 %s64, 26
    %s70 = sor.u32 %s68, %s69
    %s71 = sshll.u32 [#allocation2], 4
    %s72 = int_to_ptr.vmem [resolvable:$true] %s71
    %75 = sst [smem:[#allocation14]] 1024
    %s76 = scalar_lea.smem [#allocation14], 1
    %77 = sst [smem:[%s76]] 1024
    %s78 = scalar_lea.smem [#allocation14], 2
    %79 = sst [smem:[%s78]] 8
    %s80 = scalar_lea.smem [#allocation14], 3
    %81 = sst [smem:[%s80]] 64
    %s82 = scalar_lea.smem [#allocation14], 4
    %83 = sst [smem:[%s82]] 128
    %s84 = scalar_lea.smem [#allocation14], 5
    %85 = sst [smem:[%s84]] 2
    %s86 = scalar_lea.smem [#allocation14], 6
    %87 = sst [smem:[%s86]] 512
    %s88 = scalar_lea.smem [#allocation14], 7
    %89 = sst [smem:[%s88]] 64
    %s90 = scalar_lea.smem [#allocation14], 8
    %91 = sst [smem:[%s90]] 4
    %93 = dma.general %s4, 98304, %s72, [#allocation5], [#allocation13], [#allocation14], %s70, 0
    %s94 = scalar_lea.sflag [#allocation5], 1
    %s96 = sshll.u32 1, 14
    %s97 = sxor.u32 4294967295, %s96
    %s99 = sadd.s32 2, %s63
    %s101 = sshll.u32 7, 26
    %s102 = sxor.u32 4294967295, %s101
    %s103 = sand.u32 0, %s102
    %s104 = sshll.u32 %s99, 26
    %s105 = sor.u32 %s103, %s104
    %s106 = sshll.u32 [#allocation3], 4
    %s107 = int_to_ptr.vmem [resolvable:$true] %s106
    %110 = sst [smem:[#allocation16]] 2048
    %s111 = scalar_lea.smem [#allocation16], 1
    %112 = sst [smem:[%s111]] 2048
    %s113 = scalar_lea.smem [#allocation16], 2
    %114 = sst [smem:[%s113]] 16
    %s115 = scalar_lea.smem [#allocation16], 3
    %116 = sst [smem:[%s115]] 64
    %s117 = scalar_lea.smem [#allocation16], 4
    %118 = sst [smem:[%s117]] 128
    %s119 = scalar_lea.smem [#allocation16], 5
    %120 = sst [smem:[%s119]] 2
    %s121 = scalar_lea.smem [#allocation16], 6
    %122 = sst [smem:[%s121]] 1024
    %s123 = scalar_lea.smem [#allocation16], 7
    %124 = sst [smem:[%s123]] 64
    %s125 = scalar_lea.smem [#allocation16], 8
    %126 = sst [smem:[%s125]] 4
    %128 = dma.general %s5, 131072, %s107, %s94, [#allocation15], [#allocation16], %s105, 0
    %s129 = scalar_lea.sflag [#allocation5], 2
    // Predicated region
    $region30: #{cd_spectrum_cnn_forward.1} parent=1 // pred_check
      _
    $region31: #{cd_spectrum_cnn_forward.1} parent=1 // pred_check_branch
      %131 = sbr.rel target = $region33
    $region32: #{cd_spectrum_cnn_forward.1} parent=1 // pred_region
      %132 = sst [smem:[#allocation19]] [#allocation18]
      %133 = sst [smem:[#allocation20]] [#allocation17]
    $region33: #{cd_spectrum_cnn_forward.1} parent=1 // pred_fallthru
      _
    %135 = shalt.err (0)
    %s137 = sshll.u32 [#allocation4], 4
    %s138 = int_to_ptr.vmem [resolvable:$true] %s137
    %140 = dma.hbm_to_vmem [thread:$0]  %s6, 16384, %s138, %s129
    %v141 = vld [vmem:[%s0] sm:$0xff]
    %v142 = vld [vmem:[%s0 + $0x8] sm:$0xff]
    %v143 = vpack.c.bf16 %v142, %v141
    %v144 = vld [vmem:[#allocation6] sm:$0xf]
    %v147 = vunpack.c.l.s4 1983009808
    %v148 = vunpack.c.0.s8 %v147
    %v149 = vlaneseq
    %v150 = vshrl.u32 %v149, 7
    %v151 = vsub.s32 %v148, %v150
    %v152 = vrot.slane %v144, %v151
    %v153 = vcombine.high %v152, %v152
    %vm154 = vcmask 23552
    %v156 = vsel %vm154, %v143, 0
    %vm158 = vcmask 1040384
    %vm159 = vcmask 1041408
    %v160 = vsel %vm158, 4294967295, 65535
    %v161 = vsel %vm159, %v160, 0
    %v163 = vand.u32 %v152, %v161
    %v166 = vand.u32 %v153, %v161
    %168 = vmatprep.subr.bf16.mxu0 %v166
    %169 = vmatpush1.bf16.msra.mxu0 %v163
    %170 = vmatprep.subr.bf16.mxu0 0
    %171 = vmatpush1.bf16.msra.mxu0 0
    %172 = vmatprep.subr.bf16.mxu0 0
    %173 = vmatpush1.bf16.msra.mxu0 0
    %174 = vmatprep.subr.bf16.mxu0 0
    %175 = vmatpush1.bf16.msra.mxu0 0
    %176 = vmatprep.subr.bf16.mxu0 0
    %177 = vmatpush1.bf16.msra.mxu0 0
    %178 = vmatprep.subr.bf16.mxu0 0
    %179 = vmatpush1.bf16.msra.mxu0 0
    %180 = vmatprep.subr.bf16.mxu0 0
    %181 = vmatpush1.bf16.msra.mxu0 0
    %182 = vmatprep.subr.bf16.mxu0 0
    %183 = vmatpush1.bf16.msra.mxu0 0
    %184 = vmatprep.subr.bf16.mxu0 0
    %185 = vmatpush1.bf16.msra.mxu0 0
    %186 = vmatprep.subr.bf16.mxu0 0
    %187 = vmatpush1.bf16.msra.mxu0 0
    %188 = vmatprep.subr.bf16.mxu0 0
    %189 = vmatpush1.bf16.msra.mxu0 0
    %190 = vmatprep.subr.bf16.mxu0 0
    %191 = vmatpush1.bf16.msra.mxu0 0
    %192 = vmatprep.subr.bf16.mxu0 0
    %193 = vmatpush1.bf16.msra.mxu0 0
    %194 = vmatprep.subr.bf16.mxu0 0
    %195 = vmatpush1.bf16.msra.mxu0 0
    %196 = vmatprep.subr.bf16.mxu0 0
    %197 = vmatpush1.bf16.msra.mxu0 0
    %198 = vmatprep.subr.bf16.mxu0 0
    %199 = vmatpush1.bf16.msra.mxu0 0
    %200 = vmatprep.mubr.bf16.mxu0 0
    %201 = vmatmul.mubr.bf16.gmra.mrb[0].mxu0 %v156
    %v202 = vpop.f32.mrb[0].mxu0
    %v203 = vadd.f32 0.0, %v202
    %v204 = vpop.f32.mrb[0].mxu0
    %v205 = vadd.f32 0.0, %v204
    %v206 = vpop.f32.mrb[0].mxu0
    %v207 = vadd.f32 0.0, %v206
    %v208 = vpop.f32.mrb[0].mxu0
    %v209 = vadd.f32 0.0, %v208
    %210 = vdwg.mxu0
    %v211 = vld [vmem:[#allocation11] sm:$0x3]
    %v212 = vld [vmem:[#allocation11 + $0x2] sm:$0x3]
    %v214 = vlaneseq
    %v215 = vshrl.u32 %v214, 7
    %v216 = vsub.s32 0, %v215
    %v217 = vrot.slane %v211, %v216
    %v218 = vlaneseq
    %v219 = vshrl.u32 %v218, 7
    %v220 = vsub.s32 1, %v219
    %v221 = vrot.slane %v211, %v220
    %v224 = vmul.f32 %v203, %v217
    %v225 = vmul.f32 %v205, %v221
    %v226 = vmul.f32 %v207, %v217
    %v227 = vmul.f32 %v209, %v221
    %v229 = vlaneseq
    %v230 = vshrl.u32 %v229, 7
    %v231 = vsub.s32 0, %v230
    %v232 = vrot.slane %v212, %v231
    %v233 = vlaneseq
    %v234 = vshrl.u32 %v233, 7
    %v235 = vsub.s32 1, %v234
    %v236 = vrot.slane %v212, %v235
    %v239 = vadd.f32 %v224, %v232
    %v240 = vadd.f32 %v225, %v236
    %v241 = vadd.f32 %v226, %v232
    %v242 = vadd.f32 %v227, %v236
    %v243 = vmax.f32 %v239, 0.0
    %v244 = vmax.f32 %v240, 0.0
    %v245 = vmax.f32 %v241, 0.0
    %v246 = vmax.f32 %v242, 0.0
    %v247 = vpack.c.bf16 %v245, %v243
    %v248 = vpack.c.bf16 %v246, %v244
    %v249 = vlaneseq
    %v250 = vshrl.u32 %v249, 7
    %v251 = vlaneseq
    %v252 = vand.u32 %v251, 127
    %v253 = vmul.u32 %v250, 2
    %vm254 = vcmp.eq.s32.totalorder %v252, %v253
    %v255 = vsel %vm254, 1.0, 0.0
    %v256 = vpack.c.bf16 %v255, %v255
    %v257 = vadd.s32 %v253, 1
    %vm258 = vcmp.eq.s32.totalorder %v252, %v257
    %v259 = vsel %vm258, 1.0, 0.0
    %v260 = vpack.c.bf16 %v259, %v259
    %vm261 = vcmask 130048
    %v263 = vsel %vm261, %v256, 0
    %265 = vmatprep.subr.bf16.mxu0 %v248
    %266 = vmatpush1.bf16.msra.mxu0 %v247
    %267 = vmatprep.subr.bf16.mxu0 0
    %268 = vmatpush1.bf16.msra.mxu0 0
    %269 = vmatprep.subr.bf16.mxu0 0
    %270 = vmatpush1.bf16.msra.mxu0 0
    %271 = vmatprep.subr.bf16.mxu0 0
    %272 = vmatpush1.bf16.msra.mxu0 0
    %273 = vmatprep.subr.bf16.mxu0 0
    %274 = vmatpush1.bf16.msra.mxu0 0
    %275 = vmatprep.subr.bf16.mxu0 0
    %276 = vmatpush1.bf16.msra.mxu0 0
    %277 = vmatprep.subr.bf16.mxu0 0
    %278 = vmatpush1.bf16.msra.mxu0 0
    %279 = vmatprep.subr.bf16.mxu0 0
    %280 = vmatpush1.bf16.msra.mxu0 0
    %281 = vmatprep.subr.bf16.mxu0 0
    %282 = vmatpush1.bf16.msra.mxu0 0
    %283 = vmatprep.subr.bf16.mxu0 0
    %284 = vmatpush1.bf16.msra.mxu0 0
    %285 = vmatprep.subr.bf16.mxu0 0
    %286 = vmatpush1.bf16.msra.mxu0 0
    %287 = vmatprep.subr.bf16.mxu0 0
    %288 = vmatpush1.bf16.msra.mxu0 0
    %289 = vmatprep.subr.bf16.mxu0 0
    %290 = vmatpush1.bf16.msra.mxu0 0
    %291 = vmatprep.subr.bf16.mxu0 0
    %292 = vmatpush1.bf16.msra.mxu0 0
    %293 = vmatprep.subr.bf16.mxu0 0
    %294 = vmatpush1.bf16.msra.mxu0 0
    %295 = vmatprep.subr.bf16.mxu0 0
    %296 = vmatpush1.bf16.msra.mxu0 0
    %297 = vmatprep.mubr.bf16.mxu0 0
    %298 = vmatmul.mubr.bf16.gmra.mrb[0].mxu0 %v263
    %v299 = vpop.f32.mrb[0].mxu0
    %v300 = vadd.f32 0.0, %v299
    %v301 = vpop.f32.mrb[0].mxu0
    %v302 = vadd.f32 0.0, %v301
    %v303 = vpop.f32.mrb[0].mxu0
    %v304 = vpop.f32.mrb[0].mxu0
    %305 = vdwg.mxu0
    %v307 = vsel %vm261, %v260, 0
    %309 = vmatprep.subr.bf16.mxu0 %v248
    %310 = vmatpush1.bf16.msra.mxu0 %v247
    %311 = vmatprep.subr.bf16.mxu0 0
    %312 = vmatpush1.bf16.msra.mxu0 0
    %313 = vmatprep.subr.bf16.mxu0 0
    %314 = vmatpush1.bf16.msra.mxu0 0
    %315 = vmatprep.subr.bf16.mxu0 0
    %316 = vmatpush1.bf16.msra.mxu0 0
    %317 = vmatprep.subr.bf16.mxu0 0
    %318 = vmatpush1.bf16.msra.mxu0 0
    %319 = vmatprep.subr.bf16.mxu0 0
    %320 = vmatpush1.bf16.msra.mxu0 0
    %321 = vmatprep.subr.bf16.mxu0 0
    %322 = vmatpush1.bf16.msra.mxu0 0
    %323 = vmatprep.subr.bf16.mxu0 0
    %324 = vmatpush1.bf16.msra.mxu0 0
    %325 = vmatprep.subr.bf16.mxu0 0
    %326 = vmatpush1.bf16.msra.mxu0 0
    %327 = vmatprep.subr.bf16.mxu0 0
    %328 = vmatpush1.bf16.msra.mxu0 0
    %329 = vmatprep.subr.bf16.mxu0 0
    %330 = vmatpush1.bf16.msra.mxu0 0
    %331 = vmatprep.subr.bf16.mxu0 0
    %332 = vmatpush1.bf16.msra.mxu0 0
    %333 = vmatprep.subr.bf16.mxu0 0
    %334 = vmatpush1.bf16.msra.mxu0 0
    %335 = vmatprep.subr.bf16.mxu0 0
    %336 = vmatpush1.bf16.msra.mxu0 0
    %337 = vmatprep.subr.bf16.mxu0 0
    %338 = vmatpush1.bf16.msra.mxu0 0
    %339 = vmatprep.subr.bf16.mxu0 0
    %340 = vmatpush1.bf16.msra.mxu0 0
    %341 = vmatprep.mubr.bf16.mxu0 0
    %342 = vmatmul.mubr.bf16.gmra.mrb[0].mxu0 %v307
    %v343 = vpop.f32.mrb[0].mxu0
    %v344 = vadd.f32 0.0, %v343
    %v345 = vpop.f32.mrb[0].mxu0
    %v346 = vadd.f32 0.0, %v345
    %v347 = vpop.f32.mrb[0].mxu0
    %v348 = vpop.f32.mrb[0].mxu0
    %349 = vdwg.mxu0
    %v350 = vmax.f32 %v300, %v344
    %v351 = vmax.f32 %v302, %v346
    %v352 = vpack.c.bf16 %v350, %v350
    %v353 = vpack.c.bf16 %v351, %v351
    %v354 = vsub.s32 %v250, 1
    %vm355 = vcmp.eq.s32.totalorder %v252, %v354
    %v356 = vand.u32 %v250, 3
    %vm357 = vcmp.ne.s32.totalorder %v356, 0
    %vm358 = vmand %vm355, %vm357
    %v359 = vsel %vm358, 1.0, 0.0
    %v360 = vpack.c.bf16 %v359, %v359
    %v361 = vadd.s32 %v250, 1
    %vm362 = vcmp.eq.s32.totalorder %v252, %v361
    %vm363 = vcmp.ne.s32.totalorder %v356, 3
    %vm364 = vmand %vm362, %vm363
    %v365 = vsel %vm364, 1.0, 0.0
    %v366 = vpack.c.bf16 %v365, %v365
    %vm367 = vcmask 64512
    %v369 = vsel %vm367, %v360, 0
    %vm371 = vcmask 1043456
    %v373 = vsel %vm371, %v352, 0
    %v376 = vsel %vm371, %v353, 0
    %378 = vmatprep.subr.bf16.mxu0 %v376
    %379 = vmatpush1.bf16.msra.mxu0 %v373
    %380 = vmatprep.subr.bf16.mxu0 0
    %381 = vmatpush1.bf16.msra.mxu0 0
    %382 = vmatprep.subr.bf16.mxu0 0
    %383 = vmatpush1.bf16.msra.mxu0 0
    %384 = vmatprep.subr.bf16.mxu0 0
    %385 = vmatpush1.bf16.msra.mxu0 0
    %386 = vmatprep.subr.bf16.mxu0 0
    %387 = vmatpush1.bf16.msra.mxu0 0
    %388 = vmatprep.subr.bf16.mxu0 0
    %389 = vmatpush1.bf16.msra.mxu0 0
    %390 = vmatprep.subr.bf16.mxu0 0
    %391 = vmatpush1.bf16.msra.mxu0 0
    %392 = vmatprep.subr.bf16.mxu0 0
    %393 = vmatpush1.bf16.msra.mxu0 0
    %394 = vmatprep.subr.bf16.mxu0 0
    %395 = vmatpush1.bf16.msra.mxu0 0
    %396 = vmatprep.subr.bf16.mxu0 0
    %397 = vmatpush1.bf16.msra.mxu0 0
    %398 = vmatprep.subr.bf16.mxu0 0
    %399 = vmatpush1.bf16.msra.mxu0 0
    %400 = vmatprep.subr.bf16.mxu0 0
    %401 = vmatpush1.bf16.msra.mxu0 0
    %402 = vmatprep.subr.bf16.mxu0 0
    %403 = vmatpush1.bf16.msra.mxu0 0
    %404 = vmatprep.subr.bf16.mxu0 0
    %405 = vmatpush1.bf16.msra.mxu0 0
    %406 = vmatprep.subr.bf16.mxu0 0
    %407 = vmatpush1.bf16.msra.mxu0 0
    %408 = vmatprep.subr.bf16.mxu0 0
    %409 = vmatpush1.bf16.msra.mxu0 0
    %410 = vmatprep.mubr.bf16.mxu0 0
    %411 = vmatmul.mubr.bf16.gmra.mrb[0].mxu0 %v369
    %v412 = vpop.f32.mrb[0].mxu0
    %v413 = vadd.f32 0.0, %v412
    %v414 = vpop.f32.mrb[0].mxu0
    %v415 = vadd.f32 0.0, %v414
    %v416 = vpop.f32.mrb[0].mxu0
    %v417 = vpop.f32.mrb[0].mxu0
    %418 = vdwg.mxu0
    %v419 = vpack.c.bf16 %v413, %v413
    %v420 = vpack.c.bf16 %v415, %v415
    %v422 = vsel %vm367, %v366, 0
    %424 = vmatprep.subr.bf16.mxu0 %v376
    %425 = vmatpush1.bf16.msra.mxu0 %v373
    %426 = vmatprep.subr.bf16.mxu0 0
    %427 = vmatpush1.bf16.msra.mxu0 0
    %428 = vmatprep.subr.bf16.mxu0 0
    %429 = vmatpush1.bf16.msra.mxu0 0
    %430 = vmatprep.subr.bf16.mxu0 0
    %431 = vmatpush1.bf16.msra.mxu0 0
    %432 = vmatprep.subr.bf16.mxu0 0
    %433 = vmatpush1.bf16.msra.mxu0 0
    %434 = vmatprep.subr.bf16.mxu0 0
    %435 = vmatpush1.bf16.msra.mxu0 0
    %436 = vmatprep.subr.bf16.mxu0 0
    %437 = vmatpush1.bf16.msra.mxu0 0
    %438 = vmatprep.subr.bf16.mxu0 0
    %439 = vmatpush1.bf16.msra.mxu0 0
    %440 = vmatprep.subr.bf16.mxu0 0
    %441 = vmatpush1.bf16.msra.mxu0 0
    %442 = vmatprep.subr.bf16.mxu0 0
    %443 = vmatpush1.bf16.msra.mxu0 0
    %444 = vmatprep.subr.bf16.mxu0 0
    %445 = vmatpush1.bf16.msra.mxu0 0
    %446 = vmatprep.subr.bf16.mxu0 0
    %447 = vmatpush1.bf16.msra.mxu0 0
    %448 = vmatprep.subr.bf16.mxu0 0
    %449 = vmatpush1.bf16.msra.mxu0 0
    %450 = vmatprep.subr.bf16.mxu0 0
    %451 = vmatpush1.bf16.msra.mxu0 0
    %452 = vmatprep.subr.bf16.mxu0 0
    %453 = vmatpush1.bf16.msra.mxu0 0
    %454 = vmatprep.subr.bf16.mxu0 0
    %455 = vmatpush1.bf16.msra.mxu0 0
    %456 = vmatprep.mubr.bf16.mxu0 0
    %457 = vmatmul.mubr.bf16.gmra.mrb[0].mxu0 %v422
    %v458 = vpop.f32.mrb[0].mxu0
    %v459 = vadd.f32 0.0, %v458
    %v460 = vpop.f32.mrb[0].mxu0
    %v461 = vadd.f32 0.0, %v460
    %v462 = vpop.f32.mrb[0].mxu0
    %v463 = vpop.f32.mrb[0].mxu0
    %464 = vdwg.mxu0
    %v465 = vpack.c.bf16 %v459, %v459
    %v466 = vpack.c.bf16 %v461, %v461
    %v467 = vld [vmem:[#allocation9] sm:$0xff]
    %v468 = vld [vmem:[#allocation9 + $0x8] sm:$0xff]
    %v469 = vld [vmem:[#allocation9 + $0x10] sm:$0xff]
    %v470 = vld [vmem:[#allocation9 + $0x18] sm:$0xff]
    %v471 = vld [vmem:[#allocation9 + $0x20] sm:$0xff]
    %v472 = vld [vmem:[#allocation9 + $0x28] sm:$0xff]
    %v473 = vld [vmem:[#allocation9 + $0x30] sm:$0xff]
    %v474 = vld [vmem:[#allocation9 + $0x38] sm:$0xff]
    %v475 = vld [vmem:[#allocation9 + $0x40] sm:$0xff]
    %v476 = vld [vmem:[#allocation9 + $0x48] sm:$0xff]
    %v477 = vld [vmem:[#allocation9 + $0x50] sm:$0xff]
    %v478 = vld [vmem:[#allocation9 + $0x58] sm:$0xff]
    %v479 = vld [vmem:[#allocation9 + $0x60] sm:$0xff]
    %v480 = vld [vmem:[#allocation9 + $0x68] sm:$0xff]
    %v481 = vld [vmem:[#allocation9 + $0x70] sm:$0xff]
    %v482 = vld [vmem:[#allocation9 + $0x78] sm:$0xff]
    %v483 = vld [vmem:[#allocation9 + $0x80] sm:$0xff]
    %v484 = vld [vmem:[#allocation9 + $0x88] sm:$0xff]
    %v485 = vld [vmem:[#allocation9 + $0x90] sm:$0xff]
    %v486 = vld [vmem:[#allocation9 + $0x98] sm:$0xff]
    %v487 = vld [vmem:[#allocation9 + $0xa0] sm:$0xff]
    %v488 = vld [vmem:[#allocation9 + $0xa8] sm:$0xff]
    %v489 = vld [vmem:[#allocation9 + $0xb0] sm:$0xff]
    %v490 = vld [vmem:[#allocation9 + $0xb8] sm:$0xff]
    %v491 = vld [vmem:[#allocation9 + $0xc0] sm:$0xff]
    %v492 = vld [vmem:[#allocation9 + $0xc8] sm:$0xff]
    %v493 = vld [vmem:[#allocation9 + $0xd0] sm:$0xff]
    %v494 = vld [vmem:[#allocation9 + $0xd8] sm:$0xff]
    %v495 = vld [vmem:[#allocation9 + $0xe0] sm:$0xff]
    %v496 = vld [vmem:[#allocation9 + $0xe8] sm:$0xff]
    %v497 = vld [vmem:[#allocation9 + $0xf0] sm:$0xff]
    %v498 = vld [vmem:[#allocation9 + $0xf8] sm:$0xff]
    %v499 = vld [vmem:[#allocation9 + $0x100] sm:$0xff]
    %v500 = vld [vmem:[#allocation9 + $0x108] sm:$0xff]
    %v501 = vld [vmem:[#allocation9 + $0x110] sm:$0xff]
    %v502 = vld [vmem:[#allocation9 + $0x118] sm:$0xff]
    %v503 = vld [vmem:[#allocation9 + $0x120] sm:$0xff]
    %v504 = vld [vmem:[#allocation9 + $0x128] sm:$0xff]
    %v505 = vld [vmem:[#allocation9 + $0x130] sm:$0xff]
    %v506 = vld [vmem:[#allocation9 + $0x138] sm:$0xff]
    %v507 = vld [vmem:[#allocation9 + $0x140] sm:$0xff]
    %v508 = vld [vmem:[#allocation9 + $0x148] sm:$0xff]
    %v509 = vld [vmem:[#allocation9 + $0x150] sm:$0xff]
    %v510 = vld [vmem:[#allocation9 + $0x158] sm:$0xff]
    %v511 = vld [vmem:[#allocation9 + $0x160] sm:$0xff]
    %v512 = vld [vmem:[#allocation9 + $0x168] sm:$0xff]
    %v513 = vld [vmem:[#allocation9 + $0x170] sm:$0xff]
    %v514 = vld [vmem:[#allocation9 + $0x178] sm:$0xff]
    %v515 = vld [vmem:[#allocation9 + $0x180] sm:$0xff]
    %v516 = vld [vmem:[#allocation9 + $0x188] sm:$0xff]
    %v517 = vld [vmem:[#allocation9 + $0x190] sm:$0xff]
    %v518 = vld [vmem:[#allocation9 + $0x198] sm:$0xff]
    %v519 = vld [vmem:[#allocation9 + $0x1a0] sm:$0xff]
    %v520 = vld [vmem:[#allocation9 + $0x1a8] sm:$0xff]
    %v521 = vld [vmem:[#allocation9 + $0x1b0] sm:$0xff]
    %v522 = vld [vmem:[#allocation9 + $0x1b8] sm:$0xff]
    %v523 = vld [vmem:[#allocation9 + $0x1c0] sm:$0xff]
    %v524 = vld [vmem:[#allocation9 + $0x1c8] sm:$0xff]
    %v525 = vld [vmem:[#allocation9 + $0x1d0] sm:$0xff]
    %v526 = vld [vmem:[#allocation9 + $0x1d8] sm:$0xff]
    %v527 = vld [vmem:[#allocation9 + $0x1e0] sm:$0xff]
    %v528 = vld [vmem:[#allocation9 + $0x1e8] sm:$0xff]
    %v529 = vld [vmem:[#allocation9 + $0x1f0] sm:$0xff]
    %v530 = vld [vmem:[#allocation9 + $0x1f8] sm:$0xff]
    %v531 = vld [vmem:[#allocation9 + $0x200] sm:$0xff]
    %v532 = vld [vmem:[#allocation9 + $0x208] sm:$0xff]
    %v533 = vld [vmem:[#allocation9 + $0x210] sm:$0xff]
    %v534 = vld [vmem:[#allocation9 + $0x218] sm:$0xff]
    %v535 = vld [vmem:[#allocation9 + $0x220] sm:$0xff]
    %v536 = vld [vmem:[#allocation9 + $0x228] sm:$0xff]
    %v537 = vld [vmem:[#allocation9 + $0x230] sm:$0xff]
    %v538 = vld [vmem:[#allocation9 + $0x238] sm:$0xff]
    %v539 = vld [vmem:[#allocation9 + $0x240] sm:$0xff]
    %v540 = vld [vmem:[#allocation9 + $0x248] sm:$0xff]
    %v541 = vld [vmem:[#allocation9 + $0x250] sm:$0xff]
    %v542 = vld [vmem:[#allocation9 + $0x258] sm:$0xff]
    %v543 = vld [vmem:[#allocation9 + $0x260] sm:$0xff]
    %v544 = vld [vmem:[#allocation9 + $0x268] sm:$0xff]
    %v545 = vld [vmem:[#allocation9 + $0x270] sm:$0xff]
    %v546 = vld [vmem:[#allocation9 + $0x278] sm:$0xff]
    %v547 = vld [vmem:[#allocation9 + $0x280] sm:$0xff]
    %v548 = vld [vmem:[#allocation9 + $0x288] sm:$0xff]
    %v549 = vld [vmem:[#allocation9 + $0x290] sm:$0xff]
    %v550 = vld [vmem:[#allocation9 + $0x298] sm:$0xff]
    %v551 = vld [vmem:[#allocation9 + $0x2a0] sm:$0xff]
    %v552 = vld [vmem:[#allocation9 + $0x2a8] sm:$0xff]
    %v553 = vld [vmem:[#allocation9 + $0x2b0] sm:$0xff]
    %v554 = vld [vmem:[#allocation9 + $0x2b8] sm:$0xff]
    %v555 = vld [vmem:[#allocation9 + $0x2c0] sm:$0xff]
    %v556 = vld [vmem:[#allocation9 + $0x2c8] sm:$0xff]
    %v557 = vld [vmem:[#allocation9 + $0x2d0] sm:$0xff]
    %v558 = vld [vmem:[#allocation9 + $0x2d8] sm:$0xff]
    %v559 = vld [vmem:[#allocation9 + $0x2e0] sm:$0xff]
    %v560 = vld [vmem:[#allocation9 + $0x2e8] sm:$0xff]
    %v561 = vld [vmem:[#allocation9 + $0x2f0] sm:$0xff]
    %v562 = vld [vmem:[#allocation9 + $0x2f8] sm:$0xff]
    %v563 = vld [vmem:[#allocation9 + $0x300] sm:$0xff]
    %v564 = vld [vmem:[#allocation9 + $0x308] sm:$0xff]
    %v565 = vld [vmem:[#allocation9 + $0x310] sm:$0xff]
    %v566 = vld [vmem:[#allocation9 + $0x318] sm:$0xff]
    %v567 = vld [vmem:[#allocation9 + $0x320] sm:$0xff]
    %v568 = vld [vmem:[#allocation9 + $0x328] sm:$0xff]
    %v569 = vld [vmem:[#allocation9 + $0x330] sm:$0xff]
    %v570 = vld [vmem:[#allocation9 + $0x338] sm:$0xff]
    %v571 = vld [vmem:[#allocation9 + $0x340] sm:$0xff]
    %v572 = vld [vmem:[#allocation9 + $0x348] sm:$0xff]
    %v573 = vld [vmem:[#allocation9 + $0x350] sm:$0xff]
    %v574 = vld [vmem:[#allocation9 + $0x358] sm:$0xff]
    %v575 = vld [vmem:[#allocation9 + $0x360] sm:$0xff]
    %v576 = vld [vmem:[#allocation9 + $0x368] sm:$0xff]
    %v577 = vld [vmem:[#allocation9 + $0x370] sm:$0xff]
    %v578 = vld [vmem:[#allocation9 + $0x378] sm:$0xff]
    %v579 = vld [vmem:[#allocation9 + $0x380] sm:$0xff]
    %v580 = vld [vmem:[#allocation9 + $0x388] sm:$0xff]
    %v581 = vld [vmem:[#allocation9 + $0x390] sm:$0xff]
    %v582 = vld [vmem:[#allocation9 + $0x398] sm:$0xff]
    %v583 = vld [vmem:[#allocation9 + $0x3a0] sm:$0xff]
    %v584 = vld [vmem:[#allocation9 + $0x3a8] sm:$0xff]
    %v585 = vld [vmem:[#allocation9 + $0x3b0] sm:$0xff]
    %v586 = vld [vmem:[#allocation9 + $0x3b8] sm:$0xff]
    %v587 = vld [vmem:[#allocation9 + $0x3c0] sm:$0xff]
    %v588 = vld [vmem:[#allocation9 + $0x3c8] sm:$0xff]
    %v589 = vld [vmem:[#allocation9 + $0x3d0] sm:$0xff]
    %v590 = vld [vmem:[#allocation9 + $0x3d8] sm:$0xff]
    %v591 = vld [vmem:[#allocation9 + $0x3e0] sm:$0xff]
    %v592 = vld [vmem:[#allocation9 + $0x3e8] sm:$0xff]
    %v593 = vld [vmem:[#allocation9 + $0x3f0] sm:$0xff]
    %v594 = vld [vmem:[#allocation9 + $0x3f8] sm:$0xff]
    %v595 = vld [vmem:[#allocation9 + $0x400] sm:$0xff]
    %v596 = vld [vmem:[#allocation9 + $0x408] sm:$0xff]
    %v597 = vld [vmem:[#allocation9 + $0x410] sm:$0xff]
    %v598 = vld [vmem:[#allocation9 + $0x418] sm:$0xff]
    %v599 = vld [vmem:[#allocation9 + $0x420] sm:$0xff]
    %v600 = vld [vmem:[#allocation9 + $0x428] sm:$0xff]
    %v601 = vld [vmem:[#allocation9 + $0x430] sm:$0xff]
    %v602 = vld [vmem:[#allocation9 + $0x438] sm:$0xff]
    %v603 = vld [vmem:[#allocation9 + $0x440] sm:$0xff]
    %v604 = vld [vmem:[#allocation9 + $0x448] sm:$0xff]
    %v605 = vld [vmem:[#allocation9 + $0x450] sm:$0xff]
    %v606 = vld [vmem:[#allocation9 + $0x458] sm:$0xff]
    %v607 = vld [vmem:[#allocation9 + $0x460] sm:$0xff]
    %v608 = vld [vmem:[#allocation9 + $0x468] sm:$0xff]
    %v609 = vld [vmem:[#allocation9 + $0x470] sm:$0xff]
    %v610 = vld [vmem:[#allocation9 + $0x478] sm:$0xff]
    %v611 = vld [vmem:[#allocation9 + $0x480] sm:$0xff]
    %v612 = vld [vmem:[#allocation9 + $0x488] sm:$0xff]
    %v613 = vld [vmem:[#allocation9 + $0x490] sm:$0xff]
    %v614 = vld [vmem:[#allocation9 + $0x498] sm:$0xff]
    %v615 = vld [vmem:[#allocation9 + $0x4a0] sm:$0xff]
    %v616 = vld [vmem:[#allocation9 + $0x4a8] sm:$0xff]
    %v617 = vld [vmem:[#allocation9 + $0x4b0] sm:$0xff]
    %v618 = vld [vmem:[#allocation9 + $0x4b8] sm:$0xff]
    %v619 = vld [vmem:[#allocation9 + $0x4c0] sm:$0xff]
    %v620 = vld [vmem:[#allocation9 + $0x4c8] sm:$0xff]
    %v621 = vld [vmem:[#allocation9 + $0x4d0] sm:$0xff]
    %v622 = vld [vmem:[#allocation9 + $0x4d8] sm:$0xff]
    %v623 = vld [vmem:[#allocation9 + $0x4e0] sm:$0xff]
    %v624 = vld [vmem:[#allocation9 + $0x4e8] sm:$0xff]
    %v625 = vld [vmem:[#allocation9 + $0x4f0] sm:$0xff]
    %v626 = vld [vmem:[#allocation9 + $0x4f8] sm:$0xff]
    %v627 = vld [vmem:[#allocation9 + $0x500] sm:$0xff]
    %v628 = vld [vmem:[#allocation9 + $0x508] sm:$0xff]
    %v629 = vld [vmem:[#allocation9 + $0x510] sm:$0xff]
    %v630 = vld [vmem:[#allocation9 + $0x518] sm:$0xff]
    %v631 = vld [vmem:[#allocation9 + $0x520] sm:$0xff]
    %v632 = vld [vmem:[#allocation9 + $0x528] sm:$0xff]
    %v633 = vld [vmem:[#allocation9 + $0x530] sm:$0xff]
    %v634 = vld [vmem:[#allocation9 + $0x538] sm:$0xff]
    %v635 = vld [vmem:[#allocation9 + $0x540] sm:$0xff]
    %v636 = vld [vmem:[#allocation9 + $0x548] sm:$0xff]
    %v637 = vld [vmem:[#allocation9 + $0x550] sm:$0xff]
    %v638 = vld [vmem:[#allocation9 + $0x558] sm:$0xff]
    %v639 = vld [vmem:[#allocation9 + $0x560] sm:$0xff]
    %v640 = vld [vmem:[#allocation9 + $0x568] sm:$0xff]
    %v641 = vld [vmem:[#allocation9 + $0x570] sm:$0xff]
    %v642 = vld [vmem:[#allocation9 + $0x578] sm:$0xff]
    %v643 = vld [vmem:[#allocation9 + $0x580] sm:$0xff]
    %v644 = vld [vmem:[#allocation9 + $0x588] sm:$0xff]
    %v645 = vld [vmem:[#allocation9 + $0x590] sm:$0xff]
    %v646 = vld [vmem:[#allocation9 + $0x598] sm:$0xff]
    %v647 = vld [vmem:[#allocation9 + $0x5a0] sm:$0xff]
    %v648 = vld [vmem:[#allocation9 + $0x5a8] sm:$0xff]
    %v649 = vld [vmem:[#allocation9 + $0x5b0] sm:$0xff]
    %v650 = vld [vmem:[#allocation9 + $0x5b8] sm:$0xff]
    %v651 = vld [vmem:[#allocation9 + $0x5c0] sm:$0xff]
    %v652 = vld [vmem:[#allocation9 + $0x5c8] sm:$0xff]
    %v653 = vld [vmem:[#allocation9 + $0x5d0] sm:$0xff]
    %v654 = vld [vmem:[#allocation9 + $0x5d8] sm:$0xff]
    %v655 = vld [vmem:[#allocation9 + $0x5e0] sm:$0xff]
    %v656 = vld [vmem:[#allocation9 + $0x5e8] sm:$0xff]
    %v657 = vld [vmem:[#allocation9 + $0x5f0] sm:$0xff]
    %v658 = vld [vmem:[#allocation9 + $0x5f8] sm:$0xff]
    %v851 = vunpack.c.l.b16 %v467
    %v852 = vunpack.c.h.b16 %v467
    %v853 = vunpack.c.l.b16 %v468
    %v854 = vunpack.c.h.b16 %v468
    %v855 = vunpack.c.l.b16 %v469
    %v856 = vunpack.c.h.b16 %v469
    %v857 = vunpack.c.l.b16 %v470
    %v858 = vunpack.c.h.b16 %v470
    %v859 = vunpack.c.l.b16 %v471
    %v860 = vunpack.c.h.b16 %v471
    %v861 = vunpack.c.l.b16 %v472
    %v862 = vunpack.c.h.b16 %v472
    %v863 = vunpack.c.l.b16 %v473
    %v864 = vunpack.c.h.b16 %v473
    %v865 = vunpack.c.l.b16 %v474
    %v866 = vunpack.c.h.b16 %v474
    %v867 = vunpack.c.l.b16 %v475
    %v868 = vunpack.c.h.b16 %v475
    %v869 = vunpack.c.l.b16 %v476
    %v870 = vunpack.c.h.b16 %v476
    %v871 = vunpack.c.l.b16 %v477
    %v872 = vunpack.c.h.b16 %v477
    %v873 = vunpack.c.l.b16 %v478
    %v874 = vunpack.c.h.b16 %v478
    %v875 = vunpack.c.l.b16 %v479
    %v876 = vunpack.c.h.b16 %v479
    %v877 = vunpack.c.l.b16 %v480
    %v878 = vunpack.c.h.b16 %v480
    %v879 = vunpack.c.l.b16 %v481
    %v880 = vunpack.c.h.b16 %v481
    %v881 = vunpack.c.l.b16 %v482
    %v882 = vunpack.c.h.b16 %v482
    %v883 = vunpack.c.l.b16 %v483
    %v884 = vunpack.c.h.b16 %v483
    %v885 = vunpack.c.l.b16 %v484
    %v886 = vunpack.c.h.b16 %v484
    %v887 = vunpack.c.l.b16 %v485
    %v888 = vunpack.c.h.b16 %v485
    %v889 = vunpack.c.l.b16 %v486
    %v890 = vunpack.c.h.b16 %v486
    %v891 = vunpack.c.l.b16 %v487
    %v892 = vunpack.c.h.b16 %v487
    %v893 = vunpack.c.l.b16 %v488
    %v894 = vunpack.c.h.b16 %v488
    %v895 = vunpack.c.l.b16 %v489
    %v896 = vunpack.c.h.b16 %v489
    %v897 = vunpack.c.l.b16 %v490
    %v898 = vunpack.c.h.b16 %v490
    %v899 = vunpack.c.l.b16 %v491
    %v900 = vunpack.c.h.b16 %v491
    %v901 = vunpack.c.l.b16 %v492
    %v902 = vunpack.c.h.b16 %v492
    %v903 = vunpack.c.l.b16 %v493
    %v904 = vunpack.c.h.b16 %v493
    %v905 = vunpack.c.l.b16 %v494
    %v906 = vunpack.c.h.b16 %v494
    %v907 = vunpack.c.l.b16 %v495
    %v908 = vunpack.c.h.b16 %v495
    %v909 = vunpack.c.l.b16 %v496
    %v910 = vunpack.c.h.b16 %v496
    %v911 = vunpack.c.l.b16 %v497
    %v912 = vunpack.c.h.b16 %v497
    %v913 = vunpack.c.l.b16 %v498
    %v914 = vunpack.c.h.b16 %v498
    %v915 = vunpack.c.l.b16 %v499
    %v916 = vunpack.c.h.b16 %v499
    %v917 = vunpack.c.l.b16 %v500
    %v918 = vunpack.c.h.b16 %v500
    %v919 = vunpack.c.l.b16 %v501
    %v920 = vunpack.c.h.b16 %v501
    %v921 = vunpack.c.l.b16 %v502
    %v922 = vunpack.c.h.b16 %v502
    %v923 = vunpack.c.l.b16 %v503
    %v924 = vunpack.c.h.b16 %v503
    %v925 = vunpack.c.l.b16 %v504
    %v926 = vunpack.c.h.b16 %v504
    %v927 = vunpack.c.l.b16 %v505
    %v928 = vunpack.c.h.b16 %v505
    %v929 = vunpack.c.l.b16 %v506
    %v930 = vunpack.c.h.b16 %v506
    %v931 = vunpack.c.l.b16 %v507
    %v932 = vunpack.c.h.b16 %v507
    %v933 = vunpack.c.l.b16 %v508
    %v934 = vunpack.c.h.b16 %v508
    %v935 = vunpack.c.l.b16 %v509
    %v936 = vunpack.c.h.b16 %v509
    %v937 = vunpack.c.l.b16 %v510
    %v938 = vunpack.c.h.b16 %v510
    %v939 = vunpack.c.l.b16 %v511
    %v940 = vunpack.c.h.b16 %v511
    %v941 = vunpack.c.l.b16 %v512
    %v942 = vunpack.c.h.b16 %v512
    %v943 = vunpack.c.l.b16 %v513
    %v944 = vunpack.c.h.b16 %v513
    %v945 = vunpack.c.l.b16 %v514
    %v946 = vunpack.c.h.b16 %v514
    %v947 = vunpack.c.l.b16 %v515
    %v948 = vunpack.c.h.b16 %v515
    %v949 = vunpack.c.l.b16 %v516
    %v950 = vunpack.c.h.b16 %v516
    %v951 = vunpack.c.l.b16 %v517
    %v952 = vunpack.c.h.b16 %v517
    %v953 = vunpack.c.l.b16 %v518
    %v954 = vunpack.c.h.b16 %v518
    %v955 = vunpack.c.l.b16 %v519
    %v956 = vunpack.c.h.b16 %v519
    %v957 = vunpack.c.l.b16 %v520
    %v958 = vunpack.c.h.b16 %v520
    %v959 = vunpack.c.l.b16 %v521
    %v960 = vunpack.c.h.b16 %v521
    %v961 = vunpack.c.l.b16 %v522
    %v962 = vunpack.c.h.b16 %v522
    %v963 = vunpack.c.l.b16 %v523
    %v964 = vunpack.c.h.b16 %v523
    %v965 = vunpack.c.l.b16 %v524
    %v966 = vunpack.c.h.b16 %v524
    %v967 = vunpack.c.l.b16 %v525
    %v968 = vunpack.c.h.b16 %v525
    %v969 = vunpack.c.l.b16 %v526
    %v970 = vunpack.c.h.b16 %v526
    %v971 = vunpack.c.l.b16 %v527
    %v972 = vunpack.c.h.b16 %v527
    %v973 = vunpack.c.l.b16 %v528
    %v974 = vunpack.c.h.b16 %v528
    %v975 = vunpack.c.l.b16 %v529
    %v976 = vunpack.c.h.b16 %v529
    %v977 = vunpack.c.l.b16 %v530
    %v978 = vunpack.c.h.b16 %v530
    %v979 = vunpack.c.l.b16 %v531
    %v980 = vunpack.c.h.b16 %v531
    %v981 = vunpack.c.l.b16 %v532
    %v982 = vunpack.c.h.b16 %v532
    %v983 = vunpack.c.l.b16 %v533
    %v984 = vunpack.c.h.b16 %v533
    %v985 = vunpack.c.l.b16 %v534
    %v986 = vunpack.c.h.b16 %v534
    %v987 = vunpack.c.l.b16 %v535
    %v988 = vunpack.c.h.b16 %v535
    %v989 = vunpack.c.l.b16 %v536
    %v990 = vunpack.c.h.b16 %v536
    %v991 = vunpack.c.l.b16 %v537
    %v992 = vunpack.c.h.b16 %v537
    %v993 = vunpack.c.l.b16 %v538
    %v994 = vunpack.c.h.b16 %v538
    %v995 = vunpack.c.l.b16 %v539
    %v996 = vunpack.c.h.b16 %v539
    %v997 = vunpack.c.l.b16 %v540
    %v998 = vunpack.c.h.b16 %v540
    %v999 = vunpack.c.l.b16 %v541
    %v1000 = vunpack.c.h.b16 %v541
    %v1001 = vunpack.c.l.b16 %v542
    %v1002 = vunpack.c.h.b16 %v542
    %v1003 = vunpack.c.l.b16 %v543
    %v1004 = vunpack.c.h.b16 %v543
    %v1005 = vunpack.c.l.b16 %v544
    %v1006 = vunpack.c.h.b16 %v544
    %v1007 = vunpack.c.l.b16 %v545
    %v1008 = vunpack.c.h.b16 %v545
    %v1009 = vunpack.c.l.b16 %v546
    %v1010 = vunpack.c.h.b16 %v546
    %v1011 = vunpack.c.l.b16 %v547
    %v1012 = vunpack.c.h.b16 %v547
    %v1013 = vunpack.c.l.b16 %v548
    %v1014 = vunpack.c.h.b16 %v548
    %v1015 = vunpack.c.l.b16 %v549
    %v1016 = vunpack.c.h.b16 %v549
    %v1017 = vunpack.c.l.b16 %v550
    %v1018 = vunpack.c.h.b16 %v550
    %v1019 = vunpack.c.l.b16 %v551
    %v1020 = vunpack.c.h.b16 %v551
    %v1021 = vunpack.c.l.b16 %v552
    %v1022 = vunpack.c.h.b16 %v552
    %v1023 = vunpack.c.l.b16 %v553
    %v1024 = vunpack.c.h.b16 %v553
    %v1025 = vunpack.c.l.b16 %v554
    %v1026 = vunpack.c.h.b16 %v554
    %v1027 = vunpack.c.l.b16 %v555
    %v1028 = vunpack.c.h.b16 %v555
    %v1029 = vunpack.c.l.b16 %v556
    %v1030 = vunpack.c.h.b16 %v556
    %v1031 = vunpack.c.l.b16 %v557
    %v1032 = vunpack.c.h.b16 %v557
    %v1033 = vunpack.c.l.b16 %v558
    %v1034 = vunpack.c.h.b16 %v558
    %v1035 = vunpack.c.l.b16 %v559
    %v1036 = vunpack.c.h.b16 %v559
    %v1037 = vunpack.c.l.b16 %v560
    %v1038 = vunpack.c.h.b16 %v560
    %v1039 = vunpack.c.l.b16 %v561
    %v1040 = vunpack.c.h.b16 %v561
    %v1041 = vunpack.c.l.b16 %v562
    %v1042 = vunpack.c.h.b16 %v562
    %v1043 = vunpack.c.l.b16 %v563
    %v1044 = vunpack.c.h.b16 %v563
    %v1045 = vunpack.c.l.b16 %v564
    %v1046 = vunpack.c.h.b16 %v564
    %v1047 = vunpack.c.l.b16 %v565
    %v1048 = vunpack.c.h.b16 %v565
    %v1049 = vunpack.c.l.b16 %v566
    %v1050 = vunpack.c.h.b16 %v566
    %v1051 = vunpack.c.l.b16 %v567
    %v1052 = vunpack.c.h.b16 %v567
    %v1053 = vunpack.c.l.b16 %v568
    %v1054 = vunpack.c.h.b16 %v568
    %v1055 = vunpack.c.l.b16 %v569
    %v1056 = vunpack.c.h.b16 %v569
    %v1057 = vunpack.c.l.b16 %v570
    %v1058 = vunpack.c.h.b16 %v570
    %v1059 = vunpack.c.l.b16 %v571
    %v1060 = vunpack.c.h.b16 %v571
    %v1061 = vunpack.c.l.b16 %v572
    %v1062 = vunpack.c.h.b16 %v572
    %v1063 = vunpack.c.l.b16 %v573
    %v1064 = vunpack.c.h.b16 %v573
    %v1065 = vunpack.c.l.b16 %v574
    %v1066 = vunpack.c.h.b16 %v574
    %v1067 = vunpack.c.l.b16 %v575
    %v1068 = vunpack.c.h.b16 %v575
    %v1069 = vunpack.c.l.b16 %v576
    %v1070 = vunpack.c.h.b16 %v576
    %v1071 = vunpack.c.l.b16 %v577
    %v1072 = vunpack.c.h.b16 %v577
    %v1073 = vunpack.c.l.b16 %v578
    %v1074 = vunpack.c.h.b16 %v578
    %v1075 = vunpack.c.l.b16 %v579
    %v1076 = vunpack.c.h.b16 %v579
    %v1077 = vunpack.c.l.b16 %v580
    %v1078 = vunpack.c.h.b16 %v580
    %v1079 = vunpack.c.l.b16 %v581
    %v1080 = vunpack.c.h.b16 %v581
    %v1081 = vunpack.c.l.b16 %v582
    %v1082 = vunpack.c.h.b16 %v582
    %v1083 = vunpack.c.l.b16 %v583
    %v1084 = vunpack.c.h.b16 %v583
    %v1085 = vunpack.c.l.b16 %v584
    %v1086 = vunpack.c.h.b16 %v584
    %v1087 = vunpack.c.l.b16 %v585
    %v1088 = vunpack.c.h.b16 %v585
    %v1089 = vunpack.c.l.b16 %v586
    %v1090 = vunpack.c.h.b16 %v586
    %v1091 = vunpack.c.l.b16 %v587
    %v1092 = vunpack.c.h.b16 %v587
    %v1093 = vunpack.c.l.b16 %v588
    %v1094 = vunpack.c.h.b16 %v588
    %v1095 = vunpack.c.l.b16 %v589
    %v1096 = vunpack.c.h.b16 %v589
    %v1097 = vunpack.c.l.b16 %v590
    %v1098 = vunpack.c.h.b16 %v590
    %v1099 = vunpack.c.l.b16 %v591
    %v1100 = vunpack.c.h.b16 %v591
    %v1101 = vunpack.c.l.b16 %v592
    %v1102 = vunpack.c.h.b16 %v592
    %v1103 = vunpack.c.l.b16 %v593
    %v1104 = vunpack.c.h.b16 %v593
    %v1105 = vunpack.c.l.b16 %v594
    %v1106 = vunpack.c.h.b16 %v594
    %v1107 = vunpack.c.l.b16 %v595
    %v1108 = vunpack.c.h.b16 %v595
    %v1109 = vunpack.c.l.b16 %v596
    %v1110 = vunpack.c.h.b16 %v596
    %v1111 = vunpack.c.l.b16 %v597
    %v1112 = vunpack.c.h.b16 %v597
    %v1113 = vunpack.c.l.b16 %v598
    %v1114 = vunpack.c.h.b16 %v598
    %v1115 = vunpack.c.l.b16 %v599
    %v1116 = vunpack.c.h.b16 %v599
    %v1117 = vunpack.c.l.b16 %v600
    %v1118 = vunpack.c.h.b16 %v600
    %v1119 = vunpack.c.l.b16 %v601
    %v1120 = vunpack.c.h.b16 %v601
    %v1121 = vunpack.c.l.b16 %v602
    %v1122 = vunpack.c.h.b16 %v602
    %v1123 = vunpack.c.l.b16 %v603
    %v1124 = vunpack.c.h.b16 %v603
    %v1125 = vunpack.c.l.b16 %v604
    %v1126 = vunpack.c.h.b16 %v604
    %v1127 = vunpack.c.l.b16 %v605
    %v1128 = vunpack.c.h.b16 %v605
    %v1129 = vunpack.c.l.b16 %v606
    %v1130 = vunpack.c.h.b16 %v606
    %v1131 = vunpack.c.l.b16 %v607
    %v1132 = vunpack.c.h.b16 %v607
    %v1133 = vunpack.c.l.b16 %v608
    %v1134 = vunpack.c.h.b16 %v608
    %v1135 = vunpack.c.l.b16 %v609
    %v1136 = vunpack.c.h.b16 %v609
    %v1137 = vunpack.c.l.b16 %v610
    %v1138 = vunpack.c.h.b16 %v610
    %v1139 = vunpack.c.l.b16 %v611
    %v1140 = vunpack.c.h.b16 %v611
    %v1141 = vunpack.c.l.b16 %v612
    %v1142 = vunpack.c.h.b16 %v612
    %v1143 = vunpack.c.l.b16 %v613
    %v1144 = vunpack.c.h.b16 %v613
    %v1145 = vunpack.c.l.b16 %v614
    %v1146 = vunpack.c.h.b16 %v614
    %v1147 = vunpack.c.l.b16 %v615
    %v1148 = vunpack.c.h.b16 %v615
    %v1149 = vunpack.c.l.b16 %v616
    %v1150 = vunpack.c.h.b16 %v616
    %v1151 = vunpack.c.l.b16 %v617
    %v1152 = vunpack.c.h.b16 %v617
    %v1153 = vunpack.c.l.b16 %v618
    %v1154 = vunpack.c.h.b16 %v618
    %v1155 = vunpack.c.l.b16 %v619
    %v1156 = vunpack.c.h.b16 %v619
    %v1157 = vunpack.c.l.b16 %v620
    %v1158 = vunpack.c.h.b16 %v620
    %v1159 = vunpack.c.l.b16 %v621
    %v1160 = vunpack.c.h.b16 %v621
    %v1161 = vunpack.c.l.b16 %v622
    %v1162 = vunpack.c.h.b16 %v622
    %v1163 = vunpack.c.l.b16 %v623
    %v1164 = vunpack.c.h.b16 %v623
    %v1165 = vunpack.c.l.b16 %v624
    %v1166 = vunpack.c.h.b16 %v624
    %v1167 = vunpack.c.l.b16 %v625
    %v1168 = vunpack.c.h.b16 %v625
    %v1169 = vunpack.c.l.b16 %v626
    %v1170 = vunpack.c.h.b16 %v626
    %v1171 = vunpack.c.l.b16 %v627
    %v1172 = vunpack.c.h.b16 %v627
    %v1173 = vunpack.c.l.b16 %v628
    %v1174 = vunpack.c.h.b16 %v628
    %v1175 = vunpack.c.l.b16 %v629
    %v1176 = vunpack.c.h.b16 %v629
    %v1177 = vunpack.c.l.b16 %v630
    %v1178 = vunpack.c.h.b16 %v630
    %v1179 = vunpack.c.l.b16 %v631
    %v1180 = vunpack.c.h.b16 %v631
    %v1181 = vunpack.c.l.b16 %v632
    %v1182 = vunpack.c.h.b16 %v632
    %v1183 = vunpack.c.l.b16 %v633
    %v1184 = vunpack.c.h.b16 %v633
    %v1185 = vunpack.c.l.b16 %v634
    %v1186 = vunpack.c.h.b16 %v634
    %v1187 = vunpack.c.l.b16 %v635
    %v1188 = vunpack.c.h.b16 %v635
    %v1189 = vunpack.c.l.b16 %v636
    %v1190 = vunpack.c.h.b16 %v636
    %v1191 = vunpack.c.l.b16 %v637
    %v1192 = vunpack.c.h.b16 %v637
    %v1193 = vunpack.c.l.b16 %v638
    %v1194 = vunpack.c.h.b16 %v638
    %v1195 = vunpack.c.l.b16 %v639
    %v1196 = vunpack.c.h.b16 %v639
    %v1197 = vunpack.c.l.b16 %v640
    %v1198 = vunpack.c.h.b16 %v640
    %v1199 = vunpack.c.l.b16 %v641
    %v1200 = vunpack.c.h.b16 %v641
    %v1201 = vunpack.c.l.b16 %v642
    %v1202 = vunpack.c.h.b16 %v642
    %v1203 = vunpack.c.l.b16 %v643
    %v1204 = vunpack.c.h.b16 %v643
    %v1205 = vunpack.c.l.b16 %v644
    %v1206 = vunpack.c.h.b16 %v644
    %v1207 = vunpack.c.l.b16 %v645
    %v1208 = vunpack.c.h.b16 %v645
    %v1209 = vunpack.c.l.b16 %v646
    %v1210 = vunpack.c.h.b16 %v646
    %v1211 = vunpack.c.l.b16 %v647
    %v1212 = vunpack.c.h.b16 %v647
    %v1213 = vunpack.c.l.b16 %v648
    %v1214 = vunpack.c.h.b16 %v648
    %v1215 = vunpack.c.l.b16 %v649
    %v1216 = vunpack.c.h.b16 %v649
    %v1217 = vunpack.c.l.b16 %v650
    %v1218 = vunpack.c.h.b16 %v650
    %v1219 = vunpack.c.l.b16 %v651
    %v1220 = vunpack.c.h.b16 %v651
    %v1221 = vunpack.c.l.b16 %v652
    %v1222 = vunpack.c.h.b16 %v652
    %v1223 = vunpack.c.l.b16 %v653
    %v1224 = vunpack.c.h.b16 %v653
    %v1225 = vunpack.c.l.b16 %v654
    %v1226 = vunpack.c.h.b16 %v654
    %v1227 = vunpack.c.l.b16 %v655
    %v1228 = vunpack.c.h.b16 %v655
    %v1229 = vunpack.c.l.b16 %v656
    %v1230 = vunpack.c.h.b16 %v656
    %v1231 = vunpack.c.l.b16 %v657
    %v1232 = vunpack.c.h.b16 %v657
    %v1233 = vunpack.c.l.b16 %v658
    %v1234 = vunpack.c.h.b16 %v658
    %v1235 = vpack.c.b16 %v855, %v851
    %v1236 = vpack.c.b16 %v856, %v852
    %v1237 = vpack.c.b16 %v857, %v853
    %v1238 = vpack.c.b16 %v858, %v854
    %v1239 = vpack.c.b16 %v863, %v859
    %v1240 = vpack.c.b16 %v864, %v860
    %v1241 = vpack.c.b16 %v865, %v861
    %v1242 = vpack.c.b16 %v866, %v862
    %v1243 = vpack.c.b16 %v871, %v867
    %v1244 = vpack.c.b16 %v872, %v868
    %v1245 = vpack.c.b16 %v873, %v869
    %v1246 = vpack.c.b16 %v874, %v870
    %v1247 = vpack.c.b16 %v879, %v875
    %v1248 = vpack.c.b16 %v880, %v876
    %v1249 = vpack.c.b16 %v881, %v877
    %v1250 = vpack.c.b16 %v882, %v878
    %v1251 = vpack.c.b16 %v887, %v883
    %v1252 = vpack.c.b16 %v888, %v884
    %v1253 = vpack.c.b16 %v889, %v885
    %v1254 = vpack.c.b16 %v890, %v886
    %v1255 = vpack.c.b16 %v895, %v891
    %v1256 = vpack.c.b16 %v896, %v892
    %v1257 = vpack.c.b16 %v897, %v893
    %v1258 = vpack.c.b16 %v898, %v894
    %v1259 = vpack.c.b16 %v903, %v899
    %v1260 = vpack.c.b16 %v904, %v900
    %v1261 = vpack.c.b16 %v905, %v901
    %v1262 = vpack.c.b16 %v906, %v902
    %v1263 = vpack.c.b16 %v911, %v907
    %v1264 = vpack.c.b16 %v912, %v908
    %v1265 = vpack.c.b16 %v913, %v909
    %v1266 = vpack.c.b16 %v914, %v910
    %v1267 = vpack.c.b16 %v919, %v915
    %v1268 = vpack.c.b16 %v920, %v916
    %v1269 = vpack.c.b16 %v921, %v917
    %v1270 = vpack.c.b16 %v922, %v918
    %v1271 = vpack.c.b16 %v927, %v923
    %v1272 = vpack.c.b16 %v928, %v924
    %v1273 = vpack.c.b16 %v929, %v925
    %v1274 = vpack.c.b16 %v930, %v926
    %v1275 = vpack.c.b16 %v935, %v931
    %v1276 = vpack.c.b16 %v936, %v932
    %v1277 = vpack.c.b16 %v937, %v933
    %v1278 = vpack.c.b16 %v938, %v934
    %v1279 = vpack.c.b16 %v943, %v939
    %v1280 = vpack.c.b16 %v944, %v940
    %v1281 = vpack.c.b16 %v945, %v941
    %v1282 = vpack.c.b16 %v946, %v942
    %v1283 = vpack.c.b16 %v951, %v947
    %v1284 = vpack.c.b16 %v952, %v948
    %v1285 = vpack.c.b16 %v953, %v949
    %v1286 = vpack.c.b16 %v954, %v950
    %v1287 = vpack.c.b16 %v959, %v955
    %v1288 = vpack.c.b16 %v960, %v956
    %v1289 = vpack.c.b16 %v961, %v957
    %v1290 = vpack.c.b16 %v962, %v958
    %v1291 = vpack.c.b16 %v967, %v963
    %v1292 = vpack.c.b16 %v968, %v964
    %v1293 = vpack.c.b16 %v969, %v965
    %v1294 = vpack.c.b16 %v970, %v966
    %v1295 = vpack.c.b16 %v975, %v971
    %v1296 = vpack.c.b16 %v976, %v972
    %v1297 = vpack.c.b16 %v977, %v973
    %v1298 = vpack.c.b16 %v978, %v974
    %v1299 = vpack.c.b16 %v983, %v979
    %v1300 = vpack.c.b16 %v984, %v980
    %v1301 = vpack.c.b16 %v985, %v981
    %v1302 = vpack.c.b16 %v986, %v982
    %v1303 = vpack.c.b16 %v991, %v987
    %v1304 = vpack.c.b16 %v992, %v988
    %v1305 = vpack.c.b16 %v993, %v989
    %v1306 = vpack.c.b16 %v994, %v990
    %v1307 = vpack.c.b16 %v999, %v995
    %v1308 = vpack.c.b16 %v1000, %v996
    %v1309 = vpack.c.b16 %v1001, %v997
    %v1310 = vpack.c.b16 %v1002, %v998
    %v1311 = vpack.c.b16 %v1007, %v1003
    %v1312 = vpack.c.b16 %v1008, %v1004
    %v1313 = vpack.c.b16 %v1009, %v1005
    %v1314 = vpack.c.b16 %v1010, %v1006
    %v1315 = vpack.c.b16 %v1015, %v1011
    %v1316 = vpack.c.b16 %v1016, %v1012
    %v1317 = vpack.c.b16 %v1017, %v1013
    %v1318 = vpack.c.b16 %v1018, %v1014
    %v1319 = vpack.c.b16 %v1023, %v1019
    %v1320 = vpack.c.b16 %v1024, %v1020
    %v1321 = vpack.c.b16 %v1025, %v1021
    %v1322 = vpack.c.b16 %v1026, %v1022
    %v1323 = vpack.c.b16 %v1031, %v1027
    %v1324 = vpack.c.b16 %v1032, %v1028
    %v1325 = vpack.c.b16 %v1033, %v1029
    %v1326 = vpack.c.b16 %v1034, %v1030
    %v1327 = vpack.c.b16 %v1039, %v1035
    %v1328 = vpack.c.b16 %v1040, %v1036
    %v1329 = vpack.c.b16 %v1041, %v1037
    %v1330 = vpack.c.b16 %v1042, %v1038
    %v1331 = vpack.c.b16 %v1047, %v1043
    %v1332 = vpack.c.b16 %v1048, %v1044
    %v1333 = vpack.c.b16 %v1049, %v1045
    %v1334 = vpack.c.b16 %v1050, %v1046
    %v1335 = vpack.c.b16 %v1055, %v1051
    %v1336 = vpack.c.b16 %v1056, %v1052
    %v1337 = vpack.c.b16 %v1057, %v1053
    %v1338 = vpack.c.b16 %v1058, %v1054
    %v1339 = vpack.c.b16 %v1063, %v1059
    %v1340 = vpack.c.b16 %v1064, %v1060
    %v1341 = vpack.c.b16 %v1065, %v1061
    %v1342 = vpack.c.b16 %v1066, %v1062
    %v1343 = vpack.c.b16 %v1071, %v1067
    %v1344 = vpack.c.b16 %v1072, %v1068
    %v1345 = vpack.c.b16 %v1073, %v1069
    %v1346 = vpack.c.b16 %v1074, %v1070
    %v1347 = vpack.c.b16 %v1079, %v1075
    %v1348 = vpack.c.b16 %v1080, %v1076
    %v1349 = vpack.c.b16 %v1081, %v1077
    %v1350 = vpack.c.b16 %v1082, %v1078
    %v1351 = vpack.c.b16 %v1087, %v1083
    %v1352 = vpack.c.b16 %v1088, %v1084
    %v1353 = vpack.c.b16 %v1089, %v1085
    %v1354 = vpack.c.b16 %v1090, %v1086
    %v1355 = vpack.c.b16 %v1095, %v1091
    %v1356 = vpack.c.b16 %v1096, %v1092
    %v1357 = vpack.c.b16 %v1097, %v1093
    %v1358 = vpack.c.b16 %v1098, %v1094
    %v1359 = vpack.c.b16 %v1103, %v1099
    %v1360 = vpack.c.b16 %v1104, %v1100
    %v1361 = vpack.c.b16 %v1105, %v1101
    %v1362 = vpack.c.b16 %v1106, %v1102
    %v1363 = vpack.c.b16 %v1111, %v1107
    %v1364 = vpack.c.b16 %v1112, %v1108
    %v1365 = vpack.c.b16 %v1113, %v1109
    %v1366 = vpack.c.b16 %v1114, %v1110
    %v1367 = vpack.c.b16 %v1119, %v1115
    %v1368 = vpack.c.b16 %v1120, %v1116
    %v1369 = vpack.c.b16 %v1121, %v1117
    %v1370 = vpack.c.b16 %v1122, %v1118
    %v1371 = vpack.c.b16 %v1127, %v1123
    %v1372 = vpack.c.b16 %v1128, %v1124
    %v1373 = vpack.c.b16 %v1129, %v1125
    %v1374 = vpack.c.b16 %v1130, %v1126
    %v1375 = vpack.c.b16 %v1135, %v1131
    %v1376 = vpack.c.b16 %v1136, %v1132
    %v1377 = vpack.c.b16 %v1137, %v1133
    %v1378 = vpack.c.b16 %v1138, %v1134
    %v1379 = vpack.c.b16 %v1143, %v1139
    %v1380 = vpack.c.b16 %v1144, %v1140
    %v1381 = vpack.c.b16 %v1145, %v1141
    %v1382 = vpack.c.b16 %v1146, %v1142
    %v1383 = vpack.c.b16 %v1151, %v1147
    %v1384 = vpack.c.b16 %v1152, %v1148
    %v1385 = vpack.c.b16 %v1153, %v1149
    %v1386 = vpack.c.b16 %v1154, %v1150
    %v1387 = vpack.c.b16 %v1159, %v1155
    %v1388 = vpack.c.b16 %v1160, %v1156
    %v1389 = vpack.c.b16 %v1161, %v1157
    %v1390 = vpack.c.b16 %v1162, %v1158
    %v1391 = vpack.c.b16 %v1167, %v1163
    %v1392 = vpack.c.b16 %v1168, %v1164
    %v1393 = vpack.c.b16 %v1169, %v1165
    %v1394 = vpack.c.b16 %v1170, %v1166
    %v1395 = vpack.c.b16 %v1175, %v1171
    %v1396 = vpack.c.b16 %v1176, %v1172
    %v1397 = vpack.c.b16 %v1177, %v1173
    %v1398 = vpack.c.b16 %v1178, %v1174
    %v1399 = vpack.c.b16 %v1183, %v1179
    %v1400 = vpack.c.b16 %v1184, %v1180
    %v1401 = vpack.c.b16 %v1185, %v1181
    %v1402 = vpack.c.b16 %v1186, %v1182
    %v1403 = vpack.c.b16 %v1191, %v1187
    %v1404 = vpack.c.b16 %v1192, %v1188
    %v1405 = vpack.c.b16 %v1193, %v1189
    %v1406 = vpack.c.b16 %v1194, %v1190
    %v1407 = vpack.c.b16 %v1199, %v1195
    %v1408 = vpack.c.b16 %v1200, %v1196
    %v1409 = vpack.c.b16 %v1201, %v1197
    %v1410 = vpack.c.b16 %v1202, %v1198
    %v1411 = vpack.c.b16 %v1207, %v1203
    %v1412 = vpack.c.b16 %v1208, %v1204
    %v1413 = vpack.c.b16 %v1209, %v1205
    %v1414 = vpack.c.b16 %v1210, %v1206
    %v1415 = vpack.c.b16 %v1215, %v1211
    %v1416 = vpack.c.b16 %v1216, %v1212
    %v1417 = vpack.c.b16 %v1217, %v1213
    %v1418 = vpack.c.b16 %v1218, %v1214
    %v1419 = vpack.c.b16 %v1223, %v1219
    %v1420 = vpack.c.b16 %v1224, %v1220
    %v1421 = vpack.c.b16 %v1225, %v1221
    %v1422 = vpack.c.b16 %v1226, %v1222
    %v1423 = vpack.c.b16 %v1231, %v1227
    %v1424 = vpack.c.b16 %v1232, %v1228
    %v1425 = vpack.c.b16 %v1233, %v1229
    %v1426 = vpack.c.b16 %v1234, %v1230
    %1619 = vmatprep.subr.bf16.mxu0 %v1236
    %1620 = vmatpush1.bf16.msra.mxu0 %v1235
    %1621 = vmatprep.subr.bf16.mxu0 %v1240
    %1622 = vmatpush1.bf16.msra.mxu0 %v1239
    %1623 = vmatprep.subr.bf16.mxu0 %v1244
    %1624 = vmatpush1.bf16.msra.mxu0 %v1243
    %1625 = vmatprep.subr.bf16.mxu0 %v1248
    %1626 = vmatpush1.bf16.msra.mxu0 %v1247
    %1627 = vmatprep.subr.bf16.mxu0 %v1252
    %1628 = vmatpush1.bf16.msra.mxu0 %v1251
    %1629 = vmatprep.subr.bf16.mxu0 %v1256
    %1630 = vmatpush1.bf16.msra.mxu0 %v1255
    %1631 = vmatprep.subr.bf16.mxu0 %v1260
    %1632 = vmatpush1.bf16.msra.mxu0 %v1259
    %1633 = vmatprep.subr.bf16.mxu0 %v1264
    %1634 = vmatpush1.bf16.msra.mxu0 %v1263
    %1635 = vmatprep.subr.bf16.mxu0 %v1268
    %1636 = vmatpush1.bf16.msra.mxu0 %v1267
    %1637 = vmatprep.subr.bf16.mxu0 %v1272
    %1638 = vmatpush1.bf16.msra.mxu0 %v1271
    %1639 = vmatprep.subr.bf16.mxu0 %v1276
    %1640 = vmatpush1.bf16.msra.mxu0 %v1275
    %1641 = vmatprep.subr.bf16.mxu0 %v1280
    %1642 = vmatpush1.bf16.msra.mxu0 %v1279
    %1643 = vmatprep.subr.bf16.mxu0 %v1284
    %1644 = vmatpush1.bf16.msra.mxu0 %v1283
    %1645 = vmatprep.subr.bf16.mxu0 %v1288
    %1646 = vmatpush1.bf16.msra.mxu0 %v1287
    %1647 = vmatprep.subr.bf16.mxu0 %v1292
    %1648 = vmatpush1.bf16.msra.mxu0 %v1291
    %1649 = vmatprep.subr.bf16.mxu0 %v1296
    %1650 = vmatpush1.bf16.msra.mxu0 %v1295
    %1651 = vmatprep.mubr.bf16.mxu0 %v420
    %1652 = vmatmul.mubr.bf16.gmra.mrb[0].mxu0 %v419
    %v1653 = vpop.f32.mrb[0].mxu0
    %v1654 = vadd.f32 0.0, %v1653
    %v1655 = vpop.f32.mrb[0].mxu0
    %v1656 = vadd.f32 0.0, %v1655
    %v1657 = vpop.f32.mrb[0].mxu0
    %v1658 = vpop.f32.mrb[0].mxu0
    %1659 = vdwg.mxu0
    %1660 = vmatprep.subr.bf16.mxu0 %v1300
    %1661 = vmatpush1.bf16.msra.mxu0 %v1299
    %1662 = vmatprep.subr.bf16.mxu0 %v1304
    %1663 = vmatpush1.bf16.msra.mxu0 %v1303
    %1664 = vmatprep.subr.bf16.mxu0 %v1308
    %1665 = vmatpush1.bf16.msra.mxu0 %v1307
    %1666 = vmatprep.subr.bf16.mxu0 %v1312
    %1667 = vmatpush1.bf16.msra.mxu0 %v1311
    %1668 = vmatprep.subr.bf16.mxu0 %v1316
    %1669 = vmatpush1.bf16.msra.mxu0 %v1315
    %1670 = vmatprep.subr.bf16.mxu0 %v1320
    %1671 = vmatpush1.bf16.msra.mxu0 %v1319
    %1672 = vmatprep.subr.bf16.mxu0 %v1324
    %1673 = vmatpush1.bf16.msra.mxu0 %v1323
    %1674 = vmatprep.subr.bf16.mxu0 %v1328
    %1675 = vmatpush1.bf16.msra.mxu0 %v1327
    %1676 = vmatprep.subr.bf16.mxu0 %v1332
    %1677 = vmatpush1.bf16.msra.mxu0 %v1331
    %1678 = vmatprep.subr.bf16.mxu0 %v1336
    %1679 = vmatpush1.bf16.msra.mxu0 %v1335
    %1680 = vmatprep.subr.bf16.mxu0 %v1340
    %1681 = vmatpush1.bf16.msra.mxu0 %v1339
    %1682 = vmatprep.subr.bf16.mxu0 %v1344
    %1683 = vmatpush1.bf16.msra.mxu0 %v1343
    %1684 = vmatprep.subr.bf16.mxu0 %v1348
    %1685 = vmatpush1.bf16.msra.mxu0 %v1347
    %1686 = vmatprep.subr.bf16.mxu0 %v1352
    %1687 = vmatpush1.bf16.msra.mxu0 %v1351
    %1688 = vmatprep.subr.bf16.mxu0 %v1356
    %1689 = vmatpush1.bf16.msra.mxu0 %v1355
    %1690 = vmatprep.subr.bf16.mxu0 %v1360
    %1691 = vmatpush1.bf16.msra.mxu0 %v1359
    %1692 = vmatprep.mubr.bf16.mxu0 %v353
    %1693 = vmatmul.mubr.bf16.gmra.mrb[0].mxu0 %v352
    %v1694 = vpop.f32.mrb[0].mxu0
    %v1695 = vadd.f32 %v1654, %v1694
    %v1696 = vpop.f32.mrb[0].mxu0
    %v1697 = vadd.f32 %v1656, %v1696
    %v1698 = vpop.f32.mrb[0].mxu0
    %v1699 = vpop.f32.mrb[0].mxu0
    %1700 = vdwg.mxu0
    %1701 = vmatprep.subr.bf16.mxu0 %v1364
    %1702 = vmatpush1.bf16.msra.mxu0 %v1363
    %1703 = vmatprep.subr.bf16.mxu0 %v1368
    %1704 = vmatpush1.bf16.msra.mxu0 %v1367
    %1705 = vmatprep.subr.bf16.mxu0 %v1372
    %1706 = vmatpush1.bf16.msra.mxu0 %v1371
    %1707 = vmatprep.subr.bf16.mxu0 %v1376
    %1708 = vmatpush1.bf16.msra.mxu0 %v1375
    %1709 = vmatprep.subr.bf16.mxu0 %v1380
    %1710 = vmatpush1.bf16.msra.mxu0 %v1379
    %1711 = vmatprep.subr.bf16.mxu0 %v1384
    %1712 = vmatpush1.bf16.msra.mxu0 %v1383
    %1713 = vmatprep.subr.bf16.mxu0 %v1388
    %1714 = vmatpush1.bf16.msra.mxu0 %v1387
    %1715 = vmatprep.subr.bf16.mxu0 %v1392
    %1716 = vmatpush1.bf16.msra.mxu0 %v1391
    %1717 = vmatprep.subr.bf16.mxu0 %v1396
    %1718 = vmatpush1.bf16.msra.mxu0 %v1395
    %1719 = vmatprep.subr.bf16.mxu0 %v1400
    %1720 = vmatpush1.bf16.msra.mxu0 %v1399
    %1721 = vmatprep.subr.bf16.mxu0 %v1404
    %1722 = vmatpush1.bf16.msra.mxu0 %v1403
    %1723 = vmatprep.subr.bf16.mxu0 %v1408
    %1724 = vmatpush1.bf16.msra.mxu0 %v1407
    %1725 = vmatprep.subr.bf16.mxu0 %v1412
    %1726 = vmatpush1.bf16.msra.mxu0 %v1411
    %1727 = vmatprep.subr.bf16.mxu0 %v1416
    %1728 = vmatpush1.bf16.msra.mxu0 %v1415
    %1729 = vmatprep.subr.bf16.mxu0 %v1420
    %1730 = vmatpush1.bf16.msra.mxu0 %v1419
    %1731 = vmatprep.subr.bf16.mxu0 %v1424
    %1732 = vmatpush1.bf16.msra.mxu0 %v1423
    %1733 = vmatprep.mubr.bf16.mxu0 %v466
    %1734 = vmatmul.mubr.bf16.gmra.mrb[0].mxu0 %v465
    %v1735 = vpop.f32.mrb[0].mxu0
    %v1736 = vadd.f32 %v1695, %v1735
    %v1737 = vpop.f32.mrb[0].mxu0
    %v1738 = vadd.f32 %v1697, %v1737
    %v1739 = vpop.f32.mrb[0].mxu0
    %v1740 = vpop.f32.mrb[0].mxu0
    %1741 = vdwg.mxu0
    %1742 = vmatprep.subr.bf16.mxu0 %v1238
    %1743 = vmatpush1.bf16.msra.mxu0 %v1237
    %1744 = vmatprep.subr.bf16.mxu0 %v1242
    %1745 = vmatpush1.bf16.msra.mxu0 %v1241
    %1746 = vmatprep.subr.bf16.mxu0 %v1246
    %1747 = vmatpush1.bf16.msra.mxu0 %v1245
    %1748 = vmatprep.subr.bf16.mxu0 %v1250
    %1749 = vmatpush1.bf16.msra.mxu0 %v1249
    %1750 = vmatprep.subr.bf16.mxu0 %v1254
    %1751 = vmatpush1.bf16.msra.mxu0 %v1253
    %1752 = vmatprep.subr.bf16.mxu0 %v1258
    %1753 = vmatpush1.bf16.msra.mxu0 %v1257
    %1754 = vmatprep.subr.bf16.mxu0 %v1262
    %1755 = vmatpush1.bf16.msra.mxu0 %v1261
    %1756 = vmatprep.subr.bf16.mxu0 %v1266
    %1757 = vmatpush1.bf16.msra.mxu0 %v1265
    %1758 = vmatprep.subr.bf16.mxu0 %v1270
    %1759 = vmatpush1.bf16.msra.mxu0 %v1269
    %1760 = vmatprep.subr.bf16.mxu0 %v1274
    %1761 = vmatpush1.bf16.msra.mxu0 %v1273
    %1762 = vmatprep.subr.bf16.mxu0 %v1278
    %1763 = vmatpush1.bf16.msra.mxu0 %v1277
    %1764 = vmatprep.subr.bf16.mxu0 %v1282
    %1765 = vmatpush1.bf16.msra.mxu0 %v1281
    %1766 = vmatprep.subr.bf16.mxu0 %v1286
    %1767 = vmatpush1.bf16.msra.mxu0 %v1285
    %1768 = vmatprep.subr.bf16.mxu0 %v1290
    %1769 = vmatpush1.bf16.msra.mxu0 %v1289
    %1770 = vmatprep.subr.bf16.mxu0 %v1294
    %1771 = vmatpush1.bf16.msra.mxu0 %v1293
    %1772 = vmatprep.subr.bf16.mxu0 %v1298
    %1773 = vmatpush1.bf16.msra.mxu0 %v1297
    %1774 = vmatprep.mubr.bf16.mxu0 %v420
    %1775 = vmatmul.mubr.bf16.gmra.mrb[0].mxu0 %v419
    %v1776 = vpop.f32.mrb[0].mxu0
    %v1777 = vadd.f32 0.0, %v1776
    %v1778 = vpop.f32.mrb[0].mxu0
    %v1779 = vadd.f32 0.0, %v1778
    %v1780 = vpop.f32.mrb[0].mxu0
    %v1781 = vpop.f32.mrb[0].mxu0
    %1782 = vdwg.mxu0
    %1783 = vmatprep.subr.bf16.mxu0 %v1302
    %1784 = vmatpush1.bf16.msra.mxu0 %v1301
    %1785 = vmatprep.subr.bf16.mxu0 %v1306
    %1786 = vmatpush1.bf16.msra.mxu0 %v1305
    %1787 = vmatprep.subr.bf16.mxu0 %v1310
    %1788 = vmatpush1.bf16.msra.mxu0 %v1309
    %1789 = vmatprep.subr.bf16.mxu0 %v1314
    %1790 = vmatpush1.bf16.msra.mxu0 %v1313
    %1791 = vmatprep.subr.bf16.mxu0 %v1318
    %1792 = vmatpush1.bf16.msra.mxu0 %v1317
    %1793 = vmatprep.subr.bf16.mxu0 %v1322
    %1794 = vmatpush1.bf16.msra.mxu0 %v1321
    %1795 = vmatprep.subr.bf16.mxu0 %v1326
    %1796 = vmatpush1.bf16.msra.mxu0 %v1325
    %1797 = vmatprep.subr.bf16.mxu0 %v1330
    %1798 = vmatpush1.bf16.msra.mxu0 %v1329
    %1799 = vmatprep.subr.bf16.mxu0 %v1334
    %1800 = vmatpush1.bf16.msra.mxu0 %v1333
    %1801 = vmatprep.subr.bf16.mxu0 %v1338
    %1802 = vmatpush1.bf16.msra.mxu0 %v1337
    %1803 = vmatprep.subr.bf16.mxu0 %v1342
    %1804 = vmatpush1.bf16.msra.mxu0 %v1341
    %1805 = vmatprep.subr.bf16.mxu0 %v1346
    %1806 = vmatpush1.bf16.msra.mxu0 %v1345
    %1807 = vmatprep.subr.bf16.mxu0 %v1350
    %1808 = vmatpush1.bf16.msra.mxu0 %v1349
    %1809 = vmatprep.subr.bf16.mxu0 %v1354
    %1810 = vmatpush1.bf16.msra.mxu0 %v1353
    %1811 = vmatprep.subr.bf16.mxu0 %v1358
    %1812 = vmatpush1.bf16.msra.mxu0 %v1357
    %1813 = vmatprep.subr.bf16.mxu0 %v1362
    %1814 = vmatpush1.bf16.msra.mxu0 %v1361
    %1815 = vmatprep.mubr.bf16.mxu0 %v353
    %1816 = vmatmul.mubr.bf16.gmra.mrb[0].mxu0 %v352
    %v1817 = vpop.f32.mrb[0].mxu0
    %v1818 = vadd.f32 %v1777, %v1817
    %v1819 = vpop.f32.mrb[0].mxu0
    %v1820 = vadd.f32 %v1779, %v1819
    %v1821 = vpop.f32.mrb[0].mxu0
    %v1822 = vpop.f32.mrb[0].mxu0
    %1823 = vdwg.mxu0
    %1824 = vmatprep.subr.bf16.mxu0 %v1366
    %1825 = vmatpush1.bf16.msra.mxu0 %v1365
    %1826 = vmatprep.subr.bf16.mxu0 %v1370
    %1827 = vmatpush1.bf16.msra.mxu0 %v1369
    %1828 = vmatprep.subr.bf16.mxu0 %v1374
    %1829 = vmatpush1.bf16.msra.mxu0 %v1373
    %1830 = vmatprep.subr.bf16.mxu0 %v1378
    %1831 = vmatpush1.bf16.msra.mxu0 %v1377
    %1832 = vmatprep.subr.bf16.mxu0 %v1382
    %1833 = vmatpush1.bf16.msra.mxu0 %v1381
    %1834 = vmatprep.subr.bf16.mxu0 %v1386
    %1835 = vmatpush1.bf16.msra.mxu0 %v1385
    %1836 = vmatprep.subr.bf16.mxu0 %v1390
    %1837 = vmatpush1.bf16.msra.mxu0 %v1389
    %1838 = vmatprep.subr.bf16.mxu0 %v1394
    %1839 = vmatpush1.bf16.msra.mxu0 %v1393
    %1840 = vmatprep.subr.bf16.mxu0 %v1398
    %1841 = vmatpush1.bf16.msra.mxu0 %v1397
    %1842 = vmatprep.subr.bf16.mxu0 %v1402
    %1843 = vmatpush1.bf16.msra.mxu0 %v1401
    %1844 = vmatprep.subr.bf16.mxu0 %v1406
    %1845 = vmatpush1.bf16.msra.mxu0 %v1405
    %1846 = vmatprep.subr.bf16.mxu0 %v1410
    %1847 = vmatpush1.bf16.msra.mxu0 %v1409
    %1848 = vmatprep.subr.bf16.mxu0 %v1414
    %1849 = vmatpush1.bf16.msra.mxu0 %v1413
    %1850 = vmatprep.subr.bf16.mxu0 %v1418
    %1851 = vmatpush1.bf16.msra.mxu0 %v1417
    %1852 = vmatprep.subr.bf16.mxu0 %v1422
    %1853 = vmatpush1.bf16.msra.mxu0 %v1421
    %1854 = vmatprep.subr.bf16.mxu0 %v1426
    %1855 = vmatpush1.bf16.msra.mxu0 %v1425
    %1856 = vmatprep.mubr.bf16.mxu0 %v466
    %1857 = vmatmul.mubr.bf16.gmra.mrb[0].mxu0 %v465
    %v1858 = vpop.f32.mrb[0].mxu0
    %v1859 = vadd.f32 %v1818, %v1858
    %v1860 = vpop.f32.mrb[0].mxu0
    %v1861 = vadd.f32 %v1820, %v1860
    %v1862 = vpop.f32.mrb[0].mxu0
    %v1863 = vpop.f32.mrb[0].mxu0
    %1864 = vdwg.mxu0
    %v1865 = vld [vmem:[#allocation11 + $0x4] sm:$0xf]
    %v1866 = vld [vmem:[#allocation11 + $0x8] sm:$0xf]
    %v1868 = vlaneseq
    %v1869 = vshrl.u32 %v1868, 7
    %v1870 = vsub.s32 0, %v1869
    %v1871 = vrot.slane %v1865, %v1870
    %v1872 = vlaneseq
    %v1873 = vshrl.u32 %v1872, 7
    %v1874 = vsub.s32 1, %v1873
    %v1875 = vrot.slane %v1865, %v1874
    %v1876 = vlaneseq
    %v1877 = vshrl.u32 %v1876, 7
    %v1878 = vsub.s32 2, %v1877
    %v1879 = vrot.slane %v1865, %v1878
    %v1880 = vlaneseq
    %v1881 = vshrl.u32 %v1880, 7
    %v1882 = vsub.s32 3, %v1881
    %v1883 = vrot.slane %v1865, %v1882
    %v1888 = vmul.f32 %v1736, %v1871
    %v1889 = vmul.f32 %v1738, %v1875
    %v1890 = vmul.f32 %v1859, %v1879
    %v1891 = vmul.f32 %v1861, %v1883
    %v1893 = vlaneseq
    %v1894 = vshrl.u32 %v1893, 7
    %v1895 = vsub.s32 0, %v1894
    %v1896 = vrot.slane %v1866, %v1895
    %v1897 = vlaneseq
    %v1898 = vshrl.u32 %v1897, 7
    %v1899 = vsub.s32 1, %v1898
    %v1900 = vrot.slane %v1866, %v1899
    %v1901 = vlaneseq
    %v1902 = vshrl.u32 %v1901, 7
    %v1903 = vsub.s32 2, %v1902
    %v1904 = vrot.slane %v1866, %v1903
    %v1905 = vlaneseq
    %v1906 = vshrl.u32 %v1905, 7
    %v1907 = vsub.s32 3, %v1906
    %v1908 = vrot.slane %v1866, %v1907
    %v1913 = vadd.f32 %v1888, %v1896
    %v1914 = vadd.f32 %v1889, %v1900
    %v1915 = vadd.f32 %v1890, %v1904
    %v1916 = vadd.f32 %v1891, %v1908
    %v1917 = vmax.f32 %v1913, 0.0
    %v1918 = vmax.f32 %v1914, 0.0
    %v1919 = vmax.f32 %v1915, 0.0
    %v1920 = vmax.f32 %v1916, 0.0
    %v1921 = vpack.c.bf16 %v1917, %v1917
    %v1922 = vpack.c.bf16 %v1918, %v1918
    %v1923 = vpack.c.bf16 %v1919, %v1919
    %v1924 = vpack.c.bf16 %v1920, %v1920
    %v1925 = vsel %vm367, %v256, 0
    %v1928 = vsel %vm371, %v1921, 0
    %v1931 = vsel %vm371, %v1922, 0
    %v1934 = vsel %vm371, %v1923, 0
    %v1937 = vsel %vm371, %v1924, 0
    %1939 = vmatprep.subr.bf16.mxu0 %v1931
    %1940 = vmatpush1.bf16.msra.mxu0 %v1928
    %1941 = vmatprep.subr.bf16.mxu0 0
    %1942 = vmatpush1.bf16.msra.mxu0 0
    %1943 = vmatprep.subr.bf16.mxu0 0
    %1944 = vmatpush1.bf16.msra.mxu0 0
    %1945 = vmatprep.subr.bf16.mxu0 0
    %1946 = vmatpush1.bf16.msra.mxu0 0
    %1947 = vmatprep.subr.bf16.mxu0 0
    %1948 = vmatpush1.bf16.msra.mxu0 0
    %1949 = vmatprep.subr.bf16.mxu0 0
    %1950 = vmatpush1.bf16.msra.mxu0 0
    %1951 = vmatprep.subr.bf16.mxu0 0
    %1952 = vmatpush1.bf16.msra.mxu0 0
    %1953 = vmatprep.subr.bf16.mxu0 0
    %1954 = vmatpush1.bf16.msra.mxu0 0
    %1955 = vmatprep.subr.bf16.mxu0 0
    %1956 = vmatpush1.bf16.msra.mxu0 0
    %1957 = vmatprep.subr.bf16.mxu0 0
    %1958 = vmatpush1.bf16.msra.mxu0 0
    %1959 = vmatprep.subr.bf16.mxu0 0
    %1960 = vmatpush1.bf16.msra.mxu0 0
    %1961 = vmatprep.subr.bf16.mxu0 0
    %1962 = vmatpush1.bf16.msra.mxu0 0
    %1963 = vmatprep.subr.bf16.mxu0 0
    %1964 = vmatpush1.bf16.msra.mxu0 0
    %1965 = vmatprep.subr.bf16.mxu0 0
    %1966 = vmatpush1.bf16.msra.mxu0 0
    %1967 = vmatprep.subr.bf16.mxu0 0
    %1968 = vmatpush1.bf16.msra.mxu0 0
    %1969 = vmatprep.subr.bf16.mxu0 0
    %1970 = vmatpush1.bf16.msra.mxu0 0
    %1971 = vmatprep.mubr.bf16.mxu0 0
    %1972 = vmatmul.mubr.bf16.gmra.mrb[0].mxu0 %v1925
    %v1973 = vpop.f32.mrb[0].mxu0
    %v1974 = vadd.f32 0.0, %v1973
    %v1975 = vpop.f32.mrb[0].mxu0
    %v1976 = vadd.f32 0.0, %v1975
    %v1977 = vpop.f32.mrb[0].mxu0
    %v1978 = vpop.f32.mrb[0].mxu0
    %1979 = vdwg.mxu0
    %1980 = vmatprep.subr.bf16.mxu0 %v1937
    %1981 = vmatpush1.bf16.msra.mxu0 %v1934
    %1982 = vmatprep.subr.bf16.mxu0 0
    %1983 = vmatpush1.bf16.msra.mxu0 0
    %1984 = vmatprep.subr.bf16.mxu0 0
    %1985 = vmatpush1.bf16.msra.mxu0 0
    %1986 = vmatprep.subr.bf16.mxu0 0
    %1987 = vmatpush1.bf16.msra.mxu0 0
    %1988 = vmatprep.subr.bf16.mxu0 0
    %1989 = vmatpush1.bf16.msra.mxu0 0
    %1990 = vmatprep.subr.bf16.mxu0 0
    %1991 = vmatpush1.bf16.msra.mxu0 0
    %1992 = vmatprep.subr.bf16.mxu0 0
    %1993 = vmatpush1.bf16.msra.mxu0 0
    %1994 = vmatprep.subr.bf16.mxu0 0
    %1995 = vmatpush1.bf16.msra.mxu0 0
    %1996 = vmatprep.subr.bf16.mxu0 0
    %1997 = vmatpush1.bf16.msra.mxu0 0
    %1998 = vmatprep.subr.bf16.mxu0 0
    %1999 = vmatpush1.bf16.msra.mxu0 0
    %2000 = vmatprep.subr.bf16.mxu0 0
    %2001 = vmatpush1.bf16.msra.mxu0 0
    %2002 = vmatprep.subr.bf16.mxu0 0
    %2003 = vmatpush1.bf16.msra.mxu0 0
    %2004 = vmatprep.subr.bf16.mxu0 0
    %2005 = vmatpush1.bf16.msra.mxu0 0
    %2006 = vmatprep.subr.bf16.mxu0 0
    %2007 = vmatpush1.bf16.msra.mxu0 0
    %2008 = vmatprep.subr.bf16.mxu0 0
    %2009 = vmatpush1.bf16.msra.mxu0 0
    %2010 = vmatprep.subr.bf16.mxu0 0
    %2011 = vmatpush1.bf16.msra.mxu0 0
    %2012 = vmatprep.mubr.bf16.mxu0 0
    %2013 = vmatmul.mubr.bf16.gmra.mrb[0].mxu0 %v1925
    %v2014 = vpop.f32.mrb[0].mxu0
    %v2015 = vadd.f32 0.0, %v2014
    %v2016 = vpop.f32.mrb[0].mxu0
    %v2017 = vadd.f32 0.0, %v2016
    %v2018 = vpop.f32.mrb[0].mxu0
    %v2019 = vpop.f32.mrb[0].mxu0
    %2020 = vdwg.mxu0
    %v2021 = vsel %vm367, %v260, 0
    %2023 = vmatprep.subr.bf16.mxu0 %v1931
    %2024 = vmatpush1.bf16.msra.mxu0 %v1928
    %2025 = vmatprep.subr.bf16.mxu0 0
    %2026 = vmatpush1.bf16.msra.mxu0 0
    %2027 = vmatprep.subr.bf16.mxu0 0
    %2028 = vmatpush1.bf16.msra.mxu0 0
    %2029 = vmatprep.subr.bf16.mxu0 0
    %2030 = vmatpush1.bf16.msra.mxu0 0
    %2031 = vmatprep.subr.bf16.mxu0 0
    %2032 = vmatpush1.bf16.msra.mxu0 0
    %2033 = vmatprep.subr.bf16.mxu0 0
    %2034 = vmatpush1.bf16.msra.mxu0 0
    %2035 = vmatprep.subr.bf16.mxu0 0
    %2036 = vmatpush1.bf16.msra.mxu0 0
    %2037 = vmatprep.subr.bf16.mxu0 0
    %2038 = vmatpush1.bf16.msra.mxu0 0
    %2039 = vmatprep.subr.bf16.mxu0 0
    %2040 = vmatpush1.bf16.msra.mxu0 0
    %2041 = vmatprep.subr.bf16.mxu0 0
    %2042 = vmatpush1.bf16.msra.mxu0 0
    %2043 = vmatprep.subr.bf16.mxu0 0
    %2044 = vmatpush1.bf16.msra.mxu0 0
    %2045 = vmatprep.subr.bf16.mxu0 0
    %2046 = vmatpush1.bf16.msra.mxu0 0
    %2047 = vmatprep.subr.bf16.mxu0 0
    %2048 = vmatpush1.bf16.msra.mxu0 0
    %2049 = vmatprep.subr.bf16.mxu0 0
    %2050 = vmatpush1.bf16.msra.mxu0 0
    %2051 = vmatprep.subr.bf16.mxu0 0
    %2052 = vmatpush1.bf16.msra.mxu0 0
    %2053 = vmatprep.subr.bf16.mxu0 0
    %2054 = vmatpush1.bf16.msra.mxu0 0
    %2055 = vmatprep.mubr.bf16.mxu0 0
    %2056 = vmatmul.mubr.bf16.gmra.mrb[0].mxu0 %v2021
    %v2057 = vpop.f32.mrb[0].mxu0
    %v2058 = vadd.f32 0.0, %v2057
    %v2059 = vpop.f32.mrb[0].mxu0
    %v2060 = vadd.f32 0.0, %v2059
    %v2061 = vpop.f32.mrb[0].mxu0
    %v2062 = vpop.f32.mrb[0].mxu0
    %2063 = vdwg.mxu0
    %2064 = vmatprep.subr.bf16.mxu0 %v1937
    %2065 = vmatpush1.bf16.msra.mxu0 %v1934
    %2066 = vmatprep.subr.bf16.mxu0 0
    %2067 = vmatpush1.bf16.msra.mxu0 0
    %2068 = vmatprep.subr.bf16.mxu0 0
    %2069 = vmatpush1.bf16.msra.mxu0 0
    %2070 = vmatprep.subr.bf16.mxu0 0
    %2071 = vmatpush1.bf16.msra.mxu0 0
    %2072 = vmatprep.subr.bf16.mxu0 0
    %2073 = vmatpush1.bf16.msra.mxu0 0
    %2074 = vmatprep.subr.bf16.mxu0 0
    %2075 = vmatpush1.bf16.msra.mxu0 0
    %2076 = vmatprep.subr.bf16.mxu0 0
    %2077 = vmatpush1.bf16.msra.mxu0 0
    %2078 = vmatprep.subr.bf16.mxu0 0
    %2079 = vmatpush1.bf16.msra.mxu0 0
    %2080 = vmatprep.subr.bf16.mxu0 0
    %2081 = vmatpush1.bf16.msra.mxu0 0
    %2082 = vmatprep.subr.bf16.mxu0 0
    %2083 = vmatpush1.bf16.msra.mxu0 0
    %2084 = vmatprep.subr.bf16.mxu0 0
    %2085 = vmatpush1.bf16.msra.mxu0 0
    %2086 = vmatprep.subr.bf16.mxu0 0
    %2087 = vmatpush1.bf16.msra.mxu0 0
    %2088 = vmatprep.subr.bf16.mxu0 0
    %2089 = vmatpush1.bf16.msra.mxu0 0
    %2090 = vmatprep.subr.bf16.mxu0 0
    %2091 = vmatpush1.bf16.msra.mxu0 0
    %2092 = vmatprep.subr.bf16.mxu0 0
    %2093 = vmatpush1.bf16.msra.mxu0 0
    %2094 = vmatprep.subr.bf16.mxu0 0
    %2095 = vmatpush1.bf16.msra.mxu0 0
    %2096 = vmatprep.mubr.bf16.mxu0 0
    %2097 = vmatmul.mubr.bf16.gmra.mrb[0].mxu0 %v2021
    %v2098 = vpop.f32.mrb[0].mxu0
    %v2099 = vadd.f32 0.0, %v2098
    %v2100 = vpop.f32.mrb[0].mxu0
    %v2101 = vadd.f32 0.0, %v2100
    %v2102 = vpop.f32.mrb[0].mxu0
    %v2103 = vpop.f32.mrb[0].mxu0
    %2104 = vdwg.mxu0
    %v2105 = vmax.f32 %v1974, %v2058
    %v2106 = vmax.f32 %v1976, %v2060
    %v2107 = vmax.f32 %v2015, %v2099
    %v2108 = vmax.f32 %v2017, %v2101
    %v2109 = vpack.c.bf16 %v2105, %v2105
    %v2110 = vpack.c.bf16 %v2106, %v2106
    %v2111 = vpack.c.bf16 %v2107, %v2107
    %v2112 = vpack.c.bf16 %v2108, %v2108
    %s2113 = smul.u32 4, 192
    %s2114 = smul.u32 %s2113, 8
    %s2115 = sshll.u32 %s2114, 4
    %2116 = dma.done [#allocation5], %s2115
    %v2117 = vand.u32 %v250, 1
    %vm2118 = vcmp.ne.s32.totalorder %v2117, 0
    %vm2119 = vmand %vm355, %vm2118
    %v2120 = vsel %vm2119, 1.0, 0.0
    %v2121 = vpack.c.bf16 %v2120, %v2120
    %vm2122 = vcmp.ne.s32.totalorder %v2117, 1
    %vm2123 = vmand %vm362, %vm2122
    %v2124 = vsel %vm2123, 1.0, 0.0
    %v2125 = vpack.c.bf16 %v2124, %v2124
    %vm2126 = vcmask 31744
    %v2128 = vsel %vm2126, %v2121, 0
    %v2131 = vsel %vm159, %v2109, 0
    %v2134 = vsel %vm159, %v2110, 0
    %v2137 = vsel %vm159, %v2111, 0
    %v2140 = vsel %vm159, %v2112, 0
    %2142 = vmatprep.subr.bf16.mxu0 %v2134
    %2143 = vmatpush1.bf16.msra.mxu0 %v2131
    %2144 = vmatprep.subr.bf16.mxu0 0
    %2145 = vmatpush1.bf16.msra.mxu0 0
    %2146 = vmatprep.subr.bf16.mxu0 0
    %2147 = vmatpush1.bf16.msra.mxu0 0
    %2148 = vmatprep.subr.bf16.mxu0 0
    %2149 = vmatpush1.bf16.msra.mxu0 0
    %2150 = vmatprep.subr.bf16.mxu0 0
    %2151 = vmatpush1.bf16.msra.mxu0 0
    %2152 = vmatprep.subr.bf16.mxu0 0
    %2153 = vmatpush1.bf16.msra.mxu0 0
    %2154 = vmatprep.subr.bf16.mxu0 0
    %2155 = vmatpush1.bf16.msra.mxu0 0
    %2156 = vmatprep.subr.bf16.mxu0 0
    %2157 = vmatpush1.bf16.msra.mxu0 0
    %2158 = vmatprep.subr.bf16.mxu0 0
    %2159 = vmatpush1.bf16.msra.mxu0 0
    %2160 = vmatprep.subr.bf16.mxu0 0
    %2161 = vmatpush1.bf16.msra.mxu0 0
    %2162 = vmatprep.subr.bf16.mxu0 0
    %2163 = vmatpush1.bf16.msra.mxu0 0
    %2164 = vmatprep.subr.bf16.mxu0 0
    %2165 = vmatpush1.bf16.msra.mxu0 0
    %2166 = vmatprep.subr.bf16.mxu0 0
    %2167 = vmatpush1.bf16.msra.mxu0 0
    %2168 = vmatprep.subr.bf16.mxu0 0
    %2169 = vmatpush1.bf16.msra.mxu0 0
    %2170 = vmatprep.subr.bf16.mxu0 0
    %2171 = vmatpush1.bf16.msra.mxu0 0
    %2172 = vmatprep.subr.bf16.mxu0 0
    %2173 = vmatpush1.bf16.msra.mxu0 0
    %2174 = vmatprep.mubr.bf16.mxu0 0
    %2175 = vmatmul.mubr.bf16.gmra.mrb[0].mxu0 %v2128
    %v2176 = vpop.f32.mrb[0].mxu0
    %v2177 = vadd.f32 0.0, %v2176
    %v2178 = vpop.f32.mrb[0].mxu0
    %v2179 = vadd.f32 0.0, %v2178
    %v2180 = vpop.f32.mrb[0].mxu0
    %v2181 = vpop.f32.mrb[0].mxu0
    %2182 = vdwg.mxu0
    %2183 = vmatprep.subr.bf16.mxu0 %v2140
    %2184 = vmatpush1.bf16.msra.mxu0 %v2137
    %2185 = vmatprep.subr.bf16.mxu0 0
    %2186 = vmatpush1.bf16.msra.mxu0 0
    %2187 = vmatprep.subr.bf16.mxu0 0
    %2188 = vmatpush1.bf16.msra.mxu0 0
    %2189 = vmatprep.subr.bf16.mxu0 0
    %2190 = vmatpush1.bf16.msra.mxu0 0
    %2191 = vmatprep.subr.bf16.mxu0 0
    %2192 = vmatpush1.bf16.msra.mxu0 0
    %2193 = vmatprep.subr.bf16.mxu0 0
    %2194 = vmatpush1.bf16.msra.mxu0 0
    %2195 = vmatprep.subr.bf16.mxu0 0
    %2196 = vmatpush1.bf16.msra.mxu0 0
    %2197 = vmatprep.subr.bf16.mxu0 0
    %2198 = vmatpush1.bf16.msra.mxu0 0
    %2199 = vmatprep.subr.bf16.mxu0 0
    %2200 = vmatpush1.bf16.msra.mxu0 0
    %2201 = vmatprep.subr.bf16.mxu0 0
    %2202 = vmatpush1.bf16.msra.mxu0 0
    %2203 = vmatprep.subr.bf16.mxu0 0
    %2204 = vmatpush1.bf16.msra.mxu0 0
    %2205 = vmatprep.subr.bf16.mxu0 0
    %2206 = vmatpush1.bf16.msra.mxu0 0
    %2207 = vmatprep.subr.bf16.mxu0 0
    %2208 = vmatpush1.bf16.msra.mxu0 0
    %2209 = vmatprep.subr.bf16.mxu0 0
    %2210 = vmatpush1.bf16.msra.mxu0 0
    %2211 = vmatprep.subr.bf16.mxu0 0
    %2212 = vmatpush1.bf16.msra.mxu0 0
    %2213 = vmatprep.subr.bf16.mxu0 0
    %2214 = vmatpush1.bf16.msra.mxu0 0
    %2215 = vmatprep.mubr.bf16.mxu0 0
    %2216 = vmatmul.mubr.bf16.gmra.mrb[0].mxu0 %v2128
    %v2217 = vpop.f32.mrb[0].mxu0
    %v2218 = vadd.f32 0.0, %v2217
    %v2219 = vpop.f32.mrb[0].mxu0
    %v2220 = vadd.f32 0.0, %v2219
    %v2221 = vpop.f32.mrb[0].mxu0
    %v2222 = vpop.f32.mrb[0].mxu0
    %2223 = vdwg.mxu0
    %v2224 = vpack.c.bf16 %v2177, %v2177
    %v2225 = vpack.c.bf16 %v2179, %v2179
    %v2226 = vpack.c.bf16 %v2218, %v2218
    %v2227 = vpack.c.bf16 %v2220, %v2220
    %v2229 = vsel %vm2126, %v2125, 0
    %2231 = vmatprep.subr.bf16.mxu0 %v2134
    %2232 = vmatpush1.bf16.msra.mxu0 %v2131
    %2233 = vmatprep.subr.bf16.mxu0 0
    %2234 = vmatpush1.bf16.msra.mxu0 0
    %2235 = vmatprep.subr.bf16.mxu0 0
    %2236 = vmatpush1.bf16.msra.mxu0 0
    %2237 = vmatprep.subr.bf16.mxu0 0
    %2238 = vmatpush1.bf16.msra.mxu0 0
    %2239 = vmatprep.subr.bf16.mxu0 0
    %2240 = vmatpush1.bf16.msra.mxu0 0
    %2241 = vmatprep.subr.bf16.mxu0 0
    %2242 = vmatpush1.bf16.msra.mxu0 0
    %2243 = vmatprep.subr.bf16.mxu0 0
    %2244 = vmatpush1.bf16.msra.mxu0 0
    %2245 = vmatprep.subr.bf16.mxu0 0
    %2246 = vmatpush1.bf16.msra.mxu0 0
    %2247 = vmatprep.subr.bf16.mxu0 0
    %2248 = vmatpush1.bf16.msra.mxu0 0
    %2249 = vmatprep.subr.bf16.mxu0 0
    %2250 = vmatpush1.bf16.msra.mxu0 0
    %2251 = vmatprep.subr.bf16.mxu0 0
    %2252 = vmatpush1.bf16.msra.mxu0 0
    %2253 = vmatprep.subr.bf16.mxu0 0
    %2254 = vmatpush1.bf16.msra.mxu0 0
    %2255 = vmatprep.subr.bf16.mxu0 0
    %2256 = vmatpush1.bf16.msra.mxu0 0
    %2257 = vmatprep.subr.bf16.mxu0 0
    %2258 = vmatpush1.bf16.msra.mxu0 0
    %2259 = vmatprep.subr.bf16.mxu0 0
    %2260 = vmatpush1.bf16.msra.mxu0 0
    %2261 = vmatprep.subr.bf16.mxu0 0
    %2262 = vmatpush1.bf16.msra.mxu0 0
    %2263 = vmatprep.mubr.bf16.mxu0 0
    %2264 = vmatmul.mubr.bf16.gmra.mrb[0].mxu0 %v2229
    %v2265 = vpop.f32.mrb[0].mxu0
    %v2266 = vadd.f32 0.0, %v2265
    %v2267 = vpop.f32.mrb[0].mxu0
    %v2268 = vadd.f32 0.0, %v2267
    %v2269 = vpop.f32.mrb[0].mxu0
    %v2270 = vpop.f32.mrb[0].mxu0
    %2271 = vdwg.mxu0
    %2272 = vmatprep.subr.bf16.mxu0 %v2140
    %2273 = vmatpush1.bf16.msra.mxu0 %v2137
    %2274 = vmatprep.subr.bf16.mxu0 0
    %2275 = vmatpush1.bf16.msra.mxu0 0
    %2276 = vmatprep.subr.bf16.mxu0 0
    %2277 = vmatpush1.bf16.msra.mxu0 0
    %2278 = vmatprep.subr.bf16.mxu0 0
    %2279 = vmatpush1.bf16.msra.mxu0 0
    %2280 = vmatprep.subr.bf16.mxu0 0
    %2281 = vmatpush1.bf16.msra.mxu0 0
    %2282 = vmatprep.subr.bf16.mxu0 0
    %2283 = vmatpush1.bf16.msra.mxu0 0
    %2284 = vmatprep.subr.bf16.mxu0 0
    %2285 = vmatpush1.bf16.msra.mxu0 0
    %2286 = vmatprep.subr.bf16.mxu0 0
    %2287 = vmatpush1.bf16.msra.mxu0 0
    %2288 = vmatprep.subr.bf16.mxu0 0
    %2289 = vmatpush1.bf16.msra.mxu0 0
    %2290 = vmatprep.subr.bf16.mxu0 0
    %2291 = vmatpush1.bf16.msra.mxu0 0
    %2292 = vmatprep.subr.bf16.mxu0 0
    %2293 = vmatpush1.bf16.msra.mxu0 0
    %2294 = vmatprep.subr.bf16.mxu0 0
    %2295 = vmatpush1.bf16.msra.mxu0 0
    %2296 = vmatprep.subr.bf16.mxu0 0
    %2297 = vmatpush1.bf16.msra.mxu0 0
    %2298 = vmatprep.subr.bf16.mxu0 0
    %2299 = vmatpush1.bf16.msra.mxu0 0
    %2300 = vmatprep.subr.bf16.mxu0 0
    %2301 = vmatpush1.bf16.msra.mxu0 0
    %2302 = vmatprep.subr.bf16.mxu0 0
    %2303 = vmatpush1.bf16.msra.mxu0 0
    %2304 = vmatprep.mubr.bf16.mxu0 0
    %2305 = vmatmul.mubr.bf16.gmra.mrb[0].mxu0 %v2229
    %v2306 = vpop.f32.mrb[0].mxu0
    %v2307 = vadd.f32 0.0, %v2306
    %v2308 = vpop.f32.mrb[0].mxu0
    %v2309 = vadd.f32 0.0, %v2308
    %v2310 = vpop.f32.mrb[0].mxu0
    %v2311 = vpop.f32.mrb[0].mxu0
    %2312 = vdwg.mxu0
    %v2313 = vpack.c.bf16 %v2266, %v2266
    %v2314 = vpack.c.bf16 %v2268, %v2268
    %v2315 = vpack.c.bf16 %v2307, %v2307
    %v2316 = vpack.c.bf16 %v2309, %v2309
    %v2317 = vld [vmem:[#allocation2] sm:$0xff]
    %v2318 = vld [vmem:[#allocation2 + $0x8] sm:$0xff]
    %v2319 = vld [vmem:[#allocation2 + $0x10] sm:$0xff]
    %v2320 = vld [vmem:[#allocation2 + $0x18] sm:$0xff]
    %v2321 = vld [vmem:[#allocation2 + $0x20] sm:$0xff]
    %v2322 = vld [vmem:[#allocation2 + $0x28] sm:$0xff]
    %v2323 = vld [vmem:[#allocation2 + $0x30] sm:$0xff]
    %v2324 = vld [vmem:[#allocation2 + $0x38] sm:$0xff]
    %v2325 = vld [vmem:[#allocation2 + $0x40] sm:$0xff]
    %v2326 = vld [vmem:[#allocation2 + $0x48] sm:$0xff]
    %v2327 = vld [vmem:[#allocation2 + $0x50] sm:$0xff]
    %v2328 = vld [vmem:[#allocation2 + $0x58] sm:$0xff]
    %v2329 = vld [vmem:[#allocation2 + $0x60] sm:$0xff]
    %v2330 = vld [vmem:[#allocation2 + $0x68] sm:$0xff]
    %v2331 = vld [vmem:[#allocation2 + $0x70] sm:$0xff]
    %v2332 = vld [vmem:[#allocation2 + $0x78] sm:$0xff]
    %v2333 = vld [vmem:[#allocation2 + $0x80] sm:$0xff]
    %v2334 = vld [vmem:[#allocation2 + $0x88] sm:$0xff]
    %v2335 = vld [vmem:[#allocation2 + $0x90] sm:$0xff]
    %v2336 = vld [vmem:[#allocation2 + $0x98] sm:$0xff]
    %v2337 = vld [vmem:[#allocation2 + $0xa0] sm:$0xff]
    %v2338 = vld [vmem:[#allocation2 + $0xa8] sm:$0xff]
    %v2339 = vld [vmem:[#allocation2 + $0xb0] sm:$0xff]
    %v2340 = vld [vmem:[#allocation2 + $0xb8] sm:$0xff]
    %v2341 = vld [vmem:[#allocation2 + $0xc0] sm:$0xff]
    %v2342 = vld [vmem:[#allocation2 + $0xc8] sm:$0xff]
    %v2343 = vld [vmem:[#allocation2 + $0xd0] sm:$0xff]
    %v2344 = vld [vmem:[#allocation2 + $0xd8] sm:$0xff]
    %v2345 = vld [vmem:[#allocation2 + $0xe0] sm:$0xff]
    %v2346 = vld [vmem:[#allocation2 + $0xe8] sm:$0xff]
    %v2347 = vld [vmem:[#allocation2 + $0xf0] sm:$0xff]
    %v2348 = vld [vmem:[#allocation2 + $0xf8] sm:$0xff]
    %v2349 = vld [vmem:[#allocation2 + $0x100] sm:$0xff]
    %v2350 = vld [vmem:[#allocation2 + $0x108] sm:$0xff]
    %v2351 = vld [vmem:[#allocation2 + $0x110] sm:$0xff]
    %v2352 = vld [vmem:[#allocation2 + $0x118] sm:$0xff]
    %v2353 = vld [vmem:[#allocation2 + $0x120] sm:$0xff]
    %v2354 = vld [vmem:[#allocation2 + $0x128] sm:$0xff]
    %v2355 = vld [vmem:[#allocation2 + $0x130] sm:$0xff]
    %v2356 = vld [vmem:[#allocation2 + $0x138] sm:$0xff]
    %v2357 = vld [vmem:[#allocation2 + $0x140] sm:$0xff]
    %v2358 = vld [vmem:[#allocation2 + $0x148] sm:$0xff]
    %v2359 = vld [vmem:[#allocation2 + $0x150] sm:$0xff]
    %v2360 = vld [vmem:[#allocation2 + $0x158] sm:$0xff]
    %v2361 = vld [vmem:[#allocation2 + $0x160] sm:$0xff]
    %v2362 = vld [vmem:[#allocation2 + $0x168] sm:$0xff]
    %v2363 = vld [vmem:[#allocation2 + $0x170] sm:$0xff]
    %v2364 = vld [vmem:[#allocation2 + $0x178] sm:$0xff]
    %v2365 = vld [vmem:[#allocation2 + $0x180] sm:$0xff]
    %v2366 = vld [vmem:[#allocation2 + $0x188] sm:$0xff]
    %v2367 = vld [vmem:[#allocation2 + $0x190] sm:$0xff]
    %v2368 = vld [vmem:[#allocation2 + $0x198] sm:$0xff]
    %v2369 = vld [vmem:[#allocation2 + $0x1a0] sm:$0xff]
    %v2370 = vld [vmem:[#allocation2 + $0x1a8] sm:$0xff]
    %v2371 = vld [vmem:[#allocation2 + $0x1b0] sm:$0xff]
    %v2372 = vld [vmem:[#allocation2 + $0x1b8] sm:$0xff]
    %v2373 = vld [vmem:[#allocation2 + $0x1c0] sm:$0xff]
    %v2374 = vld [vmem:[#allocation2 + $0x1c8] sm:$0xff]
    %v2375 = vld [vmem:[#allocation2 + $0x1d0] sm:$0xff]
    %v2376 = vld [vmem:[#allocation2 + $0x1d8] sm:$0xff]
    %v2377 = vld [vmem:[#allocation2 + $0x1e0] sm:$0xff]
    %v2378 = vld [vmem:[#allocation2 + $0x1e8] sm:$0xff]
    %v2379 = vld [vmem:[#allocation2 + $0x1f0] sm:$0xff]
    %v2380 = vld [vmem:[#allocation2 + $0x1f8] sm:$0xff]
    %v2381 = vld [vmem:[#allocation2 + $0x200] sm:$0xff]
    %v2382 = vld [vmem:[#allocation2 + $0x208] sm:$0xff]
    %v2383 = vld [vmem:[#allocation2 + $0x210] sm:$0xff]
    %v2384 = vld [vmem:[#allocation2 + $0x218] sm:$0xff]
    %v2385 = vld [vmem:[#allocation2 + $0x220] sm:$0xff]
    %v2386 = vld [vmem:[#allocation2 + $0x228] sm:$0xff]
    %v2387 = vld [vmem:[#allocation2 + $0x230] sm:$0xff]
    %v2388 = vld [vmem:[#allocation2 + $0x238] sm:$0xff]
    %v2389 = vld [vmem:[#allocation2 + $0x240] sm:$0xff]
    %v2390 = vld [vmem:[#allocation2 + $0x248] sm:$0xff]
    %v2391 = vld [vmem:[#allocation2 + $0x250] sm:$0xff]
    %v2392 = vld [vmem:[#allocation2 + $0x258] sm:$0xff]
    %v2393 = vld [vmem:[#allocation2 + $0x260] sm:$0xff]
    %v2394 = vld [vmem:[#allocation2 + $0x268] sm:$0xff]
    %v2395 = vld [vmem:[#allocation2 + $0x270] sm:$0xff]
    %v2396 = vld [vmem:[#allocation2 + $0x278] sm:$0xff]
    %v2397 = vld [vmem:[#allocation2 + $0x280] sm:$0xff]
    %v2398 = vld [vmem:[#allocation2 + $0x288] sm:$0xff]
    %v2399 = vld [vmem:[#allocation2 + $0x290] sm:$0xff]
    %v2400 = vld [vmem:[#allocation2 + $0x298] sm:$0xff]
    %v2401 = vld [vmem:[#allocation2 + $0x2a0] sm:$0xff]
    %v2402 = vld [vmem:[#allocation2 + $0x2a8] sm:$0xff]
    %v2403 = vld [vmem:[#allocation2 + $0x2b0] sm:$0xff]
    %v2404 = vld [vmem:[#allocation2 + $0x2b8] sm:$0xff]
    %v2405 = vld [vmem:[#allocation2 + $0x2c0] sm:$0xff]
    %v2406 = vld [vmem:[#allocation2 + $0x2c8] sm:$0xff]
    %v2407 = vld [vmem:[#allocation2 + $0x2d0] sm:$0xff]
    %v2408 = vld [vmem:[#allocation2 + $0x2d8] sm:$0xff]
    %v2409 = vld [vmem:[#allocation2 + $0x2e0] sm:$0xff]
    %v2410 = vld [vmem:[#allocation2 + $0x2e8] sm:$0xff]
    %v2411 = vld [vmem:[#allocation2 + $0x2f0] sm:$0xff]
    %v2412 = vld [vmem:[#allocation2 + $0x2f8] sm:$0xff]
    %v2413 = vld [vmem:[#allocation2 + $0x300] sm:$0xff]
    %v2414 = vld [vmem:[#allocation2 + $0x308] sm:$0xff]
    %v2415 = vld [vmem:[#allocation2 + $0x310] sm:$0xff]
    %v2416 = vld [vmem:[#allocation2 + $0x318] sm:$0xff]
    %v2417 = vld [vmem:[#allocation2 + $0x320] sm:$0xff]
    %v2418 = vld [vmem:[#allocation2 + $0x328] sm:$0xff]
    %v2419 = vld [vmem:[#allocation2 + $0x330] sm:$0xff]
    %v2420 = vld [vmem:[#allocation2 + $0x338] sm:$0xff]
    %v2421 = vld [vmem:[#allocation2 + $0x340] sm:$0xff]
    %v2422 = vld [vmem:[#allocation2 + $0x348] sm:$0xff]
    %v2423 = vld [vmem:[#allocation2 + $0x350] sm:$0xff]
    %v2424 = vld [vmem:[#allocation2 + $0x358] sm:$0xff]
    %v2425 = vld [vmem:[#allocation2 + $0x360] sm:$0xff]
    %v2426 = vld [vmem:[#allocation2 + $0x368] sm:$0xff]
    %v2427 = vld [vmem:[#allocation2 + $0x370] sm:$0xff]
    %v2428 = vld [vmem:[#allocation2 + $0x378] sm:$0xff]
    %v2429 = vld [vmem:[#allocation2 + $0x380] sm:$0xff]
    %v2430 = vld [vmem:[#allocation2 + $0x388] sm:$0xff]
    %v2431 = vld [vmem:[#allocation2 + $0x390] sm:$0xff]
    %v2432 = vld [vmem:[#allocation2 + $0x398] sm:$0xff]
    %v2433 = vld [vmem:[#allocation2 + $0x3a0] sm:$0xff]
    %v2434 = vld [vmem:[#allocation2 + $0x3a8] sm:$0xff]
    %v2435 = vld [vmem:[#allocation2 + $0x3b0] sm:$0xff]
    %v2436 = vld [vmem:[#allocation2 + $0x3b8] sm:$0xff]
    %v2437 = vld [vmem:[#allocation2 + $0x3c0] sm:$0xff]
    %v2438 = vld [vmem:[#allocation2 + $0x3c8] sm:$0xff]
    %v2439 = vld [vmem:[#allocation2 + $0x3d0] sm:$0xff]
    %v2440 = vld [vmem:[#allocation2 + $0x3d8] sm:$0xff]
    %v2441 = vld [vmem:[#allocation2 + $0x3e0] sm:$0xff]
    %v2442 = vld [vmem:[#allocation2 + $0x3e8] sm:$0xff]
    %v2443 = vld [vmem:[#allocation2 + $0x3f0] sm:$0xff]
    %v2444 = vld [vmem:[#allocation2 + $0x3f8] sm:$0xff]
    %v2445 = vld [vmem:[#allocation2 + $0x400] sm:$0xff]
    %v2446 = vld [vmem:[#allocation2 + $0x408] sm:$0xff]
    %v2447 = vld [vmem:[#allocation2 + $0x410] sm:$0xff]
    %v2448 = vld [vmem:[#allocation2 + $0x418] sm:$0xff]
    %v2449 = vld [vmem:[#allocation2 + $0x420] sm:$0xff]
    %v2450 = vld [vmem:[#allocation2 + $0x428] sm:$0xff]
    %v2451 = vld [vmem:[#allocation2 + $0x430] sm:$0xff]
    %v2452 = vld [vmem:[#allocation2 + $0x438] sm:$0xff]
    %v2453 = vld [vmem:[#allocation2 + $0x440] sm:$0xff]
    %v2454 = vld [vmem:[#allocation2 + $0x448] sm:$0xff]
    %v2455 = vld [vmem:[#allocation2 + $0x450] sm:$0xff]
    %v2456 = vld [vmem:[#allocation2 + $0x458] sm:$0xff]
    %v2457 = vld [vmem:[#allocation2 + $0x460] sm:$0xff]
    %v2458 = vld [vmem:[#allocation2 + $0x468] sm:$0xff]
    %v2459 = vld [vmem:[#allocation2 + $0x470] sm:$0xff]
    %v2460 = vld [vmem:[#allocation2 + $0x478] sm:$0xff]
    %v2461 = vld [vmem:[#allocation2 + $0x480] sm:$0xff]
    %v2462 = vld [vmem:[#allocation2 + $0x488] sm:$0xff]
    %v2463 = vld [vmem:[#allocation2 + $0x490] sm:$0xff]
    %v2464 = vld [vmem:[#allocation2 + $0x498] sm:$0xff]
    %v2465 = vld [vmem:[#allocation2 + $0x4a0] sm:$0xff]
    %v2466 = vld [vmem:[#allocation2 + $0x4a8] sm:$0xff]
    %v2467 = vld [vmem:[#allocation2 + $0x4b0] sm:$0xff]
    %v2468 = vld [vmem:[#allocation2 + $0x4b8] sm:$0xff]
    %v2469 = vld [vmem:[#allocation2 + $0x4c0] sm:$0xff]
    %v2470 = vld [vmem:[#allocation2 + $0x4c8] sm:$0xff]
    %v2471 = vld [vmem:[#allocation2 + $0x4d0] sm:$0xff]
    %v2472 = vld [vmem:[#allocation2 + $0x4d8] sm:$0xff]
    %v2473 = vld [vmem:[#allocation2 + $0x4e0] sm:$0xff]
    %v2474 = vld [vmem:[#allocation2 + $0x4e8] sm:$0xff]
    %v2475 = vld [vmem:[#allocation2 + $0x4f0] sm:$0xff]
    %v2476 = vld [vmem:[#allocation2 + $0x4f8] sm:$0xff]
    %v2477 = vld [vmem:[#allocation2 + $0x500] sm:$0xff]
    %v2478 = vld [vmem:[#allocation2 + $0x508] sm:$0xff]
    %v2479 = vld [vmem:[#allocation2 + $0x510] sm:$0xff]
    %v2480 = vld [vmem:[#allocation2 + $0x518] sm:$0xff]
    %v2481 = vld [vmem:[#allocation2 + $0x520] sm:$0xff]
    %v2482 = vld [vmem:[#allocation2 + $0x528] sm:$0xff]
    %v2483 = vld [vmem:[#allocation2 + $0x530] sm:$0xff]
    %v2484 = vld [vmem:[#allocation2 + $0x538] sm:$0xff]
    %v2485 = vld [vmem:[#allocation2 + $0x540] sm:$0xff]
    %v2486 = vld [vmem:[#allocation2 + $0x548] sm:$0xff]
    %v2487 = vld [vmem:[#allocation2 + $0x550] sm:$0xff]
    %v2488 = vld [vmem:[#allocation2 + $0x558] sm:$0xff]
    %v2489 = vld [vmem:[#allocation2 + $0x560] sm:$0xff]
    %v2490 = vld [vmem:[#allocation2 + $0x568] sm:$0xff]
    %v2491 = vld [vmem:[#allocation2 + $0x570] sm:$0xff]
    %v2492 = vld [vmem:[#allocation2 + $0x578] sm:$0xff]
    %v2493 = vld [vmem:[#allocation2 + $0x580] sm:$0xff]
    %v2494 = vld [vmem:[#allocation2 + $0x588] sm:$0xff]
    %v2495 = vld [vmem:[#allocation2 + $0x590] sm:$0xff]
    %v2496 = vld [vmem:[#allocation2 + $0x598] sm:$0xff]
    %v2497 = vld [vmem:[#allocation2 + $0x5a0] sm:$0xff]
    %v2498 = vld [vmem:[#allocation2 + $0x5a8] sm:$0xff]
    %v2499 = vld [vmem:[#allocation2 + $0x5b0] sm:$0xff]
    %v2500 = vld [vmem:[#allocation2 + $0x5b8] sm:$0xff]
    %v2501 = vld [vmem:[#allocation2 + $0x5c0] sm:$0xff]
    %v2502 = vld [vmem:[#allocation2 + $0x5c8] sm:$0xff]
    %v2503 = vld [vmem:[#allocation2 + $0x5d0] sm:$0xff]
    %v2504 = vld [vmem:[#allocation2 + $0x5d8] sm:$0xff]
    %v2505 = vld [vmem:[#allocation2 + $0x5e0] sm:$0xff]
    %v2506 = vld [vmem:[#allocation2 + $0x5e8] sm:$0xff]
    %v2507 = vld [vmem:[#allocation2 + $0x5f0] sm:$0xff]
    %v2508 = vld [vmem:[#allocation2 + $0x5f8] sm:$0xff]
    %v2509 = vld [vmem:[#allocation2 + $0x600] sm:$0xff]
    %v2510 = vld [vmem:[#allocation2 + $0x608] sm:$0xff]
    %v2511 = vld [vmem:[#allocation2 + $0x610] sm:$0xff]
    %v2512 = vld [vmem:[#allocation2 + $0x618] sm:$0xff]
    %v2513 = vld [vmem:[#allocation2 + $0x620] sm:$0xff]
    %v2514 = vld [vmem:[#allocation2 + $0x628] sm:$0xff]
    %v2515 = vld [vmem:[#allocation2 + $0x630] sm:$0xff]
    %v2516 = vld [vmem:[#allocation2 + $0x638] sm:$0xff]
    %v2517 = vld [vmem:[#allocation2 + $0x640] sm:$0xff]
    %v2518 = vld [vmem:[#allocation2 + $0x648] sm:$0xff]
    %v2519 = vld [vmem:[#allocation2 + $0x650] sm:$0xff]
    %v2520 = vld [vmem:[#allocation2 + $0x658] sm:$0xff]
    %v2521 = vld [vmem:[#allocation2 + $0x660] sm:$0xff]
    %v2522 = vld [vmem:[#allocation2 + $0x668] sm:$0xff]
    %v2523 = vld [vmem:[#allocation2 + $0x670] sm:$0xff]
    %v2524 = vld [vmem:[#allocation2 + $0x678] sm:$0xff]
    %v2525 = vld [vmem:[#allocation2 + $0x680] sm:$0xff]
    %v2526 = vld [vmem:[#allocation2 + $0x688] sm:$0xff]
    %v2527 = vld [vmem:[#allocation2 + $0x690] sm:$0xff]
    %v2528 = vld [vmem:[#allocation2 + $0x698] sm:$0xff]
    %v2529 = vld [vmem:[#allocation2 + $0x6a0] sm:$0xff]
    %v2530 = vld [vmem:[#allocation2 + $0x6a8] sm:$0xff]
    %v2531 = vld [vmem:[#allocation2 + $0x6b0] sm:$0xff]
    %v2532 = vld [vmem:[#allocation2 + $0x6b8] sm:$0xff]
    %v2533 = vld [vmem:[#allocation2 + $0x6c0] sm:$0xff]
    %v2534 = vld [vmem:[#allocation2 + $0x6c8] sm:$0xff]
    %v2535 = vld [vmem:[#allocation2 + $0x6d0] sm:$0xff]
    %v2536 = vld [vmem:[#allocation2 + $0x6d8] sm:$0xff]
    %v2537 = vld [vmem:[#allocation2 + $0x6e0] sm:$0xff]
    %v2538 = vld [vmem:[#allocation2 + $0x6e8] sm:$0xff]
    %v2539 = vld [vmem:[#allocation2 + $0x6f0] sm:$0xff]
    %v2540 = vld [vmem:[#allocation2 + $0x6f8] sm:$0xff]
    %v2541 = vld [vmem:[#allocation2 + $0x700] sm:$0xff]
    %v2542 = vld [vmem:[#allocation2 + $0x708] sm:$0xff]
    %v2543 = vld [vmem:[#allocation2 + $0x710] sm:$0xff]
    %v2544 = vld [vmem:[#allocation2 + $0x718] sm:$0xff]
    %v2545 = vld [vmem:[#allocation2 + $0x720] sm:$0xff]
    %v2546 = vld [vmem:[#allocation2 + $0x728] sm:$0xff]
    %v2547 = vld [vmem:[#allocation2 + $0x730] sm:$0xff]
    %v2548 = vld [vmem:[#allocation2 + $0x738] sm:$0xff]
    %v2549 = vld [vmem:[#allocation2 + $0x740] sm:$0xff]
    %v2550 = vld [vmem:[#allocation2 + $0x748] sm:$0xff]
    %v2551 = vld [vmem:[#allocation2 + $0x750] sm:$0xff]
    %v2552 = vld [vmem:[#allocation2 + $0x758] sm:$0xff]
    %v2553 = vld [vmem:[#allocation2 + $0x760] sm:$0xff]
    %v2554 = vld [vmem:[#allocation2 + $0x768] sm:$0xff]
    %v2555 = vld [vmem:[#allocation2 + $0x770] sm:$0xff]
    %v2556 = vld [vmem:[#allocation2 + $0x778] sm:$0xff]
    %v2557 = vld [vmem:[#allocation2 + $0x780] sm:$0xff]
    %v2558 = vld [vmem:[#allocation2 + $0x788] sm:$0xff]
    %v2559 = vld [vmem:[#allocation2 + $0x790] sm:$0xff]
    %v2560 = vld [vmem:[#allocation2 + $0x798] sm:$0xff]
    %v2561 = vld [vmem:[#allocation2 + $0x7a0] sm:$0xff]
    %v2562 = vld [vmem:[#allocation2 + $0x7a8] sm:$0xff]
    %v2563 = vld [vmem:[#allocation2 + $0x7b0] sm:$0xff]
    %v2564 = vld [vmem:[#allocation2 + $0x7b8] sm:$0xff]
    %v2565 = vld [vmem:[#allocation2 + $0x7c0] sm:$0xff]
    %v2566 = vld [vmem:[#allocation2 + $0x7c8] sm:$0xff]
    %v2567 = vld [vmem:[#allocation2 + $0x7d0] sm:$0xff]
    %v2568 = vld [vmem:[#allocation2 + $0x7d8] sm:$0xff]
    %v2569 = vld [vmem:[#allocation2 + $0x7e0] sm:$0xff]
    %v2570 = vld [vmem:[#allocation2 + $0x7e8] sm:$0xff]
    %v2571 = vld [vmem:[#allocation2 + $0x7f0] sm:$0xff]
    %v2572 = vld [vmem:[#allocation2 + $0x7f8] sm:$0xff]
    %v2573 = vld [vmem:[#allocation2 + $0x800] sm:$0xff]
    %v2574 = vld [vmem:[#allocation2 + $0x808] sm:$0xff]
    %v2575 = vld [vmem:[#allocation2 + $0x810] sm:$0xff]
    %v2576 = vld [vmem:[#allocation2 + $0x818] sm:$0xff]
    %v2577 = vld [vmem:[#allocation2 + $0x820] sm:$0xff]
    %v2578 = vld [vmem:[#allocation2 + $0x828] sm:$0xff]
    %v2579 = vld [vmem:[#allocation2 + $0x830] sm:$0xff]
    %v2580 = vld [vmem:[#allocation2 + $0x838] sm:$0xff]
    %v2581 = vld [vmem:[#allocation2 + $0x840] sm:$0xff]
    %v2582 = vld [vmem:[#allocation2 + $0x848] sm:$0xff]
    %v2583 = vld [vmem:[#allocation2 + $0x850] sm:$0xff]
    %v2584 = vld [vmem:[#allocation2 + $0x858] sm:$0xff]
    %v2585 = vld [vmem:[#allocation2 + $0x860] sm:$0xff]
    %v2586 = vld [vmem:[#allocation2 + $0x868] sm:$0xff]
    %v2587 = vld [vmem:[#allocation2 + $0x870] sm:$0xff]
    %v2588 = vld [vmem:[#allocation2 + $0x878] sm:$0xff]
    %v2589 = vld [vmem:[#allocation2 + $0x880] sm:$0xff]
    %v2590 = vld [vmem:[#allocation2 + $0x888] sm:$0xff]
    %v2591 = vld [vmem:[#allocation2 + $0x890] sm:$0xff]
    %v2592 = vld [vmem:[#allocation2 + $0x898] sm:$0xff]
    %v2593 = vld [vmem:[#allocation2 + $0x8a0] sm:$0xff]
    %v2594 = vld [vmem:[#allocation2 + $0x8a8] sm:$0xff]
    %v2595 = vld [vmem:[#allocation2 + $0x8b0] sm:$0xff]
    %v2596 = vld [vmem:[#allocation2 + $0x8b8] sm:$0xff]
    %v2597 = vld [vmem:[#allocation2 + $0x8c0] sm:$0xff]
    %v2598 = vld [vmem:[#allocation2 + $0x8c8] sm:$0xff]
    %v2599 = vld [vmem:[#allocation2 + $0x8d0] sm:$0xff]
    %v2600 = vld [vmem:[#allocation2 + $0x8d8] sm:$0xff]
    %v2601 = vld [vmem:[#allocation2 + $0x8e0] sm:$0xff]
    %v2602 = vld [vmem:[#allocation2 + $0x8e8] sm:$0xff]
    %v2603 = vld [vmem:[#allocation2 + $0x8f0] sm:$0xff]
    %v2604 = vld [vmem:[#allocation2 + $0x8f8] sm:$0xff]
    %v2605 = vld [vmem:[#allocation2 + $0x900] sm:$0xff]
    %v2606 = vld [vmem:[#allocation2 + $0x908] sm:$0xff]
    %v2607 = vld [vmem:[#allocation2 + $0x910] sm:$0xff]
    %v2608 = vld [vmem:[#allocation2 + $0x918] sm:$0xff]
    %v2609 = vld [vmem:[#allocation2 + $0x920] sm:$0xff]
    %v2610 = vld [vmem:[#allocation2 + $0x928] sm:$0xff]
    %v2611 = vld [vmem:[#allocation2 + $0x930] sm:$0xff]
    %v2612 = vld [vmem:[#allocation2 + $0x938] sm:$0xff]
    %v2613 = vld [vmem:[#allocation2 + $0x940] sm:$0xff]
    %v2614 = vld [vmem:[#allocation2 + $0x948] sm:$0xff]
    %v2615 = vld [vmem:[#allocation2 + $0x950] sm:$0xff]
    %v2616 = vld [vmem:[#allocation2 + $0x958] sm:$0xff]
    %v2617 = vld [vmem:[#allocation2 + $0x960] sm:$0xff]
    %v2618 = vld [vmem:[#allocation2 + $0x968] sm:$0xff]
    %v2619 = vld [vmem:[#allocation2 + $0x970] sm:$0xff]
    %v2620 = vld [vmem:[#allocation2 + $0x978] sm:$0xff]
    %v2621 = vld [vmem:[#allocation2 + $0x980] sm:$0xff]
    %v2622 = vld [vmem:[#allocation2 + $0x988] sm:$0xff]
    %v2623 = vld [vmem:[#allocation2 + $0x990] sm:$0xff]
    %v2624 = vld [vmem:[#allocation2 + $0x998] sm:$0xff]
    %v2625 = vld [vmem:[#allocation2 + $0x9a0] sm:$0xff]
    %v2626 = vld [vmem:[#allocation2 + $0x9a8] sm:$0xff]
    %v2627 = vld [vmem:[#allocation2 + $0x9b0] sm:$0xff]
    %v2628 = vld [vmem:[#allocation2 + $0x9b8] sm:$0xff]
    %v2629 = vld [vmem:[#allocation2 + $0x9c0] sm:$0xff]
    %v2630 = vld [vmem:[#allocation2 + $0x9c8] sm:$0xff]
    %v2631 = vld [vmem:[#allocation2 + $0x9d0] sm:$0xff]
    %v2632 = vld [vmem:[#allocation2 + $0x9d8] sm:$0xff]
    %v2633 = vld [vmem:[#allocation2 + $0x9e0] sm:$0xff]
    %v2634 = vld [vmem:[#allocation2 + $0x9e8] sm:$0xff]
    %v2635 = vld [vmem:[#allocation2 + $0x9f0] sm:$0xff]
    %v2636 = vld [vmem:[#allocation2 + $0x9f8] sm:$0xff]
    %v2637 = vld [vmem:[#allocation2 + $0xa00] sm:$0xff]
    %v2638 = vld [vmem:[#allocation2 + $0xa08] sm:$0xff]
    %v2639 = vld [vmem:[#allocation2 + $0xa10] sm:$0xff]
    %v2640 = vld [vmem:[#allocation2 + $0xa18] sm:$0xff]
    %v2641 = vld [vmem:[#allocation2 + $0xa20] sm:$0xff]
    %v2642 = vld [vmem:[#allocation2 + $0xa28] sm:$0xff]
    %v2643 = vld [vmem:[#allocation2 + $0xa30] sm:$0xff]
    %v2644 = vld [vmem:[#allocation2 + $0xa38] sm:$0xff]
    %v2645 = vld [vmem:[#allocation2 + $0xa40] sm:$0xff]
    %v2646 = vld [vmem:[#allocation2 + $0xa48] sm:$0xff]
    %v2647 = vld [vmem:[#allocation2 + $0xa50] sm:$0xff]
    %v2648 = vld [vmem:[#allocation2 + $0xa58] sm:$0xff]
    %v2649 = vld [vmem:[#allocation2 + $0xa60] sm:$0xff]
    %v2650 = vld [vmem:[#allocation2 + $0xa68] sm:$0xff]
    %v2651 = vld [vmem:[#allocation2 + $0xa70] sm:$0xff]
    %v2652 = vld [vmem:[#allocation2 + $0xa78] sm:$0xff]
    %v2653 = vld [vmem:[#allocation2 + $0xa80] sm:$0xff]
    %v2654 = vld [vmem:[#allocation2 + $0xa88] sm:$0xff]
    %v2655 = vld [vmem:[#allocation2 + $0xa90] sm:$0xff]
    %v2656 = vld [vmem:[#allocation2 + $0xa98] sm:$0xff]
    %v2657 = vld [vmem:[#allocation2 + $0xaa0] sm:$0xff]
    %v2658 = vld [vmem:[#allocation2 + $0xaa8] sm:$0xff]
    %v2659 = vld [vmem:[#allocation2 + $0xab0] sm:$0xff]
    %v2660 = vld [vmem:[#allocation2 + $0xab8] sm:$0xff]
    %v2661 = vld [vmem:[#allocation2 + $0xac0] sm:$0xff]
    %v2662 = vld [vmem:[#allocation2 + $0xac8] sm:$0xff]
    %v2663 = vld [vmem:[#allocation2 + $0xad0] sm:$0xff]
    %v2664 = vld [vmem:[#allocation2 + $0xad8] sm:$0xff]
    %v2665 = vld [vmem:[#allocation2 + $0xae0] sm:$0xff]
    %v2666 = vld [vmem:[#allocation2 + $0xae8] sm:$0xff]
    %v2667 = vld [vmem:[#allocation2 + $0xaf0] sm:$0xff]
    %v2668 = vld [vmem:[#allocation2 + $0xaf8] sm:$0xff]
    %v2669 = vld [vmem:[#allocation2 + $0xb00] sm:$0xff]
    %v2670 = vld [vmem:[#allocation2 + $0xb08] sm:$0xff]
    %v2671 = vld [vmem:[#allocation2 + $0xb10] sm:$0xff]
    %v2672 = vld [vmem:[#allocation2 + $0xb18] sm:$0xff]
    %v2673 = vld [vmem:[#allocation2 + $0xb20] sm:$0xff]
    %v2674 = vld [vmem:[#allocation2 + $0xb28] sm:$0xff]
    %v2675 = vld [vmem:[#allocation2 + $0xb30] sm:$0xff]
    %v2676 = vld [vmem:[#allocation2 + $0xb38] sm:$0xff]
    %v2677 = vld [vmem:[#allocation2 + $0xb40] sm:$0xff]
    %v2678 = vld [vmem:[#allocation2 + $0xb48] sm:$0xff]
    %v2679 = vld [vmem:[#allocation2 + $0xb50] sm:$0xff]
    %v2680 = vld [vmem:[#allocation2 + $0xb58] sm:$0xff]
    %v2681 = vld [vmem:[#allocation2 + $0xb60] sm:$0xff]
    %v2682 = vld [vmem:[#allocation2 + $0xb68] sm:$0xff]
    %v2683 = vld [vmem:[#allocation2 + $0xb70] sm:$0xff]
    %v2684 = vld [vmem:[#allocation2 + $0xb78] sm:$0xff]
    %v2685 = vld [vmem:[#allocation2 + $0xb80] sm:$0xff]
    %v2686 = vld [vmem:[#allocation2 + $0xb88] sm:$0xff]
    %v2687 = vld [vmem:[#allocation2 + $0xb90] sm:$0xff]
    %v2688 = vld [vmem:[#allocation2 + $0xb98] sm:$0xff]
    %v2689 = vld [vmem:[#allocation2 + $0xba0] sm:$0xff]
    %v2690 = vld [vmem:[#allocation2 + $0xba8] sm:$0xff]
    %v2691 = vld [vmem:[#allocation2 + $0xbb0] sm:$0xff]
    %v2692 = vld [vmem:[#allocation2 + $0xbb8] sm:$0xff]
    %v2693 = vld [vmem:[#allocation2 + $0xbc0] sm:$0xff]
    %v2694 = vld [vmem:[#allocation2 + $0xbc8] sm:$0xff]
    %v2695 = vld [vmem:[#allocation2 + $0xbd0] sm:$0xff]
    %v2696 = vld [vmem:[#allocation2 + $0xbd8] sm:$0xff]
    %v2697 = vld [vmem:[#allocation2 + $0xbe0] sm:$0xff]
    %v2698 = vld [vmem:[#allocation2 + $0xbe8] sm:$0xff]
    %v2699 = vld [vmem:[#allocation2 + $0xbf0] sm:$0xff]
    %v2700 = vld [vmem:[#allocation2 + $0xbf8] sm:$0xff]
    %v2701 = vld [vmem:[#allocation2 + $0xc00] sm:$0xff]
    %v2702 = vld [vmem:[#allocation2 + $0xc08] sm:$0xff]
    %v2703 = vld [vmem:[#allocation2 + $0xc10] sm:$0xff]
    %v2704 = vld [vmem:[#allocation2 + $0xc18] sm:$0xff]
    %v2705 = vld [vmem:[#allocation2 + $0xc20] sm:$0xff]
    %v2706 = vld [vmem:[#allocation2 + $0xc28] sm:$0xff]
    %v2707 = vld [vmem:[#allocation2 + $0xc30] sm:$0xff]
    %v2708 = vld [vmem:[#allocation2 + $0xc38] sm:$0xff]
    %v2709 = vld [vmem:[#allocation2 + $0xc40] sm:$0xff]
    %v2710 = vld [vmem:[#allocation2 + $0xc48] sm:$0xff]
    %v2711 = vld [vmem:[#allocation2 + $0xc50] sm:$0xff]
    %v2712 = vld [vmem:[#allocation2 + $0xc58] sm:$0xff]
    %v2713 = vld [vmem:[#allocation2 + $0xc60] sm:$0xff]
    %v2714 = vld [vmem:[#allocation2 + $0xc68] sm:$0xff]
    %v2715 = vld [vmem:[#allocation2 + $0xc70] sm:$0xff]
    %v2716 = vld [vmem:[#allocation2 + $0xc78] sm:$0xff]
    %v2717 = vld [vmem:[#allocation2 + $0xc80] sm:$0xff]
    %v2718 = vld [vmem:[#allocation2 + $0xc88] sm:$0xff]
    %v2719 = vld [vmem:[#allocation2 + $0xc90] sm:$0xff]
    %v2720 = vld [vmem:[#allocation2 + $0xc98] sm:$0xff]
    %v2721 = vld [vmem:[#allocation2 + $0xca0] sm:$0xff]
    %v2722 = vld [vmem:[#allocation2 + $0xca8] sm:$0xff]
    %v2723 = vld [vmem:[#allocation2 + $0xcb0] sm:$0xff]
    %v2724 = vld [vmem:[#allocation2 + $0xcb8] sm:$0xff]
    %v2725 = vld [vmem:[#allocation2 + $0xcc0] sm:$0xff]
    %v2726 = vld [vmem:[#allocation2 + $0xcc8] sm:$0xff]
    %v2727 = vld [vmem:[#allocation2 + $0xcd0] sm:$0xff]
    %v2728 = vld [vmem:[#allocation2 + $0xcd8] sm:$0xff]
    %v2729 = vld [vmem:[#allocation2 + $0xce0] sm:$0xff]
    %v2730 = vld [vmem:[#allocation2 + $0xce8] sm:$0xff]
    %v2731 = vld [vmem:[#allocation2 + $0xcf0] sm:$0xff]
    %v2732 = vld [vmem:[#allocation2 + $0xcf8] sm:$0xff]
    %v2733 = vld [vmem:[#allocation2 + $0xd00] sm:$0xff]
    %v2734 = vld [vmem:[#allocation2 + $0xd08] sm:$0xff]
    %v2735 = vld [vmem:[#allocation2 + $0xd10] sm:$0xff]
    %v2736 = vld [vmem:[#allocation2 + $0xd18] sm:$0xff]
    %v2737 = vld [vmem:[#allocation2 + $0xd20] sm:$0xff]
    %v2738 = vld [vmem:[#allocation2 + $0xd28] sm:$0xff]
    %v2739 = vld [vmem:[#allocation2 + $0xd30] sm:$0xff]
    %v2740 = vld [vmem:[#allocation2 + $0xd38] sm:$0xff]
    %v2741 = vld [vmem:[#allocation2 + $0xd40] sm:$0xff]
    %v2742 = vld [vmem:[#allocation2 + $0xd48] sm:$0xff]
    %v2743 = vld [vmem:[#allocation2 + $0xd50] sm:$0xff]
    %v2744 = vld [vmem:[#allocation2 + $0xd58] sm:$0xff]
    %v2745 = vld [vmem:[#allocation2 + $0xd60] sm:$0xff]
    %v2746 = vld [vmem:[#allocation2 + $0xd68] sm:$0xff]
    %v2747 = vld [vmem:[#allocation2 + $0xd70] sm:$0xff]
    %v2748 = vld [vmem:[#allocation2 + $0xd78] sm:$0xff]
    %v2749 = vld [vmem:[#allocation2 + $0xd80] sm:$0xff]
    %v2750 = vld [vmem:[#allocation2 + $0xd88] sm:$0xff]
    %v2751 = vld [vmem:[#allocation2 + $0xd90] sm:$0xff]
    %v2752 = vld [vmem:[#allocation2 + $0xd98] sm:$0xff]
    %v2753 = vld [vmem:[#allocation2 + $0xda0] sm:$0xff]
    %v2754 = vld [vmem:[#allocation2 + $0xda8] sm:$0xff]
    %v2755 = vld [vmem:[#allocation2 + $0xdb0] sm:$0xff]
    %v2756 = vld [vmem:[#allocation2 + $0xdb8] sm:$0xff]
    %v2757 = vld [vmem:[#allocation2 + $0xdc0] sm:$0xff]
    %v2758 = vld [vmem:[#allocation2 + $0xdc8] sm:$0xff]
    %v2759 = vld [vmem:[#allocation2 + $0xdd0] sm:$0xff]
    %v2760 = vld [vmem:[#allocation2 + $0xdd8] sm:$0xff]
    %v2761 = vld [vmem:[#allocation2 + $0xde0] sm:$0xff]
    %v2762 = vld [vmem:[#allocation2 + $0xde8] sm:$0xff]
    %v2763 = vld [vmem:[#allocation2 + $0xdf0] sm:$0xff]
    %v2764 = vld [vmem:[#allocation2 + $0xdf8] sm:$0xff]
    %v2765 = vld [vmem:[#allocation2 + $0xe00] sm:$0xff]
    %v2766 = vld [vmem:[#allocation2 + $0xe08] sm:$0xff]
    %v2767 = vld [vmem:[#allocation2 + $0xe10] sm:$0xff]
    %v2768 = vld [vmem:[#allocation2 + $0xe18] sm:$0xff]
    %v2769 = vld [vmem:[#allocation2 + $0xe20] sm:$0xff]
    %v2770 = vld [vmem:[#allocation2 + $0xe28] sm:$0xff]
    %v2771 = vld [vmem:[#allocation2 + $0xe30] sm:$0xff]
    %v2772 = vld [vmem:[#allocation2 + $0xe38] sm:$0xff]
    %v2773 = vld [vmem:[#allocation2 + $0xe40] sm:$0xff]
    %v2774 = vld [vmem:[#allocation2 + $0xe48] sm:$0xff]
    %v2775 = vld [vmem:[#allocation2 + $0xe50] sm:$0xff]
    %v2776 = vld [vmem:[#allocation2 + $0xe58] sm:$0xff]
    %v2777 = vld [vmem:[#allocation2 + $0xe60] sm:$0xff]
    %v2778 = vld [vmem:[#allocation2 + $0xe68] sm:$0xff]
    %v2779 = vld [vmem:[#allocation2 + $0xe70] sm:$0xff]
    %v2780 = vld [vmem:[#allocation2 + $0xe78] sm:$0xff]
    %v2781 = vld [vmem:[#allocation2 + $0xe80] sm:$0xff]
    %v2782 = vld [vmem:[#allocation2 + $0xe88] sm:$0xff]
    %v2783 = vld [vmem:[#allocation2 + $0xe90] sm:$0xff]
    %v2784 = vld [vmem:[#allocation2 + $0xe98] sm:$0xff]
    %v2785 = vld [vmem:[#allocation2 + $0xea0] sm:$0xff]
    %v2786 = vld [vmem:[#allocation2 + $0xea8] sm:$0xff]
    %v2787 = vld [vmem:[#allocation2 + $0xeb0] sm:$0xff]
    %v2788 = vld [vmem:[#allocation2 + $0xeb8] sm:$0xff]
    %v2789 = vld [vmem:[#allocation2 + $0xec0] sm:$0xff]
    %v2790 = vld [vmem:[#allocation2 + $0xec8] sm:$0xff]
    %v2791 = vld [vmem:[#allocation2 + $0xed0] sm:$0xff]
    %v2792 = vld [vmem:[#allocation2 + $0xed8] sm:$0xff]
    %v2793 = vld [vmem:[#allocation2 + $0xee0] sm:$0xff]
    %v2794 = vld [vmem:[#allocation2 + $0xee8] sm:$0xff]
    %v2795 = vld [vmem:[#allocation2 + $0xef0] sm:$0xff]
    %v2796 = vld [vmem:[#allocation2 + $0xef8] sm:$0xff]
    %v2797 = vld [vmem:[#allocation2 + $0xf00] sm:$0xff]
    %v2798 = vld [vmem:[#allocation2 + $0xf08] sm:$0xff]
    %v2799 = vld [vmem:[#allocation2 + $0xf10] sm:$0xff]
    %v2800 = vld [vmem:[#allocation2 + $0xf18] sm:$0xff]
    %v2801 = vld [vmem:[#allocation2 + $0xf20] sm:$0xff]
    %v2802 = vld [vmem:[#allocation2 + $0xf28] sm:$0xff]
    %v2803 = vld [vmem:[#allocation2 + $0xf30] sm:$0xff]
    %v2804 = vld [vmem:[#allocation2 + $0xf38] sm:$0xff]
    %v2805 = vld [vmem:[#allocation2 + $0xf40] sm:$0xff]
    %v2806 = vld [vmem:[#allocation2 + $0xf48] sm:$0xff]
    %v2807 = vld [vmem:[#allocation2 + $0xf50] sm:$0xff]
    %v2808 = vld [vmem:[#allocation2 + $0xf58] sm:$0xff]
    %v2809 = vld [vmem:[#allocation2 + $0xf60] sm:$0xff]
    %v2810 = vld [vmem:[#allocation2 + $0xf68] sm:$0xff]
    %v2811 = vld [vmem:[#allocation2 + $0xf70] sm:$0xff]
    %v2812 = vld [vmem:[#allocation2 + $0xf78] sm:$0xff]
    %v2813 = vld [vmem:[#allocation2 + $0xf80] sm:$0xff]
    %v2814 = vld [vmem:[#allocation2 + $0xf88] sm:$0xff]
    %v2815 = vld [vmem:[#allocation2 + $0xf90] sm:$0xff]
    %v2816 = vld [vmem:[#allocation2 + $0xf98] sm:$0xff]
    %v2817 = vld [vmem:[#allocation2 + $0xfa0] sm:$0xff]
    %v2818 = vld [vmem:[#allocation2 + $0xfa8] sm:$0xff]
    %v2819 = vld [vmem:[#allocation2 + $0xfb0] sm:$0xff]
    %v2820 = vld [vmem:[#allocation2 + $0xfb8] sm:$0xff]
    %v2821 = vld [vmem:[#allocation2 + $0xfc0] sm:$0xff]
    %v2822 = vld [vmem:[#allocation2 + $0xfc8] sm:$0xff]
    %v2823 = vld [vmem:[#allocation2 + $0xfd0] sm:$0xff]
    %v2824 = vld [vmem:[#allocation2 + $0xfd8] sm:$0xff]
    %v2825 = vld [vmem:[#allocation2 + $0xfe0] sm:$0xff]
    %v2826 = vld [vmem:[#allocation2 + $0xfe8] sm:$0xff]
    %v2827 = vld [vmem:[#allocation2 + $0xff0] sm:$0xff]
    %v2828 = vld [vmem:[#allocation2 + $0xff8] sm:$0xff]
    %v2829 = vld [vmem:[#allocation2 + $0x1000] sm:$0xff]
    %v2830 = vld [vmem:[#allocation2 + $0x1008] sm:$0xff]
    %v2831 = vld [vmem:[#allocation2 + $0x1010] sm:$0xff]
    %v2832 = vld [vmem:[#allocation2 + $0x1018] sm:$0xff]
    %v2833 = vld [vmem:[#allocation2 + $0x1020] sm:$0xff]
    %v2834 = vld [vmem:[#allocation2 + $0x1028] sm:$0xff]
    %v2835 = vld [vmem:[#allocation2 + $0x1030] sm:$0xff]
    %v2836 = vld [vmem:[#allocation2 + $0x1038] sm:$0xff]
    %v2837 = vld [vmem:[#allocation2 + $0x1040] sm:$0xff]
    %v2838 = vld [vmem:[#allocation2 + $0x1048] sm:$0xff]
    %v2839 = vld [vmem:[#allocation2 + $0x1050] sm:$0xff]
    %v2840 = vld [vmem:[#allocation2 + $0x1058] sm:$0xff]
    %v2841 = vld [vmem:[#allocation2 + $0x1060] sm:$0xff]
    %v2842 = vld [vmem:[#allocation2 + $0x1068] sm:$0xff]
    %v2843 = vld [vmem:[#allocation2 + $0x1070] sm:$0xff]
    %v2844 = vld [vmem:[#allocation2 + $0x1078] sm:$0xff]
    %v2845 = vld [vmem:[#allocation2 + $0x1080] sm:$0xff]
    %v2846 = vld [vmem:[#allocation2 + $0x1088] sm:$0xff]
    %v2847 = vld [vmem:[#allocation2 + $0x1090] sm:$0xff]
    %v2848 = vld [vmem:[#allocation2 + $0x1098] sm:$0xff]
    %v2849 = vld [vmem:[#allocation2 + $0x10a0] sm:$0xff]
    %v2850 = vld [vmem:[#allocation2 + $0x10a8] sm:$0xff]
    %v2851 = vld [vmem:[#allocation2 + $0x10b0] sm:$0xff]
    %v2852 = vld [vmem:[#allocation2 + $0x10b8] sm:$0xff]
    %v2853 = vld [vmem:[#allocation2 + $0x10c0] sm:$0xff]
    %v2854 = vld [vmem:[#allocation2 + $0x10c8] sm:$0xff]
    %v2855 = vld [vmem:[#allocation2 + $0x10d0] sm:$0xff]
    %v2856 = vld [vmem:[#allocation2 + $0x10d8] sm:$0xff]
    %v2857 = vld [vmem:[#allocation2 + $0x10e0] sm:$0xff]
    %v2858 = vld [vmem:[#allocation2 + $0x10e8] sm:$0xff]
    %v2859 = vld [vmem:[#allocation2 + $0x10f0] sm:$0xff]
    %v2860 = vld [vmem:[#allocation2 + $0x10f8] sm:$0xff]
    %v2861 = vld [vmem:[#allocation2 + $0x1100] sm:$0xff]
    %v2862 = vld [vmem:[#allocation2 + $0x1108] sm:$0xff]
    %v2863 = vld [vmem:[#allocation2 + $0x1110] sm:$0xff]
    %v2864 = vld [vmem:[#allocation2 + $0x1118] sm:$0xff]
    %v2865 = vld [vmem:[#allocation2 + $0x1120] sm:$0xff]
    %v2866 = vld [vmem:[#allocation2 + $0x1128] sm:$0xff]
    %v2867 = vld [vmem:[#allocation2 + $0x1130] sm:$0xff]
    %v2868 = vld [vmem:[#allocation2 + $0x1138] sm:$0xff]
    %v2869 = vld [vmem:[#allocation2 + $0x1140] sm:$0xff]
    %v2870 = vld [vmem:[#allocation2 + $0x1148] sm:$0xff]
    %v2871 = vld [vmem:[#allocation2 + $0x1150] sm:$0xff]
    %v2872 = vld [vmem:[#allocation2 + $0x1158] sm:$0xff]
    %v2873 = vld [vmem:[#allocation2 + $0x1160] sm:$0xff]
    %v2874 = vld [vmem:[#allocation2 + $0x1168] sm:$0xff]
    %v2875 = vld [vmem:[#allocation2 + $0x1170] sm:$0xff]
    %v2876 = vld [vmem:[#allocation2 + $0x1178] sm:$0xff]
    %v2877 = vld [vmem:[#allocation2 + $0x1180] sm:$0xff]
    %v2878 = vld [vmem:[#allocation2 + $0x1188] sm:$0xff]
    %v2879 = vld [vmem:[#allocation2 + $0x1190] sm:$0xff]
    %v2880 = vld [vmem:[#allocation2 + $0x1198] sm:$0xff]
    %v2881 = vld [vmem:[#allocation2 + $0x11a0] sm:$0xff]
    %v2882 = vld [vmem:[#allocation2 + $0x11a8] sm:$0xff]
    %v2883 = vld [vmem:[#allocation2 + $0x11b0] sm:$0xff]
    %v2884 = vld [vmem:[#allocation2 + $0x11b8] sm:$0xff]
    %v2885 = vld [vmem:[#allocation2 + $0x11c0] sm:$0xff]
    %v2886 = vld [vmem:[#allocation2 + $0x11c8] sm:$0xff]
    %v2887 = vld [vmem:[#allocation2 + $0x11d0] sm:$0xff]
    %v2888 = vld [vmem:[#allocation2 + $0x11d8] sm:$0xff]
    %v2889 = vld [vmem:[#allocation2 + $0x11e0] sm:$0xff]
    %v2890 = vld [vmem:[#allocation2 + $0x11e8] sm:$0xff]
    %v2891 = vld [vmem:[#allocation2 + $0x11f0] sm:$0xff]
    %v2892 = vld [vmem:[#allocation2 + $0x11f8] sm:$0xff]
    %v2893 = vld [vmem:[#allocation2 + $0x1200] sm:$0xff]
    %v2894 = vld [vmem:[#allocation2 + $0x1208] sm:$0xff]
    %v2895 = vld [vmem:[#allocation2 + $0x1210] sm:$0xff]
    %v2896 = vld [vmem:[#allocation2 + $0x1218] sm:$0xff]
    %v2897 = vld [vmem:[#allocation2 + $0x1220] sm:$0xff]
    %v2898 = vld [vmem:[#allocation2 + $0x1228] sm:$0xff]
    %v2899 = vld [vmem:[#allocation2 + $0x1230] sm:$0xff]
    %v2900 = vld [vmem:[#allocation2 + $0x1238] sm:$0xff]
    %v2901 = vld [vmem:[#allocation2 + $0x1240] sm:$0xff]
    %v2902 = vld [vmem:[#allocation2 + $0x1248] sm:$0xff]
    %v2903 = vld [vmem:[#allocation2 + $0x1250] sm:$0xff]
    %v2904 = vld [vmem:[#allocation2 + $0x1258] sm:$0xff]
    %v2905 = vld [vmem:[#allocation2 + $0x1260] sm:$0xff]
    %v2906 = vld [vmem:[#allocation2 + $0x1268] sm:$0xff]
    %v2907 = vld [vmem:[#allocation2 + $0x1270] sm:$0xff]
    %v2908 = vld [vmem:[#allocation2 + $0x1278] sm:$0xff]
    %v2909 = vld [vmem:[#allocation2 + $0x1280] sm:$0xff]
    %v2910 = vld [vmem:[#allocation2 + $0x1288] sm:$0xff]
    %v2911 = vld [vmem:[#allocation2 + $0x1290] sm:$0xff]
    %v2912 = vld [vmem:[#allocation2 + $0x1298] sm:$0xff]
    %v2913 = vld [vmem:[#allocation2 + $0x12a0] sm:$0xff]
    %v2914 = vld [vmem:[#allocation2 + $0x12a8] sm:$0xff]
    %v2915 = vld [vmem:[#allocation2 + $0x12b0] sm:$0xff]
    %v2916 = vld [vmem:[#allocation2 + $0x12b8] sm:$0xff]
    %v2917 = vld [vmem:[#allocation2 + $0x12c0] sm:$0xff]
    %v2918 = vld [vmem:[#allocation2 + $0x12c8] sm:$0xff]
    %v2919 = vld [vmem:[#allocation2 + $0x12d0] sm:$0xff]
    %v2920 = vld [vmem:[#allocation2 + $0x12d8] sm:$0xff]
    %v2921 = vld [vmem:[#allocation2 + $0x12e0] sm:$0xff]
    %v2922 = vld [vmem:[#allocation2 + $0x12e8] sm:$0xff]
    %v2923 = vld [vmem:[#allocation2 + $0x12f0] sm:$0xff]
    %v2924 = vld [vmem:[#allocation2 + $0x12f8] sm:$0xff]
    %v2925 = vld [vmem:[#allocation2 + $0x1300] sm:$0xff]
    %v2926 = vld [vmem:[#allocation2 + $0x1308] sm:$0xff]
    %v2927 = vld [vmem:[#allocation2 + $0x1310] sm:$0xff]
    %v2928 = vld [vmem:[#allocation2 + $0x1318] sm:$0xff]
    %v2929 = vld [vmem:[#allocation2 + $0x1320] sm:$0xff]
    %v2930 = vld [vmem:[#allocation2 + $0x1328] sm:$0xff]
    %v2931 = vld [vmem:[#allocation2 + $0x1330] sm:$0xff]
    %v2932 = vld [vmem:[#allocation2 + $0x1338] sm:$0xff]
    %v2933 = vld [vmem:[#allocation2 + $0x1340] sm:$0xff]
    %v2934 = vld [vmem:[#allocation2 + $0x1348] sm:$0xff]
    %v2935 = vld [vmem:[#allocation2 + $0x1350] sm:$0xff]
    %v2936 = vld [vmem:[#allocation2 + $0x1358] sm:$0xff]
    %v2937 = vld [vmem:[#allocation2 + $0x1360] sm:$0xff]
    %v2938 = vld [vmem:[#allocation2 + $0x1368] sm:$0xff]
    %v2939 = vld [vmem:[#allocation2 + $0x1370] sm:$0xff]
    %v2940 = vld [vmem:[#allocation2 + $0x1378] sm:$0xff]
    %v2941 = vld [vmem:[#allocation2 + $0x1380] sm:$0xff]
    %v2942 = vld [vmem:[#allocation2 + $0x1388] sm:$0xff]
    %v2943 = vld [vmem:[#allocation2 + $0x1390] sm:$0xff]
    %v2944 = vld [vmem:[#allocation2 + $0x1398] sm:$0xff]
    %v2945 = vld [vmem:[#allocation2 + $0x13a0] sm:$0xff]
    %v2946 = vld [vmem:[#allocation2 + $0x13a8] sm:$0xff]
    %v2947 = vld [vmem:[#allocation2 + $0x13b0] sm:$0xff]
    %v2948 = vld [vmem:[#allocation2 + $0x13b8] sm:$0xff]
    %v2949 = vld [vmem:[#allocation2 + $0x13c0] sm:$0xff]
    %v2950 = vld [vmem:[#allocation2 + $0x13c8] sm:$0xff]
    %v2951 = vld [vmem:[#allocation2 + $0x13d0] sm:$0xff]
    %v2952 = vld [vmem:[#allocation2 + $0x13d8] sm:$0xff]
    %v2953 = vld [vmem:[#allocation2 + $0x13e0] sm:$0xff]
    %v2954 = vld [vmem:[#allocation2 + $0x13e8] sm:$0xff]
    %v2955 = vld [vmem:[#allocation2 + $0x13f0] sm:$0xff]
    %v2956 = vld [vmem:[#allocation2 + $0x13f8] sm:$0xff]
    %v2957 = vld [vmem:[#allocation2 + $0x1400] sm:$0xff]
    %v2958 = vld [vmem:[#allocation2 + $0x1408] sm:$0xff]
    %v2959 = vld [vmem:[#allocation2 + $0x1410] sm:$0xff]
    %v2960 = vld [vmem:[#allocation2 + $0x1418] sm:$0xff]
    %v2961 = vld [vmem:[#allocation2 + $0x1420] sm:$0xff]
    %v2962 = vld [vmem:[#allocation2 + $0x1428] sm:$0xff]
    %v2963 = vld [vmem:[#allocation2 + $0x1430] sm:$0xff]
    %v2964 = vld [vmem:[#allocation2 + $0x1438] sm:$0xff]
    %v2965 = vld [vmem:[#allocation2 + $0x1440] sm:$0xff]
    %v2966 = vld [vmem:[#allocation2 + $0x1448] sm:$0xff]
    %v2967 = vld [vmem:[#allocation2 + $0x1450] sm:$0xff]
    %v2968 = vld [vmem:[#allocation2 + $0x1458] sm:$0xff]
    %v2969 = vld [vmem:[#allocation2 + $0x1460] sm:$0xff]
    %v2970 = vld [vmem:[#allocation2 + $0x1468] sm:$0xff]
    %v2971 = vld [vmem:[#allocation2 + $0x1470] sm:$0xff]
    %v2972 = vld [vmem:[#allocation2 + $0x1478] sm:$0xff]
    %v2973 = vld [vmem:[#allocation2 + $0x1480] sm:$0xff]
    %v2974 = vld [vmem:[#allocation2 + $0x1488] sm:$0xff]
    %v2975 = vld [vmem:[#allocation2 + $0x1490] sm:$0xff]
    %v2976 = vld [vmem:[#allocation2 + $0x1498] sm:$0xff]
    %v2977 = vld [vmem:[#allocation2 + $0x14a0] sm:$0xff]
    %v2978 = vld [vmem:[#allocation2 + $0x14a8] sm:$0xff]
    %v2979 = vld [vmem:[#allocation2 + $0x14b0] sm:$0xff]
    %v2980 = vld [vmem:[#allocation2 + $0x14b8] sm:$0xff]
    %v2981 = vld [vmem:[#allocation2 + $0x14c0] sm:$0xff]
    %v2982 = vld [vmem:[#allocation2 + $0x14c8] sm:$0xff]
    %v2983 = vld [vmem:[#allocation2 + $0x14d0] sm:$0xff]
    %v2984 = vld [vmem:[#allocation2 + $0x14d8] sm:$0xff]
    %v2985 = vld [vmem:[#allocation2 + $0x14e0] sm:$0xff]
    %v2986 = vld [vmem:[#allocation2 + $0x14e8] sm:$0xff]
    %v2987 = vld [vmem:[#allocation2 + $0x14f0] sm:$0xff]
    %v2988 = vld [vmem:[#allocation2 + $0x14f8] sm:$0xff]
    %v2989 = vld [vmem:[#allocation2 + $0x1500] sm:$0xff]
    %v2990 = vld [vmem:[#allocation2 + $0x1508] sm:$0xff]
    %v2991 = vld [vmem:[#allocation2 + $0x1510] sm:$0xff]
    %v2992 = vld [vmem:[#allocation2 + $0x1518] sm:$0xff]
    %v2993 = vld [vmem:[#allocation2 + $0x1520] sm:$0xff]
    %v2994 = vld [vmem:[#allocation2 + $0x1528] sm:$0xff]
    %v2995 = vld [vmem:[#allocation2 + $0x1530] sm:$0xff]
    %v2996 = vld [vmem:[#allocation2 + $0x1538] sm:$0xff]
    %v2997 = vld [vmem:[#allocation2 + $0x1540] sm:$0xff]
    %v2998 = vld [vmem:[#allocation2 + $0x1548] sm:$0xff]
    %v2999 = vld [vmem:[#allocation2 + $0x1550] sm:$0xff]
    %v3000 = vld [vmem:[#allocation2 + $0x1558] sm:$0xff]
    %v3001 = vld [vmem:[#allocation2 + $0x1560] sm:$0xff]
    %v3002 = vld [vmem:[#allocation2 + $0x1568] sm:$0xff]
    %v3003 = vld [vmem:[#allocation2 + $0x1570] sm:$0xff]
    %v3004 = vld [vmem:[#allocation2 + $0x1578] sm:$0xff]
    %v3005 = vld [vmem:[#allocation2 + $0x1580] sm:$0xff]
    %v3006 = vld [vmem:[#allocation2 + $0x1588] sm:$0xff]
    %v3007 = vld [vmem:[#allocation2 + $0x1590] sm:$0xff]
    %v3008 = vld [vmem:[#allocation2 + $0x1598] sm:$0xff]
    %v3009 = vld [vmem:[#allocation2 + $0x15a0] sm:$0xff]
    %v3010 = vld [vmem:[#allocation2 + $0x15a8] sm:$0xff]
    %v3011 = vld [vmem:[#allocation2 + $0x15b0] sm:$0xff]
    %v3012 = vld [vmem:[#allocation2 + $0x15b8] sm:$0xff]
    %v3013 = vld [vmem:[#allocation2 + $0x15c0] sm:$0xff]
    %v3014 = vld [vmem:[#allocation2 + $0x15c8] sm:$0xff]
    %v3015 = vld [vmem:[#allocation2 + $0x15d0] sm:$0xff]
    %v3016 = vld [vmem:[#allocation2 + $0x15d8] sm:$0xff]
    %v3017 = vld [vmem:[#allocation2 + $0x15e0] sm:$0xff]
    %v3018 = vld [vmem:[#allocation2 + $0x15e8] sm:$0xff]
    %v3019 = vld [vmem:[#allocation2 + $0x15f0] sm:$0xff]
    %v3020 = vld [vmem:[#allocation2 + $0x15f8] sm:$0xff]
    %v3021 = vld [vmem:[#allocation2 + $0x1600] sm:$0xff]
    %v3022 = vld [vmem:[#allocation2 + $0x1608] sm:$0xff]
    %v3023 = vld [vmem:[#allocation2 + $0x1610] sm:$0xff]
    %v3024 = vld [vmem:[#allocation2 + $0x1618] sm:$0xff]
    %v3025 = vld [vmem:[#allocation2 + $0x1620] sm:$0xff]
    %v3026 = vld [vmem:[#allocation2 + $0x1628] sm:$0xff]
    %v3027 = vld [vmem:[#allocation2 + $0x1630] sm:$0xff]
    %v3028 = vld [vmem:[#allocation2 + $0x1638] sm:$0xff]
    %v3029 = vld [vmem:[#allocation2 + $0x1640] sm:$0xff]
    %v3030 = vld [vmem:[#allocation2 + $0x1648] sm:$0xff]
    %v3031 = vld [vmem:[#allocation2 + $0x1650] sm:$0xff]
    %v3032 = vld [vmem:[#allocation2 + $0x1658] sm:$0xff]
    %v3033 = vld [vmem:[#allocation2 + $0x1660] sm:$0xff]
    %v3034 = vld [vmem:[#allocation2 + $0x1668] sm:$0xff]
    %v3035 = vld [vmem:[#allocation2 + $0x1670] sm:$0xff]
    %v3036 = vld [vmem:[#allocation2 + $0x1678] sm:$0xff]
    %v3037 = vld [vmem:[#allocation2 + $0x1680] sm:$0xff]
    %v3038 = vld [vmem:[#allocation2 + $0x1688] sm:$0xff]
    %v3039 = vld [vmem:[#allocation2 + $0x1690] sm:$0xff]
    %v3040 = vld [vmem:[#allocation2 + $0x1698] sm:$0xff]
    %v3041 = vld [vmem:[#allocation2 + $0x16a0] sm:$0xff]
    %v3042 = vld [vmem:[#allocation2 + $0x16a8] sm:$0xff]
    %v3043 = vld [vmem:[#allocation2 + $0x16b0] sm:$0xff]
    %v3044 = vld [vmem:[#allocation2 + $0x16b8] sm:$0xff]
    %v3045 = vld [vmem:[#allocation2 + $0x16c0] sm:$0xff]
    %v3046 = vld [vmem:[#allocation2 + $0x16c8] sm:$0xff]
    %v3047 = vld [vmem:[#allocation2 + $0x16d0] sm:$0xff]
    %v3048 = vld [vmem:[#allocation2 + $0x16d8] sm:$0xff]
    %v3049 = vld [vmem:[#allocation2 + $0x16e0] sm:$0xff]
    %v3050 = vld [vmem:[#allocation2 + $0x16e8] sm:$0xff]
    %v3051 = vld [vmem:[#allocation2 + $0x16f0] sm:$0xff]
    %v3052 = vld [vmem:[#allocation2 + $0x16f8] sm:$0xff]
    %v3053 = vld [vmem:[#allocation2 + $0x1700] sm:$0xff]
    %v3054 = vld [vmem:[#allocation2 + $0x1708] sm:$0xff]
    %v3055 = vld [vmem:[#allocation2 + $0x1710] sm:$0xff]
    %v3056 = vld [vmem:[#allocation2 + $0x1718] sm:$0xff]
    %v3057 = vld [vmem:[#allocation2 + $0x1720] sm:$0xff]
    %v3058 = vld [vmem:[#allocation2 + $0x1728] sm:$0xff]
    %v3059 = vld [vmem:[#allocation2 + $0x1730] sm:$0xff]
    %v3060 = vld [vmem:[#allocation2 + $0x1738] sm:$0xff]
    %v3061 = vld [vmem:[#allocation2 + $0x1740] sm:$0xff]
    %v3062 = vld [vmem:[#allocation2 + $0x1748] sm:$0xff]
    %v3063 = vld [vmem:[#allocation2 + $0x1750] sm:$0xff]
    %v3064 = vld [vmem:[#allocation2 + $0x1758] sm:$0xff]
    %v3065 = vld [vmem:[#allocation2 + $0x1760] sm:$0xff]
    %v3066 = vld [vmem:[#allocation2 + $0x1768] sm:$0xff]
    %v3067 = vld [vmem:[#allocation2 + $0x1770] sm:$0xff]
    %v3068 = vld [vmem:[#allocation2 + $0x1778] sm:$0xff]
    %v3069 = vld [vmem:[#allocation2 + $0x1780] sm:$0xff]
    %v3070 = vld [vmem:[#allocation2 + $0x1788] sm:$0xff]
    %v3071 = vld [vmem:[#allocation2 + $0x1790] sm:$0xff]
    %v3072 = vld [vmem:[#allocation2 + $0x1798] sm:$0xff]
    %v3073 = vld [vmem:[#allocation2 + $0x17a0] sm:$0xff]
    %v3074 = vld [vmem:[#allocation2 + $0x17a8] sm:$0xff]
    %v3075 = vld [vmem:[#allocation2 + $0x17b0] sm:$0xff]
    %v3076 = vld [vmem:[#allocation2 + $0x17b8] sm:$0xff]
    %v3077 = vld [vmem:[#allocation2 + $0x17c0] sm:$0xff]
    %v3078 = vld [vmem:[#allocation2 + $0x17c8] sm:$0xff]
    %v3079 = vld [vmem:[#allocation2 + $0x17d0] sm:$0xff]
    %v3080 = vld [vmem:[#allocation2 + $0x17d8] sm:$0xff]
    %v3081 = vld [vmem:[#allocation2 + $0x17e0] sm:$0xff]
    %v3082 = vld [vmem:[#allocation2 + $0x17e8] sm:$0xff]
    %v3083 = vld [vmem:[#allocation2 + $0x17f0] sm:$0xff]
    %v3084 = vld [vmem:[#allocation2 + $0x17f8] sm:$0xff]
    %3085 = vmatprep.subr.bf16.mxu0 %v2318
    %3086 = vmatpush1.bf16.msra.mxu0 %v2317
    %3087 = vmatprep.subr.bf16.mxu0 %v2326
    %3088 = vmatpush1.bf16.msra.mxu0 %v2325
    %3089 = vmatprep.subr.bf16.mxu0 %v2334
    %3090 = vmatpush1.bf16.msra.mxu0 %v2333
    %3091 = vmatprep.subr.bf16.mxu0 %v2342
    %3092 = vmatpush1.bf16.msra.mxu0 %v2341
    %3093 = vmatprep.subr.bf16.mxu0 %v2350
    %3094 = vmatpush1.bf16.msra.mxu0 %v2349
    %3095 = vmatprep.subr.bf16.mxu0 %v2358
    %3096 = vmatpush1.bf16.msra.mxu0 %v2357
    %3097 = vmatprep.subr.bf16.mxu0 %v2366
    %3098 = vmatpush1.bf16.msra.mxu0 %v2365
    %3099 = vmatprep.subr.bf16.mxu0 %v2374
    %3100 = vmatpush1.bf16.msra.mxu0 %v2373
    %3101 = vmatprep.subr.bf16.mxu0 %v2382
    %3102 = vmatpush1.bf16.msra.mxu0 %v2381
    %3103 = vmatprep.subr.bf16.mxu0 %v2390
    %3104 = vmatpush1.bf16.msra.mxu0 %v2389
    %3105 = vmatprep.subr.bf16.mxu0 %v2398
    %3106 = vmatpush1.bf16.msra.mxu0 %v2397
    %3107 = vmatprep.subr.bf16.mxu0 %v2406
    %3108 = vmatpush1.bf16.msra.mxu0 %v2405
    %3109 = vmatprep.subr.bf16.mxu0 %v2414
    %3110 = vmatpush1.bf16.msra.mxu0 %v2413
    %3111 = vmatprep.subr.bf16.mxu0 %v2422
    %3112 = vmatpush1.bf16.msra.mxu0 %v2421
    %3113 = vmatprep.subr.bf16.mxu0 %v2430
    %3114 = vmatpush1.bf16.msra.mxu0 %v2429
    %3115 = vmatprep.subr.bf16.mxu0 %v2438
    %3116 = vmatpush1.bf16.msra.mxu0 %v2437
    %3117 = vmatprep.mubr.bf16.mxu0 %v2225
    %3118 = vmatmul.mubr.bf16.gmra.mrb[0].mxu0 %v2224
    %v3119 = vpop.f32.mrb[0].mxu0
    %v3120 = vadd.f32 0.0, %v3119
    %v3121 = vpop.f32.mrb[0].mxu0
    %v3122 = vadd.f32 0.0, %v3121
    %v3123 = vpop.f32.mrb[0].mxu0
    %v3124 = vpop.f32.mrb[0].mxu0
    %3125 = vdwg.mxu0
    %3126 = vmatprep.subr.bf16.mxu0 %v2446
    %3127 = vmatpush1.bf16.msra.mxu0 %v2445
    %3128 = vmatprep.subr.bf16.mxu0 %v2454
    %3129 = vmatpush1.bf16.msra.mxu0 %v2453
    %3130 = vmatprep.subr.bf16.mxu0 %v2462
    %3131 = vmatpush1.bf16.msra.mxu0 %v2461
    %3132 = vmatprep.subr.bf16.mxu0 %v2470
    %3133 = vmatpush1.bf16.msra.mxu0 %v2469
    %3134 = vmatprep.subr.bf16.mxu0 %v2478
    %3135 = vmatpush1.bf16.msra.mxu0 %v2477
    %3136 = vmatprep.subr.bf16.mxu0 %v2486
    %3137 = vmatpush1.bf16.msra.mxu0 %v2485
    %3138 = vmatprep.subr.bf16.mxu0 %v2494
    %3139 = vmatpush1.bf16.msra.mxu0 %v2493
    %3140 = vmatprep.subr.bf16.mxu0 %v2502
    %3141 = vmatpush1.bf16.msra.mxu0 %v2501
    %3142 = vmatprep.subr.bf16.mxu0 %v2510
    %3143 = vmatpush1.bf16.msra.mxu0 %v2509
    %3144 = vmatprep.subr.bf16.mxu0 %v2518
    %3145 = vmatpush1.bf16.msra.mxu0 %v2517
    %3146 = vmatprep.subr.bf16.mxu0 %v2526
    %3147 = vmatpush1.bf16.msra.mxu0 %v2525
    %3148 = vmatprep.subr.bf16.mxu0 %v2534
    %3149 = vmatpush1.bf16.msra.mxu0 %v2533
    %3150 = vmatprep.subr.bf16.mxu0 %v2542
    %3151 = vmatpush1.bf16.msra.mxu0 %v2541
    %3152 = vmatprep.subr.bf16.mxu0 %v2550
    %3153 = vmatpush1.bf16.msra.mxu0 %v2549
    %3154 = vmatprep.subr.bf16.mxu0 %v2558
    %3155 = vmatpush1.bf16.msra.mxu0 %v2557
    %3156 = vmatprep.subr.bf16.mxu0 %v2566
    %3157 = vmatpush1.bf16.msra.mxu0 %v2565
    %3158 = vmatprep.mubr.bf16.mxu0 %v2227
    %3159 = vmatmul.mubr.bf16.gmra.mrb[0].mxu0 %v2226
    %v3160 = vpop.f32.mrb[0].mxu0
    %v3161 = vadd.f32 %v3120, %v3160
    %v3162 = vpop.f32.mrb[0].mxu0
    %v3163 = vadd.f32 %v3122, %v3162
    %v3164 = vpop.f32.mrb[0].mxu0
    %v3165 = vpop.f32.mrb[0].mxu0
    %3166 = vdwg.mxu0
    %3167 = vmatprep.subr.bf16.mxu0 %v2574
    %3168 = vmatpush1.bf16.msra.mxu0 %v2573
    %3169 = vmatprep.subr.bf16.mxu0 %v2582
    %3170 = vmatpush1.bf16.msra.mxu0 %v2581
    %3171 = vmatprep.subr.bf16.mxu0 %v2590
    %3172 = vmatpush1.bf16.msra.mxu0 %v2589
    %3173 = vmatprep.subr.bf16.mxu0 %v2598
    %3174 = vmatpush1.bf16.msra.mxu0 %v2597
    %3175 = vmatprep.subr.bf16.mxu0 %v2606
    %3176 = vmatpush1.bf16.msra.mxu0 %v2605
    %3177 = vmatprep.subr.bf16.mxu0 %v2614
    %3178 = vmatpush1.bf16.msra.mxu0 %v2613
    %3179 = vmatprep.subr.bf16.mxu0 %v2622
    %3180 = vmatpush1.bf16.msra.mxu0 %v2621
    %3181 = vmatprep.subr.bf16.mxu0 %v2630
    %3182 = vmatpush1.bf16.msra.mxu0 %v2629
    %3183 = vmatprep.subr.bf16.mxu0 %v2638
    %3184 = vmatpush1.bf16.msra.mxu0 %v2637
    %3185 = vmatprep.subr.bf16.mxu0 %v2646
    %3186 = vmatpush1.bf16.msra.mxu0 %v2645
    %3187 = vmatprep.subr.bf16.mxu0 %v2654
    %3188 = vmatpush1.bf16.msra.mxu0 %v2653
    %3189 = vmatprep.subr.bf16.mxu0 %v2662
    %3190 = vmatpush1.bf16.msra.mxu0 %v2661
    %3191 = vmatprep.subr.bf16.mxu0 %v2670
    %3192 = vmatpush1.bf16.msra.mxu0 %v2669
    %3193 = vmatprep.subr.bf16.mxu0 %v2678
    %3194 = vmatpush1.bf16.msra.mxu0 %v2677
    %3195 = vmatprep.subr.bf16.mxu0 %v2686
    %3196 = vmatpush1.bf16.msra.mxu0 %v2685
    %3197 = vmatprep.subr.bf16.mxu0 %v2694
    %3198 = vmatpush1.bf16.msra.mxu0 %v2693
    %3199 = vmatprep.mubr.bf16.mxu0 %v2110
    %3200 = vmatmul.mubr.bf16.gmra.mrb[0].mxu0 %v2109
    %v3201 = vpop.f32.mrb[0].mxu0
    %v3202 = vadd.f32 %v3161, %v3201
    %v3203 = vpop.f32.mrb[0].mxu0
    %v3204 = vadd.f32 %v3163, %v3203
    %v3205 = vpop.f32.mrb[0].mxu0
    %v3206 = vpop.f32.mrb[0].mxu0
    %3207 = vdwg.mxu0
    %3208 = vmatprep.subr.bf16.mxu0 %v2702
    %3209 = vmatpush1.bf16.msra.mxu0 %v2701
    %3210 = vmatprep.subr.bf16.mxu0 %v2710
    %3211 = vmatpush1.bf16.msra.mxu0 %v2709
    %3212 = vmatprep.subr.bf16.mxu0 %v2718
    %3213 = vmatpush1.bf16.msra.mxu0 %v2717
    %3214 = vmatprep.subr.bf16.mxu0 %v2726
    %3215 = vmatpush1.bf16.msra.mxu0 %v2725
    %3216 = vmatprep.subr.bf16.mxu0 %v2734
    %3217 = vmatpush1.bf16.msra.mxu0 %v2733
    %3218 = vmatprep.subr.bf16.mxu0 %v2742
    %3219 = vmatpush1.bf16.msra.mxu0 %v2741
    %3220 = vmatprep.subr.bf16.mxu0 %v2750
    %3221 = vmatpush1.bf16.msra.mxu0 %v2749
    %3222 = vmatprep.subr.bf16.mxu0 %v2758
    %3223 = vmatpush1.bf16.msra.mxu0 %v2757
    %3224 = vmatprep.subr.bf16.mxu0 %v2766
    %3225 = vmatpush1.bf16.msra.mxu0 %v2765
    %3226 = vmatprep.subr.bf16.mxu0 %v2774
    %3227 = vmatpush1.bf16.msra.mxu0 %v2773
    %3228 = vmatprep.subr.bf16.mxu0 %v2782
    %3229 = vmatpush1.bf16.msra.mxu0 %v2781
    %3230 = vmatprep.subr.bf16.mxu0 %v2790
    %3231 = vmatpush1.bf16.msra.mxu0 %v2789
    %3232 = vmatprep.subr.bf16.mxu0 %v2798
    %3233 = vmatpush1.bf16.msra.mxu0 %v2797
    %3234 = vmatprep.subr.bf16.mxu0 %v2806
    %3235 = vmatpush1.bf16.msra.mxu0 %v2805
    %3236 = vmatprep.subr.bf16.mxu0 %v2814
    %3237 = vmatpush1.bf16.msra.mxu0 %v2813
    %3238 = vmatprep.subr.bf16.mxu0 %v2822
    %3239 = vmatpush1.bf16.msra.mxu0 %v2821
    %3240 = vmatprep.mubr.bf16.mxu0 %v2112
    %3241 = vmatmul.mubr.bf16.gmra.mrb[0].mxu0 %v2111
    %v3242 = vpop.f32.mrb[0].mxu0
    %v3243 = vadd.f32 %v3202, %v3242
    %v3244 = vpop.f32.mrb[0].mxu0
    %v3245 = vadd.f32 %v3204, %v3244
    %v3246 = vpop.f32.mrb[0].mxu0
    %v3247 = vpop.f32.mrb[0].mxu0
    %3248 = vdwg.mxu0
    %3249 = vmatprep.subr.bf16.mxu0 %v2830
    %3250 = vmatpush1.bf16.msra.mxu0 %v2829
    %3251 = vmatprep.subr.bf16.mxu0 %v2838
    %3252 = vmatpush1.bf16.msra.mxu0 %v2837
    %3253 = vmatprep.subr.bf16.mxu0 %v2846
    %3254 = vmatpush1.bf16.msra.mxu0 %v2845
    %3255 = vmatprep.subr.bf16.mxu0 %v2854
    %3256 = vmatpush1.bf16.msra.mxu0 %v2853
    %3257 = vmatprep.subr.bf16.mxu0 %v2862
    %3258 = vmatpush1.bf16.msra.mxu0 %v2861
    %3259 = vmatprep.subr.bf16.mxu0 %v2870
    %3260 = vmatpush1.bf16.msra.mxu0 %v2869
    %3261 = vmatprep.subr.bf16.mxu0 %v2878
    %3262 = vmatpush1.bf16.msra.mxu0 %v2877
    %3263 = vmatprep.subr.bf16.mxu0 %v2886
    %3264 = vmatpush1.bf16.msra.mxu0 %v2885
    %3265 = vmatprep.subr.bf16.mxu0 %v2894
    %3266 = vmatpush1.bf16.msra.mxu0 %v2893
    %3267 = vmatprep.subr.bf16.mxu0 %v2902
    %3268 = vmatpush1.bf16.msra.mxu0 %v2901
    %3269 = vmatprep.subr.bf16.mxu0 %v2910
    %3270 = vmatpush1.bf16.msra.mxu0 %v2909
    %3271 = vmatprep.subr.bf16.mxu0 %v2918
    %3272 = vmatpush1.bf16.msra.mxu0 %v2917
    %3273 = vmatprep.subr.bf16.mxu0 %v2926
    %3274 = vmatpush1.bf16.msra.mxu0 %v2925
    %3275 = vmatprep.subr.bf16.mxu0 %v2934
    %3276 = vmatpush1.bf16.msra.mxu0 %v2933
    %3277 = vmatprep.subr.bf16.mxu0 %v2942
    %3278 = vmatpush1.bf16.msra.mxu0 %v2941
    %3279 = vmatprep.subr.bf16.mxu0 %v2950
    %3280 = vmatpush1.bf16.msra.mxu0 %v2949
    %3281 = vmatprep.mubr.bf16.mxu0 %v2314
    %3282 = vmatmul.mubr.bf16.gmra.mrb[0].mxu0 %v2313
    %v3283 = vpop.f32.mrb[0].mxu0
    %v3284 = vadd.f32 %v3243, %v3283
    %v3285 = vpop.f32.mrb[0].mxu0
    %v3286 = vadd.f32 %v3245, %v3285
    %v3287 = vpop.f32.mrb[0].mxu0
    %v3288 = vpop.f32.mrb[0].mxu0
    %3289 = vdwg.mxu0
    %3290 = vmatprep.subr.bf16.mxu0 %v2958
    %3291 = vmatpush1.bf16.msra.mxu0 %v2957
    %3292 = vmatprep.subr.bf16.mxu0 %v2966
    %3293 = vmatpush1.bf16.msra.mxu0 %v2965
    %3294 = vmatprep.subr.bf16.mxu0 %v2974
    %3295 = vmatpush1.bf16.msra.mxu0 %v2973
    %3296 = vmatprep.subr.bf16.mxu0 %v2982
    %3297 = vmatpush1.bf16.msra.mxu0 %v2981
    %3298 = vmatprep.subr.bf16.mxu0 %v2990
    %3299 = vmatpush1.bf16.msra.mxu0 %v2989
    %3300 = vmatprep.subr.bf16.mxu0 %v2998
    %3301 = vmatpush1.bf16.msra.mxu0 %v2997
    %3302 = vmatprep.subr.bf16.mxu0 %v3006
    %3303 = vmatpush1.bf16.msra.mxu0 %v3005
    %3304 = vmatprep.subr.bf16.mxu0 %v3014
    %3305 = vmatpush1.bf16.msra.mxu0 %v3013
    %3306 = vmatprep.subr.bf16.mxu0 %v3022
    %3307 = vmatpush1.bf16.msra.mxu0 %v3021
    %3308 = vmatprep.subr.bf16.mxu0 %v3030
    %3309 = vmatpush1.bf16.msra.mxu0 %v3029
    %3310 = vmatprep.subr.bf16.mxu0 %v3038
    %3311 = vmatpush1.bf16.msra.mxu0 %v3037
    %3312 = vmatprep.subr.bf16.mxu0 %v3046
    %3313 = vmatpush1.bf16.msra.mxu0 %v3045
    %3314 = vmatprep.subr.bf16.mxu0 %v3054
    %3315 = vmatpush1.bf16.msra.mxu0 %v3053
    %3316 = vmatprep.subr.bf16.mxu0 %v3062
    %3317 = vmatpush1.bf16.msra.mxu0 %v3061
    %3318 = vmatprep.subr.bf16.mxu0 %v3070
    %3319 = vmatpush1.bf16.msra.mxu0 %v3069
    %3320 = vmatprep.subr.bf16.mxu0 %v3078
    %3321 = vmatpush1.bf16.msra.mxu0 %v3077
    %3322 = vmatprep.mubr.bf16.mxu0 %v2316
    %3323 = vmatmul.mubr.bf16.gmra.mrb[0].mxu0 %v2315
    %v3324 = vpop.f32.mrb[0].mxu0
    %v3325 = vadd.f32 %v3284, %v3324
    %v3326 = vpop.f32.mrb[0].mxu0
    %v3327 = vadd.f32 %v3286, %v3326
    %v3328 = vpop.f32.mrb[0].mxu0
    %v3329 = vpop.f32.mrb[0].mxu0
    %3330 = vdwg.mxu0
    %3331 = vmatprep.subr.bf16.mxu0 %v2320
    %3332 = vmatpush1.bf16.msra.mxu0 %v2319
    %3333 = vmatprep.subr.bf16.mxu0 %v2328
    %3334 = vmatpush1.bf16.msra.mxu0 %v2327
    %3335 = vmatprep.subr.bf16.mxu0 %v2336
    %3336 = vmatpush1.bf16.msra.mxu0 %v2335
    %3337 = vmatprep.subr.bf16.mxu0 %v2344
    %3338 = vmatpush1.bf16.msra.mxu0 %v2343
    %3339 = vmatprep.subr.bf16.mxu0 %v2352
    %3340 = vmatpush1.bf16.msra.mxu0 %v2351
    %3341 = vmatprep.subr.bf16.mxu0 %v2360
    %3342 = vmatpush1.bf16.msra.mxu0 %v2359
    %3343 = vmatprep.subr.bf16.mxu0 %v2368
    %3344 = vmatpush1.bf16.msra.mxu0 %v2367
    %3345 = vmatprep.subr.bf16.mxu0 %v2376
    %3346 = vmatpush1.bf16.msra.mxu0 %v2375
    %3347 = vmatprep.subr.bf16.mxu0 %v2384
    %3348 = vmatpush1.bf16.msra.mxu0 %v2383
    %3349 = vmatprep.subr.bf16.mxu0 %v2392
    %3350 = vmatpush1.bf16.msra.mxu0 %v2391
    %3351 = vmatprep.subr.bf16.mxu0 %v2400
    %3352 = vmatpush1.bf16.msra.mxu0 %v2399
    %3353 = vmatprep.subr.bf16.mxu0 %v2408
    %3354 = vmatpush1.bf16.msra.mxu0 %v2407
    %3355 = vmatprep.subr.bf16.mxu0 %v2416
    %3356 = vmatpush1.bf16.msra.mxu0 %v2415
    %3357 = vmatprep.subr.bf16.mxu0 %v2424
    %3358 = vmatpush1.bf16.msra.mxu0 %v2423
    %3359 = vmatprep.subr.bf16.mxu0 %v2432
    %3360 = vmatpush1.bf16.msra.mxu0 %v2431
    %3361 = vmatprep.subr.bf16.mxu0 %v2440
    %3362 = vmatpush1.bf16.msra.mxu0 %v2439
    %3363 = vmatprep.mubr.bf16.mxu0 %v2225
    %3364 = vmatmul.mubr.bf16.gmra.mrb[0].mxu0 %v2224
    %v3365 = vpop.f32.mrb[0].mxu0
    %v3366 = vadd.f32 0.0, %v3365
    %v3367 = vpop.f32.mrb[0].mxu0
    %v3368 = vadd.f32 0.0, %v3367
    %v3369 = vpop.f32.mrb[0].mxu0
    %v3370 = vpop.f32.mrb[0].mxu0
    %3371 = vdwg.mxu0
    %3372 = vmatprep.subr.bf16.mxu0 %v2448
    %3373 = vmatpush1.bf16.msra.mxu0 %v2447
    %3374 = vmatprep.subr.bf16.mxu0 %v2456
    %3375 = vmatpush1.bf16.msra.mxu0 %v2455
    %3376 = vmatprep.subr.bf16.mxu0 %v2464
    %3377 = vmatpush1.bf16.msra.mxu0 %v2463
    %3378 = vmatprep.subr.bf16.mxu0 %v2472
    %3379 = vmatpush1.bf16.msra.mxu0 %v2471
    %3380 = vmatprep.subr.bf16.mxu0 %v2480
    %3381 = vmatpush1.bf16.msra.mxu0 %v2479
    %3382 = vmatprep.subr.bf16.mxu0 %v2488
    %3383 = vmatpush1.bf16.msra.mxu0 %v2487
    %3384 = vmatprep.subr.bf16.mxu0 %v2496
    %3385 = vmatpush1.bf16.msra.mxu0 %v2495
    %3386 = vmatprep.subr.bf16.mxu0 %v2504
    %3387 = vmatpush1.bf16.msra.mxu0 %v2503
    %3388 = vmatprep.subr.bf16.mxu0 %v2512
    %3389 = vmatpush1.bf16.msra.mxu0 %v2511
    %3390 = vmatprep.subr.bf16.mxu0 %v2520
    %3391 = vmatpush1.bf16.msra.mxu0 %v2519
    %3392 = vmatprep.subr.bf16.mxu0 %v2528
    %3393 = vmatpush1.bf16.msra.mxu0 %v2527
    %3394 = vmatprep.subr.bf16.mxu0 %v2536
    %3395 = vmatpush1.bf16.msra.mxu0 %v2535
    %3396 = vmatprep.subr.bf16.mxu0 %v2544
    %3397 = vmatpush1.bf16.msra.mxu0 %v2543
    %3398 = vmatprep.subr.bf16.mxu0 %v2552
    %3399 = vmatpush1.bf16.msra.mxu0 %v2551
    %3400 = vmatprep.subr.bf16.mxu0 %v2560
    %3401 = vmatpush1.bf16.msra.mxu0 %v2559
    %3402 = vmatprep.subr.bf16.mxu0 %v2568
    %3403 = vmatpush1.bf16.msra.mxu0 %v2567
    %3404 = vmatprep.mubr.bf16.mxu0 %v2227
    %3405 = vmatmul.mubr.bf16.gmra.mrb[0].mxu0 %v2226
    %v3406 = vpop.f32.mrb[0].mxu0
    %v3407 = vadd.f32 %v3366, %v3406
    %v3408 = vpop.f32.mrb[0].mxu0
    %v3409 = vadd.f32 %v3368, %v3408
    %v3410 = vpop.f32.mrb[0].mxu0
    %v3411 = vpop.f32.mrb[0].mxu0
    %3412 = vdwg.mxu0
    %3413 = vmatprep.subr.bf16.mxu0 %v2576
    %3414 = vmatpush1.bf16.msra.mxu0 %v2575
    %3415 = vmatprep.subr.bf16.mxu0 %v2584
    %3416 = vmatpush1.bf16.msra.mxu0 %v2583
    %3417 = vmatprep.subr.bf16.mxu0 %v2592
    %3418 = vmatpush1.bf16.msra.mxu0 %v2591
    %3419 = vmatprep.subr.bf16.mxu0 %v2600
    %3420 = vmatpush1.bf16.msra.mxu0 %v2599
    %3421 = vmatprep.subr.bf16.mxu0 %v2608
    %3422 = vmatpush1.bf16.msra.mxu0 %v2607
    %3423 = vmatprep.subr.bf16.mxu0 %v2616
    %3424 = vmatpush1.bf16.msra.mxu0 %v2615
    %3425 = vmatprep.subr.bf16.mxu0 %v2624
    %3426 = vmatpush1.bf16.msra.mxu0 %v2623
    %3427 = vmatprep.subr.bf16.mxu0 %v2632
    %3428 = vmatpush1.bf16.msra.mxu0 %v2631
    %3429 = vmatprep.subr.bf16.mxu0 %v2640
    %3430 = vmatpush1.bf16.msra.mxu0 %v2639
    %3431 = vmatprep.subr.bf16.mxu0 %v2648
    %3432 = vmatpush1.bf16.msra.mxu0 %v2647
    %3433 = vmatprep.subr.bf16.mxu0 %v2656
    %3434 = vmatpush1.bf16.msra.mxu0 %v2655
    %3435 = vmatprep.subr.bf16.mxu0 %v2664
    %3436 = vmatpush1.bf16.msra.mxu0 %v2663
    %3437 = vmatprep.subr.bf16.mxu0 %v2672
    %3438 = vmatpush1.bf16.msra.mxu0 %v2671
    %3439 = vmatprep.subr.bf16.mxu0 %v2680
    %3440 = vmatpush1.bf16.msra.mxu0 %v2679
    %3441 = vmatprep.subr.bf16.mxu0 %v2688
    %3442 = vmatpush1.bf16.msra.mxu0 %v2687
    %3443 = vmatprep.subr.bf16.mxu0 %v2696
    %3444 = vmatpush1.bf16.msra.mxu0 %v2695
    %3445 = vmatprep.mubr.bf16.mxu0 %v2110
    %3446 = vmatmul.mubr.bf16.gmra.mrb[0].mxu0 %v2109
    %v3447 = vpop.f32.mrb[0].mxu0
    %v3448 = vadd.f32 %v3407, %v3447
    %v3449 = vpop.f32.mrb[0].mxu0
    %v3450 = vadd.f32 %v3409, %v3449
    %v3451 = vpop.f32.mrb[0].mxu0
    %v3452 = vpop.f32.mrb[0].mxu0
    %3453 = vdwg.mxu0
    %3454 = vmatprep.subr.bf16.mxu0 %v2704
    %3455 = vmatpush1.bf16.msra.mxu0 %v2703
    %3456 = vmatprep.subr.bf16.mxu0 %v2712
    %3457 = vmatpush1.bf16.msra.mxu0 %v2711
    %3458 = vmatprep.subr.bf16.mxu0 %v2720
    %3459 = vmatpush1.bf16.msra.mxu0 %v2719
    %3460 = vmatprep.subr.bf16.mxu0 %v2728
    %3461 = vmatpush1.bf16.msra.mxu0 %v2727
    %3462 = vmatprep.subr.bf16.mxu0 %v2736
    %3463 = vmatpush1.bf16.msra.mxu0 %v2735
    %3464 = vmatprep.subr.bf16.mxu0 %v2744
    %3465 = vmatpush1.bf16.msra.mxu0 %v2743
    %3466 = vmatprep.subr.bf16.mxu0 %v2752
    %3467 = vmatpush1.bf16.msra.mxu0 %v2751
    %3468 = vmatprep.subr.bf16.mxu0 %v2760
    %3469 = vmatpush1.bf16.msra.mxu0 %v2759
    %3470 = vmatprep.subr.bf16.mxu0 %v2768
    %3471 = vmatpush1.bf16.msra.mxu0 %v2767
    %3472 = vmatprep.subr.bf16.mxu0 %v2776
    %3473 = vmatpush1.bf16.msra.mxu0 %v2775
    %3474 = vmatprep.subr.bf16.mxu0 %v2784
    %3475 = vmatpush1.bf16.msra.mxu0 %v2783
    %3476 = vmatprep.subr.bf16.mxu0 %v2792
    %3477 = vmatpush1.bf16.msra.mxu0 %v2791
    %3478 = vmatprep.subr.bf16.mxu0 %v2800
    %3479 = vmatpush1.bf16.msra.mxu0 %v2799
    %3480 = vmatprep.subr.bf16.mxu0 %v2808
    %3481 = vmatpush1.bf16.msra.mxu0 %v2807
    %3482 = vmatprep.subr.bf16.mxu0 %v2816
    %3483 = vmatpush1.bf16.msra.mxu0 %v2815
    %3484 = vmatprep.subr.bf16.mxu0 %v2824
    %3485 = vmatpush1.bf16.msra.mxu0 %v2823
    %3486 = vmatprep.mubr.bf16.mxu0 %v2112
    %3487 = vmatmul.mubr.bf16.gmra.mrb[0].mxu0 %v2111
    %v3488 = vpop.f32.mrb[0].mxu0
    %v3489 = vadd.f32 %v3448, %v3488
    %v3490 = vpop.f32.mrb[0].mxu0
    %v3491 = vadd.f32 %v3450, %v3490
    %v3492 = vpop.f32.mrb[0].mxu0
    %v3493 = vpop.f32.mrb[0].mxu0
    %3494 = vdwg.mxu0
    %3495 = vmatprep.subr.bf16.mxu0 %v2832
    %3496 = vmatpush1.bf16.msra.mxu0 %v2831
    %3497 = vmatprep.subr.bf16.mxu0 %v2840
    %3498 = vmatpush1.bf16.msra.mxu0 %v2839
    %3499 = vmatprep.subr.bf16.mxu0 %v2848
    %3500 = vmatpush1.bf16.msra.mxu0 %v2847
    %3501 = vmatprep.subr.bf16.mxu0 %v2856
    %3502 = vmatpush1.bf16.msra.mxu0 %v2855
    %3503 = vmatprep.subr.bf16.mxu0 %v2864
    %3504 = vmatpush1.bf16.msra.mxu0 %v2863
    %3505 = vmatprep.subr.bf16.mxu0 %v2872
    %3506 = vmatpush1.bf16.msra.mxu0 %v2871
    %3507 = vmatprep.subr.bf16.mxu0 %v2880
    %3508 = vmatpush1.bf16.msra.mxu0 %v2879
    %3509 = vmatprep.subr.bf16.mxu0 %v2888
    %3510 = vmatpush1.bf16.msra.mxu0 %v2887
    %3511 = vmatprep.subr.bf16.mxu0 %v2896
    %3512 = vmatpush1.bf16.msra.mxu0 %v2895
    %3513 = vmatprep.subr.bf16.mxu0 %v2904
    %3514 = vmatpush1.bf16.msra.mxu0 %v2903
    %3515 = vmatprep.subr.bf16.mxu0 %v2912
    %3516 = vmatpush1.bf16.msra.mxu0 %v2911
    %3517 = vmatprep.subr.bf16.mxu0 %v2920
    %3518 = vmatpush1.bf16.msra.mxu0 %v2919
    %3519 = vmatprep.subr.bf16.mxu0 %v2928
    %3520 = vmatpush1.bf16.msra.mxu0 %v2927
    %3521 = vmatprep.subr.bf16.mxu0 %v2936
    %3522 = vmatpush1.bf16.msra.mxu0 %v2935
    %3523 = vmatprep.subr.bf16.mxu0 %v2944
    %3524 = vmatpush1.bf16.msra.mxu0 %v2943
    %3525 = vmatprep.subr.bf16.mxu0 %v2952
    %3526 = vmatpush1.bf16.msra.mxu0 %v2951
    %3527 = vmatprep.mubr.bf16.mxu0 %v2314
    %3528 = vmatmul.mubr.bf16.gmra.mrb[0].mxu0 %v2313
    %v3529 = vpop.f32.mrb[0].mxu0
    %v3530 = vadd.f32 %v3489, %v3529
    %v3531 = vpop.f32.mrb[0].mxu0
    %v3532 = vadd.f32 %v3491, %v3531
    %v3533 = vpop.f32.mrb[0].mxu0
    %v3534 = vpop.f32.mrb[0].mxu0
    %3535 = vdwg.mxu0
    %3536 = vmatprep.subr.bf16.mxu0 %v2960
    %3537 = vmatpush1.bf16.msra.mxu0 %v2959
    %3538 = vmatprep.subr.bf16.mxu0 %v2968
    %3539 = vmatpush1.bf16.msra.mxu0 %v2967
    %3540 = vmatprep.subr.bf16.mxu0 %v2976
    %3541 = vmatpush1.bf16.msra.mxu0 %v2975
    %3542 = vmatprep.subr.bf16.mxu0 %v2984
    %3543 = vmatpush1.bf16.msra.mxu0 %v2983
    %3544 = vmatprep.subr.bf16.mxu0 %v2992
    %3545 = vmatpush1.bf16.msra.mxu0 %v2991
    %3546 = vmatprep.subr.bf16.mxu0 %v3000
    %3547 = vmatpush1.bf16.msra.mxu0 %v2999
    %3548 = vmatprep.subr.bf16.mxu0 %v3008
    %3549 = vmatpush1.bf16.msra.mxu0 %v3007
    %3550 = vmatprep.subr.bf16.mxu0 %v3016
    %3551 = vmatpush1.bf16.msra.mxu0 %v3015
    %3552 = vmatprep.subr.bf16.mxu0 %v3024
    %3553 = vmatpush1.bf16.msra.mxu0 %v3023
    %3554 = vmatprep.subr.bf16.mxu0 %v3032
    %3555 = vmatpush1.bf16.msra.mxu0 %v3031
    %3556 = vmatprep.subr.bf16.mxu0 %v3040
    %3557 = vmatpush1.bf16.msra.mxu0 %v3039
    %3558 = vmatprep.subr.bf16.mxu0 %v3048
    %3559 = vmatpush1.bf16.msra.mxu0 %v3047
    %3560 = vmatprep.subr.bf16.mxu0 %v3056
    %3561 = vmatpush1.bf16.msra.mxu0 %v3055
    %3562 = vmatprep.subr.bf16.mxu0 %v3064
    %3563 = vmatpush1.bf16.msra.mxu0 %v3063
    %3564 = vmatprep.subr.bf16.mxu0 %v3072
    %3565 = vmatpush1.bf16.msra.mxu0 %v3071
    %3566 = vmatprep.subr.bf16.mxu0 %v3080
    %3567 = vmatpush1.bf16.msra.mxu0 %v3079
    %3568 = vmatprep.mubr.bf16.mxu0 %v2316
    %3569 = vmatmul.mubr.bf16.gmra.mrb[0].mxu0 %v2315
    %v3570 = vpop.f32.mrb[0].mxu0
    %v3571 = vadd.f32 %v3530, %v3570
    %v3572 = vpop.f32.mrb[0].mxu0
    %v3573 = vadd.f32 %v3532, %v3572
    %v3574 = vpop.f32.mrb[0].mxu0
    %v3575 = vpop.f32.mrb[0].mxu0
    %3576 = vdwg.mxu0
    %3577 = vmatprep.subr.bf16.mxu0 %v2322
    %3578 = vmatpush1.bf16.msra.mxu0 %v2321
    %3579 = vmatprep.subr.bf16.mxu0 %v2330
    %3580 = vmatpush1.bf16.msra.mxu0 %v2329
    %3581 = vmatprep.subr.bf16.mxu0 %v2338
    %3582 = vmatpush1.bf16.msra.mxu0 %v2337
    %3583 = vmatprep.subr.bf16.mxu0 %v2346
    %3584 = vmatpush1.bf16.msra.mxu0 %v2345
    %3585 = vmatprep.subr.bf16.mxu0 %v2354
    %3586 = vmatpush1.bf16.msra.mxu0 %v2353
    %3587 = vmatprep.subr.bf16.mxu0 %v2362
    %3588 = vmatpush1.bf16.msra.mxu0 %v2361
    %3589 = vmatprep.subr.bf16.mxu0 %v2370
    %3590 = vmatpush1.bf16.msra.mxu0 %v2369
    %3591 = vmatprep.subr.bf16.mxu0 %v2378
    %3592 = vmatpush1.bf16.msra.mxu0 %v2377
    %3593 = vmatprep.subr.bf16.mxu0 %v2386
    %3594 = vmatpush1.bf16.msra.mxu0 %v2385
    %3595 = vmatprep.subr.bf16.mxu0 %v2394
    %3596 = vmatpush1.bf16.msra.mxu0 %v2393
    %3597 = vmatprep.subr.bf16.mxu0 %v2402
    %3598 = vmatpush1.bf16.msra.mxu0 %v2401
    %3599 = vmatprep.subr.bf16.mxu0 %v2410
    %3600 = vmatpush1.bf16.msra.mxu0 %v2409
    %3601 = vmatprep.subr.bf16.mxu0 %v2418
    %3602 = vmatpush1.bf16.msra.mxu0 %v2417
    %3603 = vmatprep.subr.bf16.mxu0 %v2426
    %3604 = vmatpush1.bf16.msra.mxu0 %v2425
    %3605 = vmatprep.subr.bf16.mxu0 %v2434
    %3606 = vmatpush1.bf16.msra.mxu0 %v2433
    %3607 = vmatprep.subr.bf16.mxu0 %v2442
    %3608 = vmatpush1.bf16.msra.mxu0 %v2441
    %3609 = vmatprep.mubr.bf16.mxu0 %v2225
    %3610 = vmatmul.mubr.bf16.gmra.mrb[0].mxu0 %v2224
    %v3611 = vpop.f32.mrb[0].mxu0
    %v3612 = vadd.f32 0.0, %v3611
    %v3613 = vpop.f32.mrb[0].mxu0
    %v3614 = vadd.f32 0.0, %v3613
    %v3615 = vpop.f32.mrb[0].mxu0
    %v3616 = vpop.f32.mrb[0].mxu0
    %3617 = vdwg.mxu0
    %3618 = vmatprep.subr.bf16.mxu0 %v2450
    %3619 = vmatpush1.bf16.msra.mxu0 %v2449
    %3620 = vmatprep.subr.bf16.mxu0 %v2458
    %3621 = vmatpush1.bf16.msra.mxu0 %v2457
    %3622 = vmatprep.subr.bf16.mxu0 %v2466
    %3623 = vmatpush1.bf16.msra.mxu0 %v2465
    %3624 = vmatprep.subr.bf16.mxu0 %v2474
    %3625 = vmatpush1.bf16.msra.mxu0 %v2473
    %3626 = vmatprep.subr.bf16.mxu0 %v2482
    %3627 = vmatpush1.bf16.msra.mxu0 %v2481
    %3628 = vmatprep.subr.bf16.mxu0 %v2490
    %3629 = vmatpush1.bf16.msra.mxu0 %v2489
    %3630 = vmatprep.subr.bf16.mxu0 %v2498
    %3631 = vmatpush1.bf16.msra.mxu0 %v2497
    %3632 = vmatprep.subr.bf16.mxu0 %v2506
    %3633 = vmatpush1.bf16.msra.mxu0 %v2505
    %3634 = vmatprep.subr.bf16.mxu0 %v2514
    %3635 = vmatpush1.bf16.msra.mxu0 %v2513
    %3636 = vmatprep.subr.bf16.mxu0 %v2522
    %3637 = vmatpush1.bf16.msra.mxu0 %v2521
    %3638 = vmatprep.subr.bf16.mxu0 %v2530
    %3639 = vmatpush1.bf16.msra.mxu0 %v2529
    %3640 = vmatprep.subr.bf16.mxu0 %v2538
    %3641 = vmatpush1.bf16.msra.mxu0 %v2537
    %3642 = vmatprep.subr.bf16.mxu0 %v2546
    %3643 = vmatpush1.bf16.msra.mxu0 %v2545
    %3644 = vmatprep.subr.bf16.mxu0 %v2554
    %3645 = vmatpush1.bf16.msra.mxu0 %v2553
    %3646 = vmatprep.subr.bf16.mxu0 %v2562
    %3647 = vmatpush1.bf16.msra.mxu0 %v2561
    %3648 = vmatprep.subr.bf16.mxu0 %v2570
    %3649 = vmatpush1.bf16.msra.mxu0 %v2569
    %3650 = vmatprep.mubr.bf16.mxu0 %v2227
    %3651 = vmatmul.mubr.bf16.gmra.mrb[0].mxu0 %v2226
    %v3652 = vpop.f32.mrb[0].mxu0
    %v3653 = vadd.f32 %v3612, %v3652
    %v3654 = vpop.f32.mrb[0].mxu0
    %v3655 = vadd.f32 %v3614, %v3654
    %v3656 = vpop.f32.mrb[0].mxu0
    %v3657 = vpop.f32.mrb[0].mxu0
    %3658 = vdwg.mxu0
    %3659 = vmatprep.subr.bf16.mxu0 %v2578
    %3660 = vmatpush1.bf16.msra.mxu0 %v2577
    %3661 = vmatprep.subr.bf16.mxu0 %v2586
    %3662 = vmatpush1.bf16.msra.mxu0 %v2585
    %3663 = vmatprep.subr.bf16.mxu0 %v2594
    %3664 = vmatpush1.bf16.msra.mxu0 %v2593
    %3665 = vmatprep.subr.bf16.mxu0 %v2602
    %3666 = vmatpush1.bf16.msra.mxu0 %v2601
    %3667 = vmatprep.subr.bf16.mxu0 %v2610
    %3668 = vmatpush1.bf16.msra.mxu0 %v2609
    %3669 = vmatprep.subr.bf16.mxu0 %v2618
    %3670 = vmatpush1.bf16.msra.mxu0 %v2617
    %3671 = vmatprep.subr.bf16.mxu0 %v2626
    %3672 = vmatpush1.bf16.msra.mxu0 %v2625
    %3673 = vmatprep.subr.bf16.mxu0 %v2634
    %3674 = vmatpush1.bf16.msra.mxu0 %v2633
    %3675 = vmatprep.subr.bf16.mxu0 %v2642
    %3676 = vmatpush1.bf16.msra.mxu0 %v2641
    %3677 = vmatprep.subr.bf16.mxu0 %v2650
    %3678 = vmatpush1.bf16.msra.mxu0 %v2649
    %3679 = vmatprep.subr.bf16.mxu0 %v2658
    %3680 = vmatpush1.bf16.msra.mxu0 %v2657
    %3681 = vmatprep.subr.bf16.mxu0 %v2666
    %3682 = vmatpush1.bf16.msra.mxu0 %v2665
    %3683 = vmatprep.subr.bf16.mxu0 %v2674
    %3684 = vmatpush1.bf16.msra.mxu0 %v2673
    %3685 = vmatprep.subr.bf16.mxu0 %v2682
    %3686 = vmatpush1.bf16.msra.mxu0 %v2681
    %3687 = vmatprep.subr.bf16.mxu0 %v2690
    %3688 = vmatpush1.bf16.msra.mxu0 %v2689
    %3689 = vmatprep.subr.bf16.mxu0 %v2698
    %3690 = vmatpush1.bf16.msra.mxu0 %v2697
    %3691 = vmatprep.mubr.bf16.mxu0 %v2110
    %3692 = vmatmul.mubr.bf16.gmra.mrb[0].mxu0 %v2109
    %v3693 = vpop.f32.mrb[0].mxu0
    %v3694 = vadd.f32 %v3653, %v3693
    %v3695 = vpop.f32.mrb[0].mxu0
    %v3696 = vadd.f32 %v3655, %v3695
    %v3697 = vpop.f32.mrb[0].mxu0
    %v3698 = vpop.f32.mrb[0].mxu0
    %3699 = vdwg.mxu0
    %3700 = vmatprep.subr.bf16.mxu0 %v2706
    %3701 = vmatpush1.bf16.msra.mxu0 %v2705
    %3702 = vmatprep.subr.bf16.mxu0 %v2714
    %3703 = vmatpush1.bf16.msra.mxu0 %v2713
    %3704 = vmatprep.subr.bf16.mxu0 %v2722
    %3705 = vmatpush1.bf16.msra.mxu0 %v2721
    %3706 = vmatprep.subr.bf16.mxu0 %v2730
    %3707 = vmatpush1.bf16.msra.mxu0 %v2729
    %3708 = vmatprep.subr.bf16.mxu0 %v2738
    %3709 = vmatpush1.bf16.msra.mxu0 %v2737
    %3710 = vmatprep.subr.bf16.mxu0 %v2746
    %3711 = vmatpush1.bf16.msra.mxu0 %v2745
    %3712 = vmatprep.subr.bf16.mxu0 %v2754
    %3713 = vmatpush1.bf16.msra.mxu0 %v2753
    %3714 = vmatprep.subr.bf16.mxu0 %v2762
    %3715 = vmatpush1.bf16.msra.mxu0 %v2761
    %3716 = vmatprep.subr.bf16.mxu0 %v2770
    %3717 = vmatpush1.bf16.msra.mxu0 %v2769
    %3718 = vmatprep.subr.bf16.mxu0 %v2778
    %3719 = vmatpush1.bf16.msra.mxu0 %v2777
    %3720 = vmatprep.subr.bf16.mxu0 %v2786
    %3721 = vmatpush1.bf16.msra.mxu0 %v2785
    %3722 = vmatprep.subr.bf16.mxu0 %v2794
    %3723 = vmatpush1.bf16.msra.mxu0 %v2793
    %3724 = vmatprep.subr.bf16.mxu0 %v2802
    %3725 = vmatpush1.bf16.msra.mxu0 %v2801
    %3726 = vmatprep.subr.bf16.mxu0 %v2810
    %3727 = vmatpush1.bf16.msra.mxu0 %v2809
    %3728 = vmatprep.subr.bf16.mxu0 %v2818
    %3729 = vmatpush1.bf16.msra.mxu0 %v2817
    %3730 = vmatprep.subr.bf16.mxu0 %v2826
    %3731 = vmatpush1.bf16.msra.mxu0 %v2825
    %3732 = vmatprep.mubr.bf16.mxu0 %v2112
    %3733 = vmatmul.mubr.bf16.gmra.mrb[0].mxu0 %v2111
    %v3734 = vpop.f32.mrb[0].mxu0
    %v3735 = vadd.f32 %v3694, %v3734
    %v3736 = vpop.f32.mrb[0].mxu0
    %v3737 = vadd.f32 %v3696, %v3736
    %v3738 = vpop.f32.mrb[0].mxu0
    %v3739 = vpop.f32.mrb[0].mxu0
    %3740 = vdwg.mxu0
    %3741 = vmatprep.subr.bf16.mxu0 %v2834
    %3742 = vmatpush1.bf16.msra.mxu0 %v2833
    %3743 = vmatprep.subr.bf16.mxu0 %v2842
    %3744 = vmatpush1.bf16.msra.mxu0 %v2841
    %3745 = vmatprep.subr.bf16.mxu0 %v2850
    %3746 = vmatpush1.bf16.msra.mxu0 %v2849
    %3747 = vmatprep.subr.bf16.mxu0 %v2858
    %3748 = vmatpush1.bf16.msra.mxu0 %v2857
    %3749 = vmatprep.subr.bf16.mxu0 %v2866
    %3750 = vmatpush1.bf16.msra.mxu0 %v2865
    %3751 = vmatprep.subr.bf16.mxu0 %v2874
    %3752 = vmatpush1.bf16.msra.mxu0 %v2873
    %3753 = vmatprep.subr.bf16.mxu0 %v2882
    %3754 = vmatpush1.bf16.msra.mxu0 %v2881
    %3755 = vmatprep.subr.bf16.mxu0 %v2890
    %3756 = vmatpush1.bf16.msra.mxu0 %v2889
    %3757 = vmatprep.subr.bf16.mxu0 %v2898
    %3758 = vmatpush1.bf16.msra.mxu0 %v2897
    %3759 = vmatprep.subr.bf16.mxu0 %v2906
    %3760 = vmatpush1.bf16.msra.mxu0 %v2905
    %3761 = vmatprep.subr.bf16.mxu0 %v2914
    %3762 = vmatpush1.bf16.msra.mxu0 %v2913
    %3763 = vmatprep.subr.bf16.mxu0 %v2922
    %3764 = vmatpush1.bf16.msra.mxu0 %v2921
    %3765 = vmatprep.subr.bf16.mxu0 %v2930
    %3766 = vmatpush1.bf16.msra.mxu0 %v2929
    %3767 = vmatprep.subr.bf16.mxu0 %v2938
    %3768 = vmatpush1.bf16.msra.mxu0 %v2937
    %3769 = vmatprep.subr.bf16.mxu0 %v2946
    %3770 = vmatpush1.bf16.msra.mxu0 %v2945
    %3771 = vmatprep.subr.bf16.mxu0 %v2954
    %3772 = vmatpush1.bf16.msra.mxu0 %v2953
    %3773 = vmatprep.mubr.bf16.mxu0 %v2314
    %3774 = vmatmul.mubr.bf16.gmra.mrb[0].mxu0 %v2313
    %v3775 = vpop.f32.mrb[0].mxu0
    %v3776 = vadd.f32 %v3735, %v3775
    %v3777 = vpop.f32.mrb[0].mxu0
    %v3778 = vadd.f32 %v3737, %v3777
    %v3779 = vpop.f32.mrb[0].mxu0
    %v3780 = vpop.f32.mrb[0].mxu0
    %3781 = vdwg.mxu0
    %3782 = vmatprep.subr.bf16.mxu0 %v2962
    %3783 = vmatpush1.bf16.msra.mxu0 %v2961
    %3784 = vmatprep.subr.bf16.mxu0 %v2970
    %3785 = vmatpush1.bf16.msra.mxu0 %v2969
    %3786 = vmatprep.subr.bf16.mxu0 %v2978
    %3787 = vmatpush1.bf16.msra.mxu0 %v2977
    %3788 = vmatprep.subr.bf16.mxu0 %v2986
    %3789 = vmatpush1.bf16.msra.mxu0 %v2985
    %3790 = vmatprep.subr.bf16.mxu0 %v2994
    %3791 = vmatpush1.bf16.msra.mxu0 %v2993
    %3792 = vmatprep.subr.bf16.mxu0 %v3002
    %3793 = vmatpush1.bf16.msra.mxu0 %v3001
    %3794 = vmatprep.subr.bf16.mxu0 %v3010
    %3795 = vmatpush1.bf16.msra.mxu0 %v3009
    %3796 = vmatprep.subr.bf16.mxu0 %v3018
    %3797 = vmatpush1.bf16.msra.mxu0 %v3017
    %3798 = vmatprep.subr.bf16.mxu0 %v3026
    %3799 = vmatpush1.bf16.msra.mxu0 %v3025
    %3800 = vmatprep.subr.bf16.mxu0 %v3034
    %3801 = vmatpush1.bf16.msra.mxu0 %v3033
    %3802 = vmatprep.subr.bf16.mxu0 %v3042
    %3803 = vmatpush1.bf16.msra.mxu0 %v3041
    %3804 = vmatprep.subr.bf16.mxu0 %v3050
    %3805 = vmatpush1.bf16.msra.mxu0 %v3049
    %3806 = vmatprep.subr.bf16.mxu0 %v3058
    %3807 = vmatpush1.bf16.msra.mxu0 %v3057
    %3808 = vmatprep.subr.bf16.mxu0 %v3066
    %3809 = vmatpush1.bf16.msra.mxu0 %v3065
    %3810 = vmatprep.subr.bf16.mxu0 %v3074
    %3811 = vmatpush1.bf16.msra.mxu0 %v3073
    %3812 = vmatprep.subr.bf16.mxu0 %v3082
    %3813 = vmatpush1.bf16.msra.mxu0 %v3081
    %3814 = vmatprep.mubr.bf16.mxu0 %v2316
    %3815 = vmatmul.mubr.bf16.gmra.mrb[0].mxu0 %v2315
    %v3816 = vpop.f32.mrb[0].mxu0
    %v3817 = vadd.f32 %v3776, %v3816
    %v3818 = vpop.f32.mrb[0].mxu0
    %v3819 = vadd.f32 %v3778, %v3818
    %v3820 = vpop.f32.mrb[0].mxu0
    %v3821 = vpop.f32.mrb[0].mxu0
    %3822 = vdwg.mxu0
    %3823 = vmatprep.subr.bf16.mxu0 %v2324
    %3824 = vmatpush1.bf16.msra.mxu0 %v2323
    %3825 = vmatprep.subr.bf16.mxu0 %v2332
    %3826 = vmatpush1.bf16.msra.mxu0 %v2331
    %3827 = vmatprep.subr.bf16.mxu0 %v2340
    %3828 = vmatpush1.bf16.msra.mxu0 %v2339
    %3829 = vmatprep.subr.bf16.mxu0 %v2348
    %3830 = vmatpush1.bf16.msra.mxu0 %v2347
    %3831 = vmatprep.subr.bf16.mxu0 %v2356
    %3832 = vmatpush1.bf16.msra.mxu0 %v2355
    %3833 = vmatprep.subr.bf16.mxu0 %v2364
    %3834 = vmatpush1.bf16.msra.mxu0 %v2363
    %3835 = vmatprep.subr.bf16.mxu0 %v2372
    %3836 = vmatpush1.bf16.msra.mxu0 %v2371
    %3837 = vmatprep.subr.bf16.mxu0 %v2380
    %3838 = vmatpush1.bf16.msra.mxu0 %v2379
    %3839 = vmatprep.subr.bf16.mxu0 %v2388
    %3840 = vmatpush1.bf16.msra.mxu0 %v2387
    %3841 = vmatprep.subr.bf16.mxu0 %v2396
    %3842 = vmatpush1.bf16.msra.mxu0 %v2395
    %3843 = vmatprep.subr.bf16.mxu0 %v2404
    %3844 = vmatpush1.bf16.msra.mxu0 %v2403
    %3845 = vmatprep.subr.bf16.mxu0 %v2412
    %3846 = vmatpush1.bf16.msra.mxu0 %v2411
    %3847 = vmatprep.subr.bf16.mxu0 %v2420
    %3848 = vmatpush1.bf16.msra.mxu0 %v2419
    %3849 = vmatprep.subr.bf16.mxu0 %v2428
    %3850 = vmatpush1.bf16.msra.mxu0 %v2427
    %3851 = vmatprep.subr.bf16.mxu0 %v2436
    %3852 = vmatpush1.bf16.msra.mxu0 %v2435
    %3853 = vmatprep.subr.bf16.mxu0 %v2444
    %3854 = vmatpush1.bf16.msra.mxu0 %v2443
    %3855 = vmatprep.mubr.bf16.mxu0 %v2225
    %3856 = vmatmul.mubr.bf16.gmra.mrb[0].mxu0 %v2224
    %v3857 = vpop.f32.mrb[0].mxu0
    %v3858 = vadd.f32 0.0, %v3857
    %v3859 = vpop.f32.mrb[0].mxu0
    %v3860 = vadd.f32 0.0, %v3859
    %v3861 = vpop.f32.mrb[0].mxu0
    %v3862 = vpop.f32.mrb[0].mxu0
    %3863 = vdwg.mxu0
    %3864 = vmatprep.subr.bf16.mxu0 %v2452
    %3865 = vmatpush1.bf16.msra.mxu0 %v2451
    %3866 = vmatprep.subr.bf16.mxu0 %v2460
    %3867 = vmatpush1.bf16.msra.mxu0 %v2459
    %3868 = vmatprep.subr.bf16.mxu0 %v2468
    %3869 = vmatpush1.bf16.msra.mxu0 %v2467
    %3870 = vmatprep.subr.bf16.mxu0 %v2476
    %3871 = vmatpush1.bf16.msra.mxu0 %v2475
    %3872 = vmatprep.subr.bf16.mxu0 %v2484
    %3873 = vmatpush1.bf16.msra.mxu0 %v2483
    %3874 = vmatprep.subr.bf16.mxu0 %v2492
    %3875 = vmatpush1.bf16.msra.mxu0 %v2491
    %3876 = vmatprep.subr.bf16.mxu0 %v2500
    %3877 = vmatpush1.bf16.msra.mxu0 %v2499
    %3878 = vmatprep.subr.bf16.mxu0 %v2508
    %3879 = vmatpush1.bf16.msra.mxu0 %v2507
    %3880 = vmatprep.subr.bf16.mxu0 %v2516
    %3881 = vmatpush1.bf16.msra.mxu0 %v2515
    %3882 = vmatprep.subr.bf16.mxu0 %v2524
    %3883 = vmatpush1.bf16.msra.mxu0 %v2523
    %3884 = vmatprep.subr.bf16.mxu0 %v2532
    %3885 = vmatpush1.bf16.msra.mxu0 %v2531
    %3886 = vmatprep.subr.bf16.mxu0 %v2540
    %3887 = vmatpush1.bf16.msra.mxu0 %v2539
    %3888 = vmatprep.subr.bf16.mxu0 %v2548
    %3889 = vmatpush1.bf16.msra.mxu0 %v2547
    %3890 = vmatprep.subr.bf16.mxu0 %v2556
    %3891 = vmatpush1.bf16.msra.mxu0 %v2555
    %3892 = vmatprep.subr.bf16.mxu0 %v2564
    %3893 = vmatpush1.bf16.msra.mxu0 %v2563
    %3894 = vmatprep.subr.bf16.mxu0 %v2572
    %3895 = vmatpush1.bf16.msra.mxu0 %v2571
    %3896 = vmatprep.mubr.bf16.mxu0 %v2227
    %3897 = vmatmul.mubr.bf16.gmra.mrb[0].mxu0 %v2226
    %v3898 = vpop.f32.mrb[0].mxu0
    %v3899 = vadd.f32 %v3858, %v3898
    %v3900 = vpop.f32.mrb[0].mxu0
    %v3901 = vadd.f32 %v3860, %v3900
    %v3902 = vpop.f32.mrb[0].mxu0
    %v3903 = vpop.f32.mrb[0].mxu0
    %3904 = vdwg.mxu0
    %3905 = vmatprep.subr.bf16.mxu0 %v2580
    %3906 = vmatpush1.bf16.msra.mxu0 %v2579
    %3907 = vmatprep.subr.bf16.mxu0 %v2588
    %3908 = vmatpush1.bf16.msra.mxu0 %v2587
    %3909 = vmatprep.subr.bf16.mxu0 %v2596
    %3910 = vmatpush1.bf16.msra.mxu0 %v2595
    %3911 = vmatprep.subr.bf16.mxu0 %v2604
    %3912 = vmatpush1.bf16.msra.mxu0 %v2603
    %3913 = vmatprep.subr.bf16.mxu0 %v2612
    %3914 = vmatpush1.bf16.msra.mxu0 %v2611
    %3915 = vmatprep.subr.bf16.mxu0 %v2620
    %3916 = vmatpush1.bf16.msra.mxu0 %v2619
    %3917 = vmatprep.subr.bf16.mxu0 %v2628
    %3918 = vmatpush1.bf16.msra.mxu0 %v2627
    %3919 = vmatprep.subr.bf16.mxu0 %v2636
    %3920 = vmatpush1.bf16.msra.mxu0 %v2635
    %3921 = vmatprep.subr.bf16.mxu0 %v2644
    %3922 = vmatpush1.bf16.msra.mxu0 %v2643
    %3923 = vmatprep.subr.bf16.mxu0 %v2652
    %3924 = vmatpush1.bf16.msra.mxu0 %v2651
    %3925 = vmatprep.subr.bf16.mxu0 %v2660
    %3926 = vmatpush1.bf16.msra.mxu0 %v2659
    %3927 = vmatprep.subr.bf16.mxu0 %v2668
    %3928 = vmatpush1.bf16.msra.mxu0 %v2667
    %3929 = vmatprep.subr.bf16.mxu0 %v2676
    %3930 = vmatpush1.bf16.msra.mxu0 %v2675
    %3931 = vmatprep.subr.bf16.mxu0 %v2684
    %3932 = vmatpush1.bf16.msra.mxu0 %v2683
    %3933 = vmatprep.subr.bf16.mxu0 %v2692
    %3934 = vmatpush1.bf16.msra.mxu0 %v2691
    %3935 = vmatprep.subr.bf16.mxu0 %v2700
    %3936 = vmatpush1.bf16.msra.mxu0 %v2699
    %3937 = vmatprep.mubr.bf16.mxu0 %v2110
    %3938 = vmatmul.mubr.bf16.gmra.mrb[0].mxu0 %v2109
    %v3939 = vpop.f32.mrb[0].mxu0
    %v3940 = vadd.f32 %v3899, %v3939
    %v3941 = vpop.f32.mrb[0].mxu0
    %v3942 = vadd.f32 %v3901, %v3941
    %v3943 = vpop.f32.mrb[0].mxu0
    %v3944 = vpop.f32.mrb[0].mxu0
    %3945 = vdwg.mxu0
    %3946 = vmatprep.subr.bf16.mxu0 %v2708
    %3947 = vmatpush1.bf16.msra.mxu0 %v2707
    %3948 = vmatprep.subr.bf16.mxu0 %v2716
    %3949 = vmatpush1.bf16.msra.mxu0 %v2715
    %3950 = vmatprep.subr.bf16.mxu0 %v2724
    %3951 = vmatpush1.bf16.msra.mxu0 %v2723
    %3952 = vmatprep.subr.bf16.mxu0 %v2732
    %3953 = vmatpush1.bf16.msra.mxu0 %v2731
    %3954 = vmatprep.subr.bf16.mxu0 %v2740
    %3955 = vmatpush1.bf16.msra.mxu0 %v2739
    %3956 = vmatprep.subr.bf16.mxu0 %v2748
    %3957 = vmatpush1.bf16.msra.mxu0 %v2747
    %3958 = vmatprep.subr.bf16.mxu0 %v2756
    %3959 = vmatpush1.bf16.msra.mxu0 %v2755
    %3960 = vmatprep.subr.bf16.mxu0 %v2764
    %3961 = vmatpush1.bf16.msra.mxu0 %v2763
    %3962 = vmatprep.subr.bf16.mxu0 %v2772
    %3963 = vmatpush1.bf16.msra.mxu0 %v2771
    %3964 = vmatprep.subr.bf16.mxu0 %v2780
    %3965 = vmatpush1.bf16.msra.mxu0 %v2779
    %3966 = vmatprep.subr.bf16.mxu0 %v2788
    %3967 = vmatpush1.bf16.msra.mxu0 %v2787
    %3968 = vmatprep.subr.bf16.mxu0 %v2796
    %3969 = vmatpush1.bf16.msra.mxu0 %v2795
    %3970 = vmatprep.subr.bf16.mxu0 %v2804
    %3971 = vmatpush1.bf16.msra.mxu0 %v2803
    %3972 = vmatprep.subr.bf16.mxu0 %v2812
    %3973 = vmatpush1.bf16.msra.mxu0 %v2811
    %3974 = vmatprep.subr.bf16.mxu0 %v2820
    %3975 = vmatpush1.bf16.msra.mxu0 %v2819
    %3976 = vmatprep.subr.bf16.mxu0 %v2828
    %3977 = vmatpush1.bf16.msra.mxu0 %v2827
    %3978 = vmatprep.mubr.bf16.mxu0 %v2112
    %3979 = vmatmul.mubr.bf16.gmra.mrb[0].mxu0 %v2111
    %v3980 = vpop.f32.mrb[0].mxu0
    %v3981 = vadd.f32 %v3940, %v3980
    %v3982 = vpop.f32.mrb[0].mxu0
    %v3983 = vadd.f32 %v3942, %v3982
    %v3984 = vpop.f32.mrb[0].mxu0
    %v3985 = vpop.f32.mrb[0].mxu0
    %3986 = vdwg.mxu0
    %3987 = vmatprep.subr.bf16.mxu0 %v2836
    %3988 = vmatpush1.bf16.msra.mxu0 %v2835
    %3989 = vmatprep.subr.bf16.mxu0 %v2844
    %3990 = vmatpush1.bf16.msra.mxu0 %v2843
    %3991 = vmatprep.subr.bf16.mxu0 %v2852
    %3992 = vmatpush1.bf16.msra.mxu0 %v2851
    %3993 = vmatprep.subr.bf16.mxu0 %v2860
    %3994 = vmatpush1.bf16.msra.mxu0 %v2859
    %3995 = vmatprep.subr.bf16.mxu0 %v2868
    %3996 = vmatpush1.bf16.msra.mxu0 %v2867
    %3997 = vmatprep.subr.bf16.mxu0 %v2876
    %3998 = vmatpush1.bf16.msra.mxu0 %v2875
    %3999 = vmatprep.subr.bf16.mxu0 %v2884
    %4000 = vmatpush1.bf16.msra.mxu0 %v2883
    %4001 = vmatprep.subr.bf16.mxu0 %v2892
    %4002 = vmatpush1.bf16.msra.mxu0 %v2891
    %4003 = vmatprep.subr.bf16.mxu0 %v2900
    %4004 = vmatpush1.bf16.msra.mxu0 %v2899
    %4005 = vmatprep.subr.bf16.mxu0 %v2908
    %4006 = vmatpush1.bf16.msra.mxu0 %v2907
    %4007 = vmatprep.subr.bf16.mxu0 %v2916
    %4008 = vmatpush1.bf16.msra.mxu0 %v2915
    %4009 = vmatprep.subr.bf16.mxu0 %v2924
    %4010 = vmatpush1.bf16.msra.mxu0 %v2923
    %4011 = vmatprep.subr.bf16.mxu0 %v2932
    %4012 = vmatpush1.bf16.msra.mxu0 %v2931
    %4013 = vmatprep.subr.bf16.mxu0 %v2940
    %4014 = vmatpush1.bf16.msra.mxu0 %v2939
    %4015 = vmatprep.subr.bf16.mxu0 %v2948
    %4016 = vmatpush1.bf16.msra.mxu0 %v2947
    %4017 = vmatprep.subr.bf16.mxu0 %v2956
    %4018 = vmatpush1.bf16.msra.mxu0 %v2955
    %4019 = vmatprep.mubr.bf16.mxu0 %v2314
    %4020 = vmatmul.mubr.bf16.gmra.mrb[0].mxu0 %v2313
    %v4021 = vpop.f32.mrb[0].mxu0
    %v4022 = vadd.f32 %v3981, %v4021
    %v4023 = vpop.f32.mrb[0].mxu0
    %v4024 = vadd.f32 %v3983, %v4023
    %v4025 = vpop.f32.mrb[0].mxu0
    %v4026 = vpop.f32.mrb[0].mxu0
    %4027 = vdwg.mxu0
    %4028 = vmatprep.subr.bf16.mxu0 %v2964
    %4029 = vmatpush1.bf16.msra.mxu0 %v2963
    %4030 = vmatprep.subr.bf16.mxu0 %v2972
    %4031 = vmatpush1.bf16.msra.mxu0 %v2971
    %4032 = vmatprep.subr.bf16.mxu0 %v2980
    %4033 = vmatpush1.bf16.msra.mxu0 %v2979
    %4034 = vmatprep.subr.bf16.mxu0 %v2988
    %4035 = vmatpush1.bf16.msra.mxu0 %v2987
    %4036 = vmatprep.subr.bf16.mxu0 %v2996
    %4037 = vmatpush1.bf16.msra.mxu0 %v2995
    %4038 = vmatprep.subr.bf16.mxu0 %v3004
    %4039 = vmatpush1.bf16.msra.mxu0 %v3003
    %4040 = vmatprep.subr.bf16.mxu0 %v3012
    %4041 = vmatpush1.bf16.msra.mxu0 %v3011
    %4042 = vmatprep.subr.bf16.mxu0 %v3020
    %4043 = vmatpush1.bf16.msra.mxu0 %v3019
    %4044 = vmatprep.subr.bf16.mxu0 %v3028
    %4045 = vmatpush1.bf16.msra.mxu0 %v3027
    %4046 = vmatprep.subr.bf16.mxu0 %v3036
    %4047 = vmatpush1.bf16.msra.mxu0 %v3035
    %4048 = vmatprep.subr.bf16.mxu0 %v3044
    %4049 = vmatpush1.bf16.msra.mxu0 %v3043
    %4050 = vmatprep.subr.bf16.mxu0 %v3052
    %4051 = vmatpush1.bf16.msra.mxu0 %v3051
    %4052 = vmatprep.subr.bf16.mxu0 %v3060
    %4053 = vmatpush1.bf16.msra.mxu0 %v3059
    %4054 = vmatprep.subr.bf16.mxu0 %v3068
    %4055 = vmatpush1.bf16.msra.mxu0 %v3067
    %4056 = vmatprep.subr.bf16.mxu0 %v3076
    %4057 = vmatpush1.bf16.msra.mxu0 %v3075
    %4058 = vmatprep.subr.bf16.mxu0 %v3084
    %4059 = vmatpush1.bf16.msra.mxu0 %v3083
    %4060 = vmatprep.mubr.bf16.mxu0 %v2316
    %4061 = vmatmul.mubr.bf16.gmra.mrb[0].mxu0 %v2315
    %v4062 = vpop.f32.mrb[0].mxu0
    %v4063 = vadd.f32 %v4022, %v4062
    %v4064 = vpop.f32.mrb[0].mxu0
    %v4065 = vadd.f32 %v4024, %v4064
    %v4066 = vpop.f32.mrb[0].mxu0
    %v4067 = vpop.f32.mrb[0].mxu0
    %4068 = vdwg.mxu0
    %v4069 = vld [vmem:[#allocation11 + $0xc] sm:$0xff]
    %v4070 = vld [vmem:[#allocation11 + $0x14] sm:$0xff]
    %v4072 = vlaneseq
    %v4073 = vshrl.u32 %v4072, 7
    %v4074 = vsub.s32 0, %v4073
    %v4075 = vrot.slane %v4069, %v4074
    %v4076 = vlaneseq
    %v4077 = vshrl.u32 %v4076, 7
    %v4078 = vsub.s32 1, %v4077
    %v4079 = vrot.slane %v4069, %v4078
    %v4080 = vlaneseq
    %v4081 = vshrl.u32 %v4080, 7
    %v4082 = vsub.s32 2, %v4081
    %v4083 = vrot.slane %v4069, %v4082
    %v4084 = vlaneseq
    %v4085 = vshrl.u32 %v4084, 7
    %v4086 = vsub.s32 3, %v4085
    %v4087 = vrot.slane %v4069, %v4086
    %v4088 = vlaneseq
    %v4089 = vshrl.u32 %v4088, 7
    %v4090 = vsub.s32 4, %v4089
    %v4091 = vrot.slane %v4069, %v4090
    %v4092 = vlaneseq
    %v4093 = vshrl.u32 %v4092, 7
    %v4094 = vsub.s32 5, %v4093
    %v4095 = vrot.slane %v4069, %v4094
    %v4096 = vlaneseq
    %v4097 = vshrl.u32 %v4096, 7
    %v4098 = vsub.s32 6, %v4097
    %v4099 = vrot.slane %v4069, %v4098
    %v4100 = vlaneseq
    %v4101 = vshrl.u32 %v4100, 7
    %v4102 = vsub.s32 7, %v4101
    %v4103 = vrot.slane %v4069, %v4102
    %v4112 = vmul.f32 %v3325, %v4075
    %v4113 = vmul.f32 %v3327, %v4079
    %v4114 = vmul.f32 %v3571, %v4083
    %v4115 = vmul.f32 %v3573, %v4087
    %v4116 = vmul.f32 %v3817, %v4091
    %v4117 = vmul.f32 %v3819, %v4095
    %v4118 = vmul.f32 %v4063, %v4099
    %v4119 = vmul.f32 %v4065, %v4103
    %v4121 = vlaneseq
    %v4122 = vshrl.u32 %v4121, 7
    %v4123 = vsub.s32 0, %v4122
    %v4124 = vrot.slane %v4070, %v4123
    %v4125 = vlaneseq
    %v4126 = vshrl.u32 %v4125, 7
    %v4127 = vsub.s32 1, %v4126
    %v4128 = vrot.slane %v4070, %v4127
    %v4129 = vlaneseq
    %v4130 = vshrl.u32 %v4129, 7
    %v4131 = vsub.s32 2, %v4130
    %v4132 = vrot.slane %v4070, %v4131
    %v4133 = vlaneseq
    %v4134 = vshrl.u32 %v4133, 7
    %v4135 = vsub.s32 3, %v4134
    %v4136 = vrot.slane %v4070, %v4135
    %v4137 = vlaneseq
    %v4138 = vshrl.u32 %v4137, 7
    %v4139 = vsub.s32 4, %v4138
    %v4140 = vrot.slane %v4070, %v4139
    %v4141 = vlaneseq
    %v4142 = vshrl.u32 %v4141, 7
    %v4143 = vsub.s32 5, %v4142
    %v4144 = vrot.slane %v4070, %v4143
    %v4145 = vlaneseq
    %v4146 = vshrl.u32 %v4145, 7
    %v4147 = vsub.s32 6, %v4146
    %v4148 = vrot.slane %v4070, %v4147
    %v4149 = vlaneseq
    %v4150 = vshrl.u32 %v4149, 7
    %v4151 = vsub.s32 7, %v4150
    %v4152 = vrot.slane %v4070, %v4151
    %v4161 = vadd.f32 %v4112, %v4124
    %v4162 = vadd.f32 %v4113, %v4128
    %v4163 = vadd.f32 %v4114, %v4132
    %v4164 = vadd.f32 %v4115, %v4136
    %v4165 = vadd.f32 %v4116, %v4140
    %v4166 = vadd.f32 %v4117, %v4144
    %v4167 = vadd.f32 %v4118, %v4148
    %v4168 = vadd.f32 %v4119, %v4152
    %v4169 = vmax.f32 %v4161, 0.0
    %v4170 = vmax.f32 %v4162, 0.0
    %v4171 = vmax.f32 %v4163, 0.0
    %v4172 = vmax.f32 %v4164, 0.0
    %v4173 = vmax.f32 %v4165, 0.0
    %v4174 = vmax.f32 %v4166, 0.0
    %v4175 = vmax.f32 %v4167, 0.0
    %v4176 = vmax.f32 %v4168, 0.0
    %v4177 = vpack.c.bf16 %v4169, %v4169
    %v4178 = vpack.c.bf16 %v4170, %v4170
    %v4179 = vpack.c.bf16 %v4171, %v4171
    %v4180 = vpack.c.bf16 %v4172, %v4172
    %v4181 = vpack.c.bf16 %v4173, %v4173
    %v4182 = vpack.c.bf16 %v4174, %v4174
    %v4183 = vpack.c.bf16 %v4175, %v4175
    %v4184 = vpack.c.bf16 %v4176, %v4176
    %v4185 = vsel %vm2126, %v256, 0
    %v4188 = vsel %vm159, %v4177, 0
    %v4191 = vsel %vm159, %v4178, 0
    %v4194 = vsel %vm159, %v4179, 0
    %v4197 = vsel %vm159, %v4180, 0
    %v4200 = vsel %vm159, %v4181, 0
    %v4203 = vsel %vm159, %v4182, 0
    %v4206 = vsel %vm159, %v4183, 0
    %v4209 = vsel %vm159, %v4184, 0
    %4211 = vmatprep.subr.bf16.mxu0 %v4191
    %4212 = vmatpush1.bf16.msra.mxu0 %v4188
    %4213 = vmatprep.subr.bf16.mxu0 0
    %4214 = vmatpush1.bf16.msra.mxu0 0
    %4215 = vmatprep.subr.bf16.mxu0 0
    %4216 = vmatpush1.bf16.msra.mxu0 0
    %4217 = vmatprep.subr.bf16.mxu0 0
    %4218 = vmatpush1.bf16.msra.mxu0 0
    %4219 = vmatprep.subr.bf16.mxu0 0
    %4220 = vmatpush1.bf16.msra.mxu0 0
    %4221 = vmatprep.subr.bf16.mxu0 0
    %4222 = vmatpush1.bf16.msra.mxu0 0
    %4223 = vmatprep.subr.bf16.mxu0 0
    %4224 = vmatpush1.bf16.msra.mxu0 0
    %4225 = vmatprep.subr.bf16.mxu0 0
    %4226 = vmatpush1.bf16.msra.mxu0 0
    %4227 = vmatprep.subr.bf16.mxu0 0
    %4228 = vmatpush1.bf16.msra.mxu0 0
    %4229 = vmatprep.subr.bf16.mxu0 0
    %4230 = vmatpush1.bf16.msra.mxu0 0
    %4231 = vmatprep.subr.bf16.mxu0 0
    %4232 = vmatpush1.bf16.msra.mxu0 0
    %4233 = vmatprep.subr.bf16.mxu0 0
    %4234 = vmatpush1.bf16.msra.mxu0 0
    %4235 = vmatprep.subr.bf16.mxu0 0
    %4236 = vmatpush1.bf16.msra.mxu0 0
    %4237 = vmatprep.subr.bf16.mxu0 0
    %4238 = vmatpush1.bf16.msra.mxu0 0
    %4239 = vmatprep.subr.bf16.mxu0 0
    %4240 = vmatpush1.bf16.msra.mxu0 0
    %4241 = vmatprep.subr.bf16.mxu0 0
    %4242 = vmatpush1.bf16.msra.mxu0 0
    %4243 = vmatprep.mubr.bf16.mxu0 0
    %4244 = vmatmul.mubr.bf16.gmra.mrb[0].mxu0 %v4185
    %v4245 = vpop.f32.mrb[0].mxu0
    %v4246 = vadd.f32 0.0, %v4245
    %v4247 = vpop.f32.mrb[0].mxu0
    %v4248 = vadd.f32 0.0, %v4247
    %v4249 = vpop.f32.mrb[0].mxu0
    %v4250 = vpop.f32.mrb[0].mxu0
    %4251 = vdwg.mxu0
    %4252 = vmatprep.subr.bf16.mxu0 %v4197
    %4253 = vmatpush1.bf16.msra.mxu0 %v4194
    %4254 = vmatprep.subr.bf16.mxu0 0
    %4255 = vmatpush1.bf16.msra.mxu0 0
    %4256 = vmatprep.subr.bf16.mxu0 0
    %4257 = vmatpush1.bf16.msra.mxu0 0
    %4258 = vmatprep.subr.bf16.mxu0 0
    %4259 = vmatpush1.bf16.msra.mxu0 0
    %4260 = vmatprep.subr.bf16.mxu0 0
    %4261 = vmatpush1.bf16.msra.mxu0 0
    %4262 = vmatprep.subr.bf16.mxu0 0
    %4263 = vmatpush1.bf16.msra.mxu0 0
    %4264 = vmatprep.subr.bf16.mxu0 0
    %4265 = vmatpush1.bf16.msra.mxu0 0
    %4266 = vmatprep.subr.bf16.mxu0 0
    %4267 = vmatpush1.bf16.msra.mxu0 0
    %4268 = vmatprep.subr.bf16.mxu0 0
    %4269 = vmatpush1.bf16.msra.mxu0 0
    %4270 = vmatprep.subr.bf16.mxu0 0
    %4271 = vmatpush1.bf16.msra.mxu0 0
    %4272 = vmatprep.subr.bf16.mxu0 0
    %4273 = vmatpush1.bf16.msra.mxu0 0
    %4274 = vmatprep.subr.bf16.mxu0 0
    %4275 = vmatpush1.bf16.msra.mxu0 0
    %4276 = vmatprep.subr.bf16.mxu0 0
    %4277 = vmatpush1.bf16.msra.mxu0 0
    %4278 = vmatprep.subr.bf16.mxu0 0
    %4279 = vmatpush1.bf16.msra.mxu0 0
    %4280 = vmatprep.subr.bf16.mxu0 0
    %4281 = vmatpush1.bf16.msra.mxu0 0
    %4282 = vmatprep.subr.bf16.mxu0 0
    %4283 = vmatpush1.bf16.msra.mxu0 0
    %4284 = vmatprep.mubr.bf16.mxu0 0
    %4285 = vmatmul.mubr.bf16.gmra.mrb[0].mxu0 %v4185
    %v4286 = vpop.f32.mrb[0].mxu0
    %v4287 = vadd.f32 0.0, %v4286
    %v4288 = vpop.f32.mrb[0].mxu0
    %v4289 = vadd.f32 0.0, %v4288
    %v4290 = vpop.f32.mrb[0].mxu0
    %v4291 = vpop.f32.mrb[0].mxu0
    %4292 = vdwg.mxu0
    %4293 = vmatprep.subr.bf16.mxu0 %v4203
    %4294 = vmatpush1.bf16.msra.mxu0 %v4200
    %4295 = vmatprep.subr.bf16.mxu0 0
    %4296 = vmatpush1.bf16.msra.mxu0 0
    %4297 = vmatprep.subr.bf16.mxu0 0
    %4298 = vmatpush1.bf16.msra.mxu0 0
    %4299 = vmatprep.subr.bf16.mxu0 0
    %4300 = vmatpush1.bf16.msra.mxu0 0
    %4301 = vmatprep.subr.bf16.mxu0 0
    %4302 = vmatpush1.bf16.msra.mxu0 0
    %4303 = vmatprep.subr.bf16.mxu0 0
    %4304 = vmatpush1.bf16.msra.mxu0 0
    %4305 = vmatprep.subr.bf16.mxu0 0
    %4306 = vmatpush1.bf16.msra.mxu0 0
    %4307 = vmatprep.subr.bf16.mxu0 0
    %4308 = vmatpush1.bf16.msra.mxu0 0
    %4309 = vmatprep.subr.bf16.mxu0 0
    %4310 = vmatpush1.bf16.msra.mxu0 0
    %4311 = vmatprep.subr.bf16.mxu0 0
    %4312 = vmatpush1.bf16.msra.mxu0 0
    %4313 = vmatprep.subr.bf16.mxu0 0
    %4314 = vmatpush1.bf16.msra.mxu0 0
    %4315 = vmatprep.subr.bf16.mxu0 0
    %4316 = vmatpush1.bf16.msra.mxu0 0
    %4317 = vmatprep.subr.bf16.mxu0 0
    %4318 = vmatpush1.bf16.msra.mxu0 0
    %4319 = vmatprep.subr.bf16.mxu0 0
    %4320 = vmatpush1.bf16.msra.mxu0 0
    %4321 = vmatprep.subr.bf16.mxu0 0
    %4322 = vmatpush1.bf16.msra.mxu0 0
    %4323 = vmatprep.subr.bf16.mxu0 0
    %4324 = vmatpush1.bf16.msra.mxu0 0
    %4325 = vmatprep.mubr.bf16.mxu0 0
    %4326 = vmatmul.mubr.bf16.gmra.mrb[0].mxu0 %v4185
    %v4327 = vpop.f32.mrb[0].mxu0
    %v4328 = vadd.f32 0.0, %v4327
    %v4329 = vpop.f32.mrb[0].mxu0
    %v4330 = vadd.f32 0.0, %v4329
    %v4331 = vpop.f32.mrb[0].mxu0
    %v4332 = vpop.f32.mrb[0].mxu0
    %4333 = vdwg.mxu0
    %4334 = vmatprep.subr.bf16.mxu0 %v4209
    %4335 = vmatpush1.bf16.msra.mxu0 %v4206
    %4336 = vmatprep.subr.bf16.mxu0 0
    %4337 = vmatpush1.bf16.msra.mxu0 0
    %4338 = vmatprep.subr.bf16.mxu0 0
    %4339 = vmatpush1.bf16.msra.mxu0 0
    %4340 = vmatprep.subr.bf16.mxu0 0
    %4341 = vmatpush1.bf16.msra.mxu0 0
    %4342 = vmatprep.subr.bf16.mxu0 0
    %4343 = vmatpush1.bf16.msra.mxu0 0
    %4344 = vmatprep.subr.bf16.mxu0 0
    %4345 = vmatpush1.bf16.msra.mxu0 0
    %4346 = vmatprep.subr.bf16.mxu0 0
    %4347 = vmatpush1.bf16.msra.mxu0 0
    %4348 = vmatprep.subr.bf16.mxu0 0
    %4349 = vmatpush1.bf16.msra.mxu0 0
    %4350 = vmatprep.subr.bf16.mxu0 0
    %4351 = vmatpush1.bf16.msra.mxu0 0
    %4352 = vmatprep.subr.bf16.mxu0 0
    %4353 = vmatpush1.bf16.msra.mxu0 0
    %4354 = vmatprep.subr.bf16.mxu0 0
    %4355 = vmatpush1.bf16.msra.mxu0 0
    %4356 = vmatprep.subr.bf16.mxu0 0
    %4357 = vmatpush1.bf16.msra.mxu0 0
    %4358 = vmatprep.subr.bf16.mxu0 0
    %4359 = vmatpush1.bf16.msra.mxu0 0
    %4360 = vmatprep.subr.bf16.mxu0 0
    %4361 = vmatpush1.bf16.msra.mxu0 0
    %4362 = vmatprep.subr.bf16.mxu0 0
    %4363 = vmatpush1.bf16.msra.mxu0 0
    %4364 = vmatprep.subr.bf16.mxu0 0
    %4365 = vmatpush1.bf16.msra.mxu0 0
    %4366 = vmatprep.mubr.bf16.mxu0 0
    %4367 = vmatmul.mubr.bf16.gmra.mrb[0].mxu0 %v4185
    %v4368 = vpop.f32.mrb[0].mxu0
    %v4369 = vadd.f32 0.0, %v4368
    %v4370 = vpop.f32.mrb[0].mxu0
    %v4371 = vadd.f32 0.0, %v4370
    %v4372 = vpop.f32.mrb[0].mxu0
    %v4373 = vpop.f32.mrb[0].mxu0
    %4374 = vdwg.mxu0
    %v4375 = vsel %vm2126, %v260, 0
    %4377 = vmatprep.subr.bf16.mxu0 %v4191
    %4378 = vmatpush1.bf16.msra.mxu0 %v4188
    %4379 = vmatprep.subr.bf16.mxu0 0
    %4380 = vmatpush1.bf16.msra.mxu0 0
    %4381 = vmatprep.subr.bf16.mxu0 0
    %4382 = vmatpush1.bf16.msra.mxu0 0
    %4383 = vmatprep.subr.bf16.mxu0 0
    %4384 = vmatpush1.bf16.msra.mxu0 0
    %4385 = vmatprep.subr.bf16.mxu0 0
    %4386 = vmatpush1.bf16.msra.mxu0 0
    %4387 = vmatprep.subr.bf16.mxu0 0
    %4388 = vmatpush1.bf16.msra.mxu0 0
    %4389 = vmatprep.subr.bf16.mxu0 0
    %4390 = vmatpush1.bf16.msra.mxu0 0
    %4391 = vmatprep.subr.bf16.mxu0 0
    %4392 = vmatpush1.bf16.msra.mxu0 0
    %4393 = vmatprep.subr.bf16.mxu0 0
    %4394 = vmatpush1.bf16.msra.mxu0 0
    %4395 = vmatprep.subr.bf16.mxu0 0
    %4396 = vmatpush1.bf16.msra.mxu0 0
    %4397 = vmatprep.subr.bf16.mxu0 0
    %4398 = vmatpush1.bf16.msra.mxu0 0
    %4399 = vmatprep.subr.bf16.mxu0 0
    %4400 = vmatpush1.bf16.msra.mxu0 0
    %4401 = vmatprep.subr.bf16.mxu0 0
    %4402 = vmatpush1.bf16.msra.mxu0 0
    %4403 = vmatprep.subr.bf16.mxu0 0
    %4404 = vmatpush1.bf16.msra.mxu0 0
    %4405 = vmatprep.subr.bf16.mxu0 0
    %4406 = vmatpush1.bf16.msra.mxu0 0
    %4407 = vmatprep.subr.bf16.mxu0 0
    %4408 = vmatpush1.bf16.msra.mxu0 0
    %4409 = vmatprep.mubr.bf16.mxu0 0
    %4410 = vmatmul.mubr.bf16.gmra.mrb[0].mxu0 %v4375
    %v4411 = vpop.f32.mrb[0].mxu0
    %v4412 = vadd.f32 0.0, %v4411
    %v4413 = vpop.f32.mrb[0].mxu0
    %v4414 = vadd.f32 0.0, %v4413
    %v4415 = vpop.f32.mrb[0].mxu0
    %v4416 = vpop.f32.mrb[0].mxu0
    %4417 = vdwg.mxu0
    %4418 = vmatprep.subr.bf16.mxu0 %v4197
    %4419 = vmatpush1.bf16.msra.mxu0 %v4194
    %4420 = vmatprep.subr.bf16.mxu0 0
    %4421 = vmatpush1.bf16.msra.mxu0 0
    %4422 = vmatprep.subr.bf16.mxu0 0
    %4423 = vmatpush1.bf16.msra.mxu0 0
    %4424 = vmatprep.subr.bf16.mxu0 0
    %4425 = vmatpush1.bf16.msra.mxu0 0
    %4426 = vmatprep.subr.bf16.mxu0 0
    %4427 = vmatpush1.bf16.msra.mxu0 0
    %4428 = vmatprep.subr.bf16.mxu0 0
    %4429 = vmatpush1.bf16.msra.mxu0 0
    %4430 = vmatprep.subr.bf16.mxu0 0
    %4431 = vmatpush1.bf16.msra.mxu0 0
    %4432 = vmatprep.subr.bf16.mxu0 0
    %4433 = vmatpush1.bf16.msra.mxu0 0
    %4434 = vmatprep.subr.bf16.mxu0 0
    %4435 = vmatpush1.bf16.msra.mxu0 0
    %4436 = vmatprep.subr.bf16.mxu0 0
    %4437 = vmatpush1.bf16.msra.mxu0 0
    %4438 = vmatprep.subr.bf16.mxu0 0
    %4439 = vmatpush1.bf16.msra.mxu0 0
    %4440 = vmatprep.subr.bf16.mxu0 0
    %4441 = vmatpush1.bf16.msra.mxu0 0
    %4442 = vmatprep.subr.bf16.mxu0 0
    %4443 = vmatpush1.bf16.msra.mxu0 0
    %4444 = vmatprep.subr.bf16.mxu0 0
    %4445 = vmatpush1.bf16.msra.mxu0 0
    %4446 = vmatprep.subr.bf16.mxu0 0
    %4447 = vmatpush1.bf16.msra.mxu0 0
    %4448 = vmatprep.subr.bf16.mxu0 0
    %4449 = vmatpush1.bf16.msra.mxu0 0
    %4450 = vmatprep.mubr.bf16.mxu0 0
    %4451 = vmatmul.mubr.bf16.gmra.mrb[0].mxu0 %v4375
    %v4452 = vpop.f32.mrb[0].mxu0
    %v4453 = vadd.f32 0.0, %v4452
    %v4454 = vpop.f32.mrb[0].mxu0
    %v4455 = vadd.f32 0.0, %v4454
    %v4456 = vpop.f32.mrb[0].mxu0
    %v4457 = vpop.f32.mrb[0].mxu0
    %4458 = vdwg.mxu0
    %4459 = vmatprep.subr.bf16.mxu0 %v4203
    %4460 = vmatpush1.bf16.msra.mxu0 %v4200
    %4461 = vmatprep.subr.bf16.mxu0 0
    %4462 = vmatpush1.bf16.msra.mxu0 0
    %4463 = vmatprep.subr.bf16.mxu0 0
    %4464 = vmatpush1.bf16.msra.mxu0 0
    %4465 = vmatprep.subr.bf16.mxu0 0
    %4466 = vmatpush1.bf16.msra.mxu0 0
    %4467 = vmatprep.subr.bf16.mxu0 0
    %4468 = vmatpush1.bf16.msra.mxu0 0
    %4469 = vmatprep.subr.bf16.mxu0 0
    %4470 = vmatpush1.bf16.msra.mxu0 0
    %4471 = vmatprep.subr.bf16.mxu0 0
    %4472 = vmatpush1.bf16.msra.mxu0 0
    %4473 = vmatprep.subr.bf16.mxu0 0
    %4474 = vmatpush1.bf16.msra.mxu0 0
    %4475 = vmatprep.subr.bf16.mxu0 0
    %4476 = vmatpush1.bf16.msra.mxu0 0
    %4477 = vmatprep.subr.bf16.mxu0 0
    %4478 = vmatpush1.bf16.msra.mxu0 0
    %4479 = vmatprep.subr.bf16.mxu0 0
    %4480 = vmatpush1.bf16.msra.mxu0 0
    %4481 = vmatprep.subr.bf16.mxu0 0
    %4482 = vmatpush1.bf16.msra.mxu0 0
    %4483 = vmatprep.subr.bf16.mxu0 0
    %4484 = vmatpush1.bf16.msra.mxu0 0
    %4485 = vmatprep.subr.bf16.mxu0 0
    %4486 = vmatpush1.bf16.msra.mxu0 0
    %4487 = vmatprep.subr.bf16.mxu0 0
    %4488 = vmatpush1.bf16.msra.mxu0 0
    %4489 = vmatprep.subr.bf16.mxu0 0
    %4490 = vmatpush1.bf16.msra.mxu0 0
    %4491 = vmatprep.mubr.bf16.mxu0 0
    %4492 = vmatmul.mubr.bf16.gmra.mrb[0].mxu0 %v4375
    %v4493 = vpop.f32.mrb[0].mxu0
    %v4494 = vadd.f32 0.0, %v4493
    %v4495 = vpop.f32.mrb[0].mxu0
    %v4496 = vadd.f32 0.0, %v4495
    %v4497 = vpop.f32.mrb[0].mxu0
    %v4498 = vpop.f32.mrb[0].mxu0
    %4499 = vdwg.mxu0
    %4500 = vmatprep.subr.bf16.mxu0 %v4209
    %4501 = vmatpush1.bf16.msra.mxu0 %v4206
    %4502 = vmatprep.subr.bf16.mxu0 0
    %4503 = vmatpush1.bf16.msra.mxu0 0
    %4504 = vmatprep.subr.bf16.mxu0 0
    %4505 = vmatpush1.bf16.msra.mxu0 0
    %4506 = vmatprep.subr.bf16.mxu0 0
    %4507 = vmatpush1.bf16.msra.mxu0 0
    %4508 = vmatprep.subr.bf16.mxu0 0
    %4509 = vmatpush1.bf16.msra.mxu0 0
    %4510 = vmatprep.subr.bf16.mxu0 0
    %4511 = vmatpush1.bf16.msra.mxu0 0
    %4512 = vmatprep.subr.bf16.mxu0 0
    %4513 = vmatpush1.bf16.msra.mxu0 0
    %4514 = vmatprep.subr.bf16.mxu0 0
    %4515 = vmatpush1.bf16.msra.mxu0 0
    %4516 = vmatprep.subr.bf16.mxu0 0
    %4517 = vmatpush1.bf16.msra.mxu0 0
    %4518 = vmatprep.subr.bf16.mxu0 0
    %4519 = vmatpush1.bf16.msra.mxu0 0
    %4520 = vmatprep.subr.bf16.mxu0 0
    %4521 = vmatpush1.bf16.msra.mxu0 0
    %4522 = vmatprep.subr.bf16.mxu0 0
    %4523 = vmatpush1.bf16.msra.mxu0 0
    %4524 = vmatprep.subr.bf16.mxu0 0
    %4525 = vmatpush1.bf16.msra.mxu0 0
    %4526 = vmatprep.subr.bf16.mxu0 0
    %4527 = vmatpush1.bf16.msra.mxu0 0
    %4528 = vmatprep.subr.bf16.mxu0 0
    %4529 = vmatpush1.bf16.msra.mxu0 0
    %4530 = vmatprep.subr.bf16.mxu0 0
    %4531 = vmatpush1.bf16.msra.mxu0 0
    %4532 = vmatprep.mubr.bf16.mxu0 0
    %4533 = vmatmul.mubr.bf16.gmra.mrb[0].mxu0 %v4375
    %v4534 = vpop.f32.mrb[0].mxu0
    %v4535 = vadd.f32 0.0, %v4534
    %v4536 = vpop.f32.mrb[0].mxu0
    %v4537 = vadd.f32 0.0, %v4536
    %v4538 = vpop.f32.mrb[0].mxu0
    %v4539 = vpop.f32.mrb[0].mxu0
    %4540 = vdwg.mxu0
    %v4541 = vmax.f32 %v4246, %v4412
    %v4542 = vmax.f32 %v4248, %v4414
    %v4543 = vmax.f32 %v4287, %v4453
    %v4544 = vmax.f32 %v4289, %v4455
    %v4545 = vmax.f32 %v4328, %v4494
    %v4546 = vmax.f32 %v4330, %v4496
    %v4547 = vmax.f32 %v4369, %v4535
    %v4548 = vmax.f32 %v4371, %v4537
    %v4549 = vpack.c.bf16 %v4541, %v4541
    %v4550 = vpack.c.bf16 %v4542, %v4542
    %v4551 = vpack.c.bf16 %v4543, %v4543
    %v4552 = vpack.c.bf16 %v4544, %v4544
    %v4553 = vpack.c.bf16 %v4545, %v4545
    %v4554 = vpack.c.bf16 %v4546, %v4546
    %v4555 = vpack.c.bf16 %v4547, %v4547
    %v4556 = vpack.c.bf16 %v4548, %v4548
    %s4557 = smul.u32 4, 128
    %s4558 = smul.u32 %s4557, 16
    %s4559 = sshll.u32 %s4558, 4
    %4560 = dma.done %s94, %s4559
    %v4561 = vld [vmem:[#allocation3] sm:$0xff]
    %v4562 = vld [vmem:[#allocation3 + $0x8] sm:$0xff]
    %v4563 = vld [vmem:[#allocation3 + $0x10] sm:$0xff]
    %v4564 = vld [vmem:[#allocation3 + $0x18] sm:$0xff]
    %v4565 = vld [vmem:[#allocation3 + $0x20] sm:$0xff]
    %v4566 = vld [vmem:[#allocation3 + $0x28] sm:$0xff]
    %v4567 = vld [vmem:[#allocation3 + $0x30] sm:$0xff]
    %v4568 = vld [vmem:[#allocation3 + $0x38] sm:$0xff]
    %v4569 = vld [vmem:[#allocation3 + $0x40] sm:$0xff]
    %v4570 = vld [vmem:[#allocation3 + $0x48] sm:$0xff]
    %v4571 = vld [vmem:[#allocation3 + $0x50] sm:$0xff]
    %v4572 = vld [vmem:[#allocation3 + $0x58] sm:$0xff]
    %v4573 = vld [vmem:[#allocation3 + $0x60] sm:$0xff]
    %v4574 = vld [vmem:[#allocation3 + $0x68] sm:$0xff]
    %v4575 = vld [vmem:[#allocation3 + $0x70] sm:$0xff]
    %v4576 = vld [vmem:[#allocation3 + $0x78] sm:$0xff]
    %v4577 = vld [vmem:[#allocation3 + $0x80] sm:$0xff]
    %v4578 = vld [vmem:[#allocation3 + $0x88] sm:$0xff]
    %v4579 = vld [vmem:[#allocation3 + $0x90] sm:$0xff]
    %v4580 = vld [vmem:[#allocation3 + $0x98] sm:$0xff]
    %v4581 = vld [vmem:[#allocation3 + $0xa0] sm:$0xff]
    %v4582 = vld [vmem:[#allocation3 + $0xa8] sm:$0xff]
    %v4583 = vld [vmem:[#allocation3 + $0xb0] sm:$0xff]
    %v4584 = vld [vmem:[#allocation3 + $0xb8] sm:$0xff]
    %v4585 = vld [vmem:[#allocation3 + $0xc0] sm:$0xff]
    %v4586 = vld [vmem:[#allocation3 + $0xc8] sm:$0xff]
    %v4587 = vld [vmem:[#allocation3 + $0xd0] sm:$0xff]
    %v4588 = vld [vmem:[#allocation3 + $0xd8] sm:$0xff]
    %v4589 = vld [vmem:[#allocation3 + $0xe0] sm:$0xff]
    %v4590 = vld [vmem:[#allocation3 + $0xe8] sm:$0xff]
    %v4591 = vld [vmem:[#allocation3 + $0xf0] sm:$0xff]
    %v4592 = vld [vmem:[#allocation3 + $0xf8] sm:$0xff]
    %v4593 = vld [vmem:[#allocation3 + $0x100] sm:$0xff]
    %v4594 = vld [vmem:[#allocation3 + $0x108] sm:$0xff]
    %v4595 = vld [vmem:[#allocation3 + $0x110] sm:$0xff]
    %v4596 = vld [vmem:[#allocation3 + $0x118] sm:$0xff]
    %v4597 = vld [vmem:[#allocation3 + $0x120] sm:$0xff]
    %v4598 = vld [vmem:[#allocation3 + $0x128] sm:$0xff]
    %v4599 = vld [vmem:[#allocation3 + $0x130] sm:$0xff]
    %v4600 = vld [vmem:[#allocation3 + $0x138] sm:$0xff]
    %v4601 = vld [vmem:[#allocation3 + $0x140] sm:$0xff]
    %v4602 = vld [vmem:[#allocation3 + $0x148] sm:$0xff]
    %v4603 = vld [vmem:[#allocation3 + $0x150] sm:$0xff]
    %v4604 = vld [vmem:[#allocation3 + $0x158] sm:$0xff]
    %v4605 = vld [vmem:[#allocation3 + $0x160] sm:$0xff]
    %v4606 = vld [vmem:[#allocation3 + $0x168] sm:$0xff]
    %v4607 = vld [vmem:[#allocation3 + $0x170] sm:$0xff]
    %v4608 = vld [vmem:[#allocation3 + $0x178] sm:$0xff]
    %v4609 = vld [vmem:[#allocation3 + $0x180] sm:$0xff]
    %v4610 = vld [vmem:[#allocation3 + $0x188] sm:$0xff]
    %v4611 = vld [vmem:[#allocation3 + $0x190] sm:$0xff]
    %v4612 = vld [vmem:[#allocation3 + $0x198] sm:$0xff]
    %v4613 = vld [vmem:[#allocation3 + $0x1a0] sm:$0xff]
    %v4614 = vld [vmem:[#allocation3 + $0x1a8] sm:$0xff]
    %v4615 = vld [vmem:[#allocation3 + $0x1b0] sm:$0xff]
    %v4616 = vld [vmem:[#allocation3 + $0x1b8] sm:$0xff]
    %v4617 = vld [vmem:[#allocation3 + $0x1c0] sm:$0xff]
    %v4618 = vld [vmem:[#allocation3 + $0x1c8] sm:$0xff]
    %v4619 = vld [vmem:[#allocation3 + $0x1d0] sm:$0xff]
    %v4620 = vld [vmem:[#allocation3 + $0x1d8] sm:$0xff]
    %v4621 = vld [vmem:[#allocation3 + $0x1e0] sm:$0xff]
    %v4622 = vld [vmem:[#allocation3 + $0x1e8] sm:$0xff]
    %v4623 = vld [vmem:[#allocation3 + $0x1f0] sm:$0xff]
    %v4624 = vld [vmem:[#allocation3 + $0x1f8] sm:$0xff]
    %v4625 = vld [vmem:[#allocation3 + $0x200] sm:$0xff]
    %v4626 = vld [vmem:[#allocation3 + $0x208] sm:$0xff]
    %v4627 = vld [vmem:[#allocation3 + $0x210] sm:$0xff]
    %v4628 = vld [vmem:[#allocation3 + $0x218] sm:$0xff]
    %v4629 = vld [vmem:[#allocation3 + $0x220] sm:$0xff]
    %v4630 = vld [vmem:[#allocation3 + $0x228] sm:$0xff]
    %v4631 = vld [vmem:[#allocation3 + $0x230] sm:$0xff]
    %v4632 = vld [vmem:[#allocation3 + $0x238] sm:$0xff]
    %v4633 = vld [vmem:[#allocation3 + $0x240] sm:$0xff]
    %v4634 = vld [vmem:[#allocation3 + $0x248] sm:$0xff]
    %v4635 = vld [vmem:[#allocation3 + $0x250] sm:$0xff]
    %v4636 = vld [vmem:[#allocation3 + $0x258] sm:$0xff]
    %v4637 = vld [vmem:[#allocation3 + $0x260] sm:$0xff]
    %v4638 = vld [vmem:[#allocation3 + $0x268] sm:$0xff]
    %v4639 = vld [vmem:[#allocation3 + $0x270] sm:$0xff]
    %v4640 = vld [vmem:[#allocation3 + $0x278] sm:$0xff]
    %v4641 = vld [vmem:[#allocation3 + $0x280] sm:$0xff]
    %v4642 = vld [vmem:[#allocation3 + $0x288] sm:$0xff]
    %v4643 = vld [vmem:[#allocation3 + $0x290] sm:$0xff]
    %v4644 = vld [vmem:[#allocation3 + $0x298] sm:$0xff]
    %v4645 = vld [vmem:[#allocation3 + $0x2a0] sm:$0xff]
    %v4646 = vld [vmem:[#allocation3 + $0x2a8] sm:$0xff]
    %v4647 = vld [vmem:[#allocation3 + $0x2b0] sm:$0xff]
    %v4648 = vld [vmem:[#allocation3 + $0x2b8] sm:$0xff]
    %v4649 = vld [vmem:[#allocation3 + $0x2c0] sm:$0xff]
    %v4650 = vld [vmem:[#allocation3 + $0x2c8] sm:$0xff]
    %v4651 = vld [vmem:[#allocation3 + $0x2d0] sm:$0xff]
    %v4652 = vld [vmem:[#allocation3 + $0x2d8] sm:$0xff]
    %v4653 = vld [vmem:[#allocation3 + $0x2e0] sm:$0xff]
    %v4654 = vld [vmem:[#allocation3 + $0x2e8] sm:$0xff]
    %v4655 = vld [vmem:[#allocation3 + $0x2f0] sm:$0xff]
    %v4656 = vld [vmem:[#allocation3 + $0x2f8] sm:$0xff]
    %v4657 = vld [vmem:[#allocation3 + $0x300] sm:$0xff]
    %v4658 = vld [vmem:[#allocation3 + $0x308] sm:$0xff]
    %v4659 = vld [vmem:[#allocation3 + $0x310] sm:$0xff]
    %v4660 = vld [vmem:[#allocation3 + $0x318] sm:$0xff]
    %v4661 = vld [vmem:[#allocation3 + $0x320] sm:$0xff]
    %v4662 = vld [vmem:[#allocation3 + $0x328] sm:$0xff]
    %v4663 = vld [vmem:[#allocation3 + $0x330] sm:$0xff]
    %v4664 = vld [vmem:[#allocation3 + $0x338] sm:$0xff]
    %v4665 = vld [vmem:[#allocation3 + $0x340] sm:$0xff]
    %v4666 = vld [vmem:[#allocation3 + $0x348] sm:$0xff]
    %v4667 = vld [vmem:[#allocation3 + $0x350] sm:$0xff]
    %v4668 = vld [vmem:[#allocation3 + $0x358] sm:$0xff]
    %v4669 = vld [vmem:[#allocation3 + $0x360] sm:$0xff]
    %v4670 = vld [vmem:[#allocation3 + $0x368] sm:$0xff]
    %v4671 = vld [vmem:[#allocation3 + $0x370] sm:$0xff]
    %v4672 = vld [vmem:[#allocation3 + $0x378] sm:$0xff]
    %v4673 = vld [vmem:[#allocation3 + $0x380] sm:$0xff]
    %v4674 = vld [vmem:[#allocation3 + $0x388] sm:$0xff]
    %v4675 = vld [vmem:[#allocation3 + $0x390] sm:$0xff]
    %v4676 = vld [vmem:[#allocation3 + $0x398] sm:$0xff]
    %v4677 = vld [vmem:[#allocation3 + $0x3a0] sm:$0xff]
    %v4678 = vld [vmem:[#allocation3 + $0x3a8] sm:$0xff]
    %v4679 = vld [vmem:[#allocation3 + $0x3b0] sm:$0xff]
    %v4680 = vld [vmem:[#allocation3 + $0x3b8] sm:$0xff]
    %v4681 = vld [vmem:[#allocation3 + $0x3c0] sm:$0xff]
    %v4682 = vld [vmem:[#allocation3 + $0x3c8] sm:$0xff]
    %v4683 = vld [vmem:[#allocation3 + $0x3d0] sm:$0xff]
    %v4684 = vld [vmem:[#allocation3 + $0x3d8] sm:$0xff]
    %v4685 = vld [vmem:[#allocation3 + $0x3e0] sm:$0xff]
    %v4686 = vld [vmem:[#allocation3 + $0x3e8] sm:$0xff]
    %v4687 = vld [vmem:[#allocation3 + $0x3f0] sm:$0xff]
    %v4688 = vld [vmem:[#allocation3 + $0x3f8] sm:$0xff]
    %v4689 = vld [vmem:[#allocation3 + $0x400] sm:$0xff]
    %v4690 = vld [vmem:[#allocation3 + $0x408] sm:$0xff]
    %v4691 = vld [vmem:[#allocation3 + $0x410] sm:$0xff]
    %v4692 = vld [vmem:[#allocation3 + $0x418] sm:$0xff]
    %v4693 = vld [vmem:[#allocation3 + $0x420] sm:$0xff]
    %v4694 = vld [vmem:[#allocation3 + $0x428] sm:$0xff]
    %v4695 = vld [vmem:[#allocation3 + $0x430] sm:$0xff]
    %v4696 = vld [vmem:[#allocation3 + $0x438] sm:$0xff]
    %v4697 = vld [vmem:[#allocation3 + $0x440] sm:$0xff]
    %v4698 = vld [vmem:[#allocation3 + $0x448] sm:$0xff]
    %v4699 = vld [vmem:[#allocation3 + $0x450] sm:$0xff]
    %v4700 = vld [vmem:[#allocation3 + $0x458] sm:$0xff]
    %v4701 = vld [vmem:[#allocation3 + $0x460] sm:$0xff]
    %v4702 = vld [vmem:[#allocation3 + $0x468] sm:$0xff]
    %v4703 = vld [vmem:[#allocation3 + $0x470] sm:$0xff]
    %v4704 = vld [vmem:[#allocation3 + $0x478] sm:$0xff]
    %v4705 = vld [vmem:[#allocation3 + $0x480] sm:$0xff]
    %v4706 = vld [vmem:[#allocation3 + $0x488] sm:$0xff]
    %v4707 = vld [vmem:[#allocation3 + $0x490] sm:$0xff]
    %v4708 = vld [vmem:[#allocation3 + $0x498] sm:$0xff]
    %v4709 = vld [vmem:[#allocation3 + $0x4a0] sm:$0xff]
    %v4710 = vld [vmem:[#allocation3 + $0x4a8] sm:$0xff]
    %v4711 = vld [vmem:[#allocation3 + $0x4b0] sm:$0xff]
    %v4712 = vld [vmem:[#allocation3 + $0x4b8] sm:$0xff]
    %v4713 = vld [vmem:[#allocation3 + $0x4c0] sm:$0xff]
    %v4714 = vld [vmem:[#allocation3 + $0x4c8] sm:$0xff]
    %v4715 = vld [vmem:[#allocation3 + $0x4d0] sm:$0xff]
    %v4716 = vld [vmem:[#allocation3 + $0x4d8] sm:$0xff]
    %v4717 = vld [vmem:[#allocation3 + $0x4e0] sm:$0xff]
    %v4718 = vld [vmem:[#allocation3 + $0x4e8] sm:$0xff]
    %v4719 = vld [vmem:[#allocation3 + $0x4f0] sm:$0xff]
    %v4720 = vld [vmem:[#allocation3 + $0x4f8] sm:$0xff]
    %v4721 = vld [vmem:[#allocation3 + $0x500] sm:$0xff]
    %v4722 = vld [vmem:[#allocation3 + $0x508] sm:$0xff]
    %v4723 = vld [vmem:[#allocation3 + $0x510] sm:$0xff]
    %v4724 = vld [vmem:[#allocation3 + $0x518] sm:$0xff]
    %v4725 = vld [vmem:[#allocation3 + $0x520] sm:$0xff]
    %v4726 = vld [vmem:[#allocation3 + $0x528] sm:$0xff]
    %v4727 = vld [vmem:[#allocation3 + $0x530] sm:$0xff]
    %v4728 = vld [vmem:[#allocation3 + $0x538] sm:$0xff]
    %v4729 = vld [vmem:[#allocation3 + $0x540] sm:$0xff]
    %v4730 = vld [vmem:[#allocation3 + $0x548] sm:$0xff]
    %v4731 = vld [vmem:[#allocation3 + $0x550] sm:$0xff]
    %v4732 = vld [vmem:[#allocation3 + $0x558] sm:$0xff]
    %v4733 = vld [vmem:[#allocation3 + $0x560] sm:$0xff]
    %v4734 = vld [vmem:[#allocation3 + $0x568] sm:$0xff]
    %v4735 = vld [vmem:[#allocation3 + $0x570] sm:$0xff]
    %v4736 = vld [vmem:[#allocation3 + $0x578] sm:$0xff]
    %v4737 = vld [vmem:[#allocation3 + $0x580] sm:$0xff]
    %v4738 = vld [vmem:[#allocation3 + $0x588] sm:$0xff]
    %v4739 = vld [vmem:[#allocation3 + $0x590] sm:$0xff]
    %v4740 = vld [vmem:[#allocation3 + $0x598] sm:$0xff]
    %v4741 = vld [vmem:[#allocation3 + $0x5a0] sm:$0xff]
    %v4742 = vld [vmem:[#allocation3 + $0x5a8] sm:$0xff]
    %v4743 = vld [vmem:[#allocation3 + $0x5b0] sm:$0xff]
    %v4744 = vld [vmem:[#allocation3 + $0x5b8] sm:$0xff]
    %v4745 = vld [vmem:[#allocation3 + $0x5c0] sm:$0xff]
    %v4746 = vld [vmem:[#allocation3 + $0x5c8] sm:$0xff]
    %v4747 = vld [vmem:[#allocation3 + $0x5d0] sm:$0xff]
    %v4748 = vld [vmem:[#allocation3 + $0x5d8] sm:$0xff]
    %v4749 = vld [vmem:[#allocation3 + $0x5e0] sm:$0xff]
    %v4750 = vld [vmem:[#allocation3 + $0x5e8] sm:$0xff]
    %v4751 = vld [vmem:[#allocation3 + $0x5f0] sm:$0xff]
    %v4752 = vld [vmem:[#allocation3 + $0x5f8] sm:$0xff]
    %v4753 = vld [vmem:[#allocation3 + $0x600] sm:$0xff]
    %v4754 = vld [vmem:[#allocation3 + $0x608] sm:$0xff]
    %v4755 = vld [vmem:[#allocation3 + $0x610] sm:$0xff]
    %v4756 = vld [vmem:[#allocation3 + $0x618] sm:$0xff]
    %v4757 = vld [vmem:[#allocation3 + $0x620] sm:$0xff]
    %v4758 = vld [vmem:[#allocation3 + $0x628] sm:$0xff]
    %v4759 = vld [vmem:[#allocation3 + $0x630] sm:$0xff]
    %v4760 = vld [vmem:[#allocation3 + $0x638] sm:$0xff]
    %v4761 = vld [vmem:[#allocation3 + $0x640] sm:$0xff]
    %v4762 = vld [vmem:[#allocation3 + $0x648] sm:$0xff]
    %v4763 = vld [vmem:[#allocation3 + $0x650] sm:$0xff]
    %v4764 = vld [vmem:[#allocation3 + $0x658] sm:$0xff]
    %v4765 = vld [vmem:[#allocation3 + $0x660] sm:$0xff]
    %v4766 = vld [vmem:[#allocation3 + $0x668] sm:$0xff]
    %v4767 = vld [vmem:[#allocation3 + $0x670] sm:$0xff]
    %v4768 = vld [vmem:[#allocation3 + $0x678] sm:$0xff]
    %v4769 = vld [vmem:[#allocation3 + $0x680] sm:$0xff]
    %v4770 = vld [vmem:[#allocation3 + $0x688] sm:$0xff]
    %v4771 = vld [vmem:[#allocation3 + $0x690] sm:$0xff]
    %v4772 = vld [vmem:[#allocation3 + $0x698] sm:$0xff]
    %v4773 = vld [vmem:[#allocation3 + $0x6a0] sm:$0xff]
    %v4774 = vld [vmem:[#allocation3 + $0x6a8] sm:$0xff]
    %v4775 = vld [vmem:[#allocation3 + $0x6b0] sm:$0xff]
    %v4776 = vld [vmem:[#allocation3 + $0x6b8] sm:$0xff]
    %v4777 = vld [vmem:[#allocation3 + $0x6c0] sm:$0xff]
    %v4778 = vld [vmem:[#allocation3 + $0x6c8] sm:$0xff]
    %v4779 = vld [vmem:[#allocation3 + $0x6d0] sm:$0xff]
    %v4780 = vld [vmem:[#allocation3 + $0x6d8] sm:$0xff]
    %v4781 = vld [vmem:[#allocation3 + $0x6e0] sm:$0xff]
    %v4782 = vld [vmem:[#allocation3 + $0x6e8] sm:$0xff]
    %v4783 = vld [vmem:[#allocation3 + $0x6f0] sm:$0xff]
    %v4784 = vld [vmem:[#allocation3 + $0x6f8] sm:$0xff]
    %v4785 = vld [vmem:[#allocation3 + $0x700] sm:$0xff]
    %v4786 = vld [vmem:[#allocation3 + $0x708] sm:$0xff]
    %v4787 = vld [vmem:[#allocation3 + $0x710] sm:$0xff]
    %v4788 = vld [vmem:[#allocation3 + $0x718] sm:$0xff]
    %v4789 = vld [vmem:[#allocation3 + $0x720] sm:$0xff]
    %v4790 = vld [vmem:[#allocation3 + $0x728] sm:$0xff]
    %v4791 = vld [vmem:[#allocation3 + $0x730] sm:$0xff]
    %v4792 = vld [vmem:[#allocation3 + $0x738] sm:$0xff]
    %v4793 = vld [vmem:[#allocation3 + $0x740] sm:$0xff]
    %v4794 = vld [vmem:[#allocation3 + $0x748] sm:$0xff]
    %v4795 = vld [vmem:[#allocation3 + $0x750] sm:$0xff]
    %v4796 = vld [vmem:[#allocation3 + $0x758] sm:$0xff]
    %v4797 = vld [vmem:[#allocation3 + $0x760] sm:$0xff]
    %v4798 = vld [vmem:[#allocation3 + $0x768] sm:$0xff]
    %v4799 = vld [vmem:[#allocation3 + $0x770] sm:$0xff]
    %v4800 = vld [vmem:[#allocation3 + $0x778] sm:$0xff]
    %v4801 = vld [vmem:[#allocation3 + $0x780] sm:$0xff]
    %v4802 = vld [vmem:[#allocation3 + $0x788] sm:$0xff]
    %v4803 = vld [vmem:[#allocation3 + $0x790] sm:$0xff]
    %v4804 = vld [vmem:[#allocation3 + $0x798] sm:$0xff]
    %v4805 = vld [vmem:[#allocation3 + $0x7a0] sm:$0xff]
    %v4806 = vld [vmem:[#allocation3 + $0x7a8] sm:$0xff]
    %v4807 = vld [vmem:[#allocation3 + $0x7b0] sm:$0xff]
    %v4808 = vld [vmem:[#allocation3 + $0x7b8] sm:$0xff]
    %v4809 = vld [vmem:[#allocation3 + $0x7c0] sm:$0xff]
    %v4810 = vld [vmem:[#allocation3 + $0x7c8] sm:$0xff]
    %v4811 = vld [vmem:[#allocation3 + $0x7d0] sm:$0xff]
    %v4812 = vld [vmem:[#allocation3 + $0x7d8] sm:$0xff]
    %v4813 = vld [vmem:[#allocation3 + $0x7e0] sm:$0xff]
    %v4814 = vld [vmem:[#allocation3 + $0x7e8] sm:$0xff]
    %v4815 = vld [vmem:[#allocation3 + $0x7f0] sm:$0xff]
    %v4816 = vld [vmem:[#allocation3 + $0x7f8] sm:$0xff]
    %v4817 = vld [vmem:[#allocation3 + $0x800] sm:$0xff]
    %v4818 = vld [vmem:[#allocation3 + $0x808] sm:$0xff]
    %v4819 = vld [vmem:[#allocation3 + $0x810] sm:$0xff]
    %v4820 = vld [vmem:[#allocation3 + $0x818] sm:$0xff]
    %v4821 = vld [vmem:[#allocation3 + $0x820] sm:$0xff]
    %v4822 = vld [vmem:[#allocation3 + $0x828] sm:$0xff]
    %v4823 = vld [vmem:[#allocation3 + $0x830] sm:$0xff]
    %v4824 = vld [vmem:[#allocation3 + $0x838] sm:$0xff]
    %v4825 = vld [vmem:[#allocation3 + $0x840] sm:$0xff]
    %v4826 = vld [vmem:[#allocation3 + $0x848] sm:$0xff]
    %v4827 = vld [vmem:[#allocation3 + $0x850] sm:$0xff]
    %v4828 = vld [vmem:[#allocation3 + $0x858] sm:$0xff]
    %v4829 = vld [vmem:[#allocation3 + $0x860] sm:$0xff]
    %v4830 = vld [vmem:[#allocation3 + $0x868] sm:$0xff]
    %v4831 = vld [vmem:[#allocation3 + $0x870] sm:$0xff]
    %v4832 = vld [vmem:[#allocation3 + $0x878] sm:$0xff]
    %v4833 = vld [vmem:[#allocation3 + $0x880] sm:$0xff]
    %v4834 = vld [vmem:[#allocation3 + $0x888] sm:$0xff]
    %v4835 = vld [vmem:[#allocation3 + $0x890] sm:$0xff]
    %v4836 = vld [vmem:[#allocation3 + $0x898] sm:$0xff]
    %v4837 = vld [vmem:[#allocation3 + $0x8a0] sm:$0xff]
    %v4838 = vld [vmem:[#allocation3 + $0x8a8] sm:$0xff]
    %v4839 = vld [vmem:[#allocation3 + $0x8b0] sm:$0xff]
    %v4840 = vld [vmem:[#allocation3 + $0x8b8] sm:$0xff]
    %v4841 = vld [vmem:[#allocation3 + $0x8c0] sm:$0xff]
    %v4842 = vld [vmem:[#allocation3 + $0x8c8] sm:$0xff]
    %v4843 = vld [vmem:[#allocation3 + $0x8d0] sm:$0xff]
    %v4844 = vld [vmem:[#allocation3 + $0x8d8] sm:$0xff]
    %v4845 = vld [vmem:[#allocation3 + $0x8e0] sm:$0xff]
    %v4846 = vld [vmem:[#allocation3 + $0x8e8] sm:$0xff]
    %v4847 = vld [vmem:[#allocation3 + $0x8f0] sm:$0xff]
    %v4848 = vld [vmem:[#allocation3 + $0x8f8] sm:$0xff]
    %v4849 = vld [vmem:[#allocation3 + $0x900] sm:$0xff]
    %v4850 = vld [vmem:[#allocation3 + $0x908] sm:$0xff]
    %v4851 = vld [vmem:[#allocation3 + $0x910] sm:$0xff]
    %v4852 = vld [vmem:[#allocation3 + $0x918] sm:$0xff]
    %v4853 = vld [vmem:[#allocation3 + $0x920] sm:$0xff]
    %v4854 = vld [vmem:[#allocation3 + $0x928] sm:$0xff]
    %v4855 = vld [vmem:[#allocation3 + $0x930] sm:$0xff]
    %v4856 = vld [vmem:[#allocation3 + $0x938] sm:$0xff]
    %v4857 = vld [vmem:[#allocation3 + $0x940] sm:$0xff]
    %v4858 = vld [vmem:[#allocation3 + $0x948] sm:$0xff]
    %v4859 = vld [vmem:[#allocation3 + $0x950] sm:$0xff]
    %v4860 = vld [vmem:[#allocation3 + $0x958] sm:$0xff]
    %v4861 = vld [vmem:[#allocation3 + $0x960] sm:$0xff]
    %v4862 = vld [vmem:[#allocation3 + $0x968] sm:$0xff]
    %v4863 = vld [vmem:[#allocation3 + $0x970] sm:$0xff]
    %v4864 = vld [vmem:[#allocation3 + $0x978] sm:$0xff]
    %v4865 = vld [vmem:[#allocation3 + $0x980] sm:$0xff]
    %v4866 = vld [vmem:[#allocation3 + $0x988] sm:$0xff]
    %v4867 = vld [vmem:[#allocation3 + $0x990] sm:$0xff]
    %v4868 = vld [vmem:[#allocation3 + $0x998] sm:$0xff]
    %v4869 = vld [vmem:[#allocation3 + $0x9a0] sm:$0xff]
    %v4870 = vld [vmem:[#allocation3 + $0x9a8] sm:$0xff]
    %v4871 = vld [vmem:[#allocation3 + $0x9b0] sm:$0xff]
    %v4872 = vld [vmem:[#allocation3 + $0x9b8] sm:$0xff]
    %v4873 = vld [vmem:[#allocation3 + $0x9c0] sm:$0xff]
    %v4874 = vld [vmem:[#allocation3 + $0x9c8] sm:$0xff]
    %v4875 = vld [vmem:[#allocation3 + $0x9d0] sm:$0xff]
    %v4876 = vld [vmem:[#allocation3 + $0x9d8] sm:$0xff]
    %v4877 = vld [vmem:[#allocation3 + $0x9e0] sm:$0xff]
    %v4878 = vld [vmem:[#allocation3 + $0x9e8] sm:$0xff]
    %v4879 = vld [vmem:[#allocation3 + $0x9f0] sm:$0xff]
    %v4880 = vld [vmem:[#allocation3 + $0x9f8] sm:$0xff]
    %v4881 = vld [vmem:[#allocation3 + $0xa00] sm:$0xff]
    %v4882 = vld [vmem:[#allocation3 + $0xa08] sm:$0xff]
    %v4883 = vld [vmem:[#allocation3 + $0xa10] sm:$0xff]
    %v4884 = vld [vmem:[#allocation3 + $0xa18] sm:$0xff]
    %v4885 = vld [vmem:[#allocation3 + $0xa20] sm:$0xff]
    %v4886 = vld [vmem:[#allocation3 + $0xa28] sm:$0xff]
    %v4887 = vld [vmem:[#allocation3 + $0xa30] sm:$0xff]
    %v4888 = vld [vmem:[#allocation3 + $0xa38] sm:$0xff]
    %v4889 = vld [vmem:[#allocation3 + $0xa40] sm:$0xff]
    %v4890 = vld [vmem:[#allocation3 + $0xa48] sm:$0xff]
    %v4891 = vld [vmem:[#allocation3 + $0xa50] sm:$0xff]
    %v4892 = vld [vmem:[#allocation3 + $0xa58] sm:$0xff]
    %v4893 = vld [vmem:[#allocation3 + $0xa60] sm:$0xff]
    %v4894 = vld [vmem:[#allocation3 + $0xa68] sm:$0xff]
    %v4895 = vld [vmem:[#allocation3 + $0xa70] sm:$0xff]
    %v4896 = vld [vmem:[#allocation3 + $0xa78] sm:$0xff]
    %v4897 = vld [vmem:[#allocation3 + $0xa80] sm:$0xff]
    %v4898 = vld [vmem:[#allocation3 + $0xa88] sm:$0xff]
    %v4899 = vld [vmem:[#allocation3 + $0xa90] sm:$0xff]
    %v4900 = vld [vmem:[#allocation3 + $0xa98] sm:$0xff]
    %v4901 = vld [vmem:[#allocation3 + $0xaa0] sm:$0xff]
    %v4902 = vld [vmem:[#allocation3 + $0xaa8] sm:$0xff]
    %v4903 = vld [vmem:[#allocation3 + $0xab0] sm:$0xff]
    %v4904 = vld [vmem:[#allocation3 + $0xab8] sm:$0xff]
    %v4905 = vld [vmem:[#allocation3 + $0xac0] sm:$0xff]
    %v4906 = vld [vmem:[#allocation3 + $0xac8] sm:$0xff]
    %v4907 = vld [vmem:[#allocation3 + $0xad0] sm:$0xff]
    %v4908 = vld [vmem:[#allocation3 + $0xad8] sm:$0xff]
    %v4909 = vld [vmem:[#allocation3 + $0xae0] sm:$0xff]
    %v4910 = vld [vmem:[#allocation3 + $0xae8] sm:$0xff]
    %v4911 = vld [vmem:[#allocation3 + $0xaf0] sm:$0xff]
    %v4912 = vld [vmem:[#allocation3 + $0xaf8] sm:$0xff]
    %v4913 = vld [vmem:[#allocation3 + $0xb00] sm:$0xff]
    %v4914 = vld [vmem:[#allocation3 + $0xb08] sm:$0xff]
    %v4915 = vld [vmem:[#allocation3 + $0xb10] sm:$0xff]
    %v4916 = vld [vmem:[#allocation3 + $0xb18] sm:$0xff]
    %v4917 = vld [vmem:[#allocation3 + $0xb20] sm:$0xff]
    %v4918 = vld [vmem:[#allocation3 + $0xb28] sm:$0xff]
    %v4919 = vld [vmem:[#allocation3 + $0xb30] sm:$0xff]
    %v4920 = vld [vmem:[#allocation3 + $0xb38] sm:$0xff]
    %v4921 = vld [vmem:[#allocation3 + $0xb40] sm:$0xff]
    %v4922 = vld [vmem:[#allocation3 + $0xb48] sm:$0xff]
    %v4923 = vld [vmem:[#allocation3 + $0xb50] sm:$0xff]
    %v4924 = vld [vmem:[#allocation3 + $0xb58] sm:$0xff]
    %v4925 = vld [vmem:[#allocation3 + $0xb60] sm:$0xff]
    %v4926 = vld [vmem:[#allocation3 + $0xb68] sm:$0xff]
    %v4927 = vld [vmem:[#allocation3 + $0xb70] sm:$0xff]
    %v4928 = vld [vmem:[#allocation3 + $0xb78] sm:$0xff]
    %v4929 = vld [vmem:[#allocation3 + $0xb80] sm:$0xff]
    %v4930 = vld [vmem:[#allocation3 + $0xb88] sm:$0xff]
    %v4931 = vld [vmem:[#allocation3 + $0xb90] sm:$0xff]
    %v4932 = vld [vmem:[#allocation3 + $0xb98] sm:$0xff]
    %v4933 = vld [vmem:[#allocation3 + $0xba0] sm:$0xff]
    %v4934 = vld [vmem:[#allocation3 + $0xba8] sm:$0xff]
    %v4935 = vld [vmem:[#allocation3 + $0xbb0] sm:$0xff]
    %v4936 = vld [vmem:[#allocation3 + $0xbb8] sm:$0xff]
    %v4937 = vld [vmem:[#allocation3 + $0xbc0] sm:$0xff]
    %v4938 = vld [vmem:[#allocation3 + $0xbc8] sm:$0xff]
    %v4939 = vld [vmem:[#allocation3 + $0xbd0] sm:$0xff]
    %v4940 = vld [vmem:[#allocation3 + $0xbd8] sm:$0xff]
    %v4941 = vld [vmem:[#allocation3 + $0xbe0] sm:$0xff]
    %v4942 = vld [vmem:[#allocation3 + $0xbe8] sm:$0xff]
    %v4943 = vld [vmem:[#allocation3 + $0xbf0] sm:$0xff]
    %v4944 = vld [vmem:[#allocation3 + $0xbf8] sm:$0xff]
    %v4945 = vld [vmem:[#allocation3 + $0xc00] sm:$0xff]
    %v4946 = vld [vmem:[#allocation3 + $0xc08] sm:$0xff]
    %v4947 = vld [vmem:[#allocation3 + $0xc10] sm:$0xff]
    %v4948 = vld [vmem:[#allocation3 + $0xc18] sm:$0xff]
    %v4949 = vld [vmem:[#allocation3 + $0xc20] sm:$0xff]
    %v4950 = vld [vmem:[#allocation3 + $0xc28] sm:$0xff]
    %v4951 = vld [vmem:[#allocation3 + $0xc30] sm:$0xff]
    %v4952 = vld [vmem:[#allocation3 + $0xc38] sm:$0xff]
    %v4953 = vld [vmem:[#allocation3 + $0xc40] sm:$0xff]
    %v4954 = vld [vmem:[#allocation3 + $0xc48] sm:$0xff]
    %v4955 = vld [vmem:[#allocation3 + $0xc50] sm:$0xff]
    %v4956 = vld [vmem:[#allocation3 + $0xc58] sm:$0xff]
    %v4957 = vld [vmem:[#allocation3 + $0xc60] sm:$0xff]
    %v4958 = vld [vmem:[#allocation3 + $0xc68] sm:$0xff]
    %v4959 = vld [vmem:[#allocation3 + $0xc70] sm:$0xff]
    %v4960 = vld [vmem:[#allocation3 + $0xc78] sm:$0xff]
    %v4961 = vld [vmem:[#allocation3 + $0xc80] sm:$0xff]
    %v4962 = vld [vmem:[#allocation3 + $0xc88] sm:$0xff]
    %v4963 = vld [vmem:[#allocation3 + $0xc90] sm:$0xff]
    %v4964 = vld [vmem:[#allocation3 + $0xc98] sm:$0xff]
    %v4965 = vld [vmem:[#allocation3 + $0xca0] sm:$0xff]
    %v4966 = vld [vmem:[#allocation3 + $0xca8] sm:$0xff]
    %v4967 = vld [vmem:[#allocation3 + $0xcb0] sm:$0xff]
    %v4968 = vld [vmem:[#allocation3 + $0xcb8] sm:$0xff]
    %v4969 = vld [vmem:[#allocation3 + $0xcc0] sm:$0xff]
    %v4970 = vld [vmem:[#allocation3 + $0xcc8] sm:$0xff]
    %v4971 = vld [vmem:[#allocation3 + $0xcd0] sm:$0xff]
    %v4972 = vld [vmem:[#allocation3 + $0xcd8] sm:$0xff]
    %v4973 = vld [vmem:[#allocation3 + $0xce0] sm:$0xff]
    %v4974 = vld [vmem:[#allocation3 + $0xce8] sm:$0xff]
    %v4975 = vld [vmem:[#allocation3 + $0xcf0] sm:$0xff]
    %v4976 = vld [vmem:[#allocation3 + $0xcf8] sm:$0xff]
    %v4977 = vld [vmem:[#allocation3 + $0xd00] sm:$0xff]
    %v4978 = vld [vmem:[#allocation3 + $0xd08] sm:$0xff]
    %v4979 = vld [vmem:[#allocation3 + $0xd10] sm:$0xff]
    %v4980 = vld [vmem:[#allocation3 + $0xd18] sm:$0xff]
    %v4981 = vld [vmem:[#allocation3 + $0xd20] sm:$0xff]
    %v4982 = vld [vmem:[#allocation3 + $0xd28] sm:$0xff]
    %v4983 = vld [vmem:[#allocation3 + $0xd30] sm:$0xff]
    %v4984 = vld [vmem:[#allocation3 + $0xd38] sm:$0xff]
    %v4985 = vld [vmem:[#allocation3 + $0xd40] sm:$0xff]
    %v4986 = vld [vmem:[#allocation3 + $0xd48] sm:$0xff]
    %v4987 = vld [vmem:[#allocation3 + $0xd50] sm:$0xff]
    %v4988 = vld [vmem:[#allocation3 + $0xd58] sm:$0xff]
    %v4989 = vld [vmem:[#allocation3 + $0xd60] sm:$0xff]
    %v4990 = vld [vmem:[#allocation3 + $0xd68] sm:$0xff]
    %v4991 = vld [vmem:[#allocation3 + $0xd70] sm:$0xff]
    %v4992 = vld [vmem:[#allocation3 + $0xd78] sm:$0xff]
    %v4993 = vld [vmem:[#allocation3 + $0xd80] sm:$0xff]
    %v4994 = vld [vmem:[#allocation3 + $0xd88] sm:$0xff]
    %v4995 = vld [vmem:[#allocation3 + $0xd90] sm:$0xff]
    %v4996 = vld [vmem:[#allocation3 + $0xd98] sm:$0xff]
    %v4997 = vld [vmem:[#allocation3 + $0xda0] sm:$0xff]
    %v4998 = vld [vmem:[#allocation3 + $0xda8] sm:$0xff]
    %v4999 = vld [vmem:[#allocation3 + $0xdb0] sm:$0xff]
    %v5000 = vld [vmem:[#allocation3 + $0xdb8] sm:$0xff]
    %v5001 = vld [vmem:[#allocation3 + $0xdc0] sm:$0xff]
    %v5002 = vld [vmem:[#allocation3 + $0xdc8] sm:$0xff]
    %v5003 = vld [vmem:[#allocation3 + $0xdd0] sm:$0xff]
    %v5004 = vld [vmem:[#allocation3 + $0xdd8] sm:$0xff]
    %v5005 = vld [vmem:[#allocation3 + $0xde0] sm:$0xff]
    %v5006 = vld [vmem:[#allocation3 + $0xde8] sm:$0xff]
    %v5007 = vld [vmem:[#allocation3 + $0xdf0] sm:$0xff]
    %v5008 = vld [vmem:[#allocation3 + $0xdf8] sm:$0xff]
    %v5009 = vld [vmem:[#allocation3 + $0xe00] sm:$0xff]
    %v5010 = vld [vmem:[#allocation3 + $0xe08] sm:$0xff]
    %v5011 = vld [vmem:[#allocation3 + $0xe10] sm:$0xff]
    %v5012 = vld [vmem:[#allocation3 + $0xe18] sm:$0xff]
    %v5013 = vld [vmem:[#allocation3 + $0xe20] sm:$0xff]
    %v5014 = vld [vmem:[#allocation3 + $0xe28] sm:$0xff]
    %v5015 = vld [vmem:[#allocation3 + $0xe30] sm:$0xff]
    %v5016 = vld [vmem:[#allocation3 + $0xe38] sm:$0xff]
    %v5017 = vld [vmem:[#allocation3 + $0xe40] sm:$0xff]
    %v5018 = vld [vmem:[#allocation3 + $0xe48] sm:$0xff]
    %v5019 = vld [vmem:[#allocation3 + $0xe50] sm:$0xff]
    %v5020 = vld [vmem:[#allocation3 + $0xe58] sm:$0xff]
    %v5021 = vld [vmem:[#allocation3 + $0xe60] sm:$0xff]
    %v5022 = vld [vmem:[#allocation3 + $0xe68] sm:$0xff]
    %v5023 = vld [vmem:[#allocation3 + $0xe70] sm:$0xff]
    %v5024 = vld [vmem:[#allocation3 + $0xe78] sm:$0xff]
    %v5025 = vld [vmem:[#allocation3 + $0xe80] sm:$0xff]
    %v5026 = vld [vmem:[#allocation3 + $0xe88] sm:$0xff]
    %v5027 = vld [vmem:[#allocation3 + $0xe90] sm:$0xff]
    %v5028 = vld [vmem:[#allocation3 + $0xe98] sm:$0xff]
    %v5029 = vld [vmem:[#allocation3 + $0xea0] sm:$0xff]
    %v5030 = vld [vmem:[#allocation3 + $0xea8] sm:$0xff]
    %v5031 = vld [vmem:[#allocation3 + $0xeb0] sm:$0xff]
    %v5032 = vld [vmem:[#allocation3 + $0xeb8] sm:$0xff]
    %v5033 = vld [vmem:[#allocation3 + $0xec0] sm:$0xff]
    %v5034 = vld [vmem:[#allocation3 + $0xec8] sm:$0xff]
    %v5035 = vld [vmem:[#allocation3 + $0xed0] sm:$0xff]
    %v5036 = vld [vmem:[#allocation3 + $0xed8] sm:$0xff]
    %v5037 = vld [vmem:[#allocation3 + $0xee0] sm:$0xff]
    %v5038 = vld [vmem:[#allocation3 + $0xee8] sm:$0xff]
    %v5039 = vld [vmem:[#allocation3 + $0xef0] sm:$0xff]
    %v5040 = vld [vmem:[#allocation3 + $0xef8] sm:$0xff]
    %v5041 = vld [vmem:[#allocation3 + $0xf00] sm:$0xff]
    %v5042 = vld [vmem:[#allocation3 + $0xf08] sm:$0xff]
    %v5043 = vld [vmem:[#allocation3 + $0xf10] sm:$0xff]
    %v5044 = vld [vmem:[#allocation3 + $0xf18] sm:$0xff]
    %v5045 = vld [vmem:[#allocation3 + $0xf20] sm:$0xff]
    %v5046 = vld [vmem:[#allocation3 + $0xf28] sm:$0xff]
    %v5047 = vld [vmem:[#allocation3 + $0xf30] sm:$0xff]
    %v5048 = vld [vmem:[#allocation3 + $0xf38] sm:$0xff]
    %v5049 = vld [vmem:[#allocation3 + $0xf40] sm:$0xff]
    %v5050 = vld [vmem:[#allocation3 + $0xf48] sm:$0xff]
    %v5051 = vld [vmem:[#allocation3 + $0xf50] sm:$0xff]
    %v5052 = vld [vmem:[#allocation3 + $0xf58] sm:$0xff]
    %v5053 = vld [vmem:[#allocation3 + $0xf60] sm:$0xff]
    %v5054 = vld [vmem:[#allocation3 + $0xf68] sm:$0xff]
    %v5055 = vld [vmem:[#allocation3 + $0xf70] sm:$0xff]
    %v5056 = vld [vmem:[#allocation3 + $0xf78] sm:$0xff]
    %v5057 = vld [vmem:[#allocation3 + $0xf80] sm:$0xff]
    %v5058 = vld [vmem:[#allocation3 + $0xf88] sm:$0xff]
    %v5059 = vld [vmem:[#allocation3 + $0xf90] sm:$0xff]
    %v5060 = vld [vmem:[#allocation3 + $0xf98] sm:$0xff]
    %v5061 = vld [vmem:[#allocation3 + $0xfa0] sm:$0xff]
    %v5062 = vld [vmem:[#allocation3 + $0xfa8] sm:$0xff]
    %v5063 = vld [vmem:[#allocation3 + $0xfb0] sm:$0xff]
    %v5064 = vld [vmem:[#allocation3 + $0xfb8] sm:$0xff]
    %v5065 = vld [vmem:[#allocation3 + $0xfc0] sm:$0xff]
    %v5066 = vld [vmem:[#allocation3 + $0xfc8] sm:$0xff]
    %v5067 = vld [vmem:[#allocation3 + $0xfd0] sm:$0xff]
    %v5068 = vld [vmem:[#allocation3 + $0xfd8] sm:$0xff]
    %v5069 = vld [vmem:[#allocation3 + $0xfe0] sm:$0xff]
    %v5070 = vld [vmem:[#allocation3 + $0xfe8] sm:$0xff]
    %v5071 = vld [vmem:[#allocation3 + $0xff0] sm:$0xff]
    %v5072 = vld [vmem:[#allocation3 + $0xff8] sm:$0xff]
    %v5073 = vld [vmem:[#allocation3 + $0x1000] sm:$0xff]
    %v5074 = vld [vmem:[#allocation3 + $0x1008] sm:$0xff]
    %v5075 = vld [vmem:[#allocation3 + $0x1010] sm:$0xff]
    %v5076 = vld [vmem:[#allocation3 + $0x1018] sm:$0xff]
    %v5077 = vld [vmem:[#allocation3 + $0x1020] sm:$0xff]
    %v5078 = vld [vmem:[#allocation3 + $0x1028] sm:$0xff]
    %v5079 = vld [vmem:[#allocation3 + $0x1030] sm:$0xff]
    %v5080 = vld [vmem:[#allocation3 + $0x1038] sm:$0xff]
    %v5081 = vld [vmem:[#allocation3 + $0x1040] sm:$0xff]
    %v5082 = vld [vmem:[#allocation3 + $0x1048] sm:$0xff]
    %v5083 = vld [vmem:[#allocation3 + $0x1050] sm:$0xff]
    %v5084 = vld [vmem:[#allocation3 + $0x1058] sm:$0xff]
    %v5085 = vld [vmem:[#allocation3 + $0x1060] sm:$0xff]
    %v5086 = vld [vmem:[#allocation3 + $0x1068] sm:$0xff]
    %v5087 = vld [vmem:[#allocation3 + $0x1070] sm:$0xff]
    %v5088 = vld [vmem:[#allocation3 + $0x1078] sm:$0xff]
    %v5089 = vld [vmem:[#allocation3 + $0x1080] sm:$0xff]
    %v5090 = vld [vmem:[#allocation3 + $0x1088] sm:$0xff]
    %v5091 = vld [vmem:[#allocation3 + $0x1090] sm:$0xff]
    %v5092 = vld [vmem:[#allocation3 + $0x1098] sm:$0xff]
    %v5093 = vld [vmem:[#allocation3 + $0x10a0] sm:$0xff]
    %v5094 = vld [vmem:[#allocation3 + $0x10a8] sm:$0xff]
    %v5095 = vld [vmem:[#allocation3 + $0x10b0] sm:$0xff]
    %v5096 = vld [vmem:[#allocation3 + $0x10b8] sm:$0xff]
    %v5097 = vld [vmem:[#allocation3 + $0x10c0] sm:$0xff]
    %v5098 = vld [vmem:[#allocation3 + $0x10c8] sm:$0xff]
    %v5099 = vld [vmem:[#allocation3 + $0x10d0] sm:$0xff]
    %v5100 = vld [vmem:[#allocation3 + $0x10d8] sm:$0xff]
    %v5101 = vld [vmem:[#allocation3 + $0x10e0] sm:$0xff]
    %v5102 = vld [vmem:[#allocation3 + $0x10e8] sm:$0xff]
    %v5103 = vld [vmem:[#allocation3 + $0x10f0] sm:$0xff]
    %v5104 = vld [vmem:[#allocation3 + $0x10f8] sm:$0xff]
    %v5105 = vld [vmem:[#allocation3 + $0x1100] sm:$0xff]
    %v5106 = vld [vmem:[#allocation3 + $0x1108] sm:$0xff]
    %v5107 = vld [vmem:[#allocation3 + $0x1110] sm:$0xff]
    %v5108 = vld [vmem:[#allocation3 + $0x1118] sm:$0xff]
    %v5109 = vld [vmem:[#allocation3 + $0x1120] sm:$0xff]
    %v5110 = vld [vmem:[#allocation3 + $0x1128] sm:$0xff]
    %v5111 = vld [vmem:[#allocation3 + $0x1130] sm:$0xff]
    %v5112 = vld [vmem:[#allocation3 + $0x1138] sm:$0xff]
    %v5113 = vld [vmem:[#allocation3 + $0x1140] sm:$0xff]
    %v5114 = vld [vmem:[#allocation3 + $0x1148] sm:$0xff]
    %v5115 = vld [vmem:[#allocation3 + $0x1150] sm:$0xff]
    %v5116 = vld [vmem:[#allocation3 + $0x1158] sm:$0xff]
    %v5117 = vld [vmem:[#allocation3 + $0x1160] sm:$0xff]
    %v5118 = vld [vmem:[#allocation3 + $0x1168] sm:$0xff]
    %v5119 = vld [vmem:[#allocation3 + $0x1170] sm:$0xff]
    %v5120 = vld [vmem:[#allocation3 + $0x1178] sm:$0xff]
    %v5121 = vld [vmem:[#allocation3 + $0x1180] sm:$0xff]
    %v5122 = vld [vmem:[#allocation3 + $0x1188] sm:$0xff]
    %v5123 = vld [vmem:[#allocation3 + $0x1190] sm:$0xff]
    %v5124 = vld [vmem:[#allocation3 + $0x1198] sm:$0xff]
    %v5125 = vld [vmem:[#allocation3 + $0x11a0] sm:$0xff]
    %v5126 = vld [vmem:[#allocation3 + $0x11a8] sm:$0xff]
    %v5127 = vld [vmem:[#allocation3 + $0x11b0] sm:$0xff]
    %v5128 = vld [vmem:[#allocation3 + $0x11b8] sm:$0xff]
    %v5129 = vld [vmem:[#allocation3 + $0x11c0] sm:$0xff]
    %v5130 = vld [vmem:[#allocation3 + $0x11c8] sm:$0xff]
    %v5131 = vld [vmem:[#allocation3 + $0x11d0] sm:$0xff]
    %v5132 = vld [vmem:[#allocation3 + $0x11d8] sm:$0xff]
    %v5133 = vld [vmem:[#allocation3 + $0x11e0] sm:$0xff]
    %v5134 = vld [vmem:[#allocation3 + $0x11e8] sm:$0xff]
    %v5135 = vld [vmem:[#allocation3 + $0x11f0] sm:$0xff]
    %v5136 = vld [vmem:[#allocation3 + $0x11f8] sm:$0xff]
    %v5137 = vld [vmem:[#allocation3 + $0x1200] sm:$0xff]
    %v5138 = vld [vmem:[#allocation3 + $0x1208] sm:$0xff]
    %v5139 = vld [vmem:[#allocation3 + $0x1210] sm:$0xff]
    %v5140 = vld [vmem:[#allocation3 + $0x1218] sm:$0xff]
    %v5141 = vld [vmem:[#allocation3 + $0x1220] sm:$0xff]
    %v5142 = vld [vmem:[#allocation3 + $0x1228] sm:$0xff]
    %v5143 = vld [vmem:[#allocation3 + $0x1230] sm:$0xff]
    %v5144 = vld [vmem:[#allocation3 + $0x1238] sm:$0xff]
    %v5145 = vld [vmem:[#allocation3 + $0x1240] sm:$0xff]
    %v5146 = vld [vmem:[#allocation3 + $0x1248] sm:$0xff]
    %v5147 = vld [vmem:[#allocation3 + $0x1250] sm:$0xff]
    %v5148 = vld [vmem:[#allocation3 + $0x1258] sm:$0xff]
    %v5149 = vld [vmem:[#allocation3 + $0x1260] sm:$0xff]
    %v5150 = vld [vmem:[#allocation3 + $0x1268] sm:$0xff]
    %v5151 = vld [vmem:[#allocation3 + $0x1270] sm:$0xff]
    %v5152 = vld [vmem:[#allocation3 + $0x1278] sm:$0xff]
    %v5153 = vld [vmem:[#allocation3 + $0x1280] sm:$0xff]
    %v5154 = vld [vmem:[#allocation3 + $0x1288] sm:$0xff]
    %v5155 = vld [vmem:[#allocation3 + $0x1290] sm:$0xff]
    %v5156 = vld [vmem:[#allocation3 + $0x1298] sm:$0xff]
    %v5157 = vld [vmem:[#allocation3 + $0x12a0] sm:$0xff]
    %v5158 = vld [vmem:[#allocation3 + $0x12a8] sm:$0xff]
    %v5159 = vld [vmem:[#allocation3 + $0x12b0] sm:$0xff]
    %v5160 = vld [vmem:[#allocation3 + $0x12b8] sm:$0xff]
    %v5161 = vld [vmem:[#allocation3 + $0x12c0] sm:$0xff]
    %v5162 = vld [vmem:[#allocation3 + $0x12c8] sm:$0xff]
    %v5163 = vld [vmem:[#allocation3 + $0x12d0] sm:$0xff]
    %v5164 = vld [vmem:[#allocation3 + $0x12d8] sm:$0xff]
    %v5165 = vld [vmem:[#allocation3 + $0x12e0] sm:$0xff]
    %v5166 = vld [vmem:[#allocation3 + $0x12e8] sm:$0xff]
    %v5167 = vld [vmem:[#allocation3 + $0x12f0] sm:$0xff]
    %v5168 = vld [vmem:[#allocation3 + $0x12f8] sm:$0xff]
    %v5169 = vld [vmem:[#allocation3 + $0x1300] sm:$0xff]
    %v5170 = vld [vmem:[#allocation3 + $0x1308] sm:$0xff]
    %v5171 = vld [vmem:[#allocation3 + $0x1310] sm:$0xff]
    %v5172 = vld [vmem:[#allocation3 + $0x1318] sm:$0xff]
    %v5173 = vld [vmem:[#allocation3 + $0x1320] sm:$0xff]
    %v5174 = vld [vmem:[#allocation3 + $0x1328] sm:$0xff]
    %v5175 = vld [vmem:[#allocation3 + $0x1330] sm:$0xff]
    %v5176 = vld [vmem:[#allocation3 + $0x1338] sm:$0xff]
    %v5177 = vld [vmem:[#allocation3 + $0x1340] sm:$0xff]
    %v5178 = vld [vmem:[#allocation3 + $0x1348] sm:$0xff]
    %v5179 = vld [vmem:[#allocation3 + $0x1350] sm:$0xff]
    %v5180 = vld [vmem:[#allocation3 + $0x1358] sm:$0xff]
    %v5181 = vld [vmem:[#allocation3 + $0x1360] sm:$0xff]
    %v5182 = vld [vmem:[#allocation3 + $0x1368] sm:$0xff]
    %v5183 = vld [vmem:[#allocation3 + $0x1370] sm:$0xff]
    %v5184 = vld [vmem:[#allocation3 + $0x1378] sm:$0xff]
    %v5185 = vld [vmem:[#allocation3 + $0x1380] sm:$0xff]
    %v5186 = vld [vmem:[#allocation3 + $0x1388] sm:$0xff]
    %v5187 = vld [vmem:[#allocation3 + $0x1390] sm:$0xff]
    %v5188 = vld [vmem:[#allocation3 + $0x1398] sm:$0xff]
    %v5189 = vld [vmem:[#allocation3 + $0x13a0] sm:$0xff]
    %v5190 = vld [vmem:[#allocation3 + $0x13a8] sm:$0xff]
    %v5191 = vld [vmem:[#allocation3 + $0x13b0] sm:$0xff]
    %v5192 = vld [vmem:[#allocation3 + $0x13b8] sm:$0xff]
    %v5193 = vld [vmem:[#allocation3 + $0x13c0] sm:$0xff]
    %v5194 = vld [vmem:[#allocation3 + $0x13c8] sm:$0xff]
    %v5195 = vld [vmem:[#allocation3 + $0x13d0] sm:$0xff]
    %v5196 = vld [vmem:[#allocation3 + $0x13d8] sm:$0xff]
    %v5197 = vld [vmem:[#allocation3 + $0x13e0] sm:$0xff]
    %v5198 = vld [vmem:[#allocation3 + $0x13e8] sm:$0xff]
    %v5199 = vld [vmem:[#allocation3 + $0x13f0] sm:$0xff]
    %v5200 = vld [vmem:[#allocation3 + $0x13f8] sm:$0xff]
    %v5201 = vld [vmem:[#allocation3 + $0x1400] sm:$0xff]
    %v5202 = vld [vmem:[#allocation3 + $0x1408] sm:$0xff]
    %v5203 = vld [vmem:[#allocation3 + $0x1410] sm:$0xff]
    %v5204 = vld [vmem:[#allocation3 + $0x1418] sm:$0xff]
    %v5205 = vld [vmem:[#allocation3 + $0x1420] sm:$0xff]
    %v5206 = vld [vmem:[#allocation3 + $0x1428] sm:$0xff]
    %v5207 = vld [vmem:[#allocation3 + $0x1430] sm:$0xff]
    %v5208 = vld [vmem:[#allocation3 + $0x1438] sm:$0xff]
    %v5209 = vld [vmem:[#allocation3 + $0x1440] sm:$0xff]
    %v5210 = vld [vmem:[#allocation3 + $0x1448] sm:$0xff]
    %v5211 = vld [vmem:[#allocation3 + $0x1450] sm:$0xff]
    %v5212 = vld [vmem:[#allocation3 + $0x1458] sm:$0xff]
    %v5213 = vld [vmem:[#allocation3 + $0x1460] sm:$0xff]
    %v5214 = vld [vmem:[#allocation3 + $0x1468] sm:$0xff]
    %v5215 = vld [vmem:[#allocation3 + $0x1470] sm:$0xff]
    %v5216 = vld [vmem:[#allocation3 + $0x1478] sm:$0xff]
    %v5217 = vld [vmem:[#allocation3 + $0x1480] sm:$0xff]
    %v5218 = vld [vmem:[#allocation3 + $0x1488] sm:$0xff]
    %v5219 = vld [vmem:[#allocation3 + $0x1490] sm:$0xff]
    %v5220 = vld [vmem:[#allocation3 + $0x1498] sm:$0xff]
    %v5221 = vld [vmem:[#allocation3 + $0x14a0] sm:$0xff]
    %v5222 = vld [vmem:[#allocation3 + $0x14a8] sm:$0xff]
    %v5223 = vld [vmem:[#allocation3 + $0x14b0] sm:$0xff]
    %v5224 = vld [vmem:[#allocation3 + $0x14b8] sm:$0xff]
    %v5225 = vld [vmem:[#allocation3 + $0x14c0] sm:$0xff]
    %v5226 = vld [vmem:[#allocation3 + $0x14c8] sm:$0xff]
    %v5227 = vld [vmem:[#allocation3 + $0x14d0] sm:$0xff]
    %v5228 = vld [vmem:[#allocation3 + $0x14d8] sm:$0xff]
    %v5229 = vld [vmem:[#allocation3 + $0x14e0] sm:$0xff]
    %v5230 = vld [vmem:[#allocation3 + $0x14e8] sm:$0xff]
    %v5231 = vld [vmem:[#allocation3 + $0x14f0] sm:$0xff]
    %v5232 = vld [vmem:[#allocation3 + $0x14f8] sm:$0xff]
    %v5233 = vld [vmem:[#allocation3 + $0x1500] sm:$0xff]
    %v5234 = vld [vmem:[#allocation3 + $0x1508] sm:$0xff]
    %v5235 = vld [vmem:[#allocation3 + $0x1510] sm:$0xff]
    %v5236 = vld [vmem:[#allocation3 + $0x1518] sm:$0xff]
    %v5237 = vld [vmem:[#allocation3 + $0x1520] sm:$0xff]
    %v5238 = vld [vmem:[#allocation3 + $0x1528] sm:$0xff]
    %v5239 = vld [vmem:[#allocation3 + $0x1530] sm:$0xff]
    %v5240 = vld [vmem:[#allocation3 + $0x1538] sm:$0xff]
    %v5241 = vld [vmem:[#allocation3 + $0x1540] sm:$0xff]
    %v5242 = vld [vmem:[#allocation3 + $0x1548] sm:$0xff]
    %v5243 = vld [vmem:[#allocation3 + $0x1550] sm:$0xff]
    %v5244 = vld [vmem:[#allocation3 + $0x1558] sm:$0xff]
    %v5245 = vld [vmem:[#allocation3 + $0x1560] sm:$0xff]
    %v5246 = vld [vmem:[#allocation3 + $0x1568] sm:$0xff]
    %v5247 = vld [vmem:[#allocation3 + $0x1570] sm:$0xff]
    %v5248 = vld [vmem:[#allocation3 + $0x1578] sm:$0xff]
    %v5249 = vld [vmem:[#allocation3 + $0x1580] sm:$0xff]
    %v5250 = vld [vmem:[#allocation3 + $0x1588] sm:$0xff]
    %v5251 = vld [vmem:[#allocation3 + $0x1590] sm:$0xff]
    %v5252 = vld [vmem:[#allocation3 + $0x1598] sm:$0xff]
    %v5253 = vld [vmem:[#allocation3 + $0x15a0] sm:$0xff]
    %v5254 = vld [vmem:[#allocation3 + $0x15a8] sm:$0xff]
    %v5255 = vld [vmem:[#allocation3 + $0x15b0] sm:$0xff]
    %v5256 = vld [vmem:[#allocation3 + $0x15b8] sm:$0xff]
    %v5257 = vld [vmem:[#allocation3 + $0x15c0] sm:$0xff]
    %v5258 = vld [vmem:[#allocation3 + $0x15c8] sm:$0xff]
    %v5259 = vld [vmem:[#allocation3 + $0x15d0] sm:$0xff]
    %v5260 = vld [vmem:[#allocation3 + $0x15d8] sm:$0xff]
    %v5261 = vld [vmem:[#allocation3 + $0x15e0] sm:$0xff]
    %v5262 = vld [vmem:[#allocation3 + $0x15e8] sm:$0xff]
    %v5263 = vld [vmem:[#allocation3 + $0x15f0] sm:$0xff]
    %v5264 = vld [vmem:[#allocation3 + $0x15f8] sm:$0xff]
    %v5265 = vld [vmem:[#allocation3 + $0x1600] sm:$0xff]
    %v5266 = vld [vmem:[#allocation3 + $0x1608] sm:$0xff]
    %v5267 = vld [vmem:[#allocation3 + $0x1610] sm:$0xff]
    %v5268 = vld [vmem:[#allocation3 + $0x1618] sm:$0xff]
    %v5269 = vld [vmem:[#allocation3 + $0x1620] sm:$0xff]
    %v5270 = vld [vmem:[#allocation3 + $0x1628] sm:$0xff]
    %v5271 = vld [vmem:[#allocation3 + $0x1630] sm:$0xff]
    %v5272 = vld [vmem:[#allocation3 + $0x1638] sm:$0xff]
    %v5273 = vld [vmem:[#allocation3 + $0x1640] sm:$0xff]
    %v5274 = vld [vmem:[#allocation3 + $0x1648] sm:$0xff]
    %v5275 = vld [vmem:[#allocation3 + $0x1650] sm:$0xff]
    %v5276 = vld [vmem:[#allocation3 + $0x1658] sm:$0xff]
    %v5277 = vld [vmem:[#allocation3 + $0x1660] sm:$0xff]
    %v5278 = vld [vmem:[#allocation3 + $0x1668] sm:$0xff]
    %v5279 = vld [vmem:[#allocation3 + $0x1670] sm:$0xff]
    %v5280 = vld [vmem:[#allocation3 + $0x1678] sm:$0xff]
    %v5281 = vld [vmem:[#allocation3 + $0x1680] sm:$0xff]
    %v5282 = vld [vmem:[#allocation3 + $0x1688] sm:$0xff]
    %v5283 = vld [vmem:[#allocation3 + $0x1690] sm:$0xff]
    %v5284 = vld [vmem:[#allocation3 + $0x1698] sm:$0xff]
    %v5285 = vld [vmem:[#allocation3 + $0x16a0] sm:$0xff]
    %v5286 = vld [vmem:[#allocation3 + $0x16a8] sm:$0xff]
    %v5287 = vld [vmem:[#allocation3 + $0x16b0] sm:$0xff]
    %v5288 = vld [vmem:[#allocation3 + $0x16b8] sm:$0xff]
    %v5289 = vld [vmem:[#allocation3 + $0x16c0] sm:$0xff]
    %v5290 = vld [vmem:[#allocation3 + $0x16c8] sm:$0xff]
    %v5291 = vld [vmem:[#allocation3 + $0x16d0] sm:$0xff]
    %v5292 = vld [vmem:[#allocation3 + $0x16d8] sm:$0xff]
    %v5293 = vld [vmem:[#allocation3 + $0x16e0] sm:$0xff]
    %v5294 = vld [vmem:[#allocation3 + $0x16e8] sm:$0xff]
    %v5295 = vld [vmem:[#allocation3 + $0x16f0] sm:$0xff]
    %v5296 = vld [vmem:[#allocation3 + $0x16f8] sm:$0xff]
    %v5297 = vld [vmem:[#allocation3 + $0x1700] sm:$0xff]
    %v5298 = vld [vmem:[#allocation3 + $0x1708] sm:$0xff]
    %v5299 = vld [vmem:[#allocation3 + $0x1710] sm:$0xff]
    %v5300 = vld [vmem:[#allocation3 + $0x1718] sm:$0xff]
    %v5301 = vld [vmem:[#allocation3 + $0x1720] sm:$0xff]
    %v5302 = vld [vmem:[#allocation3 + $0x1728] sm:$0xff]
    %v5303 = vld [vmem:[#allocation3 + $0x1730] sm:$0xff]
    %v5304 = vld [vmem:[#allocation3 + $0x1738] sm:$0xff]
    %v5305 = vld [vmem:[#allocation3 + $0x1740] sm:$0xff]
    %v5306 = vld [vmem:[#allocation3 + $0x1748] sm:$0xff]
    %v5307 = vld [vmem:[#allocation3 + $0x1750] sm:$0xff]
    %v5308 = vld [vmem:[#allocation3 + $0x1758] sm:$0xff]
    %v5309 = vld [vmem:[#allocation3 + $0x1760] sm:$0xff]
    %v5310 = vld [vmem:[#allocation3 + $0x1768] sm:$0xff]
    %v5311 = vld [vmem:[#allocation3 + $0x1770] sm:$0xff]
    %v5312 = vld [vmem:[#allocation3 + $0x1778] sm:$0xff]
    %v5313 = vld [vmem:[#allocation3 + $0x1780] sm:$0xff]
    %v5314 = vld [vmem:[#allocation3 + $0x1788] sm:$0xff]
    %v5315 = vld [vmem:[#allocation3 + $0x1790] sm:$0xff]
    %v5316 = vld [vmem:[#allocation3 + $0x1798] sm:$0xff]
    %v5317 = vld [vmem:[#allocation3 + $0x17a0] sm:$0xff]
    %v5318 = vld [vmem:[#allocation3 + $0x17a8] sm:$0xff]
    %v5319 = vld [vmem:[#allocation3 + $0x17b0] sm:$0xff]
    %v5320 = vld [vmem:[#allocation3 + $0x17b8] sm:$0xff]
    %v5321 = vld [vmem:[#allocation3 + $0x17c0] sm:$0xff]
    %v5322 = vld [vmem:[#allocation3 + $0x17c8] sm:$0xff]
    %v5323 = vld [vmem:[#allocation3 + $0x17d0] sm:$0xff]
    %v5324 = vld [vmem:[#allocation3 + $0x17d8] sm:$0xff]
    %v5325 = vld [vmem:[#allocation3 + $0x17e0] sm:$0xff]
    %v5326 = vld [vmem:[#allocation3 + $0x17e8] sm:$0xff]
    %v5327 = vld [vmem:[#allocation3 + $0x17f0] sm:$0xff]
    %v5328 = vld [vmem:[#allocation3 + $0x17f8] sm:$0xff]
    %v5329 = vld [vmem:[#allocation3 + $0x1800] sm:$0xff]
    %v5330 = vld [vmem:[#allocation3 + $0x1808] sm:$0xff]
    %v5331 = vld [vmem:[#allocation3 + $0x1810] sm:$0xff]
    %v5332 = vld [vmem:[#allocation3 + $0x1818] sm:$0xff]
    %v5333 = vld [vmem:[#allocation3 + $0x1820] sm:$0xff]
    %v5334 = vld [vmem:[#allocation3 + $0x1828] sm:$0xff]
    %v5335 = vld [vmem:[#allocation3 + $0x1830] sm:$0xff]
    %v5336 = vld [vmem:[#allocation3 + $0x1838] sm:$0xff]
    %v5337 = vld [vmem:[#allocation3 + $0x1840] sm:$0xff]
    %v5338 = vld [vmem:[#allocation3 + $0x1848] sm:$0xff]
    %v5339 = vld [vmem:[#allocation3 + $0x1850] sm:$0xff]
    %v5340 = vld [vmem:[#allocation3 + $0x1858] sm:$0xff]
    %v5341 = vld [vmem:[#allocation3 + $0x1860] sm:$0xff]
    %v5342 = vld [vmem:[#allocation3 + $0x1868] sm:$0xff]
    %v5343 = vld [vmem:[#allocation3 + $0x1870] sm:$0xff]
    %v5344 = vld [vmem:[#allocation3 + $0x1878] sm:$0xff]
    %v5345 = vld [vmem:[#allocation3 + $0x1880] sm:$0xff]
    %v5346 = vld [vmem:[#allocation3 + $0x1888] sm:$0xff]
    %v5347 = vld [vmem:[#allocation3 + $0x1890] sm:$0xff]
    %v5348 = vld [vmem:[#allocation3 + $0x1898] sm:$0xff]
    %v5349 = vld [vmem:[#allocation3 + $0x18a0] sm:$0xff]
    %v5350 = vld [vmem:[#allocation3 + $0x18a8] sm:$0xff]
    %v5351 = vld [vmem:[#allocation3 + $0x18b0] sm:$0xff]
    %v5352 = vld [vmem:[#allocation3 + $0x18b8] sm:$0xff]
    %v5353 = vld [vmem:[#allocation3 + $0x18c0] sm:$0xff]
    %v5354 = vld [vmem:[#allocation3 + $0x18c8] sm:$0xff]
    %v5355 = vld [vmem:[#allocation3 + $0x18d0] sm:$0xff]
    %v5356 = vld [vmem:[#allocation3 + $0x18d8] sm:$0xff]
    %v5357 = vld [vmem:[#allocation3 + $0x18e0] sm:$0xff]
    %v5358 = vld [vmem:[#allocation3 + $0x18e8] sm:$0xff]
    %v5359 = vld [vmem:[#allocation3 + $0x18f0] sm:$0xff]
    %v5360 = vld [vmem:[#allocation3 + $0x18f8] sm:$0xff]
    %v5361 = vld [vmem:[#allocation3 + $0x1900] sm:$0xff]
    %v5362 = vld [vmem:[#allocation3 + $0x1908] sm:$0xff]
    %v5363 = vld [vmem:[#allocation3 + $0x1910] sm:$0xff]
    %v5364 = vld [vmem:[#allocation3 + $0x1918] sm:$0xff]
    %v5365 = vld [vmem:[#allocation3 + $0x1920] sm:$0xff]
    %v5366 = vld [vmem:[#allocation3 + $0x1928] sm:$0xff]
    %v5367 = vld [vmem:[#allocation3 + $0x1930] sm:$0xff]
    %v5368 = vld [vmem:[#allocation3 + $0x1938] sm:$0xff]
    %v5369 = vld [vmem:[#allocation3 + $0x1940] sm:$0xff]
    %v5370 = vld [vmem:[#allocation3 + $0x1948] sm:$0xff]
    %v5371 = vld [vmem:[#allocation3 + $0x1950] sm:$0xff]
    %v5372 = vld [vmem:[#allocation3 + $0x1958] sm:$0xff]
    %v5373 = vld [vmem:[#allocation3 + $0x1960] sm:$0xff]
    %v5374 = vld [vmem:[#allocation3 + $0x1968] sm:$0xff]
    %v5375 = vld [vmem:[#allocation3 + $0x1970] sm:$0xff]
    %v5376 = vld [vmem:[#allocation3 + $0x1978] sm:$0xff]
    %v5377 = vld [vmem:[#allocation3 + $0x1980] sm:$0xff]
    %v5378 = vld [vmem:[#allocation3 + $0x1988] sm:$0xff]
    %v5379 = vld [vmem:[#allocation3 + $0x1990] sm:$0xff]
    %v5380 = vld [vmem:[#allocation3 + $0x1998] sm:$0xff]
    %v5381 = vld [vmem:[#allocation3 + $0x19a0] sm:$0xff]
    %v5382 = vld [vmem:[#allocation3 + $0x19a8] sm:$0xff]
    %v5383 = vld [vmem:[#allocation3 + $0x19b0] sm:$0xff]
    %v5384 = vld [vmem:[#allocation3 + $0x19b8] sm:$0xff]
    %v5385 = vld [vmem:[#allocation3 + $0x19c0] sm:$0xff]
    %v5386 = vld [vmem:[#allocation3 + $0x19c8] sm:$0xff]
    %v5387 = vld [vmem:[#allocation3 + $0x19d0] sm:$0xff]
    %v5388 = vld [vmem:[#allocation3 + $0x19d8] sm:$0xff]
    %v5389 = vld [vmem:[#allocation3 + $0x19e0] sm:$0xff]
    %v5390 = vld [vmem:[#allocation3 + $0x19e8] sm:$0xff]
    %v5391 = vld [vmem:[#allocation3 + $0x19f0] sm:$0xff]
    %v5392 = vld [vmem:[#allocation3 + $0x19f8] sm:$0xff]
    %v5393 = vld [vmem:[#allocation3 + $0x1a00] sm:$0xff]
    %v5394 = vld [vmem:[#allocation3 + $0x1a08] sm:$0xff]
    %v5395 = vld [vmem:[#allocation3 + $0x1a10] sm:$0xff]
    %v5396 = vld [vmem:[#allocation3 + $0x1a18] sm:$0xff]
    %v5397 = vld [vmem:[#allocation3 + $0x1a20] sm:$0xff]
    %v5398 = vld [vmem:[#allocation3 + $0x1a28] sm:$0xff]
    %v5399 = vld [vmem:[#allocation3 + $0x1a30] sm:$0xff]
    %v5400 = vld [vmem:[#allocation3 + $0x1a38] sm:$0xff]
    %v5401 = vld [vmem:[#allocation3 + $0x1a40] sm:$0xff]
    %v5402 = vld [vmem:[#allocation3 + $0x1a48] sm:$0xff]
    %v5403 = vld [vmem:[#allocation3 + $0x1a50] sm:$0xff]
    %v5404 = vld [vmem:[#allocation3 + $0x1a58] sm:$0xff]
    %v5405 = vld [vmem:[#allocation3 + $0x1a60] sm:$0xff]
    %v5406 = vld [vmem:[#allocation3 + $0x1a68] sm:$0xff]
    %v5407 = vld [vmem:[#allocation3 + $0x1a70] sm:$0xff]
    %v5408 = vld [vmem:[#allocation3 + $0x1a78] sm:$0xff]
    %v5409 = vld [vmem:[#allocation3 + $0x1a80] sm:$0xff]
    %v5410 = vld [vmem:[#allocation3 + $0x1a88] sm:$0xff]
    %v5411 = vld [vmem:[#allocation3 + $0x1a90] sm:$0xff]
    %v5412 = vld [vmem:[#allocation3 + $0x1a98] sm:$0xff]
    %v5413 = vld [vmem:[#allocation3 + $0x1aa0] sm:$0xff]
    %v5414 = vld [vmem:[#allocation3 + $0x1aa8] sm:$0xff]
    %v5415 = vld [vmem:[#allocation3 + $0x1ab0] sm:$0xff]
    %v5416 = vld [vmem:[#allocation3 + $0x1ab8] sm:$0xff]
    %v5417 = vld [vmem:[#allocation3 + $0x1ac0] sm:$0xff]
    %v5418 = vld [vmem:[#allocation3 + $0x1ac8] sm:$0xff]
    %v5419 = vld [vmem:[#allocation3 + $0x1ad0] sm:$0xff]
    %v5420 = vld [vmem:[#allocation3 + $0x1ad8] sm:$0xff]
    %v5421 = vld [vmem:[#allocation3 + $0x1ae0] sm:$0xff]
    %v5422 = vld [vmem:[#allocation3 + $0x1ae8] sm:$0xff]
    %v5423 = vld [vmem:[#allocation3 + $0x1af0] sm:$0xff]
    %v5424 = vld [vmem:[#allocation3 + $0x1af8] sm:$0xff]
    %v5425 = vld [vmem:[#allocation3 + $0x1b00] sm:$0xff]
    %v5426 = vld [vmem:[#allocation3 + $0x1b08] sm:$0xff]
    %v5427 = vld [vmem:[#allocation3 + $0x1b10] sm:$0xff]
    %v5428 = vld [vmem:[#allocation3 + $0x1b18] sm:$0xff]
    %v5429 = vld [vmem:[#allocation3 + $0x1b20] sm:$0xff]
    %v5430 = vld [vmem:[#allocation3 + $0x1b28] sm:$0xff]
    %v5431 = vld [vmem:[#allocation3 + $0x1b30] sm:$0xff]
    %v5432 = vld [vmem:[#allocation3 + $0x1b38] sm:$0xff]
    %v5433 = vld [vmem:[#allocation3 + $0x1b40] sm:$0xff]
    %v5434 = vld [vmem:[#allocation3 + $0x1b48] sm:$0xff]
    %v5435 = vld [vmem:[#allocation3 + $0x1b50] sm:$0xff]
    %v5436 = vld [vmem:[#allocation3 + $0x1b58] sm:$0xff]
    %v5437 = vld [vmem:[#allocation3 + $0x1b60] sm:$0xff]
    %v5438 = vld [vmem:[#allocation3 + $0x1b68] sm:$0xff]
    %v5439 = vld [vmem:[#allocation3 + $0x1b70] sm:$0xff]
    %v5440 = vld [vmem:[#allocation3 + $0x1b78] sm:$0xff]
    %v5441 = vld [vmem:[#allocation3 + $0x1b80] sm:$0xff]
    %v5442 = vld [vmem:[#allocation3 + $0x1b88] sm:$0xff]
    %v5443 = vld [vmem:[#allocation3 + $0x1b90] sm:$0xff]
    %v5444 = vld [vmem:[#allocation3 + $0x1b98] sm:$0xff]
    %v5445 = vld [vmem:[#allocation3 + $0x1ba0] sm:$0xff]
    %v5446 = vld [vmem:[#allocation3 + $0x1ba8] sm:$0xff]
    %v5447 = vld [vmem:[#allocation3 + $0x1bb0] sm:$0xff]
    %v5448 = vld [vmem:[#allocation3 + $0x1bb8] sm:$0xff]
    %v5449 = vld [vmem:[#allocation3 + $0x1bc0] sm:$0xff]
    %v5450 = vld [vmem:[#allocation3 + $0x1bc8] sm:$0xff]
    %v5451 = vld [vmem:[#allocation3 + $0x1bd0] sm:$0xff]
    %v5452 = vld [vmem:[#allocation3 + $0x1bd8] sm:$0xff]
    %v5453 = vld [vmem:[#allocation3 + $0x1be0] sm:$0xff]
    %v5454 = vld [vmem:[#allocation3 + $0x1be8] sm:$0xff]
    %v5455 = vld [vmem:[#allocation3 + $0x1bf0] sm:$0xff]
    %v5456 = vld [vmem:[#allocation3 + $0x1bf8] sm:$0xff]
    %v5457 = vld [vmem:[#allocation3 + $0x1c00] sm:$0xff]
    %v5458 = vld [vmem:[#allocation3 + $0x1c08] sm:$0xff]
    %v5459 = vld [vmem:[#allocation3 + $0x1c10] sm:$0xff]
    %v5460 = vld [vmem:[#allocation3 + $0x1c18] sm:$0xff]
    %v5461 = vld [vmem:[#allocation3 + $0x1c20] sm:$0xff]
    %v5462 = vld [vmem:[#allocation3 + $0x1c28] sm:$0xff]
    %v5463 = vld [vmem:[#allocation3 + $0x1c30] sm:$0xff]
    %v5464 = vld [vmem:[#allocation3 + $0x1c38] sm:$0xff]
    %v5465 = vld [vmem:[#allocation3 + $0x1c40] sm:$0xff]
    %v5466 = vld [vmem:[#allocation3 + $0x1c48] sm:$0xff]
    %v5467 = vld [vmem:[#allocation3 + $0x1c50] sm:$0xff]
    %v5468 = vld [vmem:[#allocation3 + $0x1c58] sm:$0xff]
    %v5469 = vld [vmem:[#allocation3 + $0x1c60] sm:$0xff]
    %v5470 = vld [vmem:[#allocation3 + $0x1c68] sm:$0xff]
    %v5471 = vld [vmem:[#allocation3 + $0x1c70] sm:$0xff]
    %v5472 = vld [vmem:[#allocation3 + $0x1c78] sm:$0xff]
    %v5473 = vld [vmem:[#allocation3 + $0x1c80] sm:$0xff]
    %v5474 = vld [vmem:[#allocation3 + $0x1c88] sm:$0xff]
    %v5475 = vld [vmem:[#allocation3 + $0x1c90] sm:$0xff]
    %v5476 = vld [vmem:[#allocation3 + $0x1c98] sm:$0xff]
    %v5477 = vld [vmem:[#allocation3 + $0x1ca0] sm:$0xff]
    %v5478 = vld [vmem:[#allocation3 + $0x1ca8] sm:$0xff]
    %v5479 = vld [vmem:[#allocation3 + $0x1cb0] sm:$0xff]
    %v5480 = vld [vmem:[#allocation3 + $0x1cb8] sm:$0xff]
    %v5481 = vld [vmem:[#allocation3 + $0x1cc0] sm:$0xff]
    %v5482 = vld [vmem:[#allocation3 + $0x1cc8] sm:$0xff]
    %v5483 = vld [vmem:[#allocation3 + $0x1cd0] sm:$0xff]
    %v5484 = vld [vmem:[#allocation3 + $0x1cd8] sm:$0xff]
    %v5485 = vld [vmem:[#allocation3 + $0x1ce0] sm:$0xff]
    %v5486 = vld [vmem:[#allocation3 + $0x1ce8] sm:$0xff]
    %v5487 = vld [vmem:[#allocation3 + $0x1cf0] sm:$0xff]
    %v5488 = vld [vmem:[#allocation3 + $0x1cf8] sm:$0xff]
    %v5489 = vld [vmem:[#allocation3 + $0x1d00] sm:$0xff]
    %v5490 = vld [vmem:[#allocation3 + $0x1d08] sm:$0xff]
    %v5491 = vld [vmem:[#allocation3 + $0x1d10] sm:$0xff]
    %v5492 = vld [vmem:[#allocation3 + $0x1d18] sm:$0xff]
    %v5493 = vld [vmem:[#allocation3 + $0x1d20] sm:$0xff]
    %v5494 = vld [vmem:[#allocation3 + $0x1d28] sm:$0xff]
    %v5495 = vld [vmem:[#allocation3 + $0x1d30] sm:$0xff]
    %v5496 = vld [vmem:[#allocation3 + $0x1d38] sm:$0xff]
    %v5497 = vld [vmem:[#allocation3 + $0x1d40] sm:$0xff]
    %v5498 = vld [vmem:[#allocation3 + $0x1d48] sm:$0xff]
    %v5499 = vld [vmem:[#allocation3 + $0x1d50] sm:$0xff]
    %v5500 = vld [vmem:[#allocation3 + $0x1d58] sm:$0xff]
    %v5501 = vld [vmem:[#allocation3 + $0x1d60] sm:$0xff]
    %v5502 = vld [vmem:[#allocation3 + $0x1d68] sm:$0xff]
    %v5503 = vld [vmem:[#allocation3 + $0x1d70] sm:$0xff]
    %v5504 = vld [vmem:[#allocation3 + $0x1d78] sm:$0xff]
    %v5505 = vld [vmem:[#allocation3 + $0x1d80] sm:$0xff]
    %v5506 = vld [vmem:[#allocation3 + $0x1d88] sm:$0xff]
    %v5507 = vld [vmem:[#allocation3 + $0x1d90] sm:$0xff]
    %v5508 = vld [vmem:[#allocation3 + $0x1d98] sm:$0xff]
    %v5509 = vld [vmem:[#allocation3 + $0x1da0] sm:$0xff]
    %v5510 = vld [vmem:[#allocation3 + $0x1da8] sm:$0xff]
    %v5511 = vld [vmem:[#allocation3 + $0x1db0] sm:$0xff]
    %v5512 = vld [vmem:[#allocation3 + $0x1db8] sm:$0xff]
    %v5513 = vld [vmem:[#allocation3 + $0x1dc0] sm:$0xff]
    %v5514 = vld [vmem:[#allocation3 + $0x1dc8] sm:$0xff]
    %v5515 = vld [vmem:[#allocation3 + $0x1dd0] sm:$0xff]
    %v5516 = vld [vmem:[#allocation3 + $0x1dd8] sm:$0xff]
    %v5517 = vld [vmem:[#allocation3 + $0x1de0] sm:$0xff]
    %v5518 = vld [vmem:[#allocation3 + $0x1de8] sm:$0xff]
    %v5519 = vld [vmem:[#allocation3 + $0x1df0] sm:$0xff]
    %v5520 = vld [vmem:[#allocation3 + $0x1df8] sm:$0xff]
    %v5521 = vld [vmem:[#allocation3 + $0x1e00] sm:$0xff]
    %v5522 = vld [vmem:[#allocation3 + $0x1e08] sm:$0xff]
    %v5523 = vld [vmem:[#allocation3 + $0x1e10] sm:$0xff]
    %v5524 = vld [vmem:[#allocation3 + $0x1e18] sm:$0xff]
    %v5525 = vld [vmem:[#allocation3 + $0x1e20] sm:$0xff]
    %v5526 = vld [vmem:[#allocation3 + $0x1e28] sm:$0xff]
    %v5527 = vld [vmem:[#allocation3 + $0x1e30] sm:$0xff]
    %v5528 = vld [vmem:[#allocation3 + $0x1e38] sm:$0xff]
    %v5529 = vld [vmem:[#allocation3 + $0x1e40] sm:$0xff]
    %v5530 = vld [vmem:[#allocation3 + $0x1e48] sm:$0xff]
    %v5531 = vld [vmem:[#allocation3 + $0x1e50] sm:$0xff]
    %v5532 = vld [vmem:[#allocation3 + $0x1e58] sm:$0xff]
    %v5533 = vld [vmem:[#allocation3 + $0x1e60] sm:$0xff]
    %v5534 = vld [vmem:[#allocation3 + $0x1e68] sm:$0xff]
    %v5535 = vld [vmem:[#allocation3 + $0x1e70] sm:$0xff]
    %v5536 = vld [vmem:[#allocation3 + $0x1e78] sm:$0xff]
    %v5537 = vld [vmem:[#allocation3 + $0x1e80] sm:$0xff]
    %v5538 = vld [vmem:[#allocation3 + $0x1e88] sm:$0xff]
    %v5539 = vld [vmem:[#allocation3 + $0x1e90] sm:$0xff]
    %v5540 = vld [vmem:[#allocation3 + $0x1e98] sm:$0xff]
    %v5541 = vld [vmem:[#allocation3 + $0x1ea0] sm:$0xff]
    %v5542 = vld [vmem:[#allocation3 + $0x1ea8] sm:$0xff]
    %v5543 = vld [vmem:[#allocation3 + $0x1eb0] sm:$0xff]
    %v5544 = vld [vmem:[#allocation3 + $0x1eb8] sm:$0xff]
    %v5545 = vld [vmem:[#allocation3 + $0x1ec0] sm:$0xff]
    %v5546 = vld [vmem:[#allocation3 + $0x1ec8] sm:$0xff]
    %v5547 = vld [vmem:[#allocation3 + $0x1ed0] sm:$0xff]
    %v5548 = vld [vmem:[#allocation3 + $0x1ed8] sm:$0xff]
    %v5549 = vld [vmem:[#allocation3 + $0x1ee0] sm:$0xff]
    %v5550 = vld [vmem:[#allocation3 + $0x1ee8] sm:$0xff]
    %v5551 = vld [vmem:[#allocation3 + $0x1ef0] sm:$0xff]
    %v5552 = vld [vmem:[#allocation3 + $0x1ef8] sm:$0xff]
    %v5553 = vld [vmem:[#allocation3 + $0x1f00] sm:$0xff]
    %v5554 = vld [vmem:[#allocation3 + $0x1f08] sm:$0xff]
    %v5555 = vld [vmem:[#allocation3 + $0x1f10] sm:$0xff]
    %v5556 = vld [vmem:[#allocation3 + $0x1f18] sm:$0xff]
    %v5557 = vld [vmem:[#allocation3 + $0x1f20] sm:$0xff]
    %v5558 = vld [vmem:[#allocation3 + $0x1f28] sm:$0xff]
    %v5559 = vld [vmem:[#allocation3 + $0x1f30] sm:$0xff]
    %v5560 = vld [vmem:[#allocation3 + $0x1f38] sm:$0xff]
    %v5561 = vld [vmem:[#allocation3 + $0x1f40] sm:$0xff]
    %v5562 = vld [vmem:[#allocation3 + $0x1f48] sm:$0xff]
    %v5563 = vld [vmem:[#allocation3 + $0x1f50] sm:$0xff]
    %v5564 = vld [vmem:[#allocation3 + $0x1f58] sm:$0xff]
    %v5565 = vld [vmem:[#allocation3 + $0x1f60] sm:$0xff]
    %v5566 = vld [vmem:[#allocation3 + $0x1f68] sm:$0xff]
    %v5567 = vld [vmem:[#allocation3 + $0x1f70] sm:$0xff]
    %v5568 = vld [vmem:[#allocation3 + $0x1f78] sm:$0xff]
    %v5569 = vld [vmem:[#allocation3 + $0x1f80] sm:$0xff]
    %v5570 = vld [vmem:[#allocation3 + $0x1f88] sm:$0xff]
    %v5571 = vld [vmem:[#allocation3 + $0x1f90] sm:$0xff]
    %v5572 = vld [vmem:[#allocation3 + $0x1f98] sm:$0xff]
    %v5573 = vld [vmem:[#allocation3 + $0x1fa0] sm:$0xff]
    %v5574 = vld [vmem:[#allocation3 + $0x1fa8] sm:$0xff]
    %v5575 = vld [vmem:[#allocation3 + $0x1fb0] sm:$0xff]
    %v5576 = vld [vmem:[#allocation3 + $0x1fb8] sm:$0xff]
    %v5577 = vld [vmem:[#allocation3 + $0x1fc0] sm:$0xff]
    %v5578 = vld [vmem:[#allocation3 + $0x1fc8] sm:$0xff]
    %v5579 = vld [vmem:[#allocation3 + $0x1fd0] sm:$0xff]
    %v5580 = vld [vmem:[#allocation3 + $0x1fd8] sm:$0xff]
    %v5581 = vld [vmem:[#allocation3 + $0x1fe0] sm:$0xff]
    %v5582 = vld [vmem:[#allocation3 + $0x1fe8] sm:$0xff]
    %v5583 = vld [vmem:[#allocation3 + $0x1ff0] sm:$0xff]
    %v5584 = vld [vmem:[#allocation3 + $0x1ff8] sm:$0xff]
    %v5585 = vld [vmem:[#allocation11 + $0x1c] sm:$0xff]
    %v5586 = vld [vmem:[#allocation11 + $0x24] sm:$0xff]
    %v5589 = vlaneseq
    %v5590 = vshrl.u32 %v5589, 7
    %v5591 = vsub.s32 0, %v5590
    %v5592 = vrot.slane %v5585, %v5591
    %v5593 = vlaneseq
    %v5594 = vshrl.u32 %v5593, 7
    %v5595 = vsub.s32 1, %v5594
    %v5596 = vrot.slane %v5585, %v5595
    %v5597 = vlaneseq
    %v5598 = vshrl.u32 %v5597, 7
    %v5599 = vsub.s32 2, %v5598
    %v5600 = vrot.slane %v5585, %v5599
    %v5601 = vlaneseq
    %v5602 = vshrl.u32 %v5601, 7
    %v5603 = vsub.s32 3, %v5602
    %v5604 = vrot.slane %v5585, %v5603
    %v5605 = vlaneseq
    %v5606 = vshrl.u32 %v5605, 7
    %v5607 = vsub.s32 4, %v5606
    %v5608 = vrot.slane %v5585, %v5607
    %v5609 = vlaneseq
    %v5610 = vshrl.u32 %v5609, 7
    %v5611 = vsub.s32 5, %v5610
    %v5612 = vrot.slane %v5585, %v5611
    %v5613 = vlaneseq
    %v5614 = vshrl.u32 %v5613, 7
    %v5615 = vsub.s32 6, %v5614
    %v5616 = vrot.slane %v5585, %v5615
    %v5617 = vlaneseq
    %v5618 = vshrl.u32 %v5617, 7
    %v5619 = vsub.s32 7, %v5618
    %v5620 = vrot.slane %v5585, %v5619
    %v5621 = vlaneseq
    %v5622 = vshrl.u32 %v5621, 7
    %v5623 = vsub.s32 0, %v5622
    %v5624 = vrot.slane %v5586, %v5623
    %v5625 = vlaneseq
    %v5626 = vshrl.u32 %v5625, 7
    %v5627 = vsub.s32 1, %v5626
    %v5628 = vrot.slane %v5586, %v5627
    %v5629 = vlaneseq
    %v5630 = vshrl.u32 %v5629, 7
    %v5631 = vsub.s32 2, %v5630
    %v5632 = vrot.slane %v5586, %v5631
    %v5633 = vlaneseq
    %v5634 = vshrl.u32 %v5633, 7
    %v5635 = vsub.s32 3, %v5634
    %v5636 = vrot.slane %v5586, %v5635
    %v5637 = vlaneseq
    %v5638 = vshrl.u32 %v5637, 7
    %v5639 = vsub.s32 4, %v5638
    %v5640 = vrot.slane %v5586, %v5639
    %v5641 = vlaneseq
    %v5642 = vshrl.u32 %v5641, 7
    %v5643 = vsub.s32 5, %v5642
    %v5644 = vrot.slane %v5586, %v5643
    %v5645 = vlaneseq
    %v5646 = vshrl.u32 %v5645, 7
    %v5647 = vsub.s32 6, %v5646
    %v5648 = vrot.slane %v5586, %v5647
    %v5649 = vlaneseq
    %v5650 = vshrl.u32 %v5649, 7
    %v5651 = vsub.s32 7, %v5650
    %v5652 = vrot.slane %v5586, %v5651
    %5669 = vmatprep.subr.bf16.mxu0 %v4562
    %5670 = vmatpush1.bf16.msra.mxu0 %v4561
    %5671 = vmatprep.subr.bf16.mxu0 %v4578
    %5672 = vmatpush1.bf16.msra.mxu0 %v4577
    %5673 = vmatprep.subr.bf16.mxu0 %v4594
    %5674 = vmatpush1.bf16.msra.mxu0 %v4593
    %5675 = vmatprep.subr.bf16.mxu0 %v4610
    %5676 = vmatpush1.bf16.msra.mxu0 %v4609
    %5677 = vmatprep.subr.bf16.mxu0 %v4626
    %5678 = vmatpush1.bf16.msra.mxu0 %v4625
    %5679 = vmatprep.subr.bf16.mxu0 %v4642
    %5680 = vmatpush1.bf16.msra.mxu0 %v4641
    %5681 = vmatprep.subr.bf16.mxu0 %v4658
    %5682 = vmatpush1.bf16.msra.mxu0 %v4657
    %5683 = vmatprep.subr.bf16.mxu0 %v4674
    %5684 = vmatpush1.bf16.msra.mxu0 %v4673
    %5685 = vmatprep.subr.bf16.mxu0 %v4690
    %5686 = vmatpush1.bf16.msra.mxu0 %v4689
    %5687 = vmatprep.subr.bf16.mxu0 %v4706
    %5688 = vmatpush1.bf16.msra.mxu0 %v4705
    %5689 = vmatprep.subr.bf16.mxu0 %v4722
    %5690 = vmatpush1.bf16.msra.mxu0 %v4721
    %5691 = vmatprep.subr.bf16.mxu0 %v4738
    %5692 = vmatpush1.bf16.msra.mxu0 %v4737
    %5693 = vmatprep.subr.bf16.mxu0 %v4754
    %5694 = vmatpush1.bf16.msra.mxu0 %v4753
    %5695 = vmatprep.subr.bf16.mxu0 %v4770
    %5696 = vmatpush1.bf16.msra.mxu0 %v4769
    %5697 = vmatprep.subr.bf16.mxu0 %v4786
    %5698 = vmatpush1.bf16.msra.mxu0 %v4785
    %5699 = vmatprep.subr.bf16.mxu0 %v4802
    %5700 = vmatpush1.bf16.msra.mxu0 %v4801
    %5701 = vmatprep.mubr.bf16.mxu0 %v4550
    %5702 = vmatmul.mubr.bf16.gmra.mrb[0].mxu0 %v4549
    %v5703 = vpop.f32.mrb[0].mxu0
    %v5704 = vadd.f32 %v5592, %v5703
    %v5705 = vpop.f32.mrb[0].mxu0
    %v5706 = vadd.f32 %v5596, %v5705
    %v5707 = vpop.f32.mrb[0].mxu0
    %v5708 = vpop.f32.mrb[0].mxu0
    %5709 = vdwg.mxu0
    %5710 = vmatprep.subr.bf16.mxu0 %v4818
    %5711 = vmatpush1.bf16.msra.mxu0 %v4817
    %5712 = vmatprep.subr.bf16.mxu0 %v4834
    %5713 = vmatpush1.bf16.msra.mxu0 %v4833
    %5714 = vmatprep.subr.bf16.mxu0 %v4850
    %5715 = vmatpush1.bf16.msra.mxu0 %v4849
    %5716 = vmatprep.subr.bf16.mxu0 %v4866
    %5717 = vmatpush1.bf16.msra.mxu0 %v4865
    %5718 = vmatprep.subr.bf16.mxu0 %v4882
    %5719 = vmatpush1.bf16.msra.mxu0 %v4881
    %5720 = vmatprep.subr.bf16.mxu0 %v4898
    %5721 = vmatpush1.bf16.msra.mxu0 %v4897
    %5722 = vmatprep.subr.bf16.mxu0 %v4914
    %5723 = vmatpush1.bf16.msra.mxu0 %v4913
    %5724 = vmatprep.subr.bf16.mxu0 %v4930
    %5725 = vmatpush1.bf16.msra.mxu0 %v4929
    %5726 = vmatprep.subr.bf16.mxu0 %v4946
    %5727 = vmatpush1.bf16.msra.mxu0 %v4945
    %5728 = vmatprep.subr.bf16.mxu0 %v4962
    %5729 = vmatpush1.bf16.msra.mxu0 %v4961
    %5730 = vmatprep.subr.bf16.mxu0 %v4978
    %5731 = vmatpush1.bf16.msra.mxu0 %v4977
    %5732 = vmatprep.subr.bf16.mxu0 %v4994
    %5733 = vmatpush1.bf16.msra.mxu0 %v4993
    %5734 = vmatprep.subr.bf16.mxu0 %v5010
    %5735 = vmatpush1.bf16.msra.mxu0 %v5009
    %5736 = vmatprep.subr.bf16.mxu0 %v5026
    %5737 = vmatpush1.bf16.msra.mxu0 %v5025
    %5738 = vmatprep.subr.bf16.mxu0 %v5042
    %5739 = vmatpush1.bf16.msra.mxu0 %v5041
    %5740 = vmatprep.subr.bf16.mxu0 %v5058
    %5741 = vmatpush1.bf16.msra.mxu0 %v5057
    %5742 = vmatprep.mubr.bf16.mxu0 %v4552
    %5743 = vmatmul.mubr.bf16.gmra.mrb[0].mxu0 %v4551
    %v5744 = vpop.f32.mrb[0].mxu0
    %v5745 = vadd.f32 %v5704, %v5744
    %v5746 = vpop.f32.mrb[0].mxu0
    %v5747 = vadd.f32 %v5706, %v5746
    %v5748 = vpop.f32.mrb[0].mxu0
    %v5749 = vpop.f32.mrb[0].mxu0
    %5750 = vdwg.mxu0
    %5751 = vmatprep.subr.bf16.mxu0 %v5074
    %5752 = vmatpush1.bf16.msra.mxu0 %v5073
    %5753 = vmatprep.subr.bf16.mxu0 %v5090
    %5754 = vmatpush1.bf16.msra.mxu0 %v5089
    %5755 = vmatprep.subr.bf16.mxu0 %v5106
    %5756 = vmatpush1.bf16.msra.mxu0 %v5105
    %5757 = vmatprep.subr.bf16.mxu0 %v5122
    %5758 = vmatpush1.bf16.msra.mxu0 %v5121
    %5759 = vmatprep.subr.bf16.mxu0 %v5138
    %5760 = vmatpush1.bf16.msra.mxu0 %v5137
    %5761 = vmatprep.subr.bf16.mxu0 %v5154
    %5762 = vmatpush1.bf16.msra.mxu0 %v5153
    %5763 = vmatprep.subr.bf16.mxu0 %v5170
    %5764 = vmatpush1.bf16.msra.mxu0 %v5169
    %5765 = vmatprep.subr.bf16.mxu0 %v5186
    %5766 = vmatpush1.bf16.msra.mxu0 %v5185
    %5767 = vmatprep.subr.bf16.mxu0 %v5202
    %5768 = vmatpush1.bf16.msra.mxu0 %v5201
    %5769 = vmatprep.subr.bf16.mxu0 %v5218
    %5770 = vmatpush1.bf16.msra.mxu0 %v5217
    %5771 = vmatprep.subr.bf16.mxu0 %v5234
    %5772 = vmatpush1.bf16.msra.mxu0 %v5233
    %5773 = vmatprep.subr.bf16.mxu0 %v5250
    %5774 = vmatpush1.bf16.msra.mxu0 %v5249
    %5775 = vmatprep.subr.bf16.mxu0 %v5266
    %5776 = vmatpush1.bf16.msra.mxu0 %v5265
    %5777 = vmatprep.subr.bf16.mxu0 %v5282
    %5778 = vmatpush1.bf16.msra.mxu0 %v5281
    %5779 = vmatprep.subr.bf16.mxu0 %v5298
    %5780 = vmatpush1.bf16.msra.mxu0 %v5297
    %5781 = vmatprep.subr.bf16.mxu0 %v5314
    %5782 = vmatpush1.bf16.msra.mxu0 %v5313
    %5783 = vmatprep.mubr.bf16.mxu0 %v4554
    %5784 = vmatmul.mubr.bf16.gmra.mrb[0].mxu0 %v4553
    %v5785 = vpop.f32.mrb[0].mxu0
    %v5786 = vadd.f32 %v5745, %v5785
    %v5787 = vpop.f32.mrb[0].mxu0
    %v5788 = vadd.f32 %v5747, %v5787
    %v5789 = vpop.f32.mrb[0].mxu0
    %v5790 = vpop.f32.mrb[0].mxu0
    %5791 = vdwg.mxu0
    %5792 = vmatprep.subr.bf16.mxu0 %v5330
    %5793 = vmatpush1.bf16.msra.mxu0 %v5329
    %5794 = vmatprep.subr.bf16.mxu0 %v5346
    %5795 = vmatpush1.bf16.msra.mxu0 %v5345
    %5796 = vmatprep.subr.bf16.mxu0 %v5362
    %5797 = vmatpush1.bf16.msra.mxu0 %v5361
    %5798 = vmatprep.subr.bf16.mxu0 %v5378
    %5799 = vmatpush1.bf16.msra.mxu0 %v5377
    %5800 = vmatprep.subr.bf16.mxu0 %v5394
    %5801 = vmatpush1.bf16.msra.mxu0 %v5393
    %5802 = vmatprep.subr.bf16.mxu0 %v5410
    %5803 = vmatpush1.bf16.msra.mxu0 %v5409
    %5804 = vmatprep.subr.bf16.mxu0 %v5426
    %5805 = vmatpush1.bf16.msra.mxu0 %v5425
    %5806 = vmatprep.subr.bf16.mxu0 %v5442
    %5807 = vmatpush1.bf16.msra.mxu0 %v5441
    %5808 = vmatprep.subr.bf16.mxu0 %v5458
    %5809 = vmatpush1.bf16.msra.mxu0 %v5457
    %5810 = vmatprep.subr.bf16.mxu0 %v5474
    %5811 = vmatpush1.bf16.msra.mxu0 %v5473
    %5812 = vmatprep.subr.bf16.mxu0 %v5490
    %5813 = vmatpush1.bf16.msra.mxu0 %v5489
    %5814 = vmatprep.subr.bf16.mxu0 %v5506
    %5815 = vmatpush1.bf16.msra.mxu0 %v5505
    %5816 = vmatprep.subr.bf16.mxu0 %v5522
    %5817 = vmatpush1.bf16.msra.mxu0 %v5521
    %5818 = vmatprep.subr.bf16.mxu0 %v5538
    %5819 = vmatpush1.bf16.msra.mxu0 %v5537
    %5820 = vmatprep.subr.bf16.mxu0 %v5554
    %5821 = vmatpush1.bf16.msra.mxu0 %v5553
    %5822 = vmatprep.subr.bf16.mxu0 %v5570
    %5823 = vmatpush1.bf16.msra.mxu0 %v5569
    %5824 = vmatprep.mubr.bf16.mxu0 %v4556
    %5825 = vmatmul.mubr.bf16.gmra.mrb[0].mxu0 %v4555
    %v5826 = vpop.f32.mrb[0].mxu0
    %v5827 = vadd.f32 %v5786, %v5826
    %v5828 = vpop.f32.mrb[0].mxu0
    %v5829 = vadd.f32 %v5788, %v5828
    %v5830 = vpop.f32.mrb[0].mxu0
    %v5831 = vpop.f32.mrb[0].mxu0
    %5832 = vdwg.mxu0
    %5833 = vmatprep.subr.bf16.mxu0 %v4564
    %5834 = vmatpush1.bf16.msra.mxu0 %v4563
    %5835 = vmatprep.subr.bf16.mxu0 %v4580
    %5836 = vmatpush1.bf16.msra.mxu0 %v4579
    %5837 = vmatprep.subr.bf16.mxu0 %v4596
    %5838 = vmatpush1.bf16.msra.mxu0 %v4595
    %5839 = vmatprep.subr.bf16.mxu0 %v4612
    %5840 = vmatpush1.bf16.msra.mxu0 %v4611
    %5841 = vmatprep.subr.bf16.mxu0 %v4628
    %5842 = vmatpush1.bf16.msra.mxu0 %v4627
    %5843 = vmatprep.subr.bf16.mxu0 %v4644
    %5844 = vmatpush1.bf16.msra.mxu0 %v4643
    %5845 = vmatprep.subr.bf16.mxu0 %v4660
    %5846 = vmatpush1.bf16.msra.mxu0 %v4659
    %5847 = vmatprep.subr.bf16.mxu0 %v4676
    %5848 = vmatpush1.bf16.msra.mxu0 %v4675
    %5849 = vmatprep.subr.bf16.mxu0 %v4692
    %5850 = vmatpush1.bf16.msra.mxu0 %v4691
    %5851 = vmatprep.subr.bf16.mxu0 %v4708
    %5852 = vmatpush1.bf16.msra.mxu0 %v4707
    %5853 = vmatprep.subr.bf16.mxu0 %v4724
    %5854 = vmatpush1.bf16.msra.mxu0 %v4723
    %5855 = vmatprep.subr.bf16.mxu0 %v4740
    %5856 = vmatpush1.bf16.msra.mxu0 %v4739
    %5857 = vmatprep.subr.bf16.mxu0 %v4756
    %5858 = vmatpush1.bf16.msra.mxu0 %v4755
    %5859 = vmatprep.subr.bf16.mxu0 %v4772
    %5860 = vmatpush1.bf16.msra.mxu0 %v4771
    %5861 = vmatprep.subr.bf16.mxu0 %v4788
    %5862 = vmatpush1.bf16.msra.mxu0 %v4787
    %5863 = vmatprep.subr.bf16.mxu0 %v4804
    %5864 = vmatpush1.bf16.msra.mxu0 %v4803
    %5865 = vmatprep.mubr.bf16.mxu0 %v4550
    %5866 = vmatmul.mubr.bf16.gmra.mrb[0].mxu0 %v4549
    %v5867 = vpop.f32.mrb[0].mxu0
    %v5868 = vadd.f32 %v5600, %v5867
    %v5869 = vpop.f32.mrb[0].mxu0
    %v5870 = vadd.f32 %v5604, %v5869
    %v5871 = vpop.f32.mrb[0].mxu0
    %v5872 = vpop.f32.mrb[0].mxu0
    %5873 = vdwg.mxu0
    %5874 = vmatprep.subr.bf16.mxu0 %v4820
    %5875 = vmatpush1.bf16.msra.mxu0 %v4819
    %5876 = vmatprep.subr.bf16.mxu0 %v4836
    %5877 = vmatpush1.bf16.msra.mxu0 %v4835
    %5878 = vmatprep.subr.bf16.mxu0 %v4852
    %5879 = vmatpush1.bf16.msra.mxu0 %v4851
    %5880 = vmatprep.subr.bf16.mxu0 %v4868
    %5881 = vmatpush1.bf16.msra.mxu0 %v4867
    %5882 = vmatprep.subr.bf16.mxu0 %v4884
    %5883 = vmatpush1.bf16.msra.mxu0 %v4883
    %5884 = vmatprep.subr.bf16.mxu0 %v4900
    %5885 = vmatpush1.bf16.msra.mxu0 %v4899
    %5886 = vmatprep.subr.bf16.mxu0 %v4916
    %5887 = vmatpush1.bf16.msra.mxu0 %v4915
    %5888 = vmatprep.subr.bf16.mxu0 %v4932
    %5889 = vmatpush1.bf16.msra.mxu0 %v4931
    %5890 = vmatprep.subr.bf16.mxu0 %v4948
    %5891 = vmatpush1.bf16.msra.mxu0 %v4947
    %5892 = vmatprep.subr.bf16.mxu0 %v4964
    %5893 = vmatpush1.bf16.msra.mxu0 %v4963
    %5894 = vmatprep.subr.bf16.mxu0 %v4980
    %5895 = vmatpush1.bf16.msra.mxu0 %v4979
    %5896 = vmatprep.subr.bf16.mxu0 %v4996
    %5897 = vmatpush1.bf16.msra.mxu0 %v4995
    %5898 = vmatprep.subr.bf16.mxu0 %v5012
    %5899 = vmatpush1.bf16.msra.mxu0 %v5011
    %5900 = vmatprep.subr.bf16.mxu0 %v5028
    %5901 = vmatpush1.bf16.msra.mxu0 %v5027
    %5902 = vmatprep.subr.bf16.mxu0 %v5044
    %5903 = vmatpush1.bf16.msra.mxu0 %v5043
    %5904 = vmatprep.subr.bf16.mxu0 %v5060
    %5905 = vmatpush1.bf16.msra.mxu0 %v5059
    %5906 = vmatprep.mubr.bf16.mxu0 %v4552
    %5907 = vmatmul.mubr.bf16.gmra.mrb[0].mxu0 %v4551
    %v5908 = vpop.f32.mrb[0].mxu0
    %v5909 = vadd.f32 %v5868, %v5908
    %v5910 = vpop.f32.mrb[0].mxu0
    %v5911 = vadd.f32 %v5870, %v5910
    %v5912 = vpop.f32.mrb[0].mxu0
    %v5913 = vpop.f32.mrb[0].mxu0
    %5914 = vdwg.mxu0
    %5915 = vmatprep.subr.bf16.mxu0 %v5076
    %5916 = vmatpush1.bf16.msra.mxu0 %v5075
    %5917 = vmatprep.subr.bf16.mxu0 %v5092
    %5918 = vmatpush1.bf16.msra.mxu0 %v5091
    %5919 = vmatprep.subr.bf16.mxu0 %v5108
    %5920 = vmatpush1.bf16.msra.mxu0 %v5107
    %5921 = vmatprep.subr.bf16.mxu0 %v5124
    %5922 = vmatpush1.bf16.msra.mxu0 %v5123
    %5923 = vmatprep.subr.bf16.mxu0 %v5140
    %5924 = vmatpush1.bf16.msra.mxu0 %v5139
    %5925 = vmatprep.subr.bf16.mxu0 %v5156
    %5926 = vmatpush1.bf16.msra.mxu0 %v5155
    %5927 = vmatprep.subr.bf16.mxu0 %v5172
    %5928 = vmatpush1.bf16.msra.mxu0 %v5171
    %5929 = vmatprep.subr.bf16.mxu0 %v5188
    %5930 = vmatpush1.bf16.msra.mxu0 %v5187
    %5931 = vmatprep.subr.bf16.mxu0 %v5204
    %5932 = vmatpush1.bf16.msra.mxu0 %v5203
    %5933 = vmatprep.subr.bf16.mxu0 %v5220
    %5934 = vmatpush1.bf16.msra.mxu0 %v5219
    %5935 = vmatprep.subr.bf16.mxu0 %v5236
    %5936 = vmatpush1.bf16.msra.mxu0 %v5235
    %5937 = vmatprep.subr.bf16.mxu0 %v5252
    %5938 = vmatpush1.bf16.msra.mxu0 %v5251
    %5939 = vmatprep.subr.bf16.mxu0 %v5268
    %5940 = vmatpush1.bf16.msra.mxu0 %v5267
    %5941 = vmatprep.subr.bf16.mxu0 %v5284
    %5942 = vmatpush1.bf16.msra.mxu0 %v5283
    %5943 = vmatprep.subr.bf16.mxu0 %v5300
    %5944 = vmatpush1.bf16.msra.mxu0 %v5299
    %5945 = vmatprep.subr.bf16.mxu0 %v5316
    %5946 = vmatpush1.bf16.msra.mxu0 %v5315
    %5947 = vmatprep.mubr.bf16.mxu0 %v4554
    %5948 = vmatmul.mubr.bf16.gmra.mrb[0].mxu0 %v4553
    %v5949 = vpop.f32.mrb[0].mxu0
    %v5950 = vadd.f32 %v5909, %v5949
    %v5951 = vpop.f32.mrb[0].mxu0
    %v5952 = vadd.f32 %v5911, %v5951
    %v5953 = vpop.f32.mrb[0].mxu0
    %v5954 = vpop.f32.mrb[0].mxu0
    %5955 = vdwg.mxu0
    %5956 = vmatprep.subr.bf16.mxu0 %v5332
    %5957 = vmatpush1.bf16.msra.mxu0 %v5331
    %5958 = vmatprep.subr.bf16.mxu0 %v5348
    %5959 = vmatpush1.bf16.msra.mxu0 %v5347
    %5960 = vmatprep.subr.bf16.mxu0 %v5364
    %5961 = vmatpush1.bf16.msra.mxu0 %v5363
    %5962 = vmatprep.subr.bf16.mxu0 %v5380
    %5963 = vmatpush1.bf16.msra.mxu0 %v5379
    %5964 = vmatprep.subr.bf16.mxu0 %v5396
    %5965 = vmatpush1.bf16.msra.mxu0 %v5395
    %5966 = vmatprep.subr.bf16.mxu0 %v5412
    %5967 = vmatpush1.bf16.msra.mxu0 %v5411
    %5968 = vmatprep.subr.bf16.mxu0 %v5428
    %5969 = vmatpush1.bf16.msra.mxu0 %v5427
    %5970 = vmatprep.subr.bf16.mxu0 %v5444
    %5971 = vmatpush1.bf16.msra.mxu0 %v5443
    %5972 = vmatprep.subr.bf16.mxu0 %v5460
    %5973 = vmatpush1.bf16.msra.mxu0 %v5459
    %5974 = vmatprep.subr.bf16.mxu0 %v5476
    %5975 = vmatpush1.bf16.msra.mxu0 %v5475
    %5976 = vmatprep.subr.bf16.mxu0 %v5492
    %5977 = vmatpush1.bf16.msra.mxu0 %v5491
    %5978 = vmatprep.subr.bf16.mxu0 %v5508
    %5979 = vmatpush1.bf16.msra.mxu0 %v5507
    %5980 = vmatprep.subr.bf16.mxu0 %v5524
    %5981 = vmatpush1.bf16.msra.mxu0 %v5523
    %5982 = vmatprep.subr.bf16.mxu0 %v5540
    %5983 = vmatpush1.bf16.msra.mxu0 %v5539
    %5984 = vmatprep.subr.bf16.mxu0 %v5556
    %5985 = vmatpush1.bf16.msra.mxu0 %v5555
    %5986 = vmatprep.subr.bf16.mxu0 %v5572
    %5987 = vmatpush1.bf16.msra.mxu0 %v5571
    %5988 = vmatprep.mubr.bf16.mxu0 %v4556
    %5989 = vmatmul.mubr.bf16.gmra.mrb[0].mxu0 %v4555
    %v5990 = vpop.f32.mrb[0].mxu0
    %v5991 = vadd.f32 %v5950, %v5990
    %v5992 = vpop.f32.mrb[0].mxu0
    %v5993 = vadd.f32 %v5952, %v5992
    %v5994 = vpop.f32.mrb[0].mxu0
    %v5995 = vpop.f32.mrb[0].mxu0
    %5996 = vdwg.mxu0
    %5997 = vmatprep.subr.bf16.mxu0 %v4566
    %5998 = vmatpush1.bf16.msra.mxu0 %v4565
    %5999 = vmatprep.subr.bf16.mxu0 %v4582
    %6000 = vmatpush1.bf16.msra.mxu0 %v4581
    %6001 = vmatprep.subr.bf16.mxu0 %v4598
    %6002 = vmatpush1.bf16.msra.mxu0 %v4597
    %6003 = vmatprep.subr.bf16.mxu0 %v4614
    %6004 = vmatpush1.bf16.msra.mxu0 %v4613
    %6005 = vmatprep.subr.bf16.mxu0 %v4630
    %6006 = vmatpush1.bf16.msra.mxu0 %v4629
    %6007 = vmatprep.subr.bf16.mxu0 %v4646
    %6008 = vmatpush1.bf16.msra.mxu0 %v4645
    %6009 = vmatprep.subr.bf16.mxu0 %v4662
    %6010 = vmatpush1.bf16.msra.mxu0 %v4661
    %6011 = vmatprep.subr.bf16.mxu0 %v4678
    %6012 = vmatpush1.bf16.msra.mxu0 %v4677
    %6013 = vmatprep.subr.bf16.mxu0 %v4694
    %6014 = vmatpush1.bf16.msra.mxu0 %v4693
    %6015 = vmatprep.subr.bf16.mxu0 %v4710
    %6016 = vmatpush1.bf16.msra.mxu0 %v4709
    %6017 = vmatprep.subr.bf16.mxu0 %v4726
    %6018 = vmatpush1.bf16.msra.mxu0 %v4725
    %6019 = vmatprep.subr.bf16.mxu0 %v4742
    %6020 = vmatpush1.bf16.msra.mxu0 %v4741
    %6021 = vmatprep.subr.bf16.mxu0 %v4758
    %6022 = vmatpush1.bf16.msra.mxu0 %v4757
    %6023 = vmatprep.subr.bf16.mxu0 %v4774
    %6024 = vmatpush1.bf16.msra.mxu0 %v4773
    %6025 = vmatprep.subr.bf16.mxu0 %v4790
    %6026 = vmatpush1.bf16.msra.mxu0 %v4789
    %6027 = vmatprep.subr.bf16.mxu0 %v4806
    %6028 = vmatpush1.bf16.msra.mxu0 %v4805
    %6029 = vmatprep.mubr.bf16.mxu0 %v4550
    %6030 = vmatmul.mubr.bf16.gmra.mrb[0].mxu0 %v4549
    %v6031 = vpop.f32.mrb[0].mxu0
    %v6032 = vadd.f32 %v5608, %v6031
    %v6033 = vpop.f32.mrb[0].mxu0
    %v6034 = vadd.f32 %v5612, %v6033
    %v6035 = vpop.f32.mrb[0].mxu0
    %v6036 = vpop.f32.mrb[0].mxu0
    %6037 = vdwg.mxu0
    %6038 = vmatprep.subr.bf16.mxu0 %v4822
    %6039 = vmatpush1.bf16.msra.mxu0 %v4821
    %6040 = vmatprep.subr.bf16.mxu0 %v4838
    %6041 = vmatpush1.bf16.msra.mxu0 %v4837
    %6042 = vmatprep.subr.bf16.mxu0 %v4854
    %6043 = vmatpush1.bf16.msra.mxu0 %v4853
    %6044 = vmatprep.subr.bf16.mxu0 %v4870
    %6045 = vmatpush1.bf16.msra.mxu0 %v4869
    %6046 = vmatprep.subr.bf16.mxu0 %v4886
    %6047 = vmatpush1.bf16.msra.mxu0 %v4885
    %6048 = vmatprep.subr.bf16.mxu0 %v4902
    %6049 = vmatpush1.bf16.msra.mxu0 %v4901
    %6050 = vmatprep.subr.bf16.mxu0 %v4918
    %6051 = vmatpush1.bf16.msra.mxu0 %v4917
    %6052 = vmatprep.subr.bf16.mxu0 %v4934
    %6053 = vmatpush1.bf16.msra.mxu0 %v4933
    %6054 = vmatprep.subr.bf16.mxu0 %v4950
    %6055 = vmatpush1.bf16.msra.mxu0 %v4949
    %6056 = vmatprep.subr.bf16.mxu0 %v4966
    %6057 = vmatpush1.bf16.msra.mxu0 %v4965
    %6058 = vmatprep.subr.bf16.mxu0 %v4982
    %6059 = vmatpush1.bf16.msra.mxu0 %v4981
    %6060 = vmatprep.subr.bf16.mxu0 %v4998
    %6061 = vmatpush1.bf16.msra.mxu0 %v4997
    %6062 = vmatprep.subr.bf16.mxu0 %v5014
    %6063 = vmatpush1.bf16.msra.mxu0 %v5013
    %6064 = vmatprep.subr.bf16.mxu0 %v5030
    %6065 = vmatpush1.bf16.msra.mxu0 %v5029
    %6066 = vmatprep.subr.bf16.mxu0 %v5046
    %6067 = vmatpush1.bf16.msra.mxu0 %v5045
    %6068 = vmatprep.subr.bf16.mxu0 %v5062
    %6069 = vmatpush1.bf16.msra.mxu0 %v5061
    %6070 = vmatprep.mubr.bf16.mxu0 %v4552
    %6071 = vmatmul.mubr.bf16.gmra.mrb[0].mxu0 %v4551
    %v6072 = vpop.f32.mrb[0].mxu0
    %v6073 = vadd.f32 %v6032, %v6072
    %v6074 = vpop.f32.mrb[0].mxu0
    %v6075 = vadd.f32 %v6034, %v6074
    %v6076 = vpop.f32.mrb[0].mxu0
    %v6077 = vpop.f32.mrb[0].mxu0
    %6078 = vdwg.mxu0
    %6079 = vmatprep.subr.bf16.mxu0 %v5078
    %6080 = vmatpush1.bf16.msra.mxu0 %v5077
    %6081 = vmatprep.subr.bf16.mxu0 %v5094
    %6082 = vmatpush1.bf16.msra.mxu0 %v5093
    %6083 = vmatprep.subr.bf16.mxu0 %v5110
    %6084 = vmatpush1.bf16.msra.mxu0 %v5109
    %6085 = vmatprep.subr.bf16.mxu0 %v5126
    %6086 = vmatpush1.bf16.msra.mxu0 %v5125
    %6087 = vmatprep.subr.bf16.mxu0 %v5142
    %6088 = vmatpush1.bf16.msra.mxu0 %v5141
    %6089 = vmatprep.subr.bf16.mxu0 %v5158
    %6090 = vmatpush1.bf16.msra.mxu0 %v5157
    %6091 = vmatprep.subr.bf16.mxu0 %v5174
    %6092 = vmatpush1.bf16.msra.mxu0 %v5173
    %6093 = vmatprep.subr.bf16.mxu0 %v5190
    %6094 = vmatpush1.bf16.msra.mxu0 %v5189
    %6095 = vmatprep.subr.bf16.mxu0 %v5206
    %6096 = vmatpush1.bf16.msra.mxu0 %v5205
    %6097 = vmatprep.subr.bf16.mxu0 %v5222
    %6098 = vmatpush1.bf16.msra.mxu0 %v5221
    %6099 = vmatprep.subr.bf16.mxu0 %v5238
    %6100 = vmatpush1.bf16.msra.mxu0 %v5237
    %6101 = vmatprep.subr.bf16.mxu0 %v5254
    %6102 = vmatpush1.bf16.msra.mxu0 %v5253
    %6103 = vmatprep.subr.bf16.mxu0 %v5270
    %6104 = vmatpush1.bf16.msra.mxu0 %v5269
    %6105 = vmatprep.subr.bf16.mxu0 %v5286
    %6106 = vmatpush1.bf16.msra.mxu0 %v5285
    %6107 = vmatprep.subr.bf16.mxu0 %v5302
    %6108 = vmatpush1.bf16.msra.mxu0 %v5301
    %6109 = vmatprep.subr.bf16.mxu0 %v5318
    %6110 = vmatpush1.bf16.msra.mxu0 %v5317
    %6111 = vmatprep.mubr.bf16.mxu0 %v4554
    %6112 = vmatmul.mubr.bf16.gmra.mrb[0].mxu0 %v4553
    %v6113 = vpop.f32.mrb[0].mxu0
    %v6114 = vadd.f32 %v6073, %v6113
    %v6115 = vpop.f32.mrb[0].mxu0
    %v6116 = vadd.f32 %v6075, %v6115
    %v6117 = vpop.f32.mrb[0].mxu0
    %v6118 = vpop.f32.mrb[0].mxu0
    %6119 = vdwg.mxu0
    %6120 = vmatprep.subr.bf16.mxu0 %v5334
    %6121 = vmatpush1.bf16.msra.mxu0 %v5333
    %6122 = vmatprep.subr.bf16.mxu0 %v5350
    %6123 = vmatpush1.bf16.msra.mxu0 %v5349
    %6124 = vmatprep.subr.bf16.mxu0 %v5366
    %6125 = vmatpush1.bf16.msra.mxu0 %v5365
    %6126 = vmatprep.subr.bf16.mxu0 %v5382
    %6127 = vmatpush1.bf16.msra.mxu0 %v5381
    %6128 = vmatprep.subr.bf16.mxu0 %v5398
    %6129 = vmatpush1.bf16.msra.mxu0 %v5397
    %6130 = vmatprep.subr.bf16.mxu0 %v5414
    %6131 = vmatpush1.bf16.msra.mxu0 %v5413
    %6132 = vmatprep.subr.bf16.mxu0 %v5430
    %6133 = vmatpush1.bf16.msra.mxu0 %v5429
    %6134 = vmatprep.subr.bf16.mxu0 %v5446
    %6135 = vmatpush1.bf16.msra.mxu0 %v5445
    %6136 = vmatprep.subr.bf16.mxu0 %v5462
    %6137 = vmatpush1.bf16.msra.mxu0 %v5461
    %6138 = vmatprep.subr.bf16.mxu0 %v5478
    %6139 = vmatpush1.bf16.msra.mxu0 %v5477
    %6140 = vmatprep.subr.bf16.mxu0 %v5494
    %6141 = vmatpush1.bf16.msra.mxu0 %v5493
    %6142 = vmatprep.subr.bf16.mxu0 %v5510
    %6143 = vmatpush1.bf16.msra.mxu0 %v5509
    %6144 = vmatprep.subr.bf16.mxu0 %v5526
    %6145 = vmatpush1.bf16.msra.mxu0 %v5525
    %6146 = vmatprep.subr.bf16.mxu0 %v5542
    %6147 = vmatpush1.bf16.msra.mxu0 %v5541
    %6148 = vmatprep.subr.bf16.mxu0 %v5558
    %6149 = vmatpush1.bf16.msra.mxu0 %v5557
    %6150 = vmatprep.subr.bf16.mxu0 %v5574
    %6151 = vmatpush1.bf16.msra.mxu0 %v5573
    %6152 = vmatprep.mubr.bf16.mxu0 %v4556
    %6153 = vmatmul.mubr.bf16.gmra.mrb[0].mxu0 %v4555
    %v6154 = vpop.f32.mrb[0].mxu0
    %v6155 = vadd.f32 %v6114, %v6154
    %v6156 = vpop.f32.mrb[0].mxu0
    %v6157 = vadd.f32 %v6116, %v6156
    %v6158 = vpop.f32.mrb[0].mxu0
    %v6159 = vpop.f32.mrb[0].mxu0
    %6160 = vdwg.mxu0
    %6161 = vmatprep.subr.bf16.mxu0 %v4568
    %6162 = vmatpush1.bf16.msra.mxu0 %v4567
    %6163 = vmatprep.subr.bf16.mxu0 %v4584
    %6164 = vmatpush1.bf16.msra.mxu0 %v4583
    %6165 = vmatprep.subr.bf16.mxu0 %v4600
    %6166 = vmatpush1.bf16.msra.mxu0 %v4599
    %6167 = vmatprep.subr.bf16.mxu0 %v4616
    %6168 = vmatpush1.bf16.msra.mxu0 %v4615
    %6169 = vmatprep.subr.bf16.mxu0 %v4632
    %6170 = vmatpush1.bf16.msra.mxu0 %v4631
    %6171 = vmatprep.subr.bf16.mxu0 %v4648
    %6172 = vmatpush1.bf16.msra.mxu0 %v4647
    %6173 = vmatprep.subr.bf16.mxu0 %v4664
    %6174 = vmatpush1.bf16.msra.mxu0 %v4663
    %6175 = vmatprep.subr.bf16.mxu0 %v4680
    %6176 = vmatpush1.bf16.msra.mxu0 %v4679
    %6177 = vmatprep.subr.bf16.mxu0 %v4696
    %6178 = vmatpush1.bf16.msra.mxu0 %v4695
    %6179 = vmatprep.subr.bf16.mxu0 %v4712
    %6180 = vmatpush1.bf16.msra.mxu0 %v4711
    %6181 = vmatprep.subr.bf16.mxu0 %v4728
    %6182 = vmatpush1.bf16.msra.mxu0 %v4727
    %6183 = vmatprep.subr.bf16.mxu0 %v4744
    %6184 = vmatpush1.bf16.msra.mxu0 %v4743
    %6185 = vmatprep.subr.bf16.mxu0 %v4760
    %6186 = vmatpush1.bf16.msra.mxu0 %v4759
    %6187 = vmatprep.subr.bf16.mxu0 %v4776
    %6188 = vmatpush1.bf16.msra.mxu0 %v4775
    %6189 = vmatprep.subr.bf16.mxu0 %v4792
    %6190 = vmatpush1.bf16.msra.mxu0 %v4791
    %6191 = vmatprep.subr.bf16.mxu0 %v4808
    %6192 = vmatpush1.bf16.msra.mxu0 %v4807
    %6193 = vmatprep.mubr.bf16.mxu0 %v4550
    %6194 = vmatmul.mubr.bf16.gmra.mrb[0].mxu0 %v4549
    %v6195 = vpop.f32.mrb[0].mxu0
    %v6196 = vadd.f32 %v5616, %v6195
    %v6197 = vpop.f32.mrb[0].mxu0
    %v6198 = vadd.f32 %v5620, %v6197
    %v6199 = vpop.f32.mrb[0].mxu0
    %v6200 = vpop.f32.mrb[0].mxu0
    %6201 = vdwg.mxu0
    %6202 = vmatprep.subr.bf16.mxu0 %v4824
    %6203 = vmatpush1.bf16.msra.mxu0 %v4823
    %6204 = vmatprep.subr.bf16.mxu0 %v4840
    %6205 = vmatpush1.bf16.msra.mxu0 %v4839
    %6206 = vmatprep.subr.bf16.mxu0 %v4856
    %6207 = vmatpush1.bf16.msra.mxu0 %v4855
    %6208 = vmatprep.subr.bf16.mxu0 %v4872
    %6209 = vmatpush1.bf16.msra.mxu0 %v4871
    %6210 = vmatprep.subr.bf16.mxu0 %v4888
    %6211 = vmatpush1.bf16.msra.mxu0 %v4887
    %6212 = vmatprep.subr.bf16.mxu0 %v4904
    %6213 = vmatpush1.bf16.msra.mxu0 %v4903
    %6214 = vmatprep.subr.bf16.mxu0 %v4920
    %6215 = vmatpush1.bf16.msra.mxu0 %v4919
    %6216 = vmatprep.subr.bf16.mxu0 %v4936
    %6217 = vmatpush1.bf16.msra.mxu0 %v4935
    %6218 = vmatprep.subr.bf16.mxu0 %v4952
    %6219 = vmatpush1.bf16.msra.mxu0 %v4951
    %6220 = vmatprep.subr.bf16.mxu0 %v4968
    %6221 = vmatpush1.bf16.msra.mxu0 %v4967
    %6222 = vmatprep.subr.bf16.mxu0 %v4984
    %6223 = vmatpush1.bf16.msra.mxu0 %v4983
    %6224 = vmatprep.subr.bf16.mxu0 %v5000
    %6225 = vmatpush1.bf16.msra.mxu0 %v4999
    %6226 = vmatprep.subr.bf16.mxu0 %v5016
    %6227 = vmatpush1.bf16.msra.mxu0 %v5015
    %6228 = vmatprep.subr.bf16.mxu0 %v5032
    %6229 = vmatpush1.bf16.msra.mxu0 %v5031
    %6230 = vmatprep.subr.bf16.mxu0 %v5048
    %6231 = vmatpush1.bf16.msra.mxu0 %v5047
    %6232 = vmatprep.subr.bf16.mxu0 %v5064
    %6233 = vmatpush1.bf16.msra.mxu0 %v5063
    %6234 = vmatprep.mubr.bf16.mxu0 %v4552
    %6235 = vmatmul.mubr.bf16.gmra.mrb[0].mxu0 %v4551
    %v6236 = vpop.f32.mrb[0].mxu0
    %v6237 = vadd.f32 %v6196, %v6236
    %v6238 = vpop.f32.mrb[0].mxu0
    %v6239 = vadd.f32 %v6198, %v6238
    %v6240 = vpop.f32.mrb[0].mxu0
    %v6241 = vpop.f32.mrb[0].mxu0
    %6242 = vdwg.mxu0
    %6243 = vmatprep.subr.bf16.mxu0 %v5080
    %6244 = vmatpush1.bf16.msra.mxu0 %v5079
    %6245 = vmatprep.subr.bf16.mxu0 %v5096
    %6246 = vmatpush1.bf16.msra.mxu0 %v5095
    %6247 = vmatprep.subr.bf16.mxu0 %v5112
    %6248 = vmatpush1.bf16.msra.mxu0 %v5111
    %6249 = vmatprep.subr.bf16.mxu0 %v5128
    %6250 = vmatpush1.bf16.msra.mxu0 %v5127
    %6251 = vmatprep.subr.bf16.mxu0 %v5144
    %6252 = vmatpush1.bf16.msra.mxu0 %v5143
    %6253 = vmatprep.subr.bf16.mxu0 %v5160
    %6254 = vmatpush1.bf16.msra.mxu0 %v5159
    %6255 = vmatprep.subr.bf16.mxu0 %v5176
    %6256 = vmatpush1.bf16.msra.mxu0 %v5175
    %6257 = vmatprep.subr.bf16.mxu0 %v5192
    %6258 = vmatpush1.bf16.msra.mxu0 %v5191
    %6259 = vmatprep.subr.bf16.mxu0 %v5208
    %6260 = vmatpush1.bf16.msra.mxu0 %v5207
    %6261 = vmatprep.subr.bf16.mxu0 %v5224
    %6262 = vmatpush1.bf16.msra.mxu0 %v5223
    %6263 = vmatprep.subr.bf16.mxu0 %v5240
    %6264 = vmatpush1.bf16.msra.mxu0 %v5239
    %6265 = vmatprep.subr.bf16.mxu0 %v5256
    %6266 = vmatpush1.bf16.msra.mxu0 %v5255
    %6267 = vmatprep.subr.bf16.mxu0 %v5272
    %6268 = vmatpush1.bf16.msra.mxu0 %v5271
    %6269 = vmatprep.subr.bf16.mxu0 %v5288
    %6270 = vmatpush1.bf16.msra.mxu0 %v5287
    %6271 = vmatprep.subr.bf16.mxu0 %v5304
    %6272 = vmatpush1.bf16.msra.mxu0 %v5303
    %6273 = vmatprep.subr.bf16.mxu0 %v5320
    %6274 = vmatpush1.bf16.msra.mxu0 %v5319
    %6275 = vmatprep.mubr.bf16.mxu0 %v4554
    %6276 = vmatmul.mubr.bf16.gmra.mrb[0].mxu0 %v4553
    %v6277 = vpop.f32.mrb[0].mxu0
    %v6278 = vadd.f32 %v6237, %v6277
    %v6279 = vpop.f32.mrb[0].mxu0
    %v6280 = vadd.f32 %v6239, %v6279
    %v6281 = vpop.f32.mrb[0].mxu0
    %v6282 = vpop.f32.mrb[0].mxu0
    %6283 = vdwg.mxu0
    %6284 = vmatprep.subr.bf16.mxu0 %v5336
    %6285 = vmatpush1.bf16.msra.mxu0 %v5335
    %6286 = vmatprep.subr.bf16.mxu0 %v5352
    %6287 = vmatpush1.bf16.msra.mxu0 %v5351
    %6288 = vmatprep.subr.bf16.mxu0 %v5368
    %6289 = vmatpush1.bf16.msra.mxu0 %v5367
    %6290 = vmatprep.subr.bf16.mxu0 %v5384
    %6291 = vmatpush1.bf16.msra.mxu0 %v5383
    %6292 = vmatprep.subr.bf16.mxu0 %v5400
    %6293 = vmatpush1.bf16.msra.mxu0 %v5399
    %6294 = vmatprep.subr.bf16.mxu0 %v5416
    %6295 = vmatpush1.bf16.msra.mxu0 %v5415
    %6296 = vmatprep.subr.bf16.mxu0 %v5432
    %6297 = vmatpush1.bf16.msra.mxu0 %v5431
    %6298 = vmatprep.subr.bf16.mxu0 %v5448
    %6299 = vmatpush1.bf16.msra.mxu0 %v5447
    %6300 = vmatprep.subr.bf16.mxu0 %v5464
    %6301 = vmatpush1.bf16.msra.mxu0 %v5463
    %6302 = vmatprep.subr.bf16.mxu0 %v5480
    %6303 = vmatpush1.bf16.msra.mxu0 %v5479
    %6304 = vmatprep.subr.bf16.mxu0 %v5496
    %6305 = vmatpush1.bf16.msra.mxu0 %v5495
    %6306 = vmatprep.subr.bf16.mxu0 %v5512
    %6307 = vmatpush1.bf16.msra.mxu0 %v5511
    %6308 = vmatprep.subr.bf16.mxu0 %v5528
    %6309 = vmatpush1.bf16.msra.mxu0 %v5527
    %6310 = vmatprep.subr.bf16.mxu0 %v5544
    %6311 = vmatpush1.bf16.msra.mxu0 %v5543
    %6312 = vmatprep.subr.bf16.mxu0 %v5560
    %6313 = vmatpush1.bf16.msra.mxu0 %v5559
    %6314 = vmatprep.subr.bf16.mxu0 %v5576
    %6315 = vmatpush1.bf16.msra.mxu0 %v5575
    %6316 = vmatprep.mubr.bf16.mxu0 %v4556
    %6317 = vmatmul.mubr.bf16.gmra.mrb[0].mxu0 %v4555
    %v6318 = vpop.f32.mrb[0].mxu0
    %v6319 = vadd.f32 %v6278, %v6318
    %v6320 = vpop.f32.mrb[0].mxu0
    %v6321 = vadd.f32 %v6280, %v6320
    %v6322 = vpop.f32.mrb[0].mxu0
    %v6323 = vpop.f32.mrb[0].mxu0
    %6324 = vdwg.mxu0
    %6325 = vmatprep.subr.bf16.mxu0 %v4570
    %6326 = vmatpush1.bf16.msra.mxu0 %v4569
    %6327 = vmatprep.subr.bf16.mxu0 %v4586
    %6328 = vmatpush1.bf16.msra.mxu0 %v4585
    %6329 = vmatprep.subr.bf16.mxu0 %v4602
    %6330 = vmatpush1.bf16.msra.mxu0 %v4601
    %6331 = vmatprep.subr.bf16.mxu0 %v4618
    %6332 = vmatpush1.bf16.msra.mxu0 %v4617
    %6333 = vmatprep.subr.bf16.mxu0 %v4634
    %6334 = vmatpush1.bf16.msra.mxu0 %v4633
    %6335 = vmatprep.subr.bf16.mxu0 %v4650
    %6336 = vmatpush1.bf16.msra.mxu0 %v4649
    %6337 = vmatprep.subr.bf16.mxu0 %v4666
    %6338 = vmatpush1.bf16.msra.mxu0 %v4665
    %6339 = vmatprep.subr.bf16.mxu0 %v4682
    %6340 = vmatpush1.bf16.msra.mxu0 %v4681
    %6341 = vmatprep.subr.bf16.mxu0 %v4698
    %6342 = vmatpush1.bf16.msra.mxu0 %v4697
    %6343 = vmatprep.subr.bf16.mxu0 %v4714
    %6344 = vmatpush1.bf16.msra.mxu0 %v4713
    %6345 = vmatprep.subr.bf16.mxu0 %v4730
    %6346 = vmatpush1.bf16.msra.mxu0 %v4729
    %6347 = vmatprep.subr.bf16.mxu0 %v4746
    %6348 = vmatpush1.bf16.msra.mxu0 %v4745
    %6349 = vmatprep.subr.bf16.mxu0 %v4762
    %6350 = vmatpush1.bf16.msra.mxu0 %v4761
    %6351 = vmatprep.subr.bf16.mxu0 %v4778
    %6352 = vmatpush1.bf16.msra.mxu0 %v4777
    %6353 = vmatprep.subr.bf16.mxu0 %v4794
    %6354 = vmatpush1.bf16.msra.mxu0 %v4793
    %6355 = vmatprep.subr.bf16.mxu0 %v4810
    %6356 = vmatpush1.bf16.msra.mxu0 %v4809
    %6357 = vmatprep.mubr.bf16.mxu0 %v4550
    %6358 = vmatmul.mubr.bf16.gmra.mrb[0].mxu0 %v4549
    %v6359 = vpop.f32.mrb[0].mxu0
    %v6360 = vadd.f32 %v5624, %v6359
    %v6361 = vpop.f32.mrb[0].mxu0
    %v6362 = vadd.f32 %v5628, %v6361
    %v6363 = vpop.f32.mrb[0].mxu0
    %v6364 = vpop.f32.mrb[0].mxu0
    %6365 = vdwg.mxu0
    %6366 = vmatprep.subr.bf16.mxu0 %v4826
    %6367 = vmatpush1.bf16.msra.mxu0 %v4825
    %6368 = vmatprep.subr.bf16.mxu0 %v4842
    %6369 = vmatpush1.bf16.msra.mxu0 %v4841
    %6370 = vmatprep.subr.bf16.mxu0 %v4858
    %6371 = vmatpush1.bf16.msra.mxu0 %v4857
    %6372 = vmatprep.subr.bf16.mxu0 %v4874
    %6373 = vmatpush1.bf16.msra.mxu0 %v4873
    %6374 = vmatprep.subr.bf16.mxu0 %v4890
    %6375 = vmatpush1.bf16.msra.mxu0 %v4889
    %6376 = vmatprep.subr.bf16.mxu0 %v4906
    %6377 = vmatpush1.bf16.msra.mxu0 %v4905
    %6378 = vmatprep.subr.bf16.mxu0 %v4922
    %6379 = vmatpush1.bf16.msra.mxu0 %v4921
    %6380 = vmatprep.subr.bf16.mxu0 %v4938
    %6381 = vmatpush1.bf16.msra.mxu0 %v4937
    %6382 = vmatprep.subr.bf16.mxu0 %v4954
    %6383 = vmatpush1.bf16.msra.mxu0 %v4953
    %6384 = vmatprep.subr.bf16.mxu0 %v4970
    %6385 = vmatpush1.bf16.msra.mxu0 %v4969
    %6386 = vmatprep.subr.bf16.mxu0 %v4986
    %6387 = vmatpush1.bf16.msra.mxu0 %v4985
    %6388 = vmatprep.subr.bf16.mxu0 %v5002
    %6389 = vmatpush1.bf16.msra.mxu0 %v5001
    %6390 = vmatprep.subr.bf16.mxu0 %v5018
    %6391 = vmatpush1.bf16.msra.mxu0 %v5017
    %6392 = vmatprep.subr.bf16.mxu0 %v5034
    %6393 = vmatpush1.bf16.msra.mxu0 %v5033
    %6394 = vmatprep.subr.bf16.mxu0 %v5050
    %6395 = vmatpush1.bf16.msra.mxu0 %v5049
    %6396 = vmatprep.subr.bf16.mxu0 %v5066
    %6397 = vmatpush1.bf16.msra.mxu0 %v5065
    %6398 = vmatprep.mubr.bf16.mxu0 %v4552
    %6399 = vmatmul.mubr.bf16.gmra.mrb[0].mxu0 %v4551
    %v6400 = vpop.f32.mrb[0].mxu0
    %v6401 = vadd.f32 %v6360, %v6400
    %v6402 = vpop.f32.mrb[0].mxu0
    %v6403 = vadd.f32 %v6362, %v6402
    %v6404 = vpop.f32.mrb[0].mxu0
    %v6405 = vpop.f32.mrb[0].mxu0
    %6406 = vdwg.mxu0
    %6407 = vmatprep.subr.bf16.mxu0 %v5082
    %6408 = vmatpush1.bf16.msra.mxu0 %v5081
    %6409 = vmatprep.subr.bf16.mxu0 %v5098
    %6410 = vmatpush1.bf16.msra.mxu0 %v5097
    %6411 = vmatprep.subr.bf16.mxu0 %v5114
    %6412 = vmatpush1.bf16.msra.mxu0 %v5113
    %6413 = vmatprep.subr.bf16.mxu0 %v5130
    %6414 = vmatpush1.bf16.msra.mxu0 %v5129
    %6415 = vmatprep.subr.bf16.mxu0 %v5146
    %6416 = vmatpush1.bf16.msra.mxu0 %v5145
    %6417 = vmatprep.subr.bf16.mxu0 %v5162
    %6418 = vmatpush1.bf16.msra.mxu0 %v5161
    %6419 = vmatprep.subr.bf16.mxu0 %v5178
    %6420 = vmatpush1.bf16.msra.mxu0 %v5177
    %6421 = vmatprep.subr.bf16.mxu0 %v5194
    %6422 = vmatpush1.bf16.msra.mxu0 %v5193
    %6423 = vmatprep.subr.bf16.mxu0 %v5210
    %6424 = vmatpush1.bf16.msra.mxu0 %v5209
    %6425 = vmatprep.subr.bf16.mxu0 %v5226
    %6426 = vmatpush1.bf16.msra.mxu0 %v5225
    %6427 = vmatprep.subr.bf16.mxu0 %v5242
    %6428 = vmatpush1.bf16.msra.mxu0 %v5241
    %6429 = vmatprep.subr.bf16.mxu0 %v5258
    %6430 = vmatpush1.bf16.msra.mxu0 %v5257
    %6431 = vmatprep.subr.bf16.mxu0 %v5274
    %6432 = vmatpush1.bf16.msra.mxu0 %v5273
    %6433 = vmatprep.subr.bf16.mxu0 %v5290
    %6434 = vmatpush1.bf16.msra.mxu0 %v5289
    %6435 = vmatprep.subr.bf16.mxu0 %v5306
    %6436 = vmatpush1.bf16.msra.mxu0 %v5305
    %6437 = vmatprep.subr.bf16.mxu0 %v5322
    %6438 = vmatpush1.bf16.msra.mxu0 %v5321
    %6439 = vmatprep.mubr.bf16.mxu0 %v4554
    %6440 = vmatmul.mubr.bf16.gmra.mrb[0].mxu0 %v4553
    %v6441 = vpop.f32.mrb[0].mxu0
    %v6442 = vadd.f32 %v6401, %v6441
    %v6443 = vpop.f32.mrb[0].mxu0
    %v6444 = vadd.f32 %v6403, %v6443
    %v6445 = vpop.f32.mrb[0].mxu0
    %v6446 = vpop.f32.mrb[0].mxu0
    %6447 = vdwg.mxu0
    %6448 = vmatprep.subr.bf16.mxu0 %v5338
    %6449 = vmatpush1.bf16.msra.mxu0 %v5337
    %6450 = vmatprep.subr.bf16.mxu0 %v5354
    %6451 = vmatpush1.bf16.msra.mxu0 %v5353
    %6452 = vmatprep.subr.bf16.mxu0 %v5370
    %6453 = vmatpush1.bf16.msra.mxu0 %v5369
    %6454 = vmatprep.subr.bf16.mxu0 %v5386
    %6455 = vmatpush1.bf16.msra.mxu0 %v5385
    %6456 = vmatprep.subr.bf16.mxu0 %v5402
    %6457 = vmatpush1.bf16.msra.mxu0 %v5401
    %6458 = vmatprep.subr.bf16.mxu0 %v5418
    %6459 = vmatpush1.bf16.msra.mxu0 %v5417
    %6460 = vmatprep.subr.bf16.mxu0 %v5434
    %6461 = vmatpush1.bf16.msra.mxu0 %v5433
    %6462 = vmatprep.subr.bf16.mxu0 %v5450
    %6463 = vmatpush1.bf16.msra.mxu0 %v5449
    %6464 = vmatprep.subr.bf16.mxu0 %v5466
    %6465 = vmatpush1.bf16.msra.mxu0 %v5465
    %6466 = vmatprep.subr.bf16.mxu0 %v5482
    %6467 = vmatpush1.bf16.msra.mxu0 %v5481
    %6468 = vmatprep.subr.bf16.mxu0 %v5498
    %6469 = vmatpush1.bf16.msra.mxu0 %v5497
    %6470 = vmatprep.subr.bf16.mxu0 %v5514
    %6471 = vmatpush1.bf16.msra.mxu0 %v5513
    %6472 = vmatprep.subr.bf16.mxu0 %v5530
    %6473 = vmatpush1.bf16.msra.mxu0 %v5529
    %6474 = vmatprep.subr.bf16.mxu0 %v5546
    %6475 = vmatpush1.bf16.msra.mxu0 %v5545
    %6476 = vmatprep.subr.bf16.mxu0 %v5562
    %6477 = vmatpush1.bf16.msra.mxu0 %v5561
    %6478 = vmatprep.subr.bf16.mxu0 %v5578
    %6479 = vmatpush1.bf16.msra.mxu0 %v5577
    %6480 = vmatprep.mubr.bf16.mxu0 %v4556
    %6481 = vmatmul.mubr.bf16.gmra.mrb[0].mxu0 %v4555
    %v6482 = vpop.f32.mrb[0].mxu0
    %v6483 = vadd.f32 %v6442, %v6482
    %v6484 = vpop.f32.mrb[0].mxu0
    %v6485 = vadd.f32 %v6444, %v6484
    %v6486 = vpop.f32.mrb[0].mxu0
    %v6487 = vpop.f32.mrb[0].mxu0
    %6488 = vdwg.mxu0
    %6489 = vmatprep.subr.bf16.mxu0 %v4572
    %6490 = vmatpush1.bf16.msra.mxu0 %v4571
    %6491 = vmatprep.subr.bf16.mxu0 %v4588
    %6492 = vmatpush1.bf16.msra.mxu0 %v4587
    %6493 = vmatprep.subr.bf16.mxu0 %v4604
    %6494 = vmatpush1.bf16.msra.mxu0 %v4603
    %6495 = vmatprep.subr.bf16.mxu0 %v4620
    %6496 = vmatpush1.bf16.msra.mxu0 %v4619
    %6497 = vmatprep.subr.bf16.mxu0 %v4636
    %6498 = vmatpush1.bf16.msra.mxu0 %v4635
    %6499 = vmatprep.subr.bf16.mxu0 %v4652
    %6500 = vmatpush1.bf16.msra.mxu0 %v4651
    %6501 = vmatprep.subr.bf16.mxu0 %v4668
    %6502 = vmatpush1.bf16.msra.mxu0 %v4667
    %6503 = vmatprep.subr.bf16.mxu0 %v4684
    %6504 = vmatpush1.bf16.msra.mxu0 %v4683
    %6505 = vmatprep.subr.bf16.mxu0 %v4700
    %6506 = vmatpush1.bf16.msra.mxu0 %v4699
    %6507 = vmatprep.subr.bf16.mxu0 %v4716
    %6508 = vmatpush1.bf16.msra.mxu0 %v4715
    %6509 = vmatprep.subr.bf16.mxu0 %v4732
    %6510 = vmatpush1.bf16.msra.mxu0 %v4731
    %6511 = vmatprep.subr.bf16.mxu0 %v4748
    %6512 = vmatpush1.bf16.msra.mxu0 %v4747
    %6513 = vmatprep.subr.bf16.mxu0 %v4764
    %6514 = vmatpush1.bf16.msra.mxu0 %v4763
    %6515 = vmatprep.subr.bf16.mxu0 %v4780
    %6516 = vmatpush1.bf16.msra.mxu0 %v4779
    %6517 = vmatprep.subr.bf16.mxu0 %v4796
    %6518 = vmatpush1.bf16.msra.mxu0 %v4795
    %6519 = vmatprep.subr.bf16.mxu0 %v4812
    %6520 = vmatpush1.bf16.msra.mxu0 %v4811
    %6521 = vmatprep.mubr.bf16.mxu0 %v4550
    %6522 = vmatmul.mubr.bf16.gmra.mrb[0].mxu0 %v4549
    %v6523 = vpop.f32.mrb[0].mxu0
    %v6524 = vadd.f32 %v5632, %v6523
    %v6525 = vpop.f32.mrb[0].mxu0
    %v6526 = vadd.f32 %v5636, %v6525
    %v6527 = vpop.f32.mrb[0].mxu0
    %v6528 = vpop.f32.mrb[0].mxu0
    %6529 = vdwg.mxu0
    %6530 = vmatprep.subr.bf16.mxu0 %v4828
    %6531 = vmatpush1.bf16.msra.mxu0 %v4827
    %6532 = vmatprep.subr.bf16.mxu0 %v4844
    %6533 = vmatpush1.bf16.msra.mxu0 %v4843
    %6534 = vmatprep.subr.bf16.mxu0 %v4860
    %6535 = vmatpush1.bf16.msra.mxu0 %v4859
    %6536 = vmatprep.subr.bf16.mxu0 %v4876
    %6537 = vmatpush1.bf16.msra.mxu0 %v4875
    %6538 = vmatprep.subr.bf16.mxu0 %v4892
    %6539 = vmatpush1.bf16.msra.mxu0 %v4891
    %6540 = vmatprep.subr.bf16.mxu0 %v4908
    %6541 = vmatpush1.bf16.msra.mxu0 %v4907
    %6542 = vmatprep.subr.bf16.mxu0 %v4924
    %6543 = vmatpush1.bf16.msra.mxu0 %v4923
    %6544 = vmatprep.subr.bf16.mxu0 %v4940
    %6545 = vmatpush1.bf16.msra.mxu0 %v4939
    %6546 = vmatprep.subr.bf16.mxu0 %v4956
    %6547 = vmatpush1.bf16.msra.mxu0 %v4955
    %6548 = vmatprep.subr.bf16.mxu0 %v4972
    %6549 = vmatpush1.bf16.msra.mxu0 %v4971
    %6550 = vmatprep.subr.bf16.mxu0 %v4988
    %6551 = vmatpush1.bf16.msra.mxu0 %v4987
    %6552 = vmatprep.subr.bf16.mxu0 %v5004
    %6553 = vmatpush1.bf16.msra.mxu0 %v5003
    %6554 = vmatprep.subr.bf16.mxu0 %v5020
    %6555 = vmatpush1.bf16.msra.mxu0 %v5019
    %6556 = vmatprep.subr.bf16.mxu0 %v5036
    %6557 = vmatpush1.bf16.msra.mxu0 %v5035
    %6558 = vmatprep.subr.bf16.mxu0 %v5052
    %6559 = vmatpush1.bf16.msra.mxu0 %v5051
    %6560 = vmatprep.subr.bf16.mxu0 %v5068
    %6561 = vmatpush1.bf16.msra.mxu0 %v5067
    %6562 = vmatprep.mubr.bf16.mxu0 %v4552
    %6563 = vmatmul.mubr.bf16.gmra.mrb[0].mxu0 %v4551
    %v6564 = vpop.f32.mrb[0].mxu0
    %v6565 = vadd.f32 %v6524, %v6564
    %v6566 = vpop.f32.mrb[0].mxu0
    %v6567 = vadd.f32 %v6526, %v6566
    %v6568 = vpop.f32.mrb[0].mxu0
    %v6569 = vpop.f32.mrb[0].mxu0
    %6570 = vdwg.mxu0
    %6571 = vmatprep.subr.bf16.mxu0 %v5084
    %6572 = vmatpush1.bf16.msra.mxu0 %v5083
    %6573 = vmatprep.subr.bf16.mxu0 %v5100
    %6574 = vmatpush1.bf16.msra.mxu0 %v5099
    %6575 = vmatprep.subr.bf16.mxu0 %v5116
    %6576 = vmatpush1.bf16.msra.mxu0 %v5115
    %6577 = vmatprep.subr.bf16.mxu0 %v5132
    %6578 = vmatpush1.bf16.msra.mxu0 %v5131
    %6579 = vmatprep.subr.bf16.mxu0 %v5148
    %6580 = vmatpush1.bf16.msra.mxu0 %v5147
    %6581 = vmatprep.subr.bf16.mxu0 %v5164
    %6582 = vmatpush1.bf16.msra.mxu0 %v5163
    %6583 = vmatprep.subr.bf16.mxu0 %v5180
    %6584 = vmatpush1.bf16.msra.mxu0 %v5179
    %6585 = vmatprep.subr.bf16.mxu0 %v5196
    %6586 = vmatpush1.bf16.msra.mxu0 %v5195
    %6587 = vmatprep.subr.bf16.mxu0 %v5212
    %6588 = vmatpush1.bf16.msra.mxu0 %v5211
    %6589 = vmatprep.subr.bf16.mxu0 %v5228
    %6590 = vmatpush1.bf16.msra.mxu0 %v5227
    %6591 = vmatprep.subr.bf16.mxu0 %v5244
    %6592 = vmatpush1.bf16.msra.mxu0 %v5243
    %6593 = vmatprep.subr.bf16.mxu0 %v5260
    %6594 = vmatpush1.bf16.msra.mxu0 %v5259
    %6595 = vmatprep.subr.bf16.mxu0 %v5276
    %6596 = vmatpush1.bf16.msra.mxu0 %v5275
    %6597 = vmatprep.subr.bf16.mxu0 %v5292
    %6598 = vmatpush1.bf16.msra.mxu0 %v5291
    %6599 = vmatprep.subr.bf16.mxu0 %v5308
    %6600 = vmatpush1.bf16.msra.mxu0 %v5307
    %6601 = vmatprep.subr.bf16.mxu0 %v5324
    %6602 = vmatpush1.bf16.msra.mxu0 %v5323
    %6603 = vmatprep.mubr.bf16.mxu0 %v4554
    %6604 = vmatmul.mubr.bf16.gmra.mrb[0].mxu0 %v4553
    %v6605 = vpop.f32.mrb[0].mxu0
    %v6606 = vadd.f32 %v6565, %v6605
    %v6607 = vpop.f32.mrb[0].mxu0
    %v6608 = vadd.f32 %v6567, %v6607
    %v6609 = vpop.f32.mrb[0].mxu0
    %v6610 = vpop.f32.mrb[0].mxu0
    %6611 = vdwg.mxu0
    %6612 = vmatprep.subr.bf16.mxu0 %v5340
    %6613 = vmatpush1.bf16.msra.mxu0 %v5339
    %6614 = vmatprep.subr.bf16.mxu0 %v5356
    %6615 = vmatpush1.bf16.msra.mxu0 %v5355
    %6616 = vmatprep.subr.bf16.mxu0 %v5372
    %6617 = vmatpush1.bf16.msra.mxu0 %v5371
    %6618 = vmatprep.subr.bf16.mxu0 %v5388
    %6619 = vmatpush1.bf16.msra.mxu0 %v5387
    %6620 = vmatprep.subr.bf16.mxu0 %v5404
    %6621 = vmatpush1.bf16.msra.mxu0 %v5403
    %6622 = vmatprep.subr.bf16.mxu0 %v5420
    %6623 = vmatpush1.bf16.msra.mxu0 %v5419
    %6624 = vmatprep.subr.bf16.mxu0 %v5436
    %6625 = vmatpush1.bf16.msra.mxu0 %v5435
    %6626 = vmatprep.subr.bf16.mxu0 %v5452
    %6627 = vmatpush1.bf16.msra.mxu0 %v5451
    %6628 = vmatprep.subr.bf16.mxu0 %v5468
    %6629 = vmatpush1.bf16.msra.mxu0 %v5467
    %6630 = vmatprep.subr.bf16.mxu0 %v5484
    %6631 = vmatpush1.bf16.msra.mxu0 %v5483
    %6632 = vmatprep.subr.bf16.mxu0 %v5500
    %6633 = vmatpush1.bf16.msra.mxu0 %v5499
    %6634 = vmatprep.subr.bf16.mxu0 %v5516
    %6635 = vmatpush1.bf16.msra.mxu0 %v5515
    %6636 = vmatprep.subr.bf16.mxu0 %v5532
    %6637 = vmatpush1.bf16.msra.mxu0 %v5531
    %6638 = vmatprep.subr.bf16.mxu0 %v5548
    %6639 = vmatpush1.bf16.msra.mxu0 %v5547
    %6640 = vmatprep.subr.bf16.mxu0 %v5564
    %6641 = vmatpush1.bf16.msra.mxu0 %v5563
    %6642 = vmatprep.subr.bf16.mxu0 %v5580
    %6643 = vmatpush1.bf16.msra.mxu0 %v5579
    %6644 = vmatprep.mubr.bf16.mxu0 %v4556
    %6645 = vmatmul.mubr.bf16.gmra.mrb[0].mxu0 %v4555
    %v6646 = vpop.f32.mrb[0].mxu0
    %v6647 = vadd.f32 %v6606, %v6646
    %v6648 = vpop.f32.mrb[0].mxu0
    %v6649 = vadd.f32 %v6608, %v6648
    %v6650 = vpop.f32.mrb[0].mxu0
    %v6651 = vpop.f32.mrb[0].mxu0
    %6652 = vdwg.mxu0
    %6653 = vmatprep.subr.bf16.mxu0 %v4574
    %6654 = vmatpush1.bf16.msra.mxu0 %v4573
    %6655 = vmatprep.subr.bf16.mxu0 %v4590
    %6656 = vmatpush1.bf16.msra.mxu0 %v4589
    %6657 = vmatprep.subr.bf16.mxu0 %v4606
    %6658 = vmatpush1.bf16.msra.mxu0 %v4605
    %6659 = vmatprep.subr.bf16.mxu0 %v4622
    %6660 = vmatpush1.bf16.msra.mxu0 %v4621
    %6661 = vmatprep.subr.bf16.mxu0 %v4638
    %6662 = vmatpush1.bf16.msra.mxu0 %v4637
    %6663 = vmatprep.subr.bf16.mxu0 %v4654
    %6664 = vmatpush1.bf16.msra.mxu0 %v4653
    %6665 = vmatprep.subr.bf16.mxu0 %v4670
    %6666 = vmatpush1.bf16.msra.mxu0 %v4669
    %6667 = vmatprep.subr.bf16.mxu0 %v4686
    %6668 = vmatpush1.bf16.msra.mxu0 %v4685
    %6669 = vmatprep.subr.bf16.mxu0 %v4702
    %6670 = vmatpush1.bf16.msra.mxu0 %v4701
    %6671 = vmatprep.subr.bf16.mxu0 %v4718
    %6672 = vmatpush1.bf16.msra.mxu0 %v4717
    %6673 = vmatprep.subr.bf16.mxu0 %v4734
    %6674 = vmatpush1.bf16.msra.mxu0 %v4733
    %6675 = vmatprep.subr.bf16.mxu0 %v4750
    %6676 = vmatpush1.bf16.msra.mxu0 %v4749
    %6677 = vmatprep.subr.bf16.mxu0 %v4766
    %6678 = vmatpush1.bf16.msra.mxu0 %v4765
    %6679 = vmatprep.subr.bf16.mxu0 %v4782
    %6680 = vmatpush1.bf16.msra.mxu0 %v4781
    %6681 = vmatprep.subr.bf16.mxu0 %v4798
    %6682 = vmatpush1.bf16.msra.mxu0 %v4797
    %6683 = vmatprep.subr.bf16.mxu0 %v4814
    %6684 = vmatpush1.bf16.msra.mxu0 %v4813
    %6685 = vmatprep.mubr.bf16.mxu0 %v4550
    %6686 = vmatmul.mubr.bf16.gmra.mrb[0].mxu0 %v4549
    %v6687 = vpop.f32.mrb[0].mxu0
    %v6688 = vadd.f32 %v5640, %v6687
    %v6689 = vpop.f32.mrb[0].mxu0
    %v6690 = vadd.f32 %v5644, %v6689
    %v6691 = vpop.f32.mrb[0].mxu0
    %v6692 = vpop.f32.mrb[0].mxu0
    %6693 = vdwg.mxu0
    %6694 = vmatprep.subr.bf16.mxu0 %v4830
    %6695 = vmatpush1.bf16.msra.mxu0 %v4829
    %6696 = vmatprep.subr.bf16.mxu0 %v4846
    %6697 = vmatpush1.bf16.msra.mxu0 %v4845
    %6698 = vmatprep.subr.bf16.mxu0 %v4862
    %6699 = vmatpush1.bf16.msra.mxu0 %v4861
    %6700 = vmatprep.subr.bf16.mxu0 %v4878
    %6701 = vmatpush1.bf16.msra.mxu0 %v4877
    %6702 = vmatprep.subr.bf16.mxu0 %v4894
    %6703 = vmatpush1.bf16.msra.mxu0 %v4893
    %6704 = vmatprep.subr.bf16.mxu0 %v4910
    %6705 = vmatpush1.bf16.msra.mxu0 %v4909
    %6706 = vmatprep.subr.bf16.mxu0 %v4926
    %6707 = vmatpush1.bf16.msra.mxu0 %v4925
    %6708 = vmatprep.subr.bf16.mxu0 %v4942
    %6709 = vmatpush1.bf16.msra.mxu0 %v4941
    %6710 = vmatprep.subr.bf16.mxu0 %v4958
    %6711 = vmatpush1.bf16.msra.mxu0 %v4957
    %6712 = vmatprep.subr.bf16.mxu0 %v4974
    %6713 = vmatpush1.bf16.msra.mxu0 %v4973
    %6714 = vmatprep.subr.bf16.mxu0 %v4990
    %6715 = vmatpush1.bf16.msra.mxu0 %v4989
    %6716 = vmatprep.subr.bf16.mxu0 %v5006
    %6717 = vmatpush1.bf16.msra.mxu0 %v5005
    %6718 = vmatprep.subr.bf16.mxu0 %v5022
    %6719 = vmatpush1.bf16.msra.mxu0 %v5021
    %6720 = vmatprep.subr.bf16.mxu0 %v5038
    %6721 = vmatpush1.bf16.msra.mxu0 %v5037
    %6722 = vmatprep.subr.bf16.mxu0 %v5054
    %6723 = vmatpush1.bf16.msra.mxu0 %v5053
    %6724 = vmatprep.subr.bf16.mxu0 %v5070
    %6725 = vmatpush1.bf16.msra.mxu0 %v5069
    %6726 = vmatprep.mubr.bf16.mxu0 %v4552
    %6727 = vmatmul.mubr.bf16.gmra.mrb[0].mxu0 %v4551
    %v6728 = vpop.f32.mrb[0].mxu0
    %v6729 = vadd.f32 %v6688, %v6728
    %v6730 = vpop.f32.mrb[0].mxu0
    %v6731 = vadd.f32 %v6690, %v6730
    %v6732 = vpop.f32.mrb[0].mxu0
    %v6733 = vpop.f32.mrb[0].mxu0
    %6734 = vdwg.mxu0
    %6735 = vmatprep.subr.bf16.mxu0 %v5086
    %6736 = vmatpush1.bf16.msra.mxu0 %v5085
    %6737 = vmatprep.subr.bf16.mxu0 %v5102
    %6738 = vmatpush1.bf16.msra.mxu0 %v5101
    %6739 = vmatprep.subr.bf16.mxu0 %v5118
    %6740 = vmatpush1.bf16.msra.mxu0 %v5117
    %6741 = vmatprep.subr.bf16.mxu0 %v5134
    %6742 = vmatpush1.bf16.msra.mxu0 %v5133
    %6743 = vmatprep.subr.bf16.mxu0 %v5150
    %6744 = vmatpush1.bf16.msra.mxu0 %v5149
    %6745 = vmatprep.subr.bf16.mxu0 %v5166
    %6746 = vmatpush1.bf16.msra.mxu0 %v5165
    %6747 = vmatprep.subr.bf16.mxu0 %v5182
    %6748 = vmatpush1.bf16.msra.mxu0 %v5181
    %6749 = vmatprep.subr.bf16.mxu0 %v5198
    %6750 = vmatpush1.bf16.msra.mxu0 %v5197
    %6751 = vmatprep.subr.bf16.mxu0 %v5214
    %6752 = vmatpush1.bf16.msra.mxu0 %v5213
    %6753 = vmatprep.subr.bf16.mxu0 %v5230
    %6754 = vmatpush1.bf16.msra.mxu0 %v5229
    %6755 = vmatprep.subr.bf16.mxu0 %v5246
    %6756 = vmatpush1.bf16.msra.mxu0 %v5245
    %6757 = vmatprep.subr.bf16.mxu0 %v5262
    %6758 = vmatpush1.bf16.msra.mxu0 %v5261
    %6759 = vmatprep.subr.bf16.mxu0 %v5278
    %6760 = vmatpush1.bf16.msra.mxu0 %v5277
    %6761 = vmatprep.subr.bf16.mxu0 %v5294
    %6762 = vmatpush1.bf16.msra.mxu0 %v5293
    %6763 = vmatprep.subr.bf16.mxu0 %v5310
    %6764 = vmatpush1.bf16.msra.mxu0 %v5309
    %6765 = vmatprep.subr.bf16.mxu0 %v5326
    %6766 = vmatpush1.bf16.msra.mxu0 %v5325
    %6767 = vmatprep.mubr.bf16.mxu0 %v4554
    %6768 = vmatmul.mubr.bf16.gmra.mrb[0].mxu0 %v4553
    %v6769 = vpop.f32.mrb[0].mxu0
    %v6770 = vadd.f32 %v6729, %v6769
    %v6771 = vpop.f32.mrb[0].mxu0
    %v6772 = vadd.f32 %v6731, %v6771
    %v6773 = vpop.f32.mrb[0].mxu0
    %v6774 = vpop.f32.mrb[0].mxu0
    %6775 = vdwg.mxu0
    %6776 = vmatprep.subr.bf16.mxu0 %v5342
    %6777 = vmatpush1.bf16.msra.mxu0 %v5341
    %6778 = vmatprep.subr.bf16.mxu0 %v5358
    %6779 = vmatpush1.bf16.msra.mxu0 %v5357
    %6780 = vmatprep.subr.bf16.mxu0 %v5374
    %6781 = vmatpush1.bf16.msra.mxu0 %v5373
    %6782 = vmatprep.subr.bf16.mxu0 %v5390
    %6783 = vmatpush1.bf16.msra.mxu0 %v5389
    %6784 = vmatprep.subr.bf16.mxu0 %v5406
    %6785 = vmatpush1.bf16.msra.mxu0 %v5405
    %6786 = vmatprep.subr.bf16.mxu0 %v5422
    %6787 = vmatpush1.bf16.msra.mxu0 %v5421
    %6788 = vmatprep.subr.bf16.mxu0 %v5438
    %6789 = vmatpush1.bf16.msra.mxu0 %v5437
    %6790 = vmatprep.subr.bf16.mxu0 %v5454
    %6791 = vmatpush1.bf16.msra.mxu0 %v5453
    %6792 = vmatprep.subr.bf16.mxu0 %v5470
    %6793 = vmatpush1.bf16.msra.mxu0 %v5469
    %6794 = vmatprep.subr.bf16.mxu0 %v5486
    %6795 = vmatpush1.bf16.msra.mxu0 %v5485
    %6796 = vmatprep.subr.bf16.mxu0 %v5502
    %6797 = vmatpush1.bf16.msra.mxu0 %v5501
    %6798 = vmatprep.subr.bf16.mxu0 %v5518
    %6799 = vmatpush1.bf16.msra.mxu0 %v5517
    %6800 = vmatprep.subr.bf16.mxu0 %v5534
    %6801 = vmatpush1.bf16.msra.mxu0 %v5533
    %6802 = vmatprep.subr.bf16.mxu0 %v5550
    %6803 = vmatpush1.bf16.msra.mxu0 %v5549
    %6804 = vmatprep.subr.bf16.mxu0 %v5566
    %6805 = vmatpush1.bf16.msra.mxu0 %v5565
    %6806 = vmatprep.subr.bf16.mxu0 %v5582
    %6807 = vmatpush1.bf16.msra.mxu0 %v5581
    %6808 = vmatprep.mubr.bf16.mxu0 %v4556
    %6809 = vmatmul.mubr.bf16.gmra.mrb[0].mxu0 %v4555
    %v6810 = vpop.f32.mrb[0].mxu0
    %v6811 = vadd.f32 %v6770, %v6810
    %v6812 = vpop.f32.mrb[0].mxu0
    %v6813 = vadd.f32 %v6772, %v6812
    %v6814 = vpop.f32.mrb[0].mxu0
    %v6815 = vpop.f32.mrb[0].mxu0
    %6816 = vdwg.mxu0
    %6817 = vmatprep.subr.bf16.mxu0 %v4576
    %6818 = vmatpush1.bf16.msra.mxu0 %v4575
    %6819 = vmatprep.subr.bf16.mxu0 %v4592
    %6820 = vmatpush1.bf16.msra.mxu0 %v4591
    %6821 = vmatprep.subr.bf16.mxu0 %v4608
    %6822 = vmatpush1.bf16.msra.mxu0 %v4607
    %6823 = vmatprep.subr.bf16.mxu0 %v4624
    %6824 = vmatpush1.bf16.msra.mxu0 %v4623
    %6825 = vmatprep.subr.bf16.mxu0 %v4640
    %6826 = vmatpush1.bf16.msra.mxu0 %v4639
    %6827 = vmatprep.subr.bf16.mxu0 %v4656
    %6828 = vmatpush1.bf16.msra.mxu0 %v4655
    %6829 = vmatprep.subr.bf16.mxu0 %v4672
    %6830 = vmatpush1.bf16.msra.mxu0 %v4671
    %6831 = vmatprep.subr.bf16.mxu0 %v4688
    %6832 = vmatpush1.bf16.msra.mxu0 %v4687
    %6833 = vmatprep.subr.bf16.mxu0 %v4704
    %6834 = vmatpush1.bf16.msra.mxu0 %v4703
    %6835 = vmatprep.subr.bf16.mxu0 %v4720
    %6836 = vmatpush1.bf16.msra.mxu0 %v4719
    %6837 = vmatprep.subr.bf16.mxu0 %v4736
    %6838 = vmatpush1.bf16.msra.mxu0 %v4735
    %6839 = vmatprep.subr.bf16.mxu0 %v4752
    %6840 = vmatpush1.bf16.msra.mxu0 %v4751
    %6841 = vmatprep.subr.bf16.mxu0 %v4768
    %6842 = vmatpush1.bf16.msra.mxu0 %v4767
    %6843 = vmatprep.subr.bf16.mxu0 %v4784
    %6844 = vmatpush1.bf16.msra.mxu0 %v4783
    %6845 = vmatprep.subr.bf16.mxu0 %v4800
    %6846 = vmatpush1.bf16.msra.mxu0 %v4799
    %6847 = vmatprep.subr.bf16.mxu0 %v4816
    %6848 = vmatpush1.bf16.msra.mxu0 %v4815
    %6849 = vmatprep.mubr.bf16.mxu0 %v4550
    %6850 = vmatmul.mubr.bf16.gmra.mrb[0].mxu0 %v4549
    %v6851 = vpop.f32.mrb[0].mxu0
    %v6852 = vadd.f32 %v5648, %v6851
    %v6853 = vpop.f32.mrb[0].mxu0
    %v6854 = vadd.f32 %v5652, %v6853
    %v6855 = vpop.f32.mrb[0].mxu0
    %v6856 = vpop.f32.mrb[0].mxu0
    %6857 = vdwg.mxu0
    %6858 = vmatprep.subr.bf16.mxu0 %v4832
    %6859 = vmatpush1.bf16.msra.mxu0 %v4831
    %6860 = vmatprep.subr.bf16.mxu0 %v4848
    %6861 = vmatpush1.bf16.msra.mxu0 %v4847
    %6862 = vmatprep.subr.bf16.mxu0 %v4864
    %6863 = vmatpush1.bf16.msra.mxu0 %v4863
    %6864 = vmatprep.subr.bf16.mxu0 %v4880
    %6865 = vmatpush1.bf16.msra.mxu0 %v4879
    %6866 = vmatprep.subr.bf16.mxu0 %v4896
    %6867 = vmatpush1.bf16.msra.mxu0 %v4895
    %6868 = vmatprep.subr.bf16.mxu0 %v4912
    %6869 = vmatpush1.bf16.msra.mxu0 %v4911
    %6870 = vmatprep.subr.bf16.mxu0 %v4928
    %6871 = vmatpush1.bf16.msra.mxu0 %v4927
    %6872 = vmatprep.subr.bf16.mxu0 %v4944
    %6873 = vmatpush1.bf16.msra.mxu0 %v4943
    %6874 = vmatprep.subr.bf16.mxu0 %v4960
    %6875 = vmatpush1.bf16.msra.mxu0 %v4959
    %6876 = vmatprep.subr.bf16.mxu0 %v4976
    %6877 = vmatpush1.bf16.msra.mxu0 %v4975
    %6878 = vmatprep.subr.bf16.mxu0 %v4992
    %6879 = vmatpush1.bf16.msra.mxu0 %v4991
    %6880 = vmatprep.subr.bf16.mxu0 %v5008
    %6881 = vmatpush1.bf16.msra.mxu0 %v5007
    %6882 = vmatprep.subr.bf16.mxu0 %v5024
    %6883 = vmatpush1.bf16.msra.mxu0 %v5023
    %6884 = vmatprep.subr.bf16.mxu0 %v5040
    %6885 = vmatpush1.bf16.msra.mxu0 %v5039
    %6886 = vmatprep.subr.bf16.mxu0 %v5056
    %6887 = vmatpush1.bf16.msra.mxu0 %v5055
    %6888 = vmatprep.subr.bf16.mxu0 %v5072
    %6889 = vmatpush1.bf16.msra.mxu0 %v5071
    %6890 = vmatprep.mubr.bf16.mxu0 %v4552
    %6891 = vmatmul.mubr.bf16.gmra.mrb[0].mxu0 %v4551
    %v6892 = vpop.f32.mrb[0].mxu0
    %v6893 = vadd.f32 %v6852, %v6892
    %v6894 = vpop.f32.mrb[0].mxu0
    %v6895 = vadd.f32 %v6854, %v6894
    %v6896 = vpop.f32.mrb[0].mxu0
    %v6897 = vpop.f32.mrb[0].mxu0
    %6898 = vdwg.mxu0
    %6899 = vmatprep.subr.bf16.mxu0 %v5088
    %6900 = vmatpush1.bf16.msra.mxu0 %v5087
    %6901 = vmatprep.subr.bf16.mxu0 %v5104
    %6902 = vmatpush1.bf16.msra.mxu0 %v5103
    %6903 = vmatprep.subr.bf16.mxu0 %v5120
    %6904 = vmatpush1.bf16.msra.mxu0 %v5119
    %6905 = vmatprep.subr.bf16.mxu0 %v5136
    %6906 = vmatpush1.bf16.msra.mxu0 %v5135
    %6907 = vmatprep.subr.bf16.mxu0 %v5152
    %6908 = vmatpush1.bf16.msra.mxu0 %v5151
    %6909 = vmatprep.subr.bf16.mxu0 %v5168
    %6910 = vmatpush1.bf16.msra.mxu0 %v5167
    %6911 = vmatprep.subr.bf16.mxu0 %v5184
    %6912 = vmatpush1.bf16.msra.mxu0 %v5183
    %6913 = vmatprep.subr.bf16.mxu0 %v5200
    %6914 = vmatpush1.bf16.msra.mxu0 %v5199
    %6915 = vmatprep.subr.bf16.mxu0 %v5216
    %6916 = vmatpush1.bf16.msra.mxu0 %v5215
    %6917 = vmatprep.subr.bf16.mxu0 %v5232
    %6918 = vmatpush1.bf16.msra.mxu0 %v5231
    %6919 = vmatprep.subr.bf16.mxu0 %v5248
    %6920 = vmatpush1.bf16.msra.mxu0 %v5247
    %6921 = vmatprep.subr.bf16.mxu0 %v5264
    %6922 = vmatpush1.bf16.msra.mxu0 %v5263
    %6923 = vmatprep.subr.bf16.mxu0 %v5280
    %6924 = vmatpush1.bf16.msra.mxu0 %v5279
    %6925 = vmatprep.subr.bf16.mxu0 %v5296
    %6926 = vmatpush1.bf16.msra.mxu0 %v5295
    %6927 = vmatprep.subr.bf16.mxu0 %v5312
    %6928 = vmatpush1.bf16.msra.mxu0 %v5311
    %6929 = vmatprep.subr.bf16.mxu0 %v5328
    %6930 = vmatpush1.bf16.msra.mxu0 %v5327
    %6931 = vmatprep.mubr.bf16.mxu0 %v4554
    %6932 = vmatmul.mubr.bf16.gmra.mrb[0].mxu0 %v4553
    %v6933 = vpop.f32.mrb[0].mxu0
    %v6934 = vadd.f32 %v6893, %v6933
    %v6935 = vpop.f32.mrb[0].mxu0
    %v6936 = vadd.f32 %v6895, %v6935
    %v6937 = vpop.f32.mrb[0].mxu0
    %v6938 = vpop.f32.mrb[0].mxu0
    %6939 = vdwg.mxu0
    %6940 = vmatprep.subr.bf16.mxu0 %v5344
    %6941 = vmatpush1.bf16.msra.mxu0 %v5343
    %6942 = vmatprep.subr.bf16.mxu0 %v5360
    %6943 = vmatpush1.bf16.msra.mxu0 %v5359
    %6944 = vmatprep.subr.bf16.mxu0 %v5376
    %6945 = vmatpush1.bf16.msra.mxu0 %v5375
    %6946 = vmatprep.subr.bf16.mxu0 %v5392
    %6947 = vmatpush1.bf16.msra.mxu0 %v5391
    %6948 = vmatprep.subr.bf16.mxu0 %v5408
    %6949 = vmatpush1.bf16.msra.mxu0 %v5407
    %6950 = vmatprep.subr.bf16.mxu0 %v5424
    %6951 = vmatpush1.bf16.msra.mxu0 %v5423
    %6952 = vmatprep.subr.bf16.mxu0 %v5440
    %6953 = vmatpush1.bf16.msra.mxu0 %v5439
    %6954 = vmatprep.subr.bf16.mxu0 %v5456
    %6955 = vmatpush1.bf16.msra.mxu0 %v5455
    %6956 = vmatprep.subr.bf16.mxu0 %v5472
    %6957 = vmatpush1.bf16.msra.mxu0 %v5471
    %6958 = vmatprep.subr.bf16.mxu0 %v5488
    %6959 = vmatpush1.bf16.msra.mxu0 %v5487
    %6960 = vmatprep.subr.bf16.mxu0 %v5504
    %6961 = vmatpush1.bf16.msra.mxu0 %v5503
    %6962 = vmatprep.subr.bf16.mxu0 %v5520
    %6963 = vmatpush1.bf16.msra.mxu0 %v5519
    %6964 = vmatprep.subr.bf16.mxu0 %v5536
    %6965 = vmatpush1.bf16.msra.mxu0 %v5535
    %6966 = vmatprep.subr.bf16.mxu0 %v5552
    %6967 = vmatpush1.bf16.msra.mxu0 %v5551
    %6968 = vmatprep.subr.bf16.mxu0 %v5568
    %6969 = vmatpush1.bf16.msra.mxu0 %v5567
    %6970 = vmatprep.subr.bf16.mxu0 %v5584
    %6971 = vmatpush1.bf16.msra.mxu0 %v5583
    %6972 = vmatprep.mubr.bf16.mxu0 %v4556
    %6973 = vmatmul.mubr.bf16.gmra.mrb[0].mxu0 %v4555
    %v6974 = vpop.f32.mrb[0].mxu0
    %v6975 = vadd.f32 %v6934, %v6974
    %v6976 = vpop.f32.mrb[0].mxu0
    %v6977 = vadd.f32 %v6936, %v6976
    %v6978 = vpop.f32.mrb[0].mxu0
    %v6979 = vpop.f32.mrb[0].mxu0
    %6980 = vdwg.mxu0
    %v6981 = vmax.f32 %v5827, 0.0
    %v6982 = vmax.f32 %v5829, 0.0
    %v6983 = vmax.f32 %v5991, 0.0
    %v6984 = vmax.f32 %v5993, 0.0
    %v6985 = vmax.f32 %v6155, 0.0
    %v6986 = vmax.f32 %v6157, 0.0
    %v6987 = vmax.f32 %v6319, 0.0
    %v6988 = vmax.f32 %v6321, 0.0
    %v6989 = vmax.f32 %v6483, 0.0
    %v6990 = vmax.f32 %v6485, 0.0
    %v6991 = vmax.f32 %v6647, 0.0
    %v6992 = vmax.f32 %v6649, 0.0
    %v6993 = vmax.f32 %v6811, 0.0
    %v6994 = vmax.f32 %v6813, 0.0
    %v6995 = vmax.f32 %v6975, 0.0
    %v6996 = vmax.f32 %v6977, 0.0
    %v6997 = vpack.c.bf16 %v6981, %v6981
    %v6998 = vpack.c.bf16 %v6982, %v6982
    %v6999 = vpack.c.bf16 %v6983, %v6983
    %v7000 = vpack.c.bf16 %v6984, %v6984
    %v7001 = vpack.c.bf16 %v6985, %v6985
    %v7002 = vpack.c.bf16 %v6986, %v6986
    %v7003 = vpack.c.bf16 %v6987, %v6987
    %v7004 = vpack.c.bf16 %v6988, %v6988
    %v7005 = vpack.c.bf16 %v6989, %v6989
    %v7006 = vpack.c.bf16 %v6990, %v6990
    %v7007 = vpack.c.bf16 %v6991, %v6991
    %v7008 = vpack.c.bf16 %v6992, %v6992
    %v7009 = vpack.c.bf16 %v6993, %v6993
    %v7010 = vpack.c.bf16 %v6994, %v6994
    %v7011 = vpack.c.bf16 %v6995, %v6995
    %v7012 = vpack.c.bf16 %v6996, %v6996
    %s7013 = smul.u32 4, 256
    %s7014 = smul.u32 %s7013, 1
    %s7015 = sshll.u32 %s7014, 4
    %7016 = dma.done %s129, %s7015
    %v7017 = vld [vmem:[#allocation4] sm:$0xff]
    %v7018 = vld [vmem:[#allocation4 + $0x8] sm:$0xff]
    %v7019 = vld [vmem:[#allocation4 + $0x10] sm:$0xff]
    %v7020 = vld [vmem:[#allocation4 + $0x18] sm:$0xff]
    %v7021 = vld [vmem:[#allocation4 + $0x20] sm:$0xff]
    %v7022 = vld [vmem:[#allocation4 + $0x28] sm:$0xff]
    %v7023 = vld [vmem:[#allocation4 + $0x30] sm:$0xff]
    %v7024 = vld [vmem:[#allocation4 + $0x38] sm:$0xff]
    %v7025 = vld [vmem:[#allocation4 + $0x40] sm:$0xff]
    %v7026 = vld [vmem:[#allocation4 + $0x48] sm:$0xff]
    %v7027 = vld [vmem:[#allocation4 + $0x50] sm:$0xff]
    %v7028 = vld [vmem:[#allocation4 + $0x58] sm:$0xff]
    %v7029 = vld [vmem:[#allocation4 + $0x60] sm:$0xff]
    %v7030 = vld [vmem:[#allocation4 + $0x68] sm:$0xff]
    %v7031 = vld [vmem:[#allocation4 + $0x70] sm:$0xff]
    %v7032 = vld [vmem:[#allocation4 + $0x78] sm:$0xff]
    %v7033 = vld [vmem:[#allocation4 + $0x80] sm:$0xff]
    %v7034 = vld [vmem:[#allocation4 + $0x88] sm:$0xff]
    %v7035 = vld [vmem:[#allocation4 + $0x90] sm:$0xff]
    %v7036 = vld [vmem:[#allocation4 + $0x98] sm:$0xff]
    %v7037 = vld [vmem:[#allocation4 + $0xa0] sm:$0xff]
    %v7038 = vld [vmem:[#allocation4 + $0xa8] sm:$0xff]
    %v7039 = vld [vmem:[#allocation4 + $0xb0] sm:$0xff]
    %v7040 = vld [vmem:[#allocation4 + $0xb8] sm:$0xff]
    %v7041 = vld [vmem:[#allocation4 + $0xc0] sm:$0xff]
    %v7042 = vld [vmem:[#allocation4 + $0xc8] sm:$0xff]
    %v7043 = vld [vmem:[#allocation4 + $0xd0] sm:$0xff]
    %v7044 = vld [vmem:[#allocation4 + $0xd8] sm:$0xff]
    %v7045 = vld [vmem:[#allocation4 + $0xe0] sm:$0xff]
    %v7046 = vld [vmem:[#allocation4 + $0xe8] sm:$0xff]
    %v7047 = vld [vmem:[#allocation4 + $0xf0] sm:$0xff]
    %v7048 = vld [vmem:[#allocation4 + $0xf8] sm:$0xff]
    %v7049 = vld [vmem:[#allocation4 + $0x100] sm:$0xff]
    %v7050 = vld [vmem:[#allocation4 + $0x108] sm:$0xff]
    %v7051 = vld [vmem:[#allocation4 + $0x110] sm:$0xff]
    %v7052 = vld [vmem:[#allocation4 + $0x118] sm:$0xff]
    %v7053 = vld [vmem:[#allocation4 + $0x120] sm:$0xff]
    %v7054 = vld [vmem:[#allocation4 + $0x128] sm:$0xff]
    %v7055 = vld [vmem:[#allocation4 + $0x130] sm:$0xff]
    %v7056 = vld [vmem:[#allocation4 + $0x138] sm:$0xff]
    %v7057 = vld [vmem:[#allocation4 + $0x140] sm:$0xff]
    %v7058 = vld [vmem:[#allocation4 + $0x148] sm:$0xff]
    %v7059 = vld [vmem:[#allocation4 + $0x150] sm:$0xff]
    %v7060 = vld [vmem:[#allocation4 + $0x158] sm:$0xff]
    %v7061 = vld [vmem:[#allocation4 + $0x160] sm:$0xff]
    %v7062 = vld [vmem:[#allocation4 + $0x168] sm:$0xff]
    %v7063 = vld [vmem:[#allocation4 + $0x170] sm:$0xff]
    %v7064 = vld [vmem:[#allocation4 + $0x178] sm:$0xff]
    %v7065 = vld [vmem:[#allocation4 + $0x180] sm:$0xff]
    %v7066 = vld [vmem:[#allocation4 + $0x188] sm:$0xff]
    %v7067 = vld [vmem:[#allocation4 + $0x190] sm:$0xff]
    %v7068 = vld [vmem:[#allocation4 + $0x198] sm:$0xff]
    %v7069 = vld [vmem:[#allocation4 + $0x1a0] sm:$0xff]
    %v7070 = vld [vmem:[#allocation4 + $0x1a8] sm:$0xff]
    %v7071 = vld [vmem:[#allocation4 + $0x1b0] sm:$0xff]
    %v7072 = vld [vmem:[#allocation4 + $0x1b8] sm:$0xff]
    %v7073 = vld [vmem:[#allocation4 + $0x1c0] sm:$0xff]
    %v7074 = vld [vmem:[#allocation4 + $0x1c8] sm:$0xff]
    %v7075 = vld [vmem:[#allocation4 + $0x1d0] sm:$0xff]
    %v7076 = vld [vmem:[#allocation4 + $0x1d8] sm:$0xff]
    %v7077 = vld [vmem:[#allocation4 + $0x1e0] sm:$0xff]
    %v7078 = vld [vmem:[#allocation4 + $0x1e8] sm:$0xff]
    %v7079 = vld [vmem:[#allocation4 + $0x1f0] sm:$0xff]
    %v7080 = vld [vmem:[#allocation4 + $0x1f8] sm:$0xff]
    %v7081 = vld [vmem:[#allocation4 + $0x200] sm:$0xff]
    %v7082 = vld [vmem:[#allocation4 + $0x208] sm:$0xff]
    %v7083 = vld [vmem:[#allocation4 + $0x210] sm:$0xff]
    %v7084 = vld [vmem:[#allocation4 + $0x218] sm:$0xff]
    %v7085 = vld [vmem:[#allocation4 + $0x220] sm:$0xff]
    %v7086 = vld [vmem:[#allocation4 + $0x228] sm:$0xff]
    %v7087 = vld [vmem:[#allocation4 + $0x230] sm:$0xff]
    %v7088 = vld [vmem:[#allocation4 + $0x238] sm:$0xff]
    %v7089 = vld [vmem:[#allocation4 + $0x240] sm:$0xff]
    %v7090 = vld [vmem:[#allocation4 + $0x248] sm:$0xff]
    %v7091 = vld [vmem:[#allocation4 + $0x250] sm:$0xff]
    %v7092 = vld [vmem:[#allocation4 + $0x258] sm:$0xff]
    %v7093 = vld [vmem:[#allocation4 + $0x260] sm:$0xff]
    %v7094 = vld [vmem:[#allocation4 + $0x268] sm:$0xff]
    %v7095 = vld [vmem:[#allocation4 + $0x270] sm:$0xff]
    %v7096 = vld [vmem:[#allocation4 + $0x278] sm:$0xff]
    %v7097 = vld [vmem:[#allocation4 + $0x280] sm:$0xff]
    %v7098 = vld [vmem:[#allocation4 + $0x288] sm:$0xff]
    %v7099 = vld [vmem:[#allocation4 + $0x290] sm:$0xff]
    %v7100 = vld [vmem:[#allocation4 + $0x298] sm:$0xff]
    %v7101 = vld [vmem:[#allocation4 + $0x2a0] sm:$0xff]
    %v7102 = vld [vmem:[#allocation4 + $0x2a8] sm:$0xff]
    %v7103 = vld [vmem:[#allocation4 + $0x2b0] sm:$0xff]
    %v7104 = vld [vmem:[#allocation4 + $0x2b8] sm:$0xff]
    %v7105 = vld [vmem:[#allocation4 + $0x2c0] sm:$0xff]
    %v7106 = vld [vmem:[#allocation4 + $0x2c8] sm:$0xff]
    %v7107 = vld [vmem:[#allocation4 + $0x2d0] sm:$0xff]
    %v7108 = vld [vmem:[#allocation4 + $0x2d8] sm:$0xff]
    %v7109 = vld [vmem:[#allocation4 + $0x2e0] sm:$0xff]
    %v7110 = vld [vmem:[#allocation4 + $0x2e8] sm:$0xff]
    %v7111 = vld [vmem:[#allocation4 + $0x2f0] sm:$0xff]
    %v7112 = vld [vmem:[#allocation4 + $0x2f8] sm:$0xff]
    %v7113 = vld [vmem:[#allocation4 + $0x300] sm:$0xff]
    %v7114 = vld [vmem:[#allocation4 + $0x308] sm:$0xff]
    %v7115 = vld [vmem:[#allocation4 + $0x310] sm:$0xff]
    %v7116 = vld [vmem:[#allocation4 + $0x318] sm:$0xff]
    %v7117 = vld [vmem:[#allocation4 + $0x320] sm:$0xff]
    %v7118 = vld [vmem:[#allocation4 + $0x328] sm:$0xff]
    %v7119 = vld [vmem:[#allocation4 + $0x330] sm:$0xff]
    %v7120 = vld [vmem:[#allocation4 + $0x338] sm:$0xff]
    %v7121 = vld [vmem:[#allocation4 + $0x340] sm:$0xff]
    %v7122 = vld [vmem:[#allocation4 + $0x348] sm:$0xff]
    %v7123 = vld [vmem:[#allocation4 + $0x350] sm:$0xff]
    %v7124 = vld [vmem:[#allocation4 + $0x358] sm:$0xff]
    %v7125 = vld [vmem:[#allocation4 + $0x360] sm:$0xff]
    %v7126 = vld [vmem:[#allocation4 + $0x368] sm:$0xff]
    %v7127 = vld [vmem:[#allocation4 + $0x370] sm:$0xff]
    %v7128 = vld [vmem:[#allocation4 + $0x378] sm:$0xff]
    %v7129 = vld [vmem:[#allocation4 + $0x380] sm:$0xff]
    %v7130 = vld [vmem:[#allocation4 + $0x388] sm:$0xff]
    %v7131 = vld [vmem:[#allocation4 + $0x390] sm:$0xff]
    %v7132 = vld [vmem:[#allocation4 + $0x398] sm:$0xff]
    %v7133 = vld [vmem:[#allocation4 + $0x3a0] sm:$0xff]
    %v7134 = vld [vmem:[#allocation4 + $0x3a8] sm:$0xff]
    %v7135 = vld [vmem:[#allocation4 + $0x3b0] sm:$0xff]
    %v7136 = vld [vmem:[#allocation4 + $0x3b8] sm:$0xff]
    %v7137 = vld [vmem:[#allocation4 + $0x3c0] sm:$0xff]
    %v7138 = vld [vmem:[#allocation4 + $0x3c8] sm:$0xff]
    %v7139 = vld [vmem:[#allocation4 + $0x3d0] sm:$0xff]
    %v7140 = vld [vmem:[#allocation4 + $0x3d8] sm:$0xff]
    %v7141 = vld [vmem:[#allocation4 + $0x3e0] sm:$0xff]
    %v7142 = vld [vmem:[#allocation4 + $0x3e8] sm:$0xff]
    %v7143 = vld [vmem:[#allocation4 + $0x3f0] sm:$0xff]
    %v7144 = vld [vmem:[#allocation4 + $0x3f8] sm:$0xff]
    %v7145 = vld [vmem:[#allocation11 + $0x2c] sm:$0x1]
    %v7147 = vlaneseq
    %v7148 = vshrl.u32 %v7147, 7
    %v7149 = vsub.s32 0, %v7148
    %v7150 = vrot.slane %v7145, %v7149
    %7152 = vmatprep.subr.bf16.mxu0 0
    %7153 = vmatpush1.bf16.msra.mxu0 %v7017
    %7154 = vmatprep.subr.bf16.mxu0 0
    %7155 = vmatpush1.bf16.msra.mxu0 %v7018
    %7156 = vmatprep.subr.bf16.mxu0 0
    %7157 = vmatpush1.bf16.msra.mxu0 %v7019
    %7158 = vmatprep.subr.bf16.mxu0 0
    %7159 = vmatpush1.bf16.msra.mxu0 %v7020
    %7160 = vmatprep.subr.bf16.mxu0 0
    %7161 = vmatpush1.bf16.msra.mxu0 %v7021
    %7162 = vmatprep.subr.bf16.mxu0 0
    %7163 = vmatpush1.bf16.msra.mxu0 %v7022
    %7164 = vmatprep.subr.bf16.mxu0 0
    %7165 = vmatpush1.bf16.msra.mxu0 %v7023
    %7166 = vmatprep.subr.bf16.mxu0 0
    %7167 = vmatpush1.bf16.msra.mxu0 %v7024
    %7168 = vmatprep.subr.bf16.mxu0 0
    %7169 = vmatpush1.bf16.msra.mxu0 %v7025
    %7170 = vmatprep.subr.bf16.mxu0 0
    %7171 = vmatpush1.bf16.msra.mxu0 %v7026
    %7172 = vmatprep.subr.bf16.mxu0 0
    %7173 = vmatpush1.bf16.msra.mxu0 %v7027
    %7174 = vmatprep.subr.bf16.mxu0 0
    %7175 = vmatpush1.bf16.msra.mxu0 %v7028
    %7176 = vmatprep.subr.bf16.mxu0 0
    %7177 = vmatpush1.bf16.msra.mxu0 %v7029
    %7178 = vmatprep.subr.bf16.mxu0 0
    %7179 = vmatpush1.bf16.msra.mxu0 %v7030
    %7180 = vmatprep.subr.bf16.mxu0 0
    %7181 = vmatpush1.bf16.msra.mxu0 %v7031
    %7182 = vmatprep.subr.bf16.mxu0 0
    %7183 = vmatpush1.bf16.msra.mxu0 %v7032
    %7184 = vmatprep.mubr.bf16.mxu0 %v6998
    %7185 = vmatmul.mubr.bf16.gmra.mrb[0].mxu0 %v6997
    %v7186 = vpop.f32.mrb[0].mxu0
    %v7187 = vadd.f32 %v7150, %v7186
    %v7188 = vpop.f32.mrb[0].mxu0
    %v7189 = vpop.f32.mrb[0].mxu0
    %v7190 = vpop.f32.mrb[0].mxu0
    %7191 = vdwg.mxu0
    %7192 = vmatprep.subr.bf16.mxu0 0
    %7193 = vmatpush1.bf16.msra.mxu0 %v7033
    %7194 = vmatprep.subr.bf16.mxu0 0
    %7195 = vmatpush1.bf16.msra.mxu0 %v7034
    %7196 = vmatprep.subr.bf16.mxu0 0
    %7197 = vmatpush1.bf16.msra.mxu0 %v7035
    %7198 = vmatprep.subr.bf16.mxu0 0
    %7199 = vmatpush1.bf16.msra.mxu0 %v7036
    %7200 = vmatprep.subr.bf16.mxu0 0
    %7201 = vmatpush1.bf16.msra.mxu0 %v7037
    %7202 = vmatprep.subr.bf16.mxu0 0
    %7203 = vmatpush1.bf16.msra.mxu0 %v7038
    %7204 = vmatprep.subr.bf16.mxu0 0
    %7205 = vmatpush1.bf16.msra.mxu0 %v7039
    %7206 = vmatprep.subr.bf16.mxu0 0
    %7207 = vmatpush1.bf16.msra.mxu0 %v7040
    %7208 = vmatprep.subr.bf16.mxu0 0
    %7209 = vmatpush1.bf16.msra.mxu0 %v7041
    %7210 = vmatprep.subr.bf16.mxu0 0
    %7211 = vmatpush1.bf16.msra.mxu0 %v7042
    %7212 = vmatprep.subr.bf16.mxu0 0
    %7213 = vmatpush1.bf16.msra.mxu0 %v7043
    %7214 = vmatprep.subr.bf16.mxu0 0
    %7215 = vmatpush1.bf16.msra.mxu0 %v7044
    %7216 = vmatprep.subr.bf16.mxu0 0
    %7217 = vmatpush1.bf16.msra.mxu0 %v7045
    %7218 = vmatprep.subr.bf16.mxu0 0
    %7219 = vmatpush1.bf16.msra.mxu0 %v7046
    %7220 = vmatprep.subr.bf16.mxu0 0
    %7221 = vmatpush1.bf16.msra.mxu0 %v7047
    %7222 = vmatprep.subr.bf16.mxu0 0
    %7223 = vmatpush1.bf16.msra.mxu0 %v7048
    %7224 = vmatprep.mubr.bf16.mxu0 %v7000
    %7225 = vmatmul.mubr.bf16.gmra.mrb[0].mxu0 %v6999
    %v7226 = vpop.f32.mrb[0].mxu0
    %v7227 = vadd.f32 %v7187, %v7226
    %v7228 = vpop.f32.mrb[0].mxu0
    %v7229 = vpop.f32.mrb[0].mxu0
    %v7230 = vpop.f32.mrb[0].mxu0
    %7231 = vdwg.mxu0
    %7232 = vmatprep.subr.bf16.mxu0 0
    %7233 = vmatpush1.bf16.msra.mxu0 %v7049
    %7234 = vmatprep.subr.bf16.mxu0 0
    %7235 = vmatpush1.bf16.msra.mxu0 %v7050
    %7236 = vmatprep.subr.bf16.mxu0 0
    %7237 = vmatpush1.bf16.msra.mxu0 %v7051
    %7238 = vmatprep.subr.bf16.mxu0 0
    %7239 = vmatpush1.bf16.msra.mxu0 %v7052
    %7240 = vmatprep.subr.bf16.mxu0 0
    %7241 = vmatpush1.bf16.msra.mxu0 %v7053
    %7242 = vmatprep.subr.bf16.mxu0 0
    %7243 = vmatpush1.bf16.msra.mxu0 %v7054
    %7244 = vmatprep.subr.bf16.mxu0 0
    %7245 = vmatpush1.bf16.msra.mxu0 %v7055
    %7246 = vmatprep.subr.bf16.mxu0 0
    %7247 = vmatpush1.bf16.msra.mxu0 %v7056
    %7248 = vmatprep.subr.bf16.mxu0 0
    %7249 = vmatpush1.bf16.msra.mxu0 %v7057
    %7250 = vmatprep.subr.bf16.mxu0 0
    %7251 = vmatpush1.bf16.msra.mxu0 %v7058
    %7252 = vmatprep.subr.bf16.mxu0 0
    %7253 = vmatpush1.bf16.msra.mxu0 %v7059
    %7254 = vmatprep.subr.bf16.mxu0 0
    %7255 = vmatpush1.bf16.msra.mxu0 %v7060
    %7256 = vmatprep.subr.bf16.mxu0 0
    %7257 = vmatpush1.bf16.msra.mxu0 %v7061
    %7258 = vmatprep.subr.bf16.mxu0 0
    %7259 = vmatpush1.bf16.msra.mxu0 %v7062
    %7260 = vmatprep.subr.bf16.mxu0 0
    %7261 = vmatpush1.bf16.msra.mxu0 %v7063
    %7262 = vmatprep.subr.bf16.mxu0 0
    %7263 = vmatpush1.bf16.msra.mxu0 %v7064
    %7264 = vmatprep.mubr.bf16.mxu0 %v7002
    %7265 = vmatmul.mubr.bf16.gmra.mrb[0].mxu0 %v7001
    %v7266 = vpop.f32.mrb[0].mxu0
    %v7267 = vadd.f32 %v7227, %v7266
    %v7268 = vpop.f32.mrb[0].mxu0
    %v7269 = vpop.f32.mrb[0].mxu0
    %v7270 = vpop.f32.mrb[0].mxu0
    %7271 = vdwg.mxu0
    %7272 = vmatprep.subr.bf16.mxu0 0
    %7273 = vmatpush1.bf16.msra.mxu0 %v7065
    %7274 = vmatprep.subr.bf16.mxu0 0
    %7275 = vmatpush1.bf16.msra.mxu0 %v7066
    %7276 = vmatprep.subr.bf16.mxu0 0
    %7277 = vmatpush1.bf16.msra.mxu0 %v7067
    %7278 = vmatprep.subr.bf16.mxu0 0
    %7279 = vmatpush1.bf16.msra.mxu0 %v7068
    %7280 = vmatprep.subr.bf16.mxu0 0
    %7281 = vmatpush1.bf16.msra.mxu0 %v7069
    %7282 = vmatprep.subr.bf16.mxu0 0
    %7283 = vmatpush1.bf16.msra.mxu0 %v7070
    %7284 = vmatprep.subr.bf16.mxu0 0
    %7285 = vmatpush1.bf16.msra.mxu0 %v7071
    %7286 = vmatprep.subr.bf16.mxu0 0
    %7287 = vmatpush1.bf16.msra.mxu0 %v7072
    %7288 = vmatprep.subr.bf16.mxu0 0
    %7289 = vmatpush1.bf16.msra.mxu0 %v7073
    %7290 = vmatprep.subr.bf16.mxu0 0
    %7291 = vmatpush1.bf16.msra.mxu0 %v7074
    %7292 = vmatprep.subr.bf16.mxu0 0
    %7293 = vmatpush1.bf16.msra.mxu0 %v7075
    %7294 = vmatprep.subr.bf16.mxu0 0
    %7295 = vmatpush1.bf16.msra.mxu0 %v7076
    %7296 = vmatprep.subr.bf16.mxu0 0
    %7297 = vmatpush1.bf16.msra.mxu0 %v7077
    %7298 = vmatprep.subr.bf16.mxu0 0
    %7299 = vmatpush1.bf16.msra.mxu0 %v7078
    %7300 = vmatprep.subr.bf16.mxu0 0
    %7301 = vmatpush1.bf16.msra.mxu0 %v7079
    %7302 = vmatprep.subr.bf16.mxu0 0
    %7303 = vmatpush1.bf16.msra.mxu0 %v7080
    %7304 = vmatprep.mubr.bf16.mxu0 %v7004
    %7305 = vmatmul.mubr.bf16.gmra.mrb[0].mxu0 %v7003
    %v7306 = vpop.f32.mrb[0].mxu0
    %v7307 = vadd.f32 %v7267, %v7306
    %v7308 = vpop.f32.mrb[0].mxu0
    %v7309 = vpop.f32.mrb[0].mxu0
    %v7310 = vpop.f32.mrb[0].mxu0
    %7311 = vdwg.mxu0
    %7312 = vmatprep.subr.bf16.mxu0 0
    %7313 = vmatpush1.bf16.msra.mxu0 %v7081
    %7314 = vmatprep.subr.bf16.mxu0 0
    %7315 = vmatpush1.bf16.msra.mxu0 %v7082
    %7316 = vmatprep.subr.bf16.mxu0 0
    %7317 = vmatpush1.bf16.msra.mxu0 %v7083
    %7318 = vmatprep.subr.bf16.mxu0 0
    %7319 = vmatpush1.bf16.msra.mxu0 %v7084
    %7320 = vmatprep.subr.bf16.mxu0 0
    %7321 = vmatpush1.bf16.msra.mxu0 %v7085
    %7322 = vmatprep.subr.bf16.mxu0 0
    %7323 = vmatpush1.bf16.msra.mxu0 %v7086
    %7324 = vmatprep.subr.bf16.mxu0 0
    %7325 = vmatpush1.bf16.msra.mxu0 %v7087
    %7326 = vmatprep.subr.bf16.mxu0 0
    %7327 = vmatpush1.bf16.msra.mxu0 %v7088
    %7328 = vmatprep.subr.bf16.mxu0 0
    %7329 = vmatpush1.bf16.msra.mxu0 %v7089
    %7330 = vmatprep.subr.bf16.mxu0 0
    %7331 = vmatpush1.bf16.msra.mxu0 %v7090
    %7332 = vmatprep.subr.bf16.mxu0 0
    %7333 = vmatpush1.bf16.msra.mxu0 %v7091
    %7334 = vmatprep.subr.bf16.mxu0 0
    %7335 = vmatpush1.bf16.msra.mxu0 %v7092
    %7336 = vmatprep.subr.bf16.mxu0 0
    %7337 = vmatpush1.bf16.msra.mxu0 %v7093
    %7338 = vmatprep.subr.bf16.mxu0 0
    %7339 = vmatpush1.bf16.msra.mxu0 %v7094
    %7340 = vmatprep.subr.bf16.mxu0 0
    %7341 = vmatpush1.bf16.msra.mxu0 %v7095
    %7342 = vmatprep.subr.bf16.mxu0 0
    %7343 = vmatpush1.bf16.msra.mxu0 %v7096
    %7344 = vmatprep.mubr.bf16.mxu0 %v7006
    %7345 = vmatmul.mubr.bf16.gmra.mrb[0].mxu0 %v7005
    %v7346 = vpop.f32.mrb[0].mxu0
    %v7347 = vadd.f32 %v7307, %v7346
    %v7348 = vpop.f32.mrb[0].mxu0
    %v7349 = vpop.f32.mrb[0].mxu0
    %v7350 = vpop.f32.mrb[0].mxu0
    %7351 = vdwg.mxu0
    %7352 = vmatprep.subr.bf16.mxu0 0
    %7353 = vmatpush1.bf16.msra.mxu0 %v7097
    %7354 = vmatprep.subr.bf16.mxu0 0
    %7355 = vmatpush1.bf16.msra.mxu0 %v7098
    %7356 = vmatprep.subr.bf16.mxu0 0
    %7357 = vmatpush1.bf16.msra.mxu0 %v7099
    %7358 = vmatprep.subr.bf16.mxu0 0
    %7359 = vmatpush1.bf16.msra.mxu0 %v7100
    %7360 = vmatprep.subr.bf16.mxu0 0
    %7361 = vmatpush1.bf16.msra.mxu0 %v7101
    %7362 = vmatprep.subr.bf16.mxu0 0
    %7363 = vmatpush1.bf16.msra.mxu0 %v7102
    %7364 = vmatprep.subr.bf16.mxu0 0
    %7365 = vmatpush1.bf16.msra.mxu0 %v7103
    %7366 = vmatprep.subr.bf16.mxu0 0
    %7367 = vmatpush1.bf16.msra.mxu0 %v7104
    %7368 = vmatprep.subr.bf16.mxu0 0
    %7369 = vmatpush1.bf16.msra.mxu0 %v7105
    %7370 = vmatprep.subr.bf16.mxu0 0
    %7371 = vmatpush1.bf16.msra.mxu0 %v7106
    %7372 = vmatprep.subr.bf16.mxu0 0
    %7373 = vmatpush1.bf16.msra.mxu0 %v7107
    %7374 = vmatprep.subr.bf16.mxu0 0
    %7375 = vmatpush1.bf16.msra.mxu0 %v7108
    %7376 = vmatprep.subr.bf16.mxu0 0
    %7377 = vmatpush1.bf16.msra.mxu0 %v7109
    %7378 = vmatprep.subr.bf16.mxu0 0
    %7379 = vmatpush1.bf16.msra.mxu0 %v7110
    %7380 = vmatprep.subr.bf16.mxu0 0
    %7381 = vmatpush1.bf16.msra.mxu0 %v7111
    %7382 = vmatprep.subr.bf16.mxu0 0
    %7383 = vmatpush1.bf16.msra.mxu0 %v7112
    %7384 = vmatprep.mubr.bf16.mxu0 %v7008
    %7385 = vmatmul.mubr.bf16.gmra.mrb[0].mxu0 %v7007
    %v7386 = vpop.f32.mrb[0].mxu0
    %v7387 = vadd.f32 %v7347, %v7386
    %v7388 = vpop.f32.mrb[0].mxu0
    %v7389 = vpop.f32.mrb[0].mxu0
    %v7390 = vpop.f32.mrb[0].mxu0
    %7391 = vdwg.mxu0
    %7392 = vmatprep.subr.bf16.mxu0 0
    %7393 = vmatpush1.bf16.msra.mxu0 %v7113
    %7394 = vmatprep.subr.bf16.mxu0 0
    %7395 = vmatpush1.bf16.msra.mxu0 %v7114
    %7396 = vmatprep.subr.bf16.mxu0 0
    %7397 = vmatpush1.bf16.msra.mxu0 %v7115
    %7398 = vmatprep.subr.bf16.mxu0 0
    %7399 = vmatpush1.bf16.msra.mxu0 %v7116
    %7400 = vmatprep.subr.bf16.mxu0 0
    %7401 = vmatpush1.bf16.msra.mxu0 %v7117
    %7402 = vmatprep.subr.bf16.mxu0 0
    %7403 = vmatpush1.bf16.msra.mxu0 %v7118
    %7404 = vmatprep.subr.bf16.mxu0 0
    %7405 = vmatpush1.bf16.msra.mxu0 %v7119
    %7406 = vmatprep.subr.bf16.mxu0 0
    %7407 = vmatpush1.bf16.msra.mxu0 %v7120
    %7408 = vmatprep.subr.bf16.mxu0 0
    %7409 = vmatpush1.bf16.msra.mxu0 %v7121
    %7410 = vmatprep.subr.bf16.mxu0 0
    %7411 = vmatpush1.bf16.msra.mxu0 %v7122
    %7412 = vmatprep.subr.bf16.mxu0 0
    %7413 = vmatpush1.bf16.msra.mxu0 %v7123
    %7414 = vmatprep.subr.bf16.mxu0 0
    %7415 = vmatpush1.bf16.msra.mxu0 %v7124
    %7416 = vmatprep.subr.bf16.mxu0 0
    %7417 = vmatpush1.bf16.msra.mxu0 %v7125
    %7418 = vmatprep.subr.bf16.mxu0 0
    %7419 = vmatpush1.bf16.msra.mxu0 %v7126
    %7420 = vmatprep.subr.bf16.mxu0 0
    %7421 = vmatpush1.bf16.msra.mxu0 %v7127
    %7422 = vmatprep.subr.bf16.mxu0 0
    %7423 = vmatpush1.bf16.msra.mxu0 %v7128
    %7424 = vmatprep.mubr.bf16.mxu0 %v7010
    %7425 = vmatmul.mubr.bf16.gmra.mrb[0].mxu0 %v7009
    %v7426 = vpop.f32.mrb[0].mxu0
    %v7427 = vadd.f32 %v7387, %v7426
    %v7428 = vpop.f32.mrb[0].mxu0
    %v7429 = vpop.f32.mrb[0].mxu0
    %v7430 = vpop.f32.mrb[0].mxu0
    %7431 = vdwg.mxu0
    %7432 = vmatprep.subr.bf16.mxu0 0
    %7433 = vmatpush1.bf16.msra.mxu0 %v7129
    %7434 = vmatprep.subr.bf16.mxu0 0
    %7435 = vmatpush1.bf16.msra.mxu0 %v7130
    %7436 = vmatprep.subr.bf16.mxu0 0
    %7437 = vmatpush1.bf16.msra.mxu0 %v7131
    %7438 = vmatprep.subr.bf16.mxu0 0
    %7439 = vmatpush1.bf16.msra.mxu0 %v7132
    %7440 = vmatprep.subr.bf16.mxu0 0
    %7441 = vmatpush1.bf16.msra.mxu0 %v7133
    %7442 = vmatprep.subr.bf16.mxu0 0
    %7443 = vmatpush1.bf16.msra.mxu0 %v7134
    %7444 = vmatprep.subr.bf16.mxu0 0
    %7445 = vmatpush1.bf16.msra.mxu0 %v7135
    %7446 = vmatprep.subr.bf16.mxu0 0
    %7447 = vmatpush1.bf16.msra.mxu0 %v7136
    %7448 = vmatprep.subr.bf16.mxu0 0
    %7449 = vmatpush1.bf16.msra.mxu0 %v7137
    %7450 = vmatprep.subr.bf16.mxu0 0
    %7451 = vmatpush1.bf16.msra.mxu0 %v7138
    %7452 = vmatprep.subr.bf16.mxu0 0
    %7453 = vmatpush1.bf16.msra.mxu0 %v7139
    %7454 = vmatprep.subr.bf16.mxu0 0
    %7455 = vmatpush1.bf16.msra.mxu0 %v7140
    %7456 = vmatprep.subr.bf16.mxu0 0
    %7457 = vmatpush1.bf16.msra.mxu0 %v7141
    %7458 = vmatprep.subr.bf16.mxu0 0
    %7459 = vmatpush1.bf16.msra.mxu0 %v7142
    %7460 = vmatprep.subr.bf16.mxu0 0
    %7461 = vmatpush1.bf16.msra.mxu0 %v7143
    %7462 = vmatprep.subr.bf16.mxu0 0
    %7463 = vmatpush1.bf16.msra.mxu0 %v7144
    %7464 = vmatprep.mubr.bf16.mxu0 %v7012
    %7465 = vmatmul.mubr.bf16.gmra.mrb[0].mxu0 %v7011
    %v7466 = vpop.f32.mrb[0].mxu0
    %v7467 = vadd.f32 %v7427, %v7466
    %v7468 = vpop.f32.mrb[0].mxu0
    %v7469 = vpop.f32.mrb[0].mxu0
    %v7470 = vpop.f32.mrb[0].mxu0
    %7471 = vdwg.mxu0
    %7472 = vst [vmem:[#allocation12] sm:$0x3] %v7467
    // Predicated region
    $region34: #{cd_spectrum_cnn_forward.1} parent=1 // pred_check
      _
    $region35: #{cd_spectrum_cnn_forward.1} parent=1 // pred_check_branch
      %7474 = sbr.rel (0) target = $region37
    $region36: #{cd_spectrum_cnn_forward.1} parent=1 // pred_region
      %s7476 = ssub.s32 32, 32
      %7477 = vsyncadd [#allocation8], %s7476
      %s7479 = sshll.u32 [#allocation12], 4
      %s7480 = int_to_ptr.vmem [resolvable:$true] %s7479
      %7482 = dma.vmem_to_hbm [thread:$0]  %s7480, 32, %s7, [#allocation8]
    $region37: #{cd_spectrum_cnn_forward.1} parent=1 // pred_fallthru
      _
    // Predicated region
    $region38: #{cd_spectrum_cnn_forward.1} parent=1 // pred_check
      _
    $region39: #{cd_spectrum_cnn_forward.1} parent=1 // pred_check_branch
      %7484 = sbr.rel (0) target = $region41
    $region40: #{cd_spectrum_cnn_forward.1} parent=1 // pred_region
      %7485 = dma.done [#allocation8], 32
    $region41: #{cd_spectrum_cnn_forward.1} parent=1 // pred_fallthru
      _
    %7486 = vsyncpa [#allocation7], 1
    %7487 = vsyncpa [#allocation10], 1
    %7488 = vsyncpa [#allocation8], 1
  %7489 = vsyncmov [#allocation5]
  %s7490 = vpop.sfrf %7489
  %p7491 = scmp.eq.s32.totalorder %s7490, 0
  %p7492 = pneg %p7491
  %7494 = shalt.err (%p7492)
  %s7495 = scalar_lea.sflag [#allocation5], 1
  %7496 = vsyncmov %s7495
  %s7497 = vpop.sfrf %7496
  %p7498 = scmp.eq.s32.totalorder %s7497, 0
  %p7499 = pneg %p7498
  %7501 = shalt.err (%p7499)
  %s7502 = scalar_lea.sflag [#allocation5], 2
  %7503 = vsyncmov %s7502
  %s7504 = vpop.sfrf %7503
  %p7505 = scmp.eq.s32.totalorder %s7504, 0
  %p7506 = pneg %p7505
  %7508 = shalt.err (%p7506)

</llo_original>
